<compile_context>
chip_gen: v6e
topology: v6e:2x2x1
jax: 0.10.0
libtpu: 0.0.40
codegen_flags: <defaults>
</compile_context>

<pallas_src>
import numpy as np
import jax
import jax.numpy as jnp
from jax.experimental import pallas as pl
from jax.experimental.pallas import tpu as pltpu  # noqa: F401  (no TPU-specific params needed at these sizes)


# ---------------------------------------------------------------------------
# Fused per-stage kernel: pool -> 1x1 proj -> num_blocks x (1x1 -> 3x3 -> 1x1
#                         -> +residual -> ReLU), all on a VMEM-resident
#                         (N*H, W*C) activation.
# ---------------------------------------------------------------------------
def _make_stage_kernel(num_blocks):
    def kernel(x_ref, ah_ref, wp_ref, bp_ref, d_ref,
               w1_ref, b1_ref, w3_ref, b3_ref, w2_ref, b2_ref, o_ref):
        f32 = jnp.float32

        # AvgPool2d(2): row pairs via `ah`; column pairs are pre-folded into
        # the 1x1 projection weight `wp` (pooling and 1x1 conv are linear).
        x = jnp.dot(ah_ref[...], x_ref[...], preferred_element_type=f32)
        # 1x1 projection conv (+ column pooling) + pre-tiled bias.
        x = jnp.dot(x, wp_ref[...], preferred_element_type=f32) + bp_ref[...]

        for b in range(num_blocks):
            # 1x1 conv
            y = jnp.dot(x, w1_ref[b], preferred_element_type=f32) + b1_ref[b]

            # 3x3 conv, padding=1: three banded column-mix matmuls (one per
            # vertical offset dy) and two tiny row-shift matmuls; the center
            # row (dy == 1) needs no shift.  Zero padding and image-boundary
            # masking live inside the precomputed D_dy / banded matrices.
            acc = None
            for dy in range(3):
                z = jnp.dot(y, w3_ref[b * 3 + dy], preferred_element_type=f32)
                if dy != 1:
                    z = jnp.dot(d_ref[dy], z, preferred_element_type=f32)
                acc = z if acc is None else acc + z
            y = acc + b3_ref[b]

            # 1x1 conv
            y = jnp.dot(y, w2_ref[b], preferred_element_type=f32) + b2_ref[b]

            # ResBlock step: residual + ReLU, fused.
            x = jnp.maximum(x + y, 0.0)

        o_ref[...] = x

    return kernel


def _full_spec(shape):
    # whole-array block (block_shape == array shape satisfies the (8,128) rule)
    return pl.BlockSpec(shape, lambda: (0,) * len(shape))


def _stage_call(x, ks):
    num_blocks = ks['w1'].shape[0]
    nh_out = ks['ah'].shape[0]
    wc_out = ks['w1'].shape[-1]
    ins = [x, ks['ah'], ks['wp'], ks['bp'], ks['dmat'],
           ks['w1'], ks['b1'], ks['w3'], ks['b3'], ks['w2'], ks['b2']]
    return pl.pallas_call(
        _make_stage_kernel(num_blocks),
        out_shape=jax.ShapeDtypeStruct((nh_out, wc_out), jnp.float32),
        in_specs=[_full_spec(a.shape) for a in ins],
        out_specs=_full_spec((nh_out, wc_out)),
    )(*ins)


# ---------------------------------------------------------------------------
# Forward pass (jit the whole thing: 5 fused pallas_calls + trivial layout ops)
# ---------------------------------------------------------------------------
def downsample_forward(kparams, x_nchw):
    N, C0, H0, W0 = x_nchw.shape
    # NCHW -> row-major (N*H, W*C) layout used by the stage kernels.
    x = jnp.transpose(x_nchw, (0, 2, 3, 1)).reshape(N * H0, W0 * C0)
    for ks in kparams:
        x = _stage_call(x, ks)
    s = 2 ** len(kparams)
    Hf, Wf = H0 // s, W0 // s
    Cf = x.shape[1] // Wf
    return jnp.transpose(x.reshape(N, Hf, Wf, Cf), (0, 3, 1, 2))   # back to NCHW


# ---------------------------------------------------------------------------
# One-time host-side repack of the natural conv params into the kernel format.
# ---------------------------------------------------------------------------
def prepare_kernel_params(params, N, H0, W0):
    kparams = []
    H_in, W_in = H0, W0
    for st in params:
        pw = np.asarray(st['pw'], np.float32)      # (cin, cout)
        pb = np.asarray(st['pb'], np.float32)      # (1, cout)
        cin, cout = pw.shape
        H, W = H_in // 2, W_in // 2
        B = int(st['w1s'].shape[0])
        eye_w = np.eye(W, dtype=np.float32)

        # Row-pair half of AvgPool2d(2): (N*H, N*H_in), entries 0.5.
        ah = np.zeros((N * H, N * H_in), np.float32)
        for n in range(N):
            for h in range(H):
                ah[n * H + h, n * H_in + 2 * h] = 0.5
                ah[n * H + h, n * H_in + 2 * h + 1] = 0.5

        # Column-pair half of the pool, folded into the 1x1 projection weight.
        aw = np.zeros((W_in * cin, W * cin), np.float32)
        for w in range(W):
            for dx in range(2):
                for ci in range(cin):
                    aw[(2 * w + dx) * cin + ci, w * cin + ci] = 0.5
        wp = aw @ np.kron(eye_w, pw)               # (W_in*cin, W*cout)
        bp = np.tile(pb, (1, W))                   # (1, W*cout)

        # Row-shift operators (dy = -1, 0, +1) for the 3x3 conv, including
        # zero padding and image-boundary masking.  dmat[1] is the identity.
        nh = N * H
        dmat = np.zeros((3, nh, nh), np.float32)
        for dy in range(3):
            for n in range(N):
                for h in range(H):
                    hs = h + dy - 1
                    if 0 <= hs < H:
                        dmat[dy, n * H + h, n * H + hs] = 1.0

        w1 = np.stack([np.kron(eye_w, np.asarray(st['w1s'][b])) for b in range(B)])
        w2 = np.stack([np.kron(eye_w, np.asarray(st['w2s'][b])) for b in range(B)])
        b1 = np.stack([np.tile(np.asarray(st['b1s'][b]), (1, W)) for b in range(B)])
        b2 = np.stack([np.tile(np.asarray(st['b2s'][b]), (1, W)) for b in range(B)])
        b3 = np.stack([np.tile(np.asarray(st['b3s'][b]), (1, W)) for b in range(B)])

        # 3x3 conv: fold the +/-1-column taps into block-tridiagonal ("banded
        # kron") matrices, one per vertical offset dy.  Stored as (B*3, ., .)
        # so the kernel indexes them with a single static leading index.
        w3 = np.zeros((B * 3, W * cout, W * cout), np.float32)
        for b in range(B):
            w3b = np.asarray(st['w3s'][b])         # (9, cout, cout), t = 3*dy + dx
            for dy in range(3):
                m = np.zeros((W * cout, W * cout), np.float32)
                for dx in range(3):
                    band = np.eye(W, k=1 - dx, dtype=np.float32)
                    m += np.kron(band, w3b[3 * dy + dx])
                w3[b * 3 + dy] = m

        kparams.append({
            'ah': jnp.asarray(ah), 'wp': jnp.asarray(wp), 'bp': jnp.asarray(bp),
            'dmat': jnp.asarray(dmat),
            'w1': jnp.asarray(w1), 'b1': jnp.asarray(b1),
            'w3': jnp.asarray(w3), 'b3': jnp.asarray(b3),
            'w2': jnp.asarray(w2), 'b2': jnp.asarray(b2),
        })
        H_in, W_in = H, W
    return kparams


# ---------------------------------------------------------------------------
# Deterministic init (PyTorch-like fan-in scaling) in the natural conv format.
# ---------------------------------------------------------------------------
def _uniform(key, shape, fan_in):
    s = 1.0 / (fan_in ** 0.5)
    return jax.random.uniform(key, shape, jnp.float32, -s, s)


def init_params(key, feature_list, num_resblock):
    params = []
    for i in range(5):
        cin, cout = feature_list[i], feature_list[i + 1]
        key, k1, k2 = jax.random.split(key, 3)
        st = {'pw': _uniform(k1, (cin, cout), cin),          # 1x1 projection conv
              'pb': _uniform(k2, (1, cout), cin)}
        w1, b1, w3, b3, w2, b2 = [], [], [], [], [], []
        for _ in range(num_resblock):
            key, *ks = jax.random.split(key, 7)
            w1.append(_uniform(ks[0], (cout, cout), cout))           # 1x1
            b1.append(_uniform(ks[1], (1, cout), cout))
            w3.append(_uniform(ks[2], (9, cout, cout), 9 * cout))    # 3x3 (HWIO flat)
            b3.append(_uniform(ks[3], (1, cout), 9 * cout))
            w2.append(_uniform(ks[4], (cout, cout), cout))           # 1x1
            b2.append(_uniform(ks[5], (1, cout), cout))
        st.update(w1s=jnp.stack(w1), b1s=jnp.stack(b1), w3s=jnp.stack(w3),
                  b3s=jnp.stack(b3), w2s=jnp.stack(w2), b2s=jnp.stack(b2))
        params.append(st)
    return params


# ---------------------------------------------------------------------------
# Pure-JAX (XLA conv) reference for verification.
# ---------------------------------------------------------------------------
def ref_forward(params, x_nchw):
    x = jnp.transpose(x_nchw, (0, 2, 3, 1))
    dn = ('NHWC', 'HWIO', 'NHWC')

    def c1(x, w, b):
        return jax.lax.conv_general_dilated(
            x, w.reshape(1, 1, *w.shape), (1, 1), 'VALID',
            dimension_numbers=dn) + b.reshape(1, 1, 1, -1)

    def c3(x, w9, b):
        c = w9.shape[-2]
        w = w9.reshape(3, 3, c, w9.shape[-1])
        return jax.lax.conv_general_dilated(
            x, w, (1, 1), ((1, 1), (1, 1)),
            dimension_numbers=dn) + b.reshape(1, 1, 1, -1)

    for st in params:
        n, h, w, c = x.shape
        x = x.reshape(n, h // 2, 2, w // 2, 2, c).mean(axis=(2, 4))   # AvgPool2d(2)
        x = c1(x, st['pw'], st['pb'])
        for b in range(st['w1s'].shape[0]):
            y = c1(x, st['w1s'][b], st['b1s'][b])
            y = c3(y, st['w3s'][b], st['b3s'][b])
            y = c1(y, st['w2s'][b], st['b2s'][b])
            x = jax.nn.relu(x + y)
    return jnp.transpose(x, (0, 3, 1, 2))


if __name__ == "__main__":
    # Small, structure-preserving config: 5 down stages, 2 ResBlock steps each.
    feature_list = [1, 8, 16, 16, 32, 32]
    num_resblock = 2
    N, H0, W0 = 2, 32, 32          # spatial 32 survives 5 halvings (32 -> 1)

    key = jax.random.PRNGKey(0)
    kp, kx = jax.random.split(key)
    params = init_params(kp, feature_list, num_resblock)
    x = jax.random.normal(kx, (N, feature_list[0], H0, W0), jnp.float32)

    # One-time weight repack into the fused-kernel format (host side).
    kparams = prepare_kernel_params(params, N, H0, W0)

    fwd = jax.jit(downsample_forward)
    out = jax.block_until_ready(fwd(kparams, x))
    assert out.shape == (N, feature_list[-1], 1, 1), out.shape

    ref = jax.block_until_ready(jax.jit(ref_forward)(params, x))
    err = float(jnp.max(jnp.abs(out - ref)))
    assert err < 2e-3, f"mismatch vs reference: {err}"

    print("KERNEL_OK")
</pallas_src>

<mosaic_0001>
module attributes {stable_mosaic.version = 11 : i64} {
  func.func @kernel(%arg0: memref<64x32xf32, #tpu.memory_space<vmem>>, %arg1: memref<32x64xf32, #tpu.memory_space<vmem>>, %arg2: memref<32x128xf32, #tpu.memory_space<vmem>>, %arg3: memref<1x128xf32, #tpu.memory_space<vmem>>, %arg4: memref<3x32x32xf32, #tpu.memory_space<vmem>>, %arg5: memref<2x128x128xf32, #tpu.memory_space<vmem>>, %arg6: memref<2x1x128xf32, #tpu.memory_space<vmem>>, %arg7: memref<6x128x128xf32, #tpu.memory_space<vmem>>, %arg8: memref<2x1x128xf32, #tpu.memory_space<vmem>>, %arg9: memref<2x128x128xf32, #tpu.memory_space<vmem>>, %arg10: memref<2x1x128xf32, #tpu.memory_space<vmem>>, %arg11: memref<32x128xf32, #tpu.memory_space<vmem>>) attributes {dimension_semantics = [], scalar_prefetch = 0 : i64, scratch_operands = 0 : i64, tpu.core_type = #tpu.core_type<tc>} {
    %c0 = arith.constant 0 : index
    %c0_0 = arith.constant 0 : index
    %0 = vector.load %arg1[%c0, %c0_0] : memref<32x64xf32, #tpu.memory_space<vmem>>, vector<32x64xf32>
    %c0_1 = arith.constant 0 : index
    %c0_2 = arith.constant 0 : index
    %1 = vector.load %arg0[%c0_1, %c0_2] : memref<64x32xf32, #tpu.memory_space<vmem>>, vector<64x32xf32>
    %cst = arith.constant dense<0.000000e+00> : vector<32x32xf32>
    %2 = tpu.matmul %0, %1, %cst {dimension_numbers = #tpu.dot_dimension_numbers<[1], [0], [0], [1], [0, 0, 1, 1], [], []>} : vector<32x64xf32>, vector<64x32xf32>, vector<32x32xf32> -> vector<32x32xf32>
    %c0_3 = arith.constant 0 : index
    %c0_4 = arith.constant 0 : index
    %3 = vector.load %arg2[%c0_3, %c0_4] : memref<32x128xf32, #tpu.memory_space<vmem>>, vector<32x128xf32>
    %cst_5 = arith.constant dense<0.000000e+00> : vector<32x128xf32>
    %4 = tpu.matmul %2, %3, %cst_5 {dimension_numbers = #tpu.dot_dimension_numbers<[1], [0], [0], [1], [0, 0, 1, 1], [], []>} : vector<32x32xf32>, vector<32x128xf32>, vector<32x128xf32> -> vector<32x128xf32>
    %c0_6 = arith.constant 0 : index
    %c0_7 = arith.constant 0 : index
    %5 = vector.load %arg3[%c0_6, %c0_7] : memref<1x128xf32, #tpu.memory_space<vmem>>, vector<1x128xf32>
    %6 = vector.broadcast %5 : vector<1x128xf32> to vector<32x128xf32>
    %7 = arith.addf %4, %6 : vector<32x128xf32>
    %c0_8 = arith.constant 0 : index
    %c0_9 = arith.constant 0 : index
    %c0_10 = arith.constant 0 : index
    %8 = vector.load %arg5[%c0_8, %c0_9, %c0_10] : memref<2x128x128xf32, #tpu.memory_space<vmem>>, vector<1x128x128xf32>
    %9 = vector.shape_cast %8 : vector<1x128x128xf32> to vector<128x128xf32>
    %cst_11 = arith.constant dense<0.000000e+00> : vector<32x128xf32>
    %10 = tpu.matmul %7, %9, %cst_11 {dimension_numbers = #tpu.dot_dimension_numbers<[1], [0], [0], [1], [0, 0, 1, 1], [], []>} : vector<32x128xf32>, vector<128x128xf32>, vector<32x128xf32> -> vector<32x128xf32>
    %c0_12 = arith.constant 0 : index
    %c0_13 = arith.constant 0 : index
    %c0_14 = arith.constant 0 : index
    %11 = vector.load %arg6[%c0_12, %c0_13, %c0_14] : memref<2x1x128xf32, #tpu.memory_space<vmem>>, vector<1x1x128xf32>
    %12 = vector.shape_cast %11 : vector<1x1x128xf32> to vector<1x128xf32>
    %13 = vector.broadcast %12 : vector<1x128xf32> to vector<32x128xf32>
    %14 = arith.addf %10, %13 : vector<32x128xf32>
    %c0_15 = arith.constant 0 : index
    %c0_16 = arith.constant 0 : index
    %c0_17 = arith.constant 0 : index
    %15 = vector.load %arg7[%c0_15, %c0_16, %c0_17] : memref<6x128x128xf32, #tpu.memory_space<vmem>>, vector<1x128x128xf32>
    %16 = vector.shape_cast %15 : vector<1x128x128xf32> to vector<128x128xf32>
    %cst_18 = arith.constant dense<0.000000e+00> : vector<32x128xf32>
    %17 = tpu.matmul %14, %16, %cst_18 {dimension_numbers = #tpu.dot_dimension_numbers<[1], [0], [0], [1], [0, 0, 1, 1], [], []>} : vector<32x128xf32>, vector<128x128xf32>, vector<32x128xf32> -> vector<32x128xf32>
    %c0_19 = arith.constant 0 : index
    %c0_20 = arith.constant 0 : index
    %c0_21 = arith.constant 0 : index
    %18 = vector.load %arg4[%c0_19, %c0_20, %c0_21] : memref<3x32x32xf32, #tpu.memory_space<vmem>>, vector<1x32x32xf32>
    %19 = vector.shape_cast %18 : vector<1x32x32xf32> to vector<32x32xf32>
    %cst_22 = arith.constant dense<0.000000e+00> : vector<32x128xf32>
    %20 = tpu.matmul %19, %17, %cst_22 {dimension_numbers = #tpu.dot_dimension_numbers<[1], [0], [0], [1], [0, 0, 1, 1], [], []>} : vector<32x32xf32>, vector<32x128xf32>, vector<32x128xf32> -> vector<32x128xf32>
    %c1 = arith.constant 1 : index
    %c0_23 = arith.constant 0 : index
    %c0_24 = arith.constant 0 : index
    %21 = vector.load %arg7[%c1, %c0_23, %c0_24] : memref<6x128x128xf32, #tpu.memory_space<vmem>>, vector<1x128x128xf32>
    %22 = vector.shape_cast %21 : vector<1x128x128xf32> to vector<128x128xf32>
    %cst_25 = arith.constant dense<0.000000e+00> : vector<32x128xf32>
    %23 = tpu.matmul %14, %22, %cst_25 {dimension_numbers = #tpu.dot_dimension_numbers<[1], [0], [0], [1], [0, 0, 1, 1], [], []>} : vector<32x128xf32>, vector<128x128xf32>, vector<32x128xf32> -> vector<32x128xf32>
    %24 = arith.addf %20, %23 : vector<32x128xf32>
    %c2 = arith.constant 2 : index
    %c0_26 = arith.constant 0 : index
    %c0_27 = arith.constant 0 : index
    %25 = vector.load %arg7[%c2, %c0_26, %c0_27] : memref<6x128x128xf32, #tpu.memory_space<vmem>>, vector<1x128x128xf32>
    %26 = vector.shape_cast %25 : vector<1x128x128xf32> to vector<128x128xf32>
    %cst_28 = arith.constant dense<0.000000e+00> : vector<32x128xf32>
    %27 = tpu.matmul %14, %26, %cst_28 {dimension_numbers = #tpu.dot_dimension_numbers<[1], [0], [0], [1], [0, 0, 1, 1], [], []>} : vector<32x128xf32>, vector<128x128xf32>, vector<32x128xf32> -> vector<32x128xf32>
    %c2_29 = arith.constant 2 : index
    %c0_30 = arith.constant 0 : index
    %c0_31 = arith.constant 0 : index
    %28 = vector.load %arg4[%c2_29, %c0_30, %c0_31] : memref<3x32x32xf32, #tpu.memory_space<vmem>>, vector<1x32x32xf32>
    %29 = vector.shape_cast %28 : vector<1x32x32xf32> to vector<32x32xf32>
    %cst_32 = arith.constant dense<0.000000e+00> : vector<32x128xf32>
    %30 = tpu.matmul %29, %27, %cst_32 {dimension_numbers = #tpu.dot_dimension_numbers<[1], [0], [0], [1], [0, 0, 1, 1], [], []>} : vector<32x32xf32>, vector<32x128xf32>, vector<32x128xf32> -> vector<32x128xf32>
    %31 = arith.addf %24, %30 : vector<32x128xf32>
    %c0_33 = arith.constant 0 : index
    %c0_34 = arith.constant 0 : index
    %c0_35 = arith.constant 0 : index
    %32 = vector.load %arg8[%c0_33, %c0_34, %c0_35] : memref<2x1x128xf32, #tpu.memory_space<vmem>>, vector<1x1x128xf32>
    %33 = vector.shape_cast %32 : vector<1x1x128xf32> to vector<1x128xf32>
    %34 = vector.broadcast %33 : vector<1x128xf32> to vector<32x128xf32>
    %35 = arith.addf %31, %34 : vector<32x128xf32>
    %c0_36 = arith.constant 0 : index
    %c0_37 = arith.constant 0 : index
    %c0_38 = arith.constant 0 : index
    %36 = vector.load %arg9[%c0_36, %c0_37, %c0_38] : memref<2x128x128xf32, #tpu.memory_space<vmem>>, vector<1x128x128xf32>
    %37 = vector.shape_cast %36 : vector<1x128x128xf32> to vector<128x128xf32>
    %cst_39 = arith.constant dense<0.000000e+00> : vector<32x128xf32>
    %38 = tpu.matmul %35, %37, %cst_39 {dimension_numbers = #tpu.dot_dimension_numbers<[1], [0], [0], [1], [0, 0, 1, 1], [], []>} : vector<32x128xf32>, vector<128x128xf32>, vector<32x128xf32> -> vector<32x128xf32>
    %c0_40 = arith.constant 0 : index
    %c0_41 = arith.constant 0 : index
    %c0_42 = arith.constant 0 : index
    %39 = vector.load %arg10[%c0_40, %c0_41, %c0_42] : memref<2x1x128xf32, #tpu.memory_space<vmem>>, vector<1x1x128xf32>
    %40 = vector.shape_cast %39 : vector<1x1x128xf32> to vector<1x128xf32>
    %41 = vector.broadcast %40 : vector<1x128xf32> to vector<32x128xf32>
    %42 = arith.addf %38, %41 : vector<32x128xf32>
    %43 = arith.addf %7, %42 : vector<32x128xf32>
    %cst_43 = arith.constant 0.000000e+00 : f32
    %44 = vector.broadcast %cst_43 : f32 to vector<32x128xf32>
    %45 = arith.maximumf %43, %44 : vector<32x128xf32>
    %c1_44 = arith.constant 1 : index
    %c0_45 = arith.constant 0 : index
    %c0_46 = arith.constant 0 : index
    %46 = vector.load %arg5[%c1_44, %c0_45, %c0_46] : memref<2x128x128xf32, #tpu.memory_space<vmem>>, vector<1x128x128xf32>
    %47 = vector.shape_cast %46 : vector<1x128x128xf32> to vector<128x128xf32>
    %cst_47 = arith.constant dense<0.000000e+00> : vector<32x128xf32>
    %48 = tpu.matmul %45, %47, %cst_47 {dimension_numbers = #tpu.dot_dimension_numbers<[1], [0], [0], [1], [0, 0, 1, 1], [], []>} : vector<32x128xf32>, vector<128x128xf32>, vector<32x128xf32> -> vector<32x128xf32>
    %c1_48 = arith.constant 1 : index
    %c0_49 = arith.constant 0 : index
    %c0_50 = arith.constant 0 : index
    %49 = vector.load %arg6[%c1_48, %c0_49, %c0_50] : memref<2x1x128xf32, #tpu.memory_space<vmem>>, vector<1x1x128xf32>
    %50 = vector.shape_cast %49 : vector<1x1x128xf32> to vector<1x128xf32>
    %51 = vector.broadcast %50 : vector<1x128xf32> to vector<32x128xf32>
    %52 = arith.addf %48, %51 : vector<32x128xf32>
    %c3 = arith.constant 3 : index
    %c0_51 = arith.constant 0 : index
    %c0_52 = arith.constant 0 : index
    %53 = vector.load %arg7[%c3, %c0_51, %c0_52] : memref<6x128x128xf32, #tpu.memory_space<vmem>>, vector<1x128x128xf32>
    %54 = vector.shape_cast %53 : vector<1x128x128xf32> to vector<128x128xf32>
    %cst_53 = arith.constant dense<0.000000e+00> : vector<32x128xf32>
    %55 = tpu.matmul %52, %54, %cst_53 {dimension_numbers = #tpu.dot_dimension_numbers<[1], [0], [0], [1], [0, 0, 1, 1], [], []>} : vector<32x128xf32>, vector<128x128xf32>, vector<32x128xf32> -> vector<32x128xf32>
    %c0_54 = arith.constant 0 : index
    %c0_55 = arith.constant 0 : index
    %c0_56 = arith.constant 0 : index
    %56 = vector.load %arg4[%c0_54, %c0_55, %c0_56] : memref<3x32x32xf32, #tpu.memory_space<vmem>>, vector<1x32x32xf32>
    %57 = vector.shape_cast %56 : vector<1x32x32xf32> to vector<32x32xf32>
    %cst_57 = arith.constant dense<0.000000e+00> : vector<32x128xf32>
    %58 = tpu.matmul %57, %55, %cst_57 {dimension_numbers = #tpu.dot_dimension_numbers<[1], [0], [0], [1], [0, 0, 1, 1], [], []>} : vector<32x32xf32>, vector<32x128xf32>, vector<32x128xf32> -> vector<32x128xf32>
    %c4 = arith.constant 4 : index
    %c0_58 = arith.constant 0 : index
    %c0_59 = arith.constant 0 : index
    %59 = vector.load %arg7[%c4, %c0_58, %c0_59] : memref<6x128x128xf32, #tpu.memory_space<vmem>>, vector<1x128x128xf32>
    %60 = vector.shape_cast %59 : vector<1x128x128xf32> to vector<128x128xf32>
    %cst_60 = arith.constant dense<0.000000e+00> : vector<32x128xf32>
    %61 = tpu.matmul %52, %60, %cst_60 {dimension_numbers = #tpu.dot_dimension_numbers<[1], [0], [0], [1], [0, 0, 1, 1], [], []>} : vector<32x128xf32>, vector<128x128xf32>, vector<32x128xf32> -> vector<32x128xf32>
    %62 = arith.addf %58, %61 : vector<32x128xf32>
    %c5 = arith.constant 5 : index
    %c0_61 = arith.constant 0 : index
    %c0_62 = arith.constant 0 : index
    %63 = vector.load %arg7[%c5, %c0_61, %c0_62] : memref<6x128x128xf32, #tpu.memory_space<vmem>>, vector<1x128x128xf32>
    %64 = vector.shape_cast %63 : vector<1x128x128xf32> to vector<128x128xf32>
    %cst_63 = arith.constant dense<0.000000e+00> : vector<32x128xf32>
    %65 = tpu.matmul %52, %64, %cst_63 {dimension_numbers = #tpu.dot_dimension_numbers<[1], [0], [0], [1], [0, 0, 1, 1], [], []>} : vector<32x128xf32>, vector<128x128xf32>, vector<32x128xf32> -> vector<32x128xf32>
    %c2_64 = arith.constant 2 : index
    %c0_65 = arith.constant 0 : index
    %c0_66 = arith.constant 0 : index
    %66 = vector.load %arg4[%c2_64, %c0_65, %c0_66] : memref<3x32x32xf32, #tpu.memory_space<vmem>>, vector<1x32x32xf32>
    %67 = vector.shape_cast %66 : vector<1x32x32xf32> to vector<32x32xf32>
    %cst_67 = arith.constant dense<0.000000e+00> : vector<32x128xf32>
    %68 = tpu.matmul %67, %65, %cst_67 {dimension_numbers = #tpu.dot_dimension_numbers<[1], [0], [0], [1], [0, 0, 1, 1], [], []>} : vector<32x32xf32>, vector<32x128xf32>, vector<32x128xf32> -> vector<32x128xf32>
    %69 = arith.addf %62, %68 : vector<32x128xf32>
    %c1_68 = arith.constant 1 : index
    %c0_69 = arith.constant 0 : index
    %c0_70 = arith.constant 0 : index
    %70 = vector.load %arg8[%c1_68, %c0_69, %c0_70] : memref<2x1x128xf32, #tpu.memory_space<vmem>>, vector<1x1x128xf32>
    %71 = vector.shape_cast %70 : vector<1x1x128xf32> to vector<1x128xf32>
    %72 = vector.broadcast %71 : vector<1x128xf32> to vector<32x128xf32>
    %73 = arith.addf %69, %72 : vector<32x128xf32>
    %c1_71 = arith.constant 1 : index
    %c0_72 = arith.constant 0 : index
    %c0_73 = arith.constant 0 : index
    %74 = vector.load %arg9[%c1_71, %c0_72, %c0_73] : memref<2x128x128xf32, #tpu.memory_space<vmem>>, vector<1x128x128xf32>
    %75 = vector.shape_cast %74 : vector<1x128x128xf32> to vector<128x128xf32>
    %cst_74 = arith.constant dense<0.000000e+00> : vector<32x128xf32>
    %76 = tpu.matmul %73, %75, %cst_74 {dimension_numbers = #tpu.dot_dimension_numbers<[1], [0], [0], [1], [0, 0, 1, 1], [], []>} : vector<32x128xf32>, vector<128x128xf32>, vector<32x128xf32> -> vector<32x128xf32>
    %c1_75 = arith.constant 1 : index
    %c0_76 = arith.constant 0 : index
    %c0_77 = arith.constant 0 : index
    %77 = vector.load %arg10[%c1_75, %c0_76, %c0_77] : memref<2x1x128xf32, #tpu.memory_space<vmem>>, vector<1x1x128xf32>
    %78 = vector.shape_cast %77 : vector<1x1x128xf32> to vector<1x128xf32>
    %79 = vector.broadcast %78 : vector<1x128xf32> to vector<32x128xf32>
    %80 = arith.addf %76, %79 : vector<32x128xf32>
    %81 = arith.addf %45, %80 : vector<32x128xf32>
    %cst_78 = arith.constant 0.000000e+00 : f32
    %82 = vector.broadcast %cst_78 : f32 to vector<32x128xf32>
    %83 = arith.maximumf %81, %82 : vector<32x128xf32>
    %c0_79 = arith.constant 0 : index
    %c0_80 = arith.constant 0 : index
    %84 = vector.load %arg11[%c0_79, %c0_80] : memref<32x128xf32, #tpu.memory_space<vmem>>, vector<32x128xf32>
    tpu.vector_store %arg11[%c0_79, %c0_80], %83 {strides = array<i32>} : memref<32x128xf32, #tpu.memory_space<vmem>>, vector<32x128xf32>,
    return
  }
}

module attributes {stable_mosaic.version = 11 : i64} {
  func.func @kernel(%arg0: memref<32x128xf32, #tpu.memory_space<vmem>>, %arg1: memref<16x32xf32, #tpu.memory_space<vmem>>, %arg2: memref<128x128xf32, #tpu.memory_space<vmem>>, %arg3: memref<1x128xf32, #tpu.memory_space<vmem>>, %arg4: memref<3x16x16xf32, #tpu.memory_space<vmem>>, %arg5: memref<2x128x128xf32, #tpu.memory_space<vmem>>, %arg6: memref<2x1x128xf32, #tpu.memory_space<vmem>>, %arg7: memref<6x128x128xf32, #tpu.memory_space<vmem>>, %arg8: memref<2x1x128xf32, #tpu.memory_space<vmem>>, %arg9: memref<2x128x128xf32, #tpu.memory_space<vmem>>, %arg10: memref<2x1x128xf32, #tpu.memory_space<vmem>>, %arg11: memref<16x128xf32, #tpu.memory_space<vmem>>) attributes {dimension_semantics = [], scalar_prefetch = 0 : i64, scratch_operands = 0 : i64, tpu.core_type = #tpu.core_type<tc>} {
    %c0 = arith.constant 0 : index
    %c0_0 = arith.constant 0 : index
    %0 = vector.load %arg1[%c0, %c0_0] : memref<16x32xf32, #tpu.memory_space<vmem>>, vector<16x32xf32>
    %c0_1 = arith.constant 0 : index
    %c0_2 = arith.constant 0 : index
    %1 = vector.load %arg0[%c0_1, %c0_2] : memref<32x128xf32, #tpu.memory_space<vmem>>, vector<32x128xf32>
    %cst = arith.constant dense<0.000000e+00> : vector<16x128xf32>
    %2 = tpu.matmul %0, %1, %cst {dimension_numbers = #tpu.dot_dimension_numbers<[1], [0], [0], [1], [0, 0, 1, 1], [], []>} : vector<16x32xf32>, vector<32x128xf32>, vector<16x128xf32> -> vector<16x128xf32>
    %c0_3 = arith.constant 0 : index
    %c0_4 = arith.constant 0 : index
    %3 = vector.load %arg2[%c0_3, %c0_4] : memref<128x128xf32, #tpu.memory_space<vmem>>, vector<128x128xf32>
    %cst_5 = arith.constant dense<0.000000e+00> : vector<16x128xf32>
    %4 = tpu.matmul %2, %3, %cst_5 {dimension_numbers = #tpu.dot_dimension_numbers<[1], [0], [0], [1], [0, 0, 1, 1], [], []>} : vector<16x128xf32>, vector<128x128xf32>, vector<16x128xf32> -> vector<16x128xf32>
    %c0_6 = arith.constant 0 : index
    %c0_7 = arith.constant 0 : index
    %5 = vector.load %arg3[%c0_6, %c0_7] : memref<1x128xf32, #tpu.memory_space<vmem>>, vector<1x128xf32>
    %6 = vector.broadcast %5 : vector<1x128xf32> to vector<16x128xf32>
    %7 = arith.addf %4, %6 : vector<16x128xf32>
    %c0_8 = arith.constant 0 : index
    %c0_9 = arith.constant 0 : index
    %c0_10 = arith.constant 0 : index
    %8 = vector.load %arg5[%c0_8, %c0_9, %c0_10] : memref<2x128x128xf32, #tpu.memory_space<vmem>>, vector<1x128x128xf32>
    %9 = vector.shape_cast %8 : vector<1x128x128xf32> to vector<128x128xf32>
    %cst_11 = arith.constant dense<0.000000e+00> : vector<16x128xf32>
    %10 = tpu.matmul %7, %9, %cst_11 {dimension_numbers = #tpu.dot_dimension_numbers<[1], [0], [0], [1], [0, 0, 1, 1], [], []>} : vector<16x128xf32>, vector<128x128xf32>, vector<16x128xf32> -> vector<16x128xf32>
    %c0_12 = arith.constant 0 : index
    %c0_13 = arith.constant 0 : index
    %c0_14 = arith.constant 0 : index
    %11 = vector.load %arg6[%c0_12, %c0_13, %c0_14] : memref<2x1x128xf32, #tpu.memory_space<vmem>>, vector<1x1x128xf32>
    %12 = vector.shape_cast %11 : vector<1x1x128xf32> to vector<1x128xf32>
    %13 = vector.broadcast %12 : vector<1x128xf32> to vector<16x128xf32>
    %14 = arith.addf %10, %13 : vector<16x128xf32>
    %c0_15 = arith.constant 0 : index
    %c0_16 = arith.constant 0 : index
    %c0_17 = arith.constant 0 : index
    %15 = vector.load %arg7[%c0_15, %c0_16, %c0_17] : memref<6x128x128xf32, #tpu.memory_space<vmem>>, vector<1x128x128xf32>
    %16 = vector.shape_cast %15 : vector<1x128x128xf32> to vector<128x128xf32>
    %cst_18 = arith.constant dense<0.000000e+00> : vector<16x128xf32>
    %17 = tpu.matmul %14, %16, %cst_18 {dimension_numbers = #tpu.dot_dimension_numbers<[1], [0], [0], [1], [0, 0, 1, 1], [], []>} : vector<16x128xf32>, vector<128x128xf32>, vector<16x128xf32> -> vector<16x128xf32>
    %c0_19 = arith.constant 0 : index
    %c0_20 = arith.constant 0 : index
    %c0_21 = arith.constant 0 : index
    %18 = vector.load %arg4[%c0_19, %c0_20, %c0_21] : memref<3x16x16xf32, #tpu.memory_space<vmem>>, vector<1x16x16xf32>
    %19 = vector.shape_cast %18 : vector<1x16x16xf32> to vector<16x16xf32>
    %cst_22 = arith.constant dense<0.000000e+00> : vector<16x128xf32>
    %20 = tpu.matmul %19, %17, %cst_22 {dimension_numbers = #tpu.dot_dimension_numbers<[1], [0], [0], [1], [0, 0, 1, 1], [], []>} : vector<16x16xf32>, vector<16x128xf32>, vector<16x128xf32> -> vector<16x128xf32>
    %c1 = arith.constant 1 : index
    %c0_23 = arith.constant 0 : index
    %c0_24 = arith.constant 0 : index
    %21 = vector.load %arg7[%c1, %c0_23, %c0_24] : memref<6x128x128xf32, #tpu.memory_space<vmem>>, vector<1x128x128xf32>
    %22 = vector.shape_cast %21 : vector<1x128x128xf32> to vector<128x128xf32>
    %cst_25 = arith.constant dense<0.000000e+00> : vector<16x128xf32>
    %23 = tpu.matmul %14, %22, %cst_25 {dimension_numbers = #tpu.dot_dimension_numbers<[1], [0], [0], [1], [0, 0, 1, 1], [], []>} : vector<16x128xf32>, vector<128x128xf32>, vector<16x128xf32> -> vector<16x128xf32>
    %24 = arith.addf %20, %23 : vector<16x128xf32>
    %c2 = arith.constant 2 : index
    %c0_26 = arith.constant 0 : index
    %c0_27 = arith.constant 0 : index
    %25 = vector.load %arg7[%c2, %c0_26, %c0_27] : memref<6x128x128xf32, #tpu.memory_space<vmem>>, vector<1x128x128xf32>
    %26 = vector.shape_cast %25 : vector<1x128x128xf32> to vector<128x128xf32>
    %cst_28 = arith.constant dense<0.000000e+00> : vector<16x128xf32>
    %27 = tpu.matmul %14, %26, %cst_28 {dimension_numbers = #tpu.dot_dimension_numbers<[1], [0], [0], [1], [0, 0, 1, 1], [], []>} : vector<16x128xf32>, vector<128x128xf32>, vector<16x128xf32> -> vector<16x128xf32>
    %c2_29 = arith.constant 2 : index
    %c0_30 = arith.constant 0 : index
    %c0_31 = arith.constant 0 : index
    %28 = vector.load %arg4[%c2_29, %c0_30, %c0_31] : memref<3x16x16xf32, #tpu.memory_space<vmem>>, vector<1x16x16xf32>
    %29 = vector.shape_cast %28 : vector<1x16x16xf32> to vector<16x16xf32>
    %cst_32 = arith.constant dense<0.000000e+00> : vector<16x128xf32>
    %30 = tpu.matmul %29, %27, %cst_32 {dimension_numbers = #tpu.dot_dimension_numbers<[1], [0], [0], [1], [0, 0, 1, 1], [], []>} : vector<16x16xf32>, vector<16x128xf32>, vector<16x128xf32> -> vector<16x128xf32>
    %31 = arith.addf %24, %30 : vector<16x128xf32>
    %c0_33 = arith.constant 0 : index
    %c0_34 = arith.constant 0 : index
    %c0_35 = arith.constant 0 : index
    %32 = vector.load %arg8[%c0_33, %c0_34, %c0_35] : memref<2x1x128xf32, #tpu.memory_space<vmem>>, vector<1x1x128xf32>
    %33 = vector.shape_cast %32 : vector<1x1x128xf32> to vector<1x128xf32>
    %34 = vector.broadcast %33 : vector<1x128xf32> to vector<16x128xf32>
    %35 = arith.addf %31, %34 : vector<16x128xf32>
    %c0_36 = arith.constant 0 : index
    %c0_37 = arith.constant 0 : index
    %c0_38 = arith.constant 0 : index
    %36 = vector.load %arg9[%c0_36, %c0_37, %c0_38] : memref<2x128x128xf32, #tpu.memory_space<vmem>>, vector<1x128x128xf32>
    %37 = vector.shape_cast %36 : vector<1x128x128xf32> to vector<128x128xf32>
    %cst_39 = arith.constant dense<0.000000e+00> : vector<16x128xf32>
    %38 = tpu.matmul %35, %37, %cst_39 {dimension_numbers = #tpu.dot_dimension_numbers<[1], [0], [0], [1], [0, 0, 1, 1], [], []>} : vector<16x128xf32>, vector<128x128xf32>, vector<16x128xf32> -> vector<16x128xf32>
    %c0_40 = arith.constant 0 : index
    %c0_41 = arith.constant 0 : index
    %c0_42 = arith.constant 0 : index
    %39 = vector.load %arg10[%c0_40, %c0_41, %c0_42] : memref<2x1x128xf32, #tpu.memory_space<vmem>>, vector<1x1x128xf32>
    %40 = vector.shape_cast %39 : vector<1x1x128xf32> to vector<1x128xf32>
    %41 = vector.broadcast %40 : vector<1x128xf32> to vector<16x128xf32>
    %42 = arith.addf %38, %41 : vector<16x128xf32>
    %43 = arith.addf %7, %42 : vector<16x128xf32>
    %cst_43 = arith.constant 0.000000e+00 : f32
    %44 = vector.broadcast %cst_43 : f32 to vector<16x128xf32>
    %45 = arith.maximumf %43, %44 : vector<16x128xf32>
    %c1_44 = arith.constant 1 : index
    %c0_45 = arith.constant 0 : index
    %c0_46 = arith.constant 0 : index
    %46 = vector.load %arg5[%c1_44, %c0_45, %c0_46] : memref<2x128x128xf32, #tpu.memory_space<vmem>>, vector<1x128x128xf32>
    %47 = vector.shape_cast %46 : vector<1x128x128xf32> to vector<128x128xf32>
    %cst_47 = arith.constant dense<0.000000e+00> : vector<16x128xf32>
    %48 = tpu.matmul %45, %47, %cst_47 {dimension_numbers = #tpu.dot_dimension_numbers<[1], [0], [0], [1], [0, 0, 1, 1], [], []>} : vector<16x128xf32>, vector<128x128xf32>, vector<16x128xf32> -> vector<16x128xf32>
    %c1_48 = arith.constant 1 : index
    %c0_49 = arith.constant 0 : index
    %c0_50 = arith.constant 0 : index
    %49 = vector.load %arg6[%c1_48, %c0_49, %c0_50] : memref<2x1x128xf32, #tpu.memory_space<vmem>>, vector<1x1x128xf32>
    %50 = vector.shape_cast %49 : vector<1x1x128xf32> to vector<1x128xf32>
    %51 = vector.broadcast %50 : vector<1x128xf32> to vector<16x128xf32>
    %52 = arith.addf %48, %51 : vector<16x128xf32>
    %c3 = arith.constant 3 : index
    %c0_51 = arith.constant 0 : index
    %c0_52 = arith.constant 0 : index
    %53 = vector.load %arg7[%c3, %c0_51, %c0_52] : memref<6x128x128xf32, #tpu.memory_space<vmem>>, vector<1x128x128xf32>
    %54 = vector.shape_cast %53 : vector<1x128x128xf32> to vector<128x128xf32>
    %cst_53 = arith.constant dense<0.000000e+00> : vector<16x128xf32>
    %55 = tpu.matmul %52, %54, %cst_53 {dimension_numbers = #tpu.dot_dimension_numbers<[1], [0], [0], [1], [0, 0, 1, 1], [], []>} : vector<16x128xf32>, vector<128x128xf32>, vector<16x128xf32> -> vector<16x128xf32>
    %c0_54 = arith.constant 0 : index
    %c0_55 = arith.constant 0 : index
    %c0_56 = arith.constant 0 : index
    %56 = vector.load %arg4[%c0_54, %c0_55, %c0_56] : memref<3x16x16xf32, #tpu.memory_space<vmem>>, vector<1x16x16xf32>
    %57 = vector.shape_cast %56 : vector<1x16x16xf32> to vector<16x16xf32>
    %cst_57 = arith.constant dense<0.000000e+00> : vector<16x128xf32>
    %58 = tpu.matmul %57, %55, %cst_57 {dimension_numbers = #tpu.dot_dimension_numbers<[1], [0], [0], [1], [0, 0, 1, 1], [], []>} : vector<16x16xf32>, vector<16x128xf32>, vector<16x128xf32> -> vector<16x128xf32>
    %c4 = arith.constant 4 : index
    %c0_58 = arith.constant 0 : index
    %c0_59 = arith.constant 0 : index
    %59 = vector.load %arg7[%c4, %c0_58, %c0_59] : memref<6x128x128xf32, #tpu.memory_space<vmem>>, vector<1x128x128xf32>
    %60 = vector.shape_cast %59 : vector<1x128x128xf32> to vector<128x128xf32>
    %cst_60 = arith.constant dense<0.000000e+00> : vector<16x128xf32>
    %61 = tpu.matmul %52, %60, %cst_60 {dimension_numbers = #tpu.dot_dimension_numbers<[1], [0], [0], [1], [0, 0, 1, 1], [], []>} : vector<16x128xf32>, vector<128x128xf32>, vector<16x128xf32> -> vector<16x128xf32>
    %62 = arith.addf %58, %61 : vector<16x128xf32>
    %c5 = arith.constant 5 : index
    %c0_61 = arith.constant 0 : index
    %c0_62 = arith.constant 0 : index
    %63 = vector.load %arg7[%c5, %c0_61, %c0_62] : memref<6x128x128xf32, #tpu.memory_space<vmem>>, vector<1x128x128xf32>
    %64 = vector.shape_cast %63 : vector<1x128x128xf32> to vector<128x128xf32>
    %cst_63 = arith.constant dense<0.000000e+00> : vector<16x128xf32>
    %65 = tpu.matmul %52, %64, %cst_63 {dimension_numbers = #tpu.dot_dimension_numbers<[1], [0], [0], [1], [0, 0, 1, 1], [], []>} : vector<16x128xf32>, vector<128x128xf32>, vector<16x128xf32> -> vector<16x128xf32>
    %c2_64 = arith.constant 2 : index
    %c0_65 = arith.constant 0 : index
    %c0_66 = arith.constant 0 : index
    %66 = vector.load %arg4[%c2_64, %c0_65, %c0_66] : memref<3x16x16xf32, #tpu.memory_space<vmem>>, vector<1x16x16xf32>
    %67 = vector.shape_cast %66 : vector<1x16x16xf32> to vector<16x16xf32>
    %cst_67 = arith.constant dense<0.000000e+00> : vector<16x128xf32>
    %68 = tpu.matmul %67, %65, %cst_67 {dimension_numbers = #tpu.dot_dimension_numbers<[1], [0], [0], [1], [0, 0, 1, 1], [], []>} : vector<16x16xf32>, vector<16x128xf32>, vector<16x128xf32> -> vector<16x128xf32>
    %69 = arith.addf %62, %68 : vector<16x128xf32>
    %c1_68 = arith.constant 1 : index
    %c0_69 = arith.constant 0 : index
    %c0_70 = arith.constant 0 : index
    %70 = vector.load %arg8[%c1_68, %c0_69, %c0_70] : memref<2x1x128xf32, #tpu.memory_space<vmem>>, vector<1x1x128xf32>
    %71 = vector.shape_cast %70 : vector<1x1x128xf32> to vector<1x128xf32>
    %72 = vector.broadcast %71 : vector<1x128xf32> to vector<16x128xf32>
    %73 = arith.addf %69, %72 : vector<16x128xf32>
    %c1_71 = arith.constant 1 : index
    %c0_72 = arith.constant 0 : index
    %c0_73 = arith.constant 0 : index
    %74 = vector.load %arg9[%c1_71, %c0_72, %c0_73] : memref<2x128x128xf32, #tpu.memory_space<vmem>>, vector<1x128x128xf32>
    %75 = vector.shape_cast %74 : vector<1x128x128xf32> to vector<128x128xf32>
    %cst_74 = arith.constant dense<0.000000e+00> : vector<16x128xf32>
    %76 = tpu.matmul %73, %75, %cst_74 {dimension_numbers = #tpu.dot_dimension_numbers<[1], [0], [0], [1], [0, 0, 1, 1], [], []>} : vector<16x128xf32>, vector<128x128xf32>, vector<16x128xf32> -> vector<16x128xf32>
    %c1_75 = arith.constant 1 : index
    %c0_76 = arith.constant 0 : index
    %c0_77 = arith.constant 0 : index
    %77 = vector.load %arg10[%c1_75, %c0_76, %c0_77] : memref<2x1x128xf32, #tpu.memory_space<vmem>>, vector<1x1x128xf32>
    %78 = vector.shape_cast %77 : vector<1x1x128xf32> to vector<1x128xf32>
    %79 = vector.broadcast %78 : vector<1x128xf32> to vector<16x128xf32>
    %80 = arith.addf %76, %79 : vector<16x128xf32>
    %81 = arith.addf %45, %80 : vector<16x128xf32>
    %cst_78 = arith.constant 0.000000e+00 : f32
    %82 = vector.broadcast %cst_78 : f32 to vector<16x128xf32>
    %83 = arith.maximumf %81, %82 : vector<16x128xf32>
    %c0_79 = arith.constant 0 : index
    %c0_80 = arith.constant 0 : index
    %84 = vector.load %arg11[%c0_79, %c0_80] : memref<16x128xf32, #tpu.memory_space<vmem>>, vector<16x128xf32>
    tpu.vector_store %arg11[%c0_79, %c0_80], %83 {strides = array<i32>} : memref<16x128xf32, #tpu.memory_space<vmem>>, vector<16x128xf32>,
    return
  }
}

module attributes {stable_mosaic.version = 11 : i64} {
  func.func @kernel(%arg0: memref<16x128xf32, #tpu.memory_space<vmem>>, %arg1: memref<8x16xf32, #tpu.memory_space<vmem>>, %arg2: memref<128x64xf32, #tpu.memory_space<vmem>>, %arg3: memref<1x64xf32, #tpu.memory_space<vmem>>, %arg4: memref<3x8x8xf32, #tpu.memory_space<vmem>>, %arg5: memref<2x64x64xf32, #tpu.memory_space<vmem>>, %arg6: memref<2x1x64xf32, #tpu.memory_space<vmem>>, %arg7: memref<6x64x64xf32, #tpu.memory_space<vmem>>, %arg8: memref<2x1x64xf32, #tpu.memory_space<vmem>>, %arg9: memref<2x64x64xf32, #tpu.memory_space<vmem>>, %arg10: memref<2x1x64xf32, #tpu.memory_space<vmem>>, %arg11: memref<8x64xf32, #tpu.memory_space<vmem>>) attributes {dimension_semantics = [], scalar_prefetch = 0 : i64, scratch_operands = 0 : i64, tpu.core_type = #tpu.core_type<tc>} {
    %c0 = arith.constant 0 : index
    %c0_0 = arith.constant 0 : index
    %0 = vector.load %arg1[%c0, %c0_0] : memref<8x16xf32, #tpu.memory_space<vmem>>, vector<8x16xf32>
    %c0_1 = arith.constant 0 : index
    %c0_2 = arith.constant 0 : index
    %1 = vector.load %arg0[%c0_1, %c0_2] : memref<16x128xf32, #tpu.memory_space<vmem>>, vector<16x128xf32>
    %cst = arith.constant dense<0.000000e+00> : vector<8x128xf32>
    %2 = tpu.matmul %0, %1, %cst {dimension_numbers = #tpu.dot_dimension_numbers<[1], [0], [0], [1], [0, 0, 1, 1], [], []>} : vector<8x16xf32>, vector<16x128xf32>, vector<8x128xf32> -> vector<8x128xf32>
    %c0_3 = arith.constant 0 : index
    %c0_4 = arith.constant 0 : index
    %3 = vector.load %arg2[%c0_3, %c0_4] : memref<128x64xf32, #tpu.memory_space<vmem>>, vector<128x64xf32>
    %cst_5 = arith.constant dense<0.000000e+00> : vector<8x64xf32>
    %4 = tpu.matmul %2, %3, %cst_5 {dimension_numbers = #tpu.dot_dimension_numbers<[1], [0], [0], [1], [0, 0, 1, 1], [], []>} : vector<8x128xf32>, vector<128x64xf32>, vector<8x64xf32> -> vector<8x64xf32>
    %c0_6 = arith.constant 0 : index
    %c0_7 = arith.constant 0 : index
    %5 = vector.load %arg3[%c0_6, %c0_7] : memref<1x64xf32, #tpu.memory_space<vmem>>, vector<1x64xf32>
    %6 = vector.broadcast %5 : vector<1x64xf32> to vector<8x64xf32>
    %7 = arith.addf %4, %6 : vector<8x64xf32>
    %c0_8 = arith.constant 0 : index
    %c0_9 = arith.constant 0 : index
    %c0_10 = arith.constant 0 : index
    %8 = vector.load %arg5[%c0_8, %c0_9, %c0_10] : memref<2x64x64xf32, #tpu.memory_space<vmem>>, vector<1x64x64xf32>
    %9 = vector.shape_cast %8 : vector<1x64x64xf32> to vector<64x64xf32>
    %cst_11 = arith.constant dense<0.000000e+00> : vector<8x64xf32>
    %10 = tpu.matmul %7, %9, %cst_11 {dimension_numbers = #tpu.dot_dimension_numbers<[1], [0], [0], [1], [0, 0, 1, 1], [], []>} : vector<8x64xf32>, vector<64x64xf32>, vector<8x64xf32> -> vector<8x64xf32>
    %c0_12 = arith.constant 0 : index
    %c0_13 = arith.constant 0 : index
    %c0_14 = arith.constant 0 : index
    %11 = vector.load %arg6[%c0_12, %c0_13, %c0_14] : memref<2x1x64xf32, #tpu.memory_space<vmem>>, vector<1x1x64xf32>
    %12 = vector.shape_cast %11 : vector<1x1x64xf32> to vector<1x64xf32>
    %13 = vector.broadcast %12 : vector<1x64xf32> to vector<8x64xf32>
    %14 = arith.addf %10, %13 : vector<8x64xf32>
    %c0_15 = arith.constant 0 : index
    %c0_16 = arith.constant 0 : index
    %c0_17 = arith.constant 0 : index
    %15 = vector.load %arg7[%c0_15, %c0_16, %c0_17] : memref<6x64x64xf32, #tpu.memory_space<vmem>>, vector<1x64x64xf32>
    %16 = vector.shape_cast %15 : vector<1x64x64xf32> to vector<64x64xf32>
    %cst_18 = arith.constant dense<0.000000e+00> : vector<8x64xf32>
    %17 = tpu.matmul %14, %16, %cst_18 {dimension_numbers = #tpu.dot_dimension_numbers<[1], [0], [0], [1], [0, 0, 1, 1], [], []>} : vector<8x64xf32>, vector<64x64xf32>, vector<8x64xf32> -> vector<8x64xf32>
    %c0_19 = arith.constant 0 : index
    %c0_20 = arith.constant 0 : index
    %c0_21 = arith.constant 0 : index
    %18 = vector.load %arg4[%c0_19, %c0_20, %c0_21] : memref<3x8x8xf32, #tpu.memory_space<vmem>>, vector<1x8x8xf32>
    %19 = vector.shape_cast %18 : vector<1x8x8xf32> to vector<8x8xf32>
    %cst_22 = arith.constant dense<0.000000e+00> : vector<8x64xf32>
    %20 = tpu.matmul %19, %17, %cst_22 {dimension_numbers = #tpu.dot_dimension_numbers<[1], [0], [0], [1], [0, 0, 1, 1], [], []>} : vector<8x8xf32>, vector<8x64xf32>, vector<8x64xf32> -> vector<8x64xf32>
    %c1 = arith.constant 1 : index
    %c0_23 = arith.constant 0 : index
    %c0_24 = arith.constant 0 : index
    %21 = vector.load %arg7[%c1, %c0_23, %c0_24] : memref<6x64x64xf32, #tpu.memory_space<vmem>>, vector<1x64x64xf32>
    %22 = vector.shape_cast %21 : vector<1x64x64xf32> to vector<64x64xf32>
    %cst_25 = arith.constant dense<0.000000e+00> : vector<8x64xf32>
    %23 = tpu.matmul %14, %22, %cst_25 {dimension_numbers = #tpu.dot_dimension_numbers<[1], [0], [0], [1], [0, 0, 1, 1], [], []>} : vector<8x64xf32>, vector<64x64xf32>, vector<8x64xf32> -> vector<8x64xf32>
    %24 = arith.addf %20, %23 : vector<8x64xf32>
    %c2 = arith.constant 2 : index
    %c0_26 = arith.constant 0 : index
    %c0_27 = arith.constant 0 : index
    %25 = vector.load %arg7[%c2, %c0_26, %c0_27] : memref<6x64x64xf32, #tpu.memory_space<vmem>>, vector<1x64x64xf32>
    %26 = vector.shape_cast %25 : vector<1x64x64xf32> to vector<64x64xf32>
    %cst_28 = arith.constant dense<0.000000e+00> : vector<8x64xf32>
    %27 = tpu.matmul %14, %26, %cst_28 {dimension_numbers = #tpu.dot_dimension_numbers<[1], [0], [0], [1], [0, 0, 1, 1], [], []>} : vector<8x64xf32>, vector<64x64xf32>, vector<8x64xf32> -> vector<8x64xf32>
    %c2_29 = arith.constant 2 : index
    %c0_30 = arith.constant 0 : index
    %c0_31 = arith.constant 0 : index
    %28 = vector.load %arg4[%c2_29, %c0_30, %c0_31] : memref<3x8x8xf32, #tpu.memory_space<vmem>>, vector<1x8x8xf32>
    %29 = vector.shape_cast %28 : vector<1x8x8xf32> to vector<8x8xf32>
    %cst_32 = arith.constant dense<0.000000e+00> : vector<8x64xf32>
    %30 = tpu.matmul %29, %27, %cst_32 {dimension_numbers = #tpu.dot_dimension_numbers<[1], [0], [0], [1], [0, 0, 1, 1], [], []>} : vector<8x8xf32>, vector<8x64xf32>, vector<8x64xf32> -> vector<8x64xf32>
    %31 = arith.addf %24, %30 : vector<8x64xf32>
    %c0_33 = arith.constant 0 : index
    %c0_34 = arith.constant 0 : index
    %c0_35 = arith.constant 0 : index
    %32 = vector.load %arg8[%c0_33, %c0_34, %c0_35] : memref<2x1x64xf32, #tpu.memory_space<vmem>>, vector<1x1x64xf32>
    %33 = vector.shape_cast %32 : vector<1x1x64xf32> to vector<1x64xf32>
    %34 = vector.broadcast %33 : vector<1x64xf32> to vector<8x64xf32>
    %35 = arith.addf %31, %34 : vector<8x64xf32>
    %c0_36 = arith.constant 0 : index
    %c0_37 = arith.constant 0 : index
    %c0_38 = arith.constant 0 : index
    %36 = vector.load %arg9[%c0_36, %c0_37, %c0_38] : memref<2x64x64xf32, #tpu.memory_space<vmem>>, vector<1x64x64xf32>
    %37 = vector.shape_cast %36 : vector<1x64x64xf32> to vector<64x64xf32>
    %cst_39 = arith.constant dense<0.000000e+00> : vector<8x64xf32>
    %38 = tpu.matmul %35, %37, %cst_39 {dimension_numbers = #tpu.dot_dimension_numbers<[1], [0], [0], [1], [0, 0, 1, 1], [], []>} : vector<8x64xf32>, vector<64x64xf32>, vector<8x64xf32> -> vector<8x64xf32>
    %c0_40 = arith.constant 0 : index
    %c0_41 = arith.constant 0 : index
    %c0_42 = arith.constant 0 : index
    %39 = vector.load %arg10[%c0_40, %c0_41, %c0_42] : memref<2x1x64xf32, #tpu.memory_space<vmem>>, vector<1x1x64xf32>
    %40 = vector.shape_cast %39 : vector<1x1x64xf32> to vector<1x64xf32>
    %41 = vector.broadcast %40 : vector<1x64xf32> to vector<8x64xf32>
    %42 = arith.addf %38, %41 : vector<8x64xf32>
    %43 = arith.addf %7, %42 : vector<8x64xf32>
    %cst_43 = arith.constant 0.000000e+00 : f32
    %44 = vector.broadcast %cst_43 : f32 to vector<8x64xf32>
    %45 = arith.maximumf %43, %44 : vector<8x64xf32>
    %c1_44 = arith.constant 1 : index
    %c0_45 = arith.constant 0 : index
    %c0_46 = arith.constant 0 : index
    %46 = vector.load %arg5[%c1_44, %c0_45, %c0_46] : memref<2x64x64xf32, #tpu.memory_space<vmem>>, vector<1x64x64xf32>
    %47 = vector.shape_cast %46 : vector<1x64x64xf32> to vector<64x64xf32>
    %cst_47 = arith.constant dense<0.000000e+00> : vector<8x64xf32>
    %48 = tpu.matmul %45, %47, %cst_47 {dimension_numbers = #tpu.dot_dimension_numbers<[1], [0], [0], [1], [0, 0, 1, 1], [], []>} : vector<8x64xf32>, vector<64x64xf32>, vector<8x64xf32> -> vector<8x64xf32>
    %c1_48 = arith.constant 1 : index
    %c0_49 = arith.constant 0 : index
    %c0_50 = arith.constant 0 : index
    %49 = vector.load %arg6[%c1_48, %c0_49, %c0_50] : memref<2x1x64xf32, #tpu.memory_space<vmem>>, vector<1x1x64xf32>
    %50 = vector.shape_cast %49 : vector<1x1x64xf32> to vector<1x64xf32>
    %51 = vector.broadcast %50 : vector<1x64xf32> to vector<8x64xf32>
    %52 = arith.addf %48, %51 : vector<8x64xf32>
    %c3 = arith.constant 3 : index
    %c0_51 = arith.constant 0 : index
    %c0_52 = arith.constant 0 : index
    %53 = vector.load %arg7[%c3, %c0_51, %c0_52] : memref<6x64x64xf32, #tpu.memory_space<vmem>>, vector<1x64x64xf32>
    %54 = vector.shape_cast %53 : vector<1x64x64xf32> to vector<64x64xf32>
    %cst_53 = arith.constant dense<0.000000e+00> : vector<8x64xf32>
    %55 = tpu.matmul %52, %54, %cst_53 {dimension_numbers = #tpu.dot_dimension_numbers<[1], [0], [0], [1], [0, 0, 1, 1], [], []>} : vector<8x64xf32>, vector<64x64xf32>, vector<8x64xf32> -> vector<8x64xf32>
    %c0_54 = arith.constant 0 : index
    %c0_55 = arith.constant 0 : index
    %c0_56 = arith.constant 0 : index
    %56 = vector.load %arg4[%c0_54, %c0_55, %c0_56] : memref<3x8x8xf32, #tpu.memory_space<vmem>>, vector<1x8x8xf32>
    %57 = vector.shape_cast %56 : vector<1x8x8xf32> to vector<8x8xf32>
    %cst_57 = arith.constant dense<0.000000e+00> : vector<8x64xf32>
    %58 = tpu.matmul %57, %55, %cst_57 {dimension_numbers = #tpu.dot_dimension_numbers<[1], [0], [0], [1], [0, 0, 1, 1], [], []>} : vector<8x8xf32>, vector<8x64xf32>, vector<8x64xf32> -> vector<8x64xf32>
    %c4 = arith.constant 4 : index
    %c0_58 = arith.constant 0 : index
    %c0_59 = arith.constant 0 : index
    %59 = vector.load %arg7[%c4, %c0_58, %c0_59] : memref<6x64x64xf32, #tpu.memory_space<vmem>>, vector<1x64x64xf32>
    %60 = vector.shape_cast %59 : vector<1x64x64xf32> to vector<64x64xf32>
    %cst_60 = arith.constant dense<0.000000e+00> : vector<8x64xf32>
    %61 = tpu.matmul %52, %60, %cst_60 {dimension_numbers = #tpu.dot_dimension_numbers<[1], [0], [0], [1], [0, 0, 1, 1], [], []>} : vector<8x64xf32>, vector<64x64xf32>, vector<8x64xf32> -> vector<8x64xf32>
    %62 = arith.addf %58, %61 : vector<8x64xf32>
    %c5 = arith.constant 5 : index
    %c0_61 = arith.constant 0 : index
    %c0_62 = arith.constant 0 : index
    %63 = vector.load %arg7[%c5, %c0_61, %c0_62] : memref<6x64x64xf32, #tpu.memory_space<vmem>>, vector<1x64x64xf32>
    %64 = vector.shape_cast %63 : vector<1x64x64xf32> to vector<64x64xf32>
    %cst_63 = arith.constant dense<0.000000e+00> : vector<8x64xf32>
    %65 = tpu.matmul %52, %64, %cst_63 {dimension_numbers = #tpu.dot_dimension_numbers<[1], [0], [0], [1], [0, 0, 1, 1], [], []>} : vector<8x64xf32>, vector<64x64xf32>, vector<8x64xf32> -> vector<8x64xf32>
    %c2_64 = arith.constant 2 : index
    %c0_65 = arith.constant 0 : index
    %c0_66 = arith.constant 0 : index
    %66 = vector.load %arg4[%c2_64, %c0_65, %c0_66] : memref<3x8x8xf32, #tpu.memory_space<vmem>>, vector<1x8x8xf32>
    %67 = vector.shape_cast %66 : vector<1x8x8xf32> to vector<8x8xf32>
    %cst_67 = arith.constant dense<0.000000e+00> : vector<8x64xf32>
    %68 = tpu.matmul %67, %65, %cst_67 {dimension_numbers = #tpu.dot_dimension_numbers<[1], [0], [0], [1], [0, 0, 1, 1], [], []>} : vector<8x8xf32>, vector<8x64xf32>, vector<8x64xf32> -> vector<8x64xf32>
    %69 = arith.addf %62, %68 : vector<8x64xf32>
    %c1_68 = arith.constant 1 : index
    %c0_69 = arith.constant 0 : index
    %c0_70 = arith.constant 0 : index
    %70 = vector.load %arg8[%c1_68, %c0_69, %c0_70] : memref<2x1x64xf32, #tpu.memory_space<vmem>>, vector<1x1x64xf32>
    %71 = vector.shape_cast %70 : vector<1x1x64xf32> to vector<1x64xf32>
    %72 = vector.broadcast %71 : vector<1x64xf32> to vector<8x64xf32>
    %73 = arith.addf %69, %72 : vector<8x64xf32>
    %c1_71 = arith.constant 1 : index
    %c0_72 = arith.constant 0 : index
    %c0_73 = arith.constant 0 : index
    %74 = vector.load %arg9[%c1_71, %c0_72, %c0_73] : memref<2x64x64xf32, #tpu.memory_space<vmem>>, vector<1x64x64xf32>
    %75 = vector.shape_cast %74 : vector<1x64x64xf32> to vector<64x64xf32>
    %cst_74 = arith.constant dense<0.000000e+00> : vector<8x64xf32>
    %76 = tpu.matmul %73, %75, %cst_74 {dimension_numbers = #tpu.dot_dimension_numbers<[1], [0], [0], [1], [0, 0, 1, 1], [], []>} : vector<8x64xf32>, vector<64x64xf32>, vector<8x64xf32> -> vector<8x64xf32>
    %c1_75 = arith.constant 1 : index
    %c0_76 = arith.constant 0 : index
    %c0_77 = arith.constant 0 : index
    %77 = vector.load %arg10[%c1_75, %c0_76, %c0_77] : memref<2x1x64xf32, #tpu.memory_space<vmem>>, vector<1x1x64xf32>
    %78 = vector.shape_cast %77 : vector<1x1x64xf32> to vector<1x64xf32>
    %79 = vector.broadcast %78 : vector<1x64xf32> to vector<8x64xf32>
    %80 = arith.addf %76, %79 : vector<8x64xf32>
    %81 = arith.addf %45, %80 : vector<8x64xf32>
    %cst_78 = arith.constant 0.000000e+00 : f32
    %82 = vector.broadcast %cst_78 : f32 to vector<8x64xf32>
    %83 = arith.maximumf %81, %82 : vector<8x64xf32>
    %c0_79 = arith.constant 0 : index
    %c0_80 = arith.constant 0 : index
    %84 = vector.load %arg11[%c0_79, %c0_80] : memref<8x64xf32, #tpu.memory_space<vmem>>, vector<8x64xf32>
    tpu.vector_store %arg11[%c0_79, %c0_80], %83 {strides = array<i32>} : memref<8x64xf32, #tpu.memory_space<vmem>>, vector<8x64xf32>,
    return
  }
}

module attributes {stable_mosaic.version = 11 : i64} {
  func.func @kernel(%arg0: memref<8x64xf32, #tpu.memory_space<vmem>>, %arg1: memref<4x8xf32, #tpu.memory_space<vmem>>, %arg2: memref<64x64xf32, #tpu.memory_space<vmem>>, %arg3: memref<1x64xf32, #tpu.memory_space<vmem>>, %arg4: memref<3x4x4xf32, #tpu.memory_space<vmem>>, %arg5: memref<2x64x64xf32, #tpu.memory_space<vmem>>, %arg6: memref<2x1x64xf32, #tpu.memory_space<vmem>>, %arg7: memref<6x64x64xf32, #tpu.memory_space<vmem>>, %arg8: memref<2x1x64xf32, #tpu.memory_space<vmem>>, %arg9: memref<2x64x64xf32, #tpu.memory_space<vmem>>, %arg10: memref<2x1x64xf32, #tpu.memory_space<vmem>>, %arg11: memref<4x64xf32, #tpu.memory_space<vmem>>) attributes {dimension_semantics = [], scalar_prefetch = 0 : i64, scratch_operands = 0 : i64, tpu.core_type = #tpu.core_type<tc>} {
    %c0 = arith.constant 0 : index
    %c0_0 = arith.constant 0 : index
    %0 = vector.load %arg1[%c0, %c0_0] : memref<4x8xf32, #tpu.memory_space<vmem>>, vector<4x8xf32>
    %c0_1 = arith.constant 0 : index
    %c0_2 = arith.constant 0 : index
    %1 = vector.load %arg0[%c0_1, %c0_2] : memref<8x64xf32, #tpu.memory_space<vmem>>, vector<8x64xf32>
    %cst = arith.constant dense<0.000000e+00> : vector<4x64xf32>
    %2 = tpu.matmul %0, %1, %cst {dimension_numbers = #tpu.dot_dimension_numbers<[1], [0], [0], [1], [0, 0, 1, 1], [], []>} : vector<4x8xf32>, vector<8x64xf32>, vector<4x64xf32> -> vector<4x64xf32>
    %c0_3 = arith.constant 0 : index
    %c0_4 = arith.constant 0 : index
    %3 = vector.load %arg2[%c0_3, %c0_4] : memref<64x64xf32, #tpu.memory_space<vmem>>, vector<64x64xf32>
    %cst_5 = arith.constant dense<0.000000e+00> : vector<4x64xf32>
    %4 = tpu.matmul %2, %3, %cst_5 {dimension_numbers = #tpu.dot_dimension_numbers<[1], [0], [0], [1], [0, 0, 1, 1], [], []>} : vector<4x64xf32>, vector<64x64xf32>, vector<4x64xf32> -> vector<4x64xf32>
    %c0_6 = arith.constant 0 : index
    %c0_7 = arith.constant 0 : index
    %5 = vector.load %arg3[%c0_6, %c0_7] : memref<1x64xf32, #tpu.memory_space<vmem>>, vector<1x64xf32>
    %6 = vector.broadcast %5 : vector<1x64xf32> to vector<4x64xf32>
    %7 = arith.addf %4, %6 : vector<4x64xf32>
    %c0_8 = arith.constant 0 : index
    %c0_9 = arith.constant 0 : index
    %c0_10 = arith.constant 0 : index
    %8 = vector.load %arg5[%c0_8, %c0_9, %c0_10] : memref<2x64x64xf32, #tpu.memory_space<vmem>>, vector<1x64x64xf32>
    %9 = vector.shape_cast %8 : vector<1x64x64xf32> to vector<64x64xf32>
    %cst_11 = arith.constant dense<0.000000e+00> : vector<4x64xf32>
    %10 = tpu.matmul %7, %9, %cst_11 {dimension_numbers = #tpu.dot_dimension_numbers<[1], [0], [0], [1], [0, 0, 1, 1], [], []>} : vector<4x64xf32>, vector<64x64xf32>, vector<4x64xf32> -> vector<4x64xf32>
    %c0_12 = arith.constant 0 : index
    %c0_13 = arith.constant 0 : index
    %c0_14 = arith.constant 0 : index
    %11 = vector.load %arg6[%c0_12, %c0_13, %c0_14] : memref<2x1x64xf32, #tpu.memory_space<vmem>>, vector<1x1x64xf32>
    %12 = vector.shape_cast %11 : vector<1x1x64xf32> to vector<1x64xf32>
    %13 = vector.broadcast %12 : vector<1x64xf32> to vector<4x64xf32>
    %14 = arith.addf %10, %13 : vector<4x64xf32>
    %c0_15 = arith.constant 0 : index
    %c0_16 = arith.constant 0 : index
    %c0_17 = arith.constant 0 : index
    %15 = vector.load %arg7[%c0_15, %c0_16, %c0_17] : memref<6x64x64xf32, #tpu.memory_space<vmem>>, vector<1x64x64xf32>
    %16 = vector.shape_cast %15 : vector<1x64x64xf32> to vector<64x64xf32>
    %cst_18 = arith.constant dense<0.000000e+00> : vector<4x64xf32>
    %17 = tpu.matmul %14, %16, %cst_18 {dimension_numbers = #tpu.dot_dimension_numbers<[1], [0], [0], [1], [0, 0, 1, 1], [], []>} : vector<4x64xf32>, vector<64x64xf32>, vector<4x64xf32> -> vector<4x64xf32>
    %c0_19 = arith.constant 0 : index
    %c0_20 = arith.constant 0 : index
    %c0_21 = arith.constant 0 : index
    %18 = vector.load %arg4[%c0_19, %c0_20, %c0_21] : memref<3x4x4xf32, #tpu.memory_space<vmem>>, vector<1x4x4xf32>
    %19 = vector.shape_cast %18 : vector<1x4x4xf32> to vector<4x4xf32>
    %cst_22 = arith.constant dense<0.000000e+00> : vector<4x64xf32>
    %20 = tpu.matmul %19, %17, %cst_22 {dimension_numbers = #tpu.dot_dimension_numbers<[1], [0], [0], [1], [0, 0, 1, 1], [], []>} : vector<4x4xf32>, vector<4x64xf32>, vector<4x64xf32> -> vector<4x64xf32>
    %c1 = arith.constant 1 : index
    %c0_23 = arith.constant 0 : index
    %c0_24 = arith.constant 0 : index
    %21 = vector.load %arg7[%c1, %c0_23, %c0_24] : memref<6x64x64xf32, #tpu.memory_space<vmem>>, vector<1x64x64xf32>
    %22 = vector.shape_cast %21 : vector<1x64x64xf32> to vector<64x64xf32>
    %cst_25 = arith.constant dense<0.000000e+00> : vector<4x64xf32>
    %23 = tpu.matmul %14, %22, %cst_25 {dimension_numbers = #tpu.dot_dimension_numbers<[1], [0], [0], [1], [0, 0, 1, 1], [], []>} : vector<4x64xf32>, vector<64x64xf32>, vector<4x64xf32> -> vector<4x64xf32>
    %24 = arith.addf %20, %23 : vector<4x64xf32>
    %c2 = arith.constant 2 : index
    %c0_26 = arith.constant 0 : index
    %c0_27 = arith.constant 0 : index
    %25 = vector.load %arg7[%c2, %c0_26, %c0_27] : memref<6x64x64xf32, #tpu.memory_space<vmem>>, vector<1x64x64xf32>
    %26 = vector.shape_cast %25 : vector<1x64x64xf32> to vector<64x64xf32>
    %cst_28 = arith.constant dense<0.000000e+00> : vector<4x64xf32>
    %27 = tpu.matmul %14, %26, %cst_28 {dimension_numbers = #tpu.dot_dimension_numbers<[1], [0], [0], [1], [0, 0, 1, 1], [], []>} : vector<4x64xf32>, vector<64x64xf32>, vector<4x64xf32> -> vector<4x64xf32>
    %c2_29 = arith.constant 2 : index
    %c0_30 = arith.constant 0 : index
    %c0_31 = arith.constant 0 : index
    %28 = vector.load %arg4[%c2_29, %c0_30, %c0_31] : memref<3x4x4xf32, #tpu.memory_space<vmem>>, vector<1x4x4xf32>
    %29 = vector.shape_cast %28 : vector<1x4x4xf32> to vector<4x4xf32>
    %cst_32 = arith.constant dense<0.000000e+00> : vector<4x64xf32>
    %30 = tpu.matmul %29, %27, %cst_32 {dimension_numbers = #tpu.dot_dimension_numbers<[1], [0], [0], [1], [0, 0, 1, 1], [], []>} : vector<4x4xf32>, vector<4x64xf32>, vector<4x64xf32> -> vector<4x64xf32>
    %31 = arith.addf %24, %30 : vector<4x64xf32>
    %c0_33 = arith.constant 0 : index
    %c0_34 = arith.constant 0 : index
    %c0_35 = arith.constant 0 : index
    %32 = vector.load %arg8[%c0_33, %c0_34, %c0_35] : memref<2x1x64xf32, #tpu.memory_space<vmem>>, vector<1x1x64xf32>
    %33 = vector.shape_cast %32 : vector<1x1x64xf32> to vector<1x64xf32>
    %34 = vector.broadcast %33 : vector<1x64xf32> to vector<4x64xf32>
    %35 = arith.addf %31, %34 : vector<4x64xf32>
    %c0_36 = arith.constant 0 : index
    %c0_37 = arith.constant 0 : index
    %c0_38 = arith.constant 0 : index
    %36 = vector.load %arg9[%c0_36, %c0_37, %c0_38] : memref<2x64x64xf32, #tpu.memory_space<vmem>>, vector<1x64x64xf32>
    %37 = vector.shape_cast %36 : vector<1x64x64xf32> to vector<64x64xf32>
    %cst_39 = arith.constant dense<0.000000e+00> : vector<4x64xf32>
    %38 = tpu.matmul %35, %37, %cst_39 {dimension_numbers = #tpu.dot_dimension_numbers<[1], [0], [0], [1], [0, 0, 1, 1], [], []>} : vector<4x64xf32>, vector<64x64xf32>, vector<4x64xf32> -> vector<4x64xf32>
    %c0_40 = arith.constant 0 : index
    %c0_41 = arith.constant 0 : index
    %c0_42 = arith.constant 0 : index
    %39 = vector.load %arg10[%c0_40, %c0_41, %c0_42] : memref<2x1x64xf32, #tpu.memory_space<vmem>>, vector<1x1x64xf32>
    %40 = vector.shape_cast %39 : vector<1x1x64xf32> to vector<1x64xf32>
    %41 = vector.broadcast %40 : vector<1x64xf32> to vector<4x64xf32>
    %42 = arith.addf %38, %41 : vector<4x64xf32>
    %43 = arith.addf %7, %42 : vector<4x64xf32>
    %cst_43 = arith.constant 0.000000e+00 : f32
    %44 = vector.broadcast %cst_43 : f32 to vector<4x64xf32>
    %45 = arith.maximumf %43, %44 : vector<4x64xf32>
    %c1_44 = arith.constant 1 : index
    %c0_45 = arith.constant 0 : index
    %c0_46 = arith.constant 0 : index
    %46 = vector.load %arg5[%c1_44, %c0_45, %c0_46] : memref<2x64x64xf32, #tpu.memory_space<vmem>>, vector<1x64x64xf32>
    %47 = vector.shape_cast %46 : vector<1x64x64xf32> to vector<64x64xf32>
    %cst_47 = arith.constant dense<0.000000e+00> : vector<4x64xf32>
    %48 = tpu.matmul %45, %47, %cst_47 {dimension_numbers = #tpu.dot_dimension_numbers<[1], [0], [0], [1], [0, 0, 1, 1], [], []>} : vector<4x64xf32>, vector<64x64xf32>, vector<4x64xf32> -> vector<4x64xf32>
    %c1_48 = arith.constant 1 : index
    %c0_49 = arith.constant 0 : index
    %c0_50 = arith.constant 0 : index
    %49 = vector.load %arg6[%c1_48, %c0_49, %c0_50] : memref<2x1x64xf32, #tpu.memory_space<vmem>>, vector<1x1x64xf32>
    %50 = vector.shape_cast %49 : vector<1x1x64xf32> to vector<1x64xf32>
    %51 = vector.broadcast %50 : vector<1x64xf32> to vector<4x64xf32>
    %52 = arith.addf %48, %51 : vector<4x64xf32>
    %c3 = arith.constant 3 : index
    %c0_51 = arith.constant 0 : index
    %c0_52 = arith.constant 0 : index
    %53 = vector.load %arg7[%c3, %c0_51, %c0_52] : memref<6x64x64xf32, #tpu.memory_space<vmem>>, vector<1x64x64xf32>
    %54 = vector.shape_cast %53 : vector<1x64x64xf32> to vector<64x64xf32>
    %cst_53 = arith.constant dense<0.000000e+00> : vector<4x64xf32>
    %55 = tpu.matmul %52, %54, %cst_53 {dimension_numbers = #tpu.dot_dimension_numbers<[1], [0], [0], [1], [0, 0, 1, 1], [], []>} : vector<4x64xf32>, vector<64x64xf32>, vector<4x64xf32> -> vector<4x64xf32>
    %c0_54 = arith.constant 0 : index
    %c0_55 = arith.constant 0 : index
    %c0_56 = arith.constant 0 : index
    %56 = vector.load %arg4[%c0_54, %c0_55, %c0_56] : memref<3x4x4xf32, #tpu.memory_space<vmem>>, vector<1x4x4xf32>
    %57 = vector.shape_cast %56 : vector<1x4x4xf32> to vector<4x4xf32>
    %cst_57 = arith.constant dense<0.000000e+00> : vector<4x64xf32>
    %58 = tpu.matmul %57, %55, %cst_57 {dimension_numbers = #tpu.dot_dimension_numbers<[1], [0], [0], [1], [0, 0, 1, 1], [], []>} : vector<4x4xf32>, vector<4x64xf32>, vector<4x64xf32> -> vector<4x64xf32>
    %c4 = arith.constant 4 : index
    %c0_58 = arith.constant 0 : index
    %c0_59 = arith.constant 0 : index
    %59 = vector.load %arg7[%c4, %c0_58, %c0_59] : memref<6x64x64xf32, #tpu.memory_space<vmem>>, vector<1x64x64xf32>
    %60 = vector.shape_cast %59 : vector<1x64x64xf32> to vector<64x64xf32>
    %cst_60 = arith.constant dense<0.000000e+00> : vector<4x64xf32>
    %61 = tpu.matmul %52, %60, %cst_60 {dimension_numbers = #tpu.dot_dimension_numbers<[1], [0], [0], [1], [0, 0, 1, 1], [], []>} : vector<4x64xf32>, vector<64x64xf32>, vector<4x64xf32> -> vector<4x64xf32>
    %62 = arith.addf %58, %61 : vector<4x64xf32>
    %c5 = arith.constant 5 : index
    %c0_61 = arith.constant 0 : index
    %c0_62 = arith.constant 0 : index
    %63 = vector.load %arg7[%c5, %c0_61, %c0_62] : memref<6x64x64xf32, #tpu.memory_space<vmem>>, vector<1x64x64xf32>
    %64 = vector.shape_cast %63 : vector<1x64x64xf32> to vector<64x64xf32>
    %cst_63 = arith.constant dense<0.000000e+00> : vector<4x64xf32>
    %65 = tpu.matmul %52, %64, %cst_63 {dimension_numbers = #tpu.dot_dimension_numbers<[1], [0], [0], [1], [0, 0, 1, 1], [], []>} : vector<4x64xf32>, vector<64x64xf32>, vector<4x64xf32> -> vector<4x64xf32>
    %c2_64 = arith.constant 2 : index
    %c0_65 = arith.constant 0 : index
    %c0_66 = arith.constant 0 : index
    %66 = vector.load %arg4[%c2_64, %c0_65, %c0_66] : memref<3x4x4xf32, #tpu.memory_space<vmem>>, vector<1x4x4xf32>
    %67 = vector.shape_cast %66 : vector<1x4x4xf32> to vector<4x4xf32>
    %cst_67 = arith.constant dense<0.000000e+00> : vector<4x64xf32>
    %68 = tpu.matmul %67, %65, %cst_67 {dimension_numbers = #tpu.dot_dimension_numbers<[1], [0], [0], [1], [0, 0, 1, 1], [], []>} : vector<4x4xf32>, vector<4x64xf32>, vector<4x64xf32> -> vector<4x64xf32>
    %69 = arith.addf %62, %68 : vector<4x64xf32>
    %c1_68 = arith.constant 1 : index
    %c0_69 = arith.constant 0 : index
    %c0_70 = arith.constant 0 : index
    %70 = vector.load %arg8[%c1_68, %c0_69, %c0_70] : memref<2x1x64xf32, #tpu.memory_space<vmem>>, vector<1x1x64xf32>
    %71 = vector.shape_cast %70 : vector<1x1x64xf32> to vector<1x64xf32>
    %72 = vector.broadcast %71 : vector<1x64xf32> to vector<4x64xf32>
    %73 = arith.addf %69, %72 : vector<4x64xf32>
    %c1_71 = arith.constant 1 : index
    %c0_72 = arith.constant 0 : index
    %c0_73 = arith.constant 0 : index
    %74 = vector.load %arg9[%c1_71, %c0_72, %c0_73] : memref<2x64x64xf32, #tpu.memory_space<vmem>>, vector<1x64x64xf32>
    %75 = vector.shape_cast %74 : vector<1x64x64xf32> to vector<64x64xf32>
    %cst_74 = arith.constant dense<0.000000e+00> : vector<4x64xf32>
    %76 = tpu.matmul %73, %75, %cst_74 {dimension_numbers = #tpu.dot_dimension_numbers<[1], [0], [0], [1], [0, 0, 1, 1], [], []>} : vector<4x64xf32>, vector<64x64xf32>, vector<4x64xf32> -> vector<4x64xf32>
    %c1_75 = arith.constant 1 : index
    %c0_76 = arith.constant 0 : index
    %c0_77 = arith.constant 0 : index
    %77 = vector.load %arg10[%c1_75, %c0_76, %c0_77] : memref<2x1x64xf32, #tpu.memory_space<vmem>>, vector<1x1x64xf32>
    %78 = vector.shape_cast %77 : vector<1x1x64xf32> to vector<1x64xf32>
    %79 = vector.broadcast %78 : vector<1x64xf32> to vector<4x64xf32>
    %80 = arith.addf %76, %79 : vector<4x64xf32>
    %81 = arith.addf %45, %80 : vector<4x64xf32>
    %cst_78 = arith.constant 0.000000e+00 : f32
    %82 = vector.broadcast %cst_78 : f32 to vector<4x64xf32>
    %83 = arith.maximumf %81, %82 : vector<4x64xf32>
    %c0_79 = arith.constant 0 : index
    %c0_80 = arith.constant 0 : index
    %84 = vector.load %arg11[%c0_79, %c0_80] : memref<4x64xf32, #tpu.memory_space<vmem>>, vector<4x64xf32>
    tpu.vector_store %arg11[%c0_79, %c0_80], %83 {strides = array<i32>} : memref<4x64xf32, #tpu.memory_space<vmem>>, vector<4x64xf32>,
    return
  }
}

module attributes {stable_mosaic.version = 11 : i64} {
  func.func @kernel(%arg0: memref<4x64xf32, #tpu.memory_space<vmem>>, %arg1: memref<2x4xf32, #tpu.memory_space<vmem>>, %arg2: memref<64x32xf32, #tpu.memory_space<vmem>>, %arg3: memref<1x32xf32, #tpu.memory_space<vmem>>, %arg4: memref<3x2x2xf32, #tpu.memory_space<vmem>>, %arg5: memref<2x32x32xf32, #tpu.memory_space<vmem>>, %arg6: memref<2x1x32xf32, #tpu.memory_space<vmem>>, %arg7: memref<6x32x32xf32, #tpu.memory_space<vmem>>, %arg8: memref<2x1x32xf32, #tpu.memory_space<vmem>>, %arg9: memref<2x32x32xf32, #tpu.memory_space<vmem>>, %arg10: memref<2x1x32xf32, #tpu.memory_space<vmem>>, %arg11: memref<2x32xf32, #tpu.memory_space<vmem>>) attributes {dimension_semantics = [], scalar_prefetch = 0 : i64, scratch_operands = 0 : i64, tpu.core_type = #tpu.core_type<tc>} {
    %c0 = arith.constant 0 : index
    %c0_0 = arith.constant 0 : index
    %0 = vector.load %arg1[%c0, %c0_0] : memref<2x4xf32, #tpu.memory_space<vmem>>, vector<2x4xf32>
    %c0_1 = arith.constant 0 : index
    %c0_2 = arith.constant 0 : index
    %1 = vector.load %arg0[%c0_1, %c0_2] : memref<4x64xf32, #tpu.memory_space<vmem>>, vector<4x64xf32>
    %cst = arith.constant dense<0.000000e+00> : vector<2x64xf32>
    %2 = tpu.matmul %0, %1, %cst {dimension_numbers = #tpu.dot_dimension_numbers<[1], [0], [0], [1], [0, 0, 1, 1], [], []>} : vector<2x4xf32>, vector<4x64xf32>, vector<2x64xf32> -> vector<2x64xf32>
    %c0_3 = arith.constant 0 : index
    %c0_4 = arith.constant 0 : index
    %3 = vector.load %arg2[%c0_3, %c0_4] : memref<64x32xf32, #tpu.memory_space<vmem>>, vector<64x32xf32>
    %cst_5 = arith.constant dense<0.000000e+00> : vector<2x32xf32>
    %4 = tpu.matmul %2, %3, %cst_5 {dimension_numbers = #tpu.dot_dimension_numbers<[1], [0], [0], [1], [0, 0, 1, 1], [], []>} : vector<2x64xf32>, vector<64x32xf32>, vector<2x32xf32> -> vector<2x32xf32>
    %c0_6 = arith.constant 0 : index
    %c0_7 = arith.constant 0 : index
    %5 = vector.load %arg3[%c0_6, %c0_7] : memref<1x32xf32, #tpu.memory_space<vmem>>, vector<1x32xf32>
    %6 = vector.broadcast %5 : vector<1x32xf32> to vector<2x32xf32>
    %7 = arith.addf %4, %6 : vector<2x32xf32>
    %c0_8 = arith.constant 0 : index
    %c0_9 = arith.constant 0 : index
    %c0_10 = arith.constant 0 : index
    %8 = vector.load %arg5[%c0_8, %c0_9, %c0_10] : memref<2x32x32xf32, #tpu.memory_space<vmem>>, vector<1x32x32xf32>
    %9 = vector.shape_cast %8 : vector<1x32x32xf32> to vector<32x32xf32>
    %cst_11 = arith.constant dense<0.000000e+00> : vector<2x32xf32>
    %10 = tpu.matmul %7, %9, %cst_11 {dimension_numbers = #tpu.dot_dimension_numbers<[1], [0], [0], [1], [0, 0, 1, 1], [], []>} : vector<2x32xf32>, vector<32x32xf32>, vector<2x32xf32> -> vector<2x32xf32>
    %c0_12 = arith.constant 0 : index
    %c0_13 = arith.constant 0 : index
    %c0_14 = arith.constant 0 : index
    %11 = vector.load %arg6[%c0_12, %c0_13, %c0_14] : memref<2x1x32xf32, #tpu.memory_space<vmem>>, vector<1x1x32xf32>
    %12 = vector.shape_cast %11 : vector<1x1x32xf32> to vector<1x32xf32>
    %13 = vector.broadcast %12 : vector<1x32xf32> to vector<2x32xf32>
    %14 = arith.addf %10, %13 : vector<2x32xf32>
    %c0_15 = arith.constant 0 : index
    %c0_16 = arith.constant 0 : index
    %c0_17 = arith.constant 0 : index
    %15 = vector.load %arg7[%c0_15, %c0_16, %c0_17] : memref<6x32x32xf32, #tpu.memory_space<vmem>>, vector<1x32x32xf32>
    %16 = vector.shape_cast %15 : vector<1x32x32xf32> to vector<32x32xf32>
    %cst_18 = arith.constant dense<0.000000e+00> : vector<2x32xf32>
    %17 = tpu.matmul %14, %16, %cst_18 {dimension_numbers = #tpu.dot_dimension_numbers<[1], [0], [0], [1], [0, 0, 1, 1], [], []>} : vector<2x32xf32>, vector<32x32xf32>, vector<2x32xf32> -> vector<2x32xf32>
    %c0_19 = arith.constant 0 : index
    %c0_20 = arith.constant 0 : index
    %c0_21 = arith.constant 0 : index
    %18 = vector.load %arg4[%c0_19, %c0_20, %c0_21] : memref<3x2x2xf32, #tpu.memory_space<vmem>>, vector<1x2x2xf32>
    %19 = vector.shape_cast %18 : vector<1x2x2xf32> to vector<2x2xf32>
    %cst_22 = arith.constant dense<0.000000e+00> : vector<2x32xf32>
    %20 = tpu.matmul %19, %17, %cst_22 {dimension_numbers = #tpu.dot_dimension_numbers<[1], [0], [0], [1], [0, 0, 1, 1], [], []>} : vector<2x2xf32>, vector<2x32xf32>, vector<2x32xf32> -> vector<2x32xf32>
    %c1 = arith.constant 1 : index
    %c0_23 = arith.constant 0 : index
    %c0_24 = arith.constant 0 : index
    %21 = vector.load %arg7[%c1, %c0_23, %c0_24] : memref<6x32x32xf32, #tpu.memory_space<vmem>>, vector<1x32x32xf32>
    %22 = vector.shape_cast %21 : vector<1x32x32xf32> to vector<32x32xf32>
    %cst_25 = arith.constant dense<0.000000e+00> : vector<2x32xf32>
    %23 = tpu.matmul %14, %22, %cst_25 {dimension_numbers = #tpu.dot_dimension_numbers<[1], [0], [0], [1], [0, 0, 1, 1], [], []>} : vector<2x32xf32>, vector<32x32xf32>, vector<2x32xf32> -> vector<2x32xf32>
    %24 = arith.addf %20, %23 : vector<2x32xf32>
    %c2 = arith.constant 2 : index
    %c0_26 = arith.constant 0 : index
    %c0_27 = arith.constant 0 : index
    %25 = vector.load %arg7[%c2, %c0_26, %c0_27] : memref<6x32x32xf32, #tpu.memory_space<vmem>>, vector<1x32x32xf32>
    %26 = vector.shape_cast %25 : vector<1x32x32xf32> to vector<32x32xf32>
    %cst_28 = arith.constant dense<0.000000e+00> : vector<2x32xf32>
    %27 = tpu.matmul %14, %26, %cst_28 {dimension_numbers = #tpu.dot_dimension_numbers<[1], [0], [0], [1], [0, 0, 1, 1], [], []>} : vector<2x32xf32>, vector<32x32xf32>, vector<2x32xf32> -> vector<2x32xf32>
    %c2_29 = arith.constant 2 : index
    %c0_30 = arith.constant 0 : index
    %c0_31 = arith.constant 0 : index
    %28 = vector.load %arg4[%c2_29, %c0_30, %c0_31] : memref<3x2x2xf32, #tpu.memory_space<vmem>>, vector<1x2x2xf32>
    %29 = vector.shape_cast %28 : vector<1x2x2xf32> to vector<2x2xf32>
    %cst_32 = arith.constant dense<0.000000e+00> : vector<2x32xf32>
    %30 = tpu.matmul %29, %27, %cst_32 {dimension_numbers = #tpu.dot_dimension_numbers<[1], [0], [0], [1], [0, 0, 1, 1], [], []>} : vector<2x2xf32>, vector<2x32xf32>, vector<2x32xf32> -> vector<2x32xf32>
    %31 = arith.addf %24, %30 : vector<2x32xf32>
    %c0_33 = arith.constant 0 : index
    %c0_34 = arith.constant 0 : index
    %c0_35 = arith.constant 0 : index
    %32 = vector.load %arg8[%c0_33, %c0_34, %c0_35] : memref<2x1x32xf32, #tpu.memory_space<vmem>>, vector<1x1x32xf32>
    %33 = vector.shape_cast %32 : vector<1x1x32xf32> to vector<1x32xf32>
    %34 = vector.broadcast %33 : vector<1x32xf32> to vector<2x32xf32>
    %35 = arith.addf %31, %34 : vector<2x32xf32>
    %c0_36 = arith.constant 0 : index
    %c0_37 = arith.constant 0 : index
    %c0_38 = arith.constant 0 : index
    %36 = vector.load %arg9[%c0_36, %c0_37, %c0_38] : memref<2x32x32xf32, #tpu.memory_space<vmem>>, vector<1x32x32xf32>
    %37 = vector.shape_cast %36 : vector<1x32x32xf32> to vector<32x32xf32>
    %cst_39 = arith.constant dense<0.000000e+00> : vector<2x32xf32>
    %38 = tpu.matmul %35, %37, %cst_39 {dimension_numbers = #tpu.dot_dimension_numbers<[1], [0], [0], [1], [0, 0, 1, 1], [], []>} : vector<2x32xf32>, vector<32x32xf32>, vector<2x32xf32> -> vector<2x32xf32>
    %c0_40 = arith.constant 0 : index
    %c0_41 = arith.constant 0 : index
    %c0_42 = arith.constant 0 : index
    %39 = vector.load %arg10[%c0_40, %c0_41, %c0_42] : memref<2x1x32xf32, #tpu.memory_space<vmem>>, vector<1x1x32xf32>
    %40 = vector.shape_cast %39 : vector<1x1x32xf32> to vector<1x32xf32>
    %41 = vector.broadcast %40 : vector<1x32xf32> to vector<2x32xf32>
    %42 = arith.addf %38, %41 : vector<2x32xf32>
    %43 = arith.addf %7, %42 : vector<2x32xf32>
    %cst_43 = arith.constant 0.000000e+00 : f32
    %44 = vector.broadcast %cst_43 : f32 to vector<2x32xf32>
    %45 = arith.maximumf %43, %44 : vector<2x32xf32>
    %c1_44 = arith.constant 1 : index
    %c0_45 = arith.constant 0 : index
    %c0_46 = arith.constant 0 : index
    %46 = vector.load %arg5[%c1_44, %c0_45, %c0_46] : memref<2x32x32xf32, #tpu.memory_space<vmem>>, vector<1x32x32xf32>
    %47 = vector.shape_cast %46 : vector<1x32x32xf32> to vector<32x32xf32>
    %cst_47 = arith.constant dense<0.000000e+00> : vector<2x32xf32>
    %48 = tpu.matmul %45, %47, %cst_47 {dimension_numbers = #tpu.dot_dimension_numbers<[1], [0], [0], [1], [0, 0, 1, 1], [], []>} : vector<2x32xf32>, vector<32x32xf32>, vector<2x32xf32> -> vector<2x32xf32>
    %c1_48 = arith.constant 1 : index
    %c0_49 = arith.constant 0 : index
    %c0_50 = arith.constant 0 : index
    %49 = vector.load %arg6[%c1_48, %c0_49, %c0_50] : memref<2x1x32xf32, #tpu.memory_space<vmem>>, vector<1x1x32xf32>
    %50 = vector.shape_cast %49 : vector<1x1x32xf32> to vector<1x32xf32>
    %51 = vector.broadcast %50 : vector<1x32xf32> to vector<2x32xf32>
    %52 = arith.addf %48, %51 : vector<2x32xf32>
    %c3 = arith.constant 3 : index
    %c0_51 = arith.constant 0 : index
    %c0_52 = arith.constant 0 : index
    %53 = vector.load %arg7[%c3, %c0_51, %c0_52] : memref<6x32x32xf32, #tpu.memory_space<vmem>>, vector<1x32x32xf32>
    %54 = vector.shape_cast %53 : vector<1x32x32xf32> to vector<32x32xf32>
    %cst_53 = arith.constant dense<0.000000e+00> : vector<2x32xf32>
    %55 = tpu.matmul %52, %54, %cst_53 {dimension_numbers = #tpu.dot_dimension_numbers<[1], [0], [0], [1], [0, 0, 1, 1], [], []>} : vector<2x32xf32>, vector<32x32xf32>, vector<2x32xf32> -> vector<2x32xf32>
    %c0_54 = arith.constant 0 : index
    %c0_55 = arith.constant 0 : index
    %c0_56 = arith.constant 0 : index
    %56 = vector.load %arg4[%c0_54, %c0_55, %c0_56] : memref<3x2x2xf32, #tpu.memory_space<vmem>>, vector<1x2x2xf32>
    %57 = vector.shape_cast %56 : vector<1x2x2xf32> to vector<2x2xf32>
    %cst_57 = arith.constant dense<0.000000e+00> : vector<2x32xf32>
    %58 = tpu.matmul %57, %55, %cst_57 {dimension_numbers = #tpu.dot_dimension_numbers<[1], [0], [0], [1], [0, 0, 1, 1], [], []>} : vector<2x2xf32>, vector<2x32xf32>, vector<2x32xf32> -> vector<2x32xf32>
    %c4 = arith.constant 4 : index
    %c0_58 = arith.constant 0 : index
    %c0_59 = arith.constant 0 : index
    %59 = vector.load %arg7[%c4, %c0_58, %c0_59] : memref<6x32x32xf32, #tpu.memory_space<vmem>>, vector<1x32x32xf32>
    %60 = vector.shape_cast %59 : vector<1x32x32xf32> to vector<32x32xf32>
    %cst_60 = arith.constant dense<0.000000e+00> : vector<2x32xf32>
    %61 = tpu.matmul %52, %60, %cst_60 {dimension_numbers = #tpu.dot_dimension_numbers<[1], [0], [0], [1], [0, 0, 1, 1], [], []>} : vector<2x32xf32>, vector<32x32xf32>, vector<2x32xf32> -> vector<2x32xf32>
    %62 = arith.addf %58, %61 : vector<2x32xf32>
    %c5 = arith.constant 5 : index
    %c0_61 = arith.constant 0 : index
    %c0_62 = arith.constant 0 : index
    %63 = vector.load %arg7[%c5, %c0_61, %c0_62] : memref<6x32x32xf32, #tpu.memory_space<vmem>>, vector<1x32x32xf32>
    %64 = vector.shape_cast %63 : vector<1x32x32xf32> to vector<32x32xf32>
    %cst_63 = arith.constant dense<0.000000e+00> : vector<2x32xf32>
    %65 = tpu.matmul %52, %64, %cst_63 {dimension_numbers = #tpu.dot_dimension_numbers<[1], [0], [0], [1], [0, 0, 1, 1], [], []>} : vector<2x32xf32>, vector<32x32xf32>, vector<2x32xf32> -> vector<2x32xf32>
    %c2_64 = arith.constant 2 : index
    %c0_65 = arith.constant 0 : index
    %c0_66 = arith.constant 0 : index
    %66 = vector.load %arg4[%c2_64, %c0_65, %c0_66] : memref<3x2x2xf32, #tpu.memory_space<vmem>>, vector<1x2x2xf32>
    %67 = vector.shape_cast %66 : vector<1x2x2xf32> to vector<2x2xf32>
    %cst_67 = arith.constant dense<0.000000e+00> : vector<2x32xf32>
    %68 = tpu.matmul %67, %65, %cst_67 {dimension_numbers = #tpu.dot_dimension_numbers<[1], [0], [0], [1], [0, 0, 1, 1], [], []>} : vector<2x2xf32>, vector<2x32xf32>, vector<2x32xf32> -> vector<2x32xf32>
    %69 = arith.addf %62, %68 : vector<2x32xf32>
    %c1_68 = arith.constant 1 : index
    %c0_69 = arith.constant 0 : index
    %c0_70 = arith.constant 0 : index
    %70 = vector.load %arg8[%c1_68, %c0_69, %c0_70] : memref<2x1x32xf32, #tpu.memory_space<vmem>>, vector<1x1x32xf32>
    %71 = vector.shape_cast %70 : vector<1x1x32xf32> to vector<1x32xf32>
    %72 = vector.broadcast %71 : vector<1x32xf32> to vector<2x32xf32>
    %73 = arith.addf %69, %72 : vector<2x32xf32>
    %c1_71 = arith.constant 1 : index
    %c0_72 = arith.constant 0 : index
    %c0_73 = arith.constant 0 : index
    %74 = vector.load %arg9[%c1_71, %c0_72, %c0_73] : memref<2x32x32xf32, #tpu.memory_space<vmem>>, vector<1x32x32xf32>
    %75 = vector.shape_cast %74 : vector<1x32x32xf32> to vector<32x32xf32>
    %cst_74 = arith.constant dense<0.000000e+00> : vector<2x32xf32>
    %76 = tpu.matmul %73, %75, %cst_74 {dimension_numbers = #tpu.dot_dimension_numbers<[1], [0], [0], [1], [0, 0, 1, 1], [], []>} : vector<2x32xf32>, vector<32x32xf32>, vector<2x32xf32> -> vector<2x32xf32>
    %c1_75 = arith.constant 1 : index
    %c0_76 = arith.constant 0 : index
    %c0_77 = arith.constant 0 : index
    %77 = vector.load %arg10[%c1_75, %c0_76, %c0_77] : memref<2x1x32xf32, #tpu.memory_space<vmem>>, vector<1x1x32xf32>
    %78 = vector.shape_cast %77 : vector<1x1x32xf32> to vector<1x32xf32>
    %79 = vector.broadcast %78 : vector<1x32xf32> to vector<2x32xf32>
    %80 = arith.addf %76, %79 : vector<2x32xf32>
    %81 = arith.addf %45, %80 : vector<2x32xf32>
    %cst_78 = arith.constant 0.000000e+00 : f32
    %82 = vector.broadcast %cst_78 : f32 to vector<2x32xf32>
    %83 = arith.maximumf %81, %82 : vector<2x32xf32>
    %c0_79 = arith.constant 0 : index
    %c0_80 = arith.constant 0 : index
    %84 = vector.load %arg11[%c0_79, %c0_80] : memref<2x32xf32, #tpu.memory_space<vmem>>, vector<2x32xf32>
    tpu.vector_store %arg11[%c0_79, %c0_80], %83 {strides = array<i32>} : memref<2x32xf32, #tpu.memory_space<vmem>>, vector<2x32xf32>,
    return
  }
}

</mosaic_0001>

<llo_original>
// kernel: downsample_forward.7
$region0: #{downsample_forward.7}
  #allocation0 [shape = 'u32[]', space=smem, size = 0x4, offset = 0x4, fixed_abs, tag = 'smem constant byte address 0x4 - core index']
  #allocation1 [shape = 'u32[144,128]{1,0:T(1,128)}', space=vmem, size = 0x12000, scoped, tag = 'internal scratch']
  %s0 = inlined_call_operand.vmem [shape: f32[16,128], index: 0, kind: input, shape index: {}]
  %s1 = inlined_call_operand.vmem [shape: f32[8,16], index: 1, kind: input, shape index: {}]
  %s2 = inlined_call_operand.vmem [shape: f32[128,64], index: 2, kind: input, shape index: {}]
  %s3 = inlined_call_operand.vmem [shape: f32[1,64], index: 3, kind: input, shape index: {}]
  %s4 = inlined_call_operand.vmem [shape: f32[3,8,8], index: 4, kind: input, shape index: {}]
  %s5 = inlined_call_operand.vmem [shape: f32[2,64,64], index: 5, kind: input, shape index: {}]
  %s6 = inlined_call_operand.vmem [shape: f32[2,1,64], index: 6, kind: input, shape index: {}]
  %s7 = inlined_call_operand.vmem [shape: f32[6,64,64], index: 7, kind: input, shape index: {}]
  %s8 = inlined_call_operand.vmem [shape: f32[2,1,64], index: 8, kind: input, shape index: {}]
  %s9 = inlined_call_operand.vmem [shape: f32[2,64,64], index: 9, kind: input, shape index: {}]
  %s10 = inlined_call_operand.vmem [shape: f32[2,1,64], index: 10, kind: input, shape index: {}]
  %s11 = inlined_call_operand.vmem [shape: f32[8,64], index: 11, kind: output, shape index: {}]
  %s12 = sld [smem:[#allocation0]]
  $region54: #{downsample_forward.7} parent=0
    _
  %s14 = ssub.s32 1, %s12
  %s15 = scalar_select 0, %s14, %s12
  // Predicated region
  $region2: #{downsample_forward.7} parent=0 // pred_check
    _
  $region3: #{downsample_forward.7} parent=0 // pred_check_branch
    %17 = sbr.rel (0) target = $region5
  $region4: #{downsample_forward.7} parent=0 // pred_region
    _
  $region5: #{downsample_forward.7} parent=0 // pred_fallthru
    _
  // Predicated region
  $region6: #{downsample_forward.7} parent=0 // pred_check
    _
  $region7: #{downsample_forward.7} parent=0 // pred_check_branch
    %19 = sbr.rel (0) target = $region9
  $region8: #{downsample_forward.7} parent=0 // pred_region
    _
  $region9: #{downsample_forward.7} parent=0 // pred_fallthru
    _
  // Predicated region
  $region10: #{downsample_forward.7} parent=0 // pred_check
    _
  $region11: #{downsample_forward.7} parent=0 // pred_check_branch
    %21 = sbr.rel (0) target = $region13
  $region12: #{downsample_forward.7} parent=0 // pred_region
    _
  $region13: #{downsample_forward.7} parent=0 // pred_fallthru
    _
  // Predicated region
  $region14: #{downsample_forward.7} parent=0 // pred_check
    _
  $region15: #{downsample_forward.7} parent=0 // pred_check_branch
    %23 = sbr.rel (0) target = $region17
  $region16: #{downsample_forward.7} parent=0 // pred_region
    _
  $region17: #{downsample_forward.7} parent=0 // pred_fallthru
    _
  // Predicated region
  $region18: #{downsample_forward.7} parent=0 // pred_check
    _
  $region19: #{downsample_forward.7} parent=0 // pred_check_branch
    %25 = sbr.rel (0) target = $region21
  $region20: #{downsample_forward.7} parent=0 // pred_region
    _
  $region21: #{downsample_forward.7} parent=0 // pred_fallthru
    _
  // Predicated region
  $region22: #{downsample_forward.7} parent=0 // pred_check
    _
  $region23: #{downsample_forward.7} parent=0 // pred_check_branch
    %27 = sbr.rel (0) target = $region25
  $region24: #{downsample_forward.7} parent=0 // pred_region
    _
  $region25: #{downsample_forward.7} parent=0 // pred_fallthru
    _
  // Predicated region
  $region26: #{downsample_forward.7} parent=0 // pred_check
    _
  $region27: #{downsample_forward.7} parent=0 // pred_check_branch
    %29 = sbr.rel (0) target = $region29
  $region28: #{downsample_forward.7} parent=0 // pred_region
    _
  $region29: #{downsample_forward.7} parent=0 // pred_fallthru
    _
  // Predicated region
  $region30: #{downsample_forward.7} parent=0 // pred_check
    _
  $region31: #{downsample_forward.7} parent=0 // pred_check_branch
    %31 = sbr.rel (0) target = $region33
  $region32: #{downsample_forward.7} parent=0 // pred_region
    _
  $region33: #{downsample_forward.7} parent=0 // pred_fallthru
    _
  // Predicated region
  $region34: #{downsample_forward.7} parent=0 // pred_check
    _
  $region35: #{downsample_forward.7} parent=0 // pred_check_branch
    %33 = sbr.rel (0) target = $region37
  $region36: #{downsample_forward.7} parent=0 // pred_region
    _
  $region37: #{downsample_forward.7} parent=0 // pred_fallthru
    _
  // Predicated region
  $region38: #{downsample_forward.7} parent=0 // pred_check
    _
  $region39: #{downsample_forward.7} parent=0 // pred_check_branch
    %35 = sbr.rel (0) target = $region41
  $region40: #{downsample_forward.7} parent=0 // pred_region
    _
  $region41: #{downsample_forward.7} parent=0 // pred_fallthru
    _
  // Predicated region
  $region42: #{downsample_forward.7} parent=0 // pred_check
    _
  $region43: #{downsample_forward.7} parent=0 // pred_check_branch
    %37 = sbr.rel (0) target = $region45
  $region44: #{downsample_forward.7} parent=0 // pred_region
    _
  $region45: #{downsample_forward.7} parent=0 // pred_fallthru
    _
  %v38 = vld [vmem:[%s1] sm:$0xff]
  %v39 = vld [vmem:[%s0] sm:$0xff]
  %v40 = vld [vmem:[%s0 + $0x8] sm:$0xff]
  %vm41 = vcmask 130048
  %v43 = vsel %vm41, %v38, 0
  %45 = vmatprep.subr.mxu0 0.0
  %46 = vmatpush1.msra.mxu0 0.0
  %47 = vmatprep.subr.mxu0 0.0
  %48 = vmatpush1.msra.mxu0 0.0
  %49 = vmatprep.subr.mxu0 0.0
  %50 = vmatpush1.msra.mxu0 0.0
  %51 = vmatprep.subr.mxu0 0.0
  %52 = vmatpush1.msra.mxu0 0.0
  %53 = vmatprep.subr.mxu0 0.0
  %54 = vmatpush1.msra.mxu0 0.0
  %55 = vmatprep.subr.mxu0 0.0
  %56 = vmatpush1.msra.mxu0 0.0
  %57 = vmatprep.subr.mxu0 0.0
  %58 = vmatpush1.msra.mxu0 0.0
  %59 = vmatprep.subr.mxu0 0.0
  %60 = vmatpush1.msra.mxu0 0.0
  %61 = vmatprep.subr.mxu0 0.0
  %62 = vmatpush1.msra.mxu0 0.0
  %63 = vmatprep.subr.mxu0 0.0
  %64 = vmatpush1.msra.mxu0 0.0
  %65 = vmatprep.subr.mxu0 0.0
  %66 = vmatpush1.msra.mxu0 0.0
  %67 = vmatprep.subr.mxu0 0.0
  %68 = vmatpush1.msra.mxu0 0.0
  %69 = vmatprep.subr.mxu0 0.0
  %70 = vmatpush1.msra.mxu0 0.0
  %71 = vmatprep.subr.mxu0 0.0
  %72 = vmatpush1.msra.mxu0 0.0
  %73 = vmatprep.subr.mxu0 0.0
  %74 = vmatpush1.msra.mxu0 %v40
  %75 = vmatprep.subr.mxu0 0.0
  %76 = vmatpush1.msra.mxu0 %v39
  %77 = vmatprep.subr.mxu0 0.0
  %78 = vmatpush2.msra.mxu0 0.0
  %79 = vmatprep.subr.mxu0 0.0
  %80 = vmatpush2.msra.mxu0 0.0
  %81 = vmatprep.subr.mxu0 0.0
  %82 = vmatpush2.msra.mxu0 0.0
  %83 = vmatprep.subr.mxu0 0.0
  %84 = vmatpush2.msra.mxu0 0.0
  %85 = vmatprep.subr.mxu0 0.0
  %86 = vmatpush2.msra.mxu0 0.0
  %87 = vmatprep.subr.mxu0 0.0
  %88 = vmatpush2.msra.mxu0 0.0
  %89 = vmatprep.subr.mxu0 0.0
  %90 = vmatpush2.msra.mxu0 0.0
  %91 = vmatprep.subr.mxu0 0.0
  %92 = vmatpush2.msra.mxu0 0.0
  %93 = vmatprep.subr.mxu0 0.0
  %94 = vmatpush2.msra.mxu0 0.0
  %95 = vmatprep.subr.mxu0 0.0
  %96 = vmatpush2.msra.mxu0 0.0
  %97 = vmatprep.subr.mxu0 0.0
  %98 = vmatpush2.msra.mxu0 0.0
  %99 = vmatprep.subr.mxu0 0.0
  %100 = vmatpush2.msra.mxu0 0.0
  %101 = vmatprep.subr.mxu0 0.0
  %102 = vmatpush2.msra.mxu0 0.0
  %103 = vmatprep.subr.mxu0 0.0
  %104 = vmatpush2.msra.mxu0 0.0
  %105 = vmatprep.subr.mxu0 0.0
  %106 = vmatpush2.msra.mxu0 0.0
  %107 = vmatprep.subr.mxu0 0.0
  %108 = vmatpush2.msra.mxu0 0.0
  %109 = vmatprep.mubr.f32.mxu0 0.0
  %110 = vmatmul.mubr.f32.gmra.mxu0 %v43
  %v111 = vpop.f32.mrf.mxu0
  %v112 = vadd.f32 0.0, %v111
  %v113 = vpop.f32.mrf.mxu0
  %114 = vdwg.mxu0
  %v115 = vld [vmem:[%s2] sm:$0xff]
  %v116 = vld [vmem:[%s2 + $0x8] sm:$0xff]
  %v117 = vld [vmem:[%s2 + $0x10] sm:$0xff]
  %v118 = vld [vmem:[%s2 + $0x18] sm:$0xff]
  %v119 = vld [vmem:[%s2 + $0x20] sm:$0xff]
  %v120 = vld [vmem:[%s2 + $0x28] sm:$0xff]
  %v121 = vld [vmem:[%s2 + $0x30] sm:$0xff]
  %v122 = vld [vmem:[%s2 + $0x38] sm:$0xff]
  %v123 = vld [vmem:[%s2 + $0x40] sm:$0xff]
  %v124 = vld [vmem:[%s2 + $0x48] sm:$0xff]
  %v125 = vld [vmem:[%s2 + $0x50] sm:$0xff]
  %v126 = vld [vmem:[%s2 + $0x58] sm:$0xff]
  %v127 = vld [vmem:[%s2 + $0x60] sm:$0xff]
  %v128 = vld [vmem:[%s2 + $0x68] sm:$0xff]
  %v129 = vld [vmem:[%s2 + $0x70] sm:$0xff]
  %v130 = vld [vmem:[%s2 + $0x78] sm:$0xff]
  %v131 = vld [vmem:[%s3] sm:$0x1]
  %v133 = vlaneseq
  %v134 = vshrl.u32 %v133, 7
  %v135 = vsub.s32 0, %v134
  %v136 = vrot.slane %v131, %v135
  %138 = vmatprep.subr.mxu0 0.0
  %139 = vmatpush1.msra.mxu0 %v130
  %140 = vmatprep.subr.mxu0 0.0
  %141 = vmatpush1.msra.mxu0 %v129
  %142 = vmatprep.subr.mxu0 0.0
  %143 = vmatpush1.msra.mxu0 %v128
  %144 = vmatprep.subr.mxu0 0.0
  %145 = vmatpush1.msra.mxu0 %v127
  %146 = vmatprep.subr.mxu0 0.0
  %147 = vmatpush1.msra.mxu0 %v126
  %148 = vmatprep.subr.mxu0 0.0
  %149 = vmatpush1.msra.mxu0 %v125
  %150 = vmatprep.subr.mxu0 0.0
  %151 = vmatpush1.msra.mxu0 %v124
  %152 = vmatprep.subr.mxu0 0.0
  %153 = vmatpush1.msra.mxu0 %v123
  %154 = vmatprep.subr.mxu0 0.0
  %155 = vmatpush1.msra.mxu0 %v122
  %156 = vmatprep.subr.mxu0 0.0
  %157 = vmatpush1.msra.mxu0 %v121
  %158 = vmatprep.subr.mxu0 0.0
  %159 = vmatpush1.msra.mxu0 %v120
  %160 = vmatprep.subr.mxu0 0.0
  %161 = vmatpush1.msra.mxu0 %v119
  %162 = vmatprep.subr.mxu0 0.0
  %163 = vmatpush1.msra.mxu0 %v118
  %164 = vmatprep.subr.mxu0 0.0
  %165 = vmatpush1.msra.mxu0 %v117
  %166 = vmatprep.subr.mxu0 0.0
  %167 = vmatpush1.msra.mxu0 %v116
  %168 = vmatprep.subr.mxu0 0.0
  %169 = vmatpush1.msra.mxu0 %v115
  %170 = vmatprep.subr.mxu0 0.0
  %171 = vmatpush2.msra.mxu0 0.0
  %172 = vmatprep.subr.mxu0 0.0
  %173 = vmatpush2.msra.mxu0 0.0
  %174 = vmatprep.subr.mxu0 0.0
  %175 = vmatpush2.msra.mxu0 0.0
  %176 = vmatprep.subr.mxu0 0.0
  %177 = vmatpush2.msra.mxu0 0.0
  %178 = vmatprep.subr.mxu0 0.0
  %179 = vmatpush2.msra.mxu0 0.0
  %180 = vmatprep.subr.mxu0 0.0
  %181 = vmatpush2.msra.mxu0 0.0
  %182 = vmatprep.subr.mxu0 0.0
  %183 = vmatpush2.msra.mxu0 0.0
  %184 = vmatprep.subr.mxu0 0.0
  %185 = vmatpush2.msra.mxu0 0.0
  %186 = vmatprep.subr.mxu0 0.0
  %187 = vmatpush2.msra.mxu0 0.0
  %188 = vmatprep.subr.mxu0 0.0
  %189 = vmatpush2.msra.mxu0 0.0
  %190 = vmatprep.subr.mxu0 0.0
  %191 = vmatpush2.msra.mxu0 0.0
  %192 = vmatprep.subr.mxu0 0.0
  %193 = vmatpush2.msra.mxu0 0.0
  %194 = vmatprep.subr.mxu0 0.0
  %195 = vmatpush2.msra.mxu0 0.0
  %196 = vmatprep.subr.mxu0 0.0
  %197 = vmatpush2.msra.mxu0 0.0
  %198 = vmatprep.subr.mxu0 0.0
  %199 = vmatpush2.msra.mxu0 0.0
  %200 = vmatprep.subr.mxu0 0.0
  %201 = vmatpush2.msra.mxu0 0.0
  %202 = vmatprep.mubr.f32.mxu0 0.0
  %203 = vmatmul.mubr.f32.gmra.mxu0 %v112
  %v204 = vpop.f32.mrf.mxu0
  %v205 = vadd.f32 %v136, %v204
  %v206 = vpop.f32.mrf.mxu0
  %207 = vdwg.mxu0
  %v208 = vld [vmem:[%s5] sm:$0xff]
  %v209 = vld [vmem:[%s5 + $0x8] sm:$0xff]
  %v210 = vld [vmem:[%s5 + $0x10] sm:$0xff]
  %v211 = vld [vmem:[%s5 + $0x18] sm:$0xff]
  %v212 = vld [vmem:[%s5 + $0x20] sm:$0xff]
  %v213 = vld [vmem:[%s5 + $0x28] sm:$0xff]
  %v214 = vld [vmem:[%s5 + $0x30] sm:$0xff]
  %v215 = vld [vmem:[%s5 + $0x38] sm:$0xff]
  %v216 = vld [vmem:[%s6] sm:$0x1]
  %v218 = vlaneseq
  %v219 = vshrl.u32 %v218, 7
  %v220 = vsub.s32 0, %v219
  %v221 = vrot.slane %v216, %v220
  %vm223 = vcmask 523264
  %v225 = vsel %vm223, %v205, 0
  %227 = vmatprep.subr.mxu0 0.0
  %228 = vmatpush1.msra.mxu0 0.0
  %229 = vmatprep.subr.mxu0 0.0
  %230 = vmatpush1.msra.mxu0 0.0
  %231 = vmatprep.subr.mxu0 0.0
  %232 = vmatpush1.msra.mxu0 0.0
  %233 = vmatprep.subr.mxu0 0.0
  %234 = vmatpush1.msra.mxu0 0.0
  %235 = vmatprep.subr.mxu0 0.0
  %236 = vmatpush1.msra.mxu0 0.0
  %237 = vmatprep.subr.mxu0 0.0
  %238 = vmatpush1.msra.mxu0 0.0
  %239 = vmatprep.subr.mxu0 0.0
  %240 = vmatpush1.msra.mxu0 0.0
  %241 = vmatprep.subr.mxu0 0.0
  %242 = vmatpush1.msra.mxu0 0.0
  %243 = vmatprep.subr.mxu0 0.0
  %244 = vmatpush1.msra.mxu0 %v215
  %245 = vmatprep.subr.mxu0 0.0
  %246 = vmatpush1.msra.mxu0 %v214
  %247 = vmatprep.subr.mxu0 0.0
  %248 = vmatpush1.msra.mxu0 %v213
  %249 = vmatprep.subr.mxu0 0.0
  %250 = vmatpush1.msra.mxu0 %v212
  %251 = vmatprep.subr.mxu0 0.0
  %252 = vmatpush1.msra.mxu0 %v211
  %253 = vmatprep.subr.mxu0 0.0
  %254 = vmatpush1.msra.mxu0 %v210
  %255 = vmatprep.subr.mxu0 0.0
  %256 = vmatpush1.msra.mxu0 %v209
  %257 = vmatprep.subr.mxu0 0.0
  %258 = vmatpush1.msra.mxu0 %v208
  %259 = vmatprep.subr.mxu0 0.0
  %260 = vmatpush2.msra.mxu0 0.0
  %261 = vmatprep.subr.mxu0 0.0
  %262 = vmatpush2.msra.mxu0 0.0
  %263 = vmatprep.subr.mxu0 0.0
  %264 = vmatpush2.msra.mxu0 0.0
  %265 = vmatprep.subr.mxu0 0.0
  %266 = vmatpush2.msra.mxu0 0.0
  %267 = vmatprep.subr.mxu0 0.0
  %268 = vmatpush2.msra.mxu0 0.0
  %269 = vmatprep.subr.mxu0 0.0
  %270 = vmatpush2.msra.mxu0 0.0
  %271 = vmatprep.subr.mxu0 0.0
  %272 = vmatpush2.msra.mxu0 0.0
  %273 = vmatprep.subr.mxu0 0.0
  %274 = vmatpush2.msra.mxu0 0.0
  %275 = vmatprep.subr.mxu0 0.0
  %276 = vmatpush2.msra.mxu0 0.0
  %277 = vmatprep.subr.mxu0 0.0
  %278 = vmatpush2.msra.mxu0 0.0
  %279 = vmatprep.subr.mxu0 0.0
  %280 = vmatpush2.msra.mxu0 0.0
  %281 = vmatprep.subr.mxu0 0.0
  %282 = vmatpush2.msra.mxu0 0.0
  %283 = vmatprep.subr.mxu0 0.0
  %284 = vmatpush2.msra.mxu0 0.0
  %285 = vmatprep.subr.mxu0 0.0
  %286 = vmatpush2.msra.mxu0 0.0
  %287 = vmatprep.subr.mxu0 0.0
  %288 = vmatpush2.msra.mxu0 0.0
  %289 = vmatprep.subr.mxu0 0.0
  %290 = vmatpush2.msra.mxu0 0.0
  %291 = vmatprep.mubr.f32.mxu0 0.0
  %292 = vmatmul.mubr.f32.gmra.mxu0 %v225
  %v293 = vpop.f32.mrf.mxu0
  %v294 = vadd.f32 %v221, %v293
  %v295 = vpop.f32.mrf.mxu0
  %296 = vdwg.mxu0
  %v297 = vld [vmem:[%s7] sm:$0xff]
  %v298 = vld [vmem:[%s7 + $0x8] sm:$0xff]
  %v299 = vld [vmem:[%s7 + $0x10] sm:$0xff]
  %v300 = vld [vmem:[%s7 + $0x18] sm:$0xff]
  %v301 = vld [vmem:[%s7 + $0x20] sm:$0xff]
  %v302 = vld [vmem:[%s7 + $0x28] sm:$0xff]
  %v303 = vld [vmem:[%s7 + $0x30] sm:$0xff]
  %v304 = vld [vmem:[%s7 + $0x38] sm:$0xff]
  %v306 = vsel %vm223, %v294, 0
  %308 = vmatprep.subr.mxu0 0.0
  %309 = vmatpush1.msra.mxu0 0.0
  %310 = vmatprep.subr.mxu0 0.0
  %311 = vmatpush1.msra.mxu0 0.0
  %312 = vmatprep.subr.mxu0 0.0
  %313 = vmatpush1.msra.mxu0 0.0
  %314 = vmatprep.subr.mxu0 0.0
  %315 = vmatpush1.msra.mxu0 0.0
  %316 = vmatprep.subr.mxu0 0.0
  %317 = vmatpush1.msra.mxu0 0.0
  %318 = vmatprep.subr.mxu0 0.0
  %319 = vmatpush1.msra.mxu0 0.0
  %320 = vmatprep.subr.mxu0 0.0
  %321 = vmatpush1.msra.mxu0 0.0
  %322 = vmatprep.subr.mxu0 0.0
  %323 = vmatpush1.msra.mxu0 0.0
  %324 = vmatprep.subr.mxu0 0.0
  %325 = vmatpush1.msra.mxu0 %v304
  %326 = vmatprep.subr.mxu0 0.0
  %327 = vmatpush1.msra.mxu0 %v303
  %328 = vmatprep.subr.mxu0 0.0
  %329 = vmatpush1.msra.mxu0 %v302
  %330 = vmatprep.subr.mxu0 0.0
  %331 = vmatpush1.msra.mxu0 %v301
  %332 = vmatprep.subr.mxu0 0.0
  %333 = vmatpush1.msra.mxu0 %v300
  %334 = vmatprep.subr.mxu0 0.0
  %335 = vmatpush1.msra.mxu0 %v299
  %336 = vmatprep.subr.mxu0 0.0
  %337 = vmatpush1.msra.mxu0 %v298
  %338 = vmatprep.subr.mxu0 0.0
  %339 = vmatpush1.msra.mxu0 %v297
  %340 = vmatprep.subr.mxu0 0.0
  %341 = vmatpush2.msra.mxu0 0.0
  %342 = vmatprep.subr.mxu0 0.0
  %343 = vmatpush2.msra.mxu0 0.0
  %344 = vmatprep.subr.mxu0 0.0
  %345 = vmatpush2.msra.mxu0 0.0
  %346 = vmatprep.subr.mxu0 0.0
  %347 = vmatpush2.msra.mxu0 0.0
  %348 = vmatprep.subr.mxu0 0.0
  %349 = vmatpush2.msra.mxu0 0.0
  %350 = vmatprep.subr.mxu0 0.0
  %351 = vmatpush2.msra.mxu0 0.0
  %352 = vmatprep.subr.mxu0 0.0
  %353 = vmatpush2.msra.mxu0 0.0
  %354 = vmatprep.subr.mxu0 0.0
  %355 = vmatpush2.msra.mxu0 0.0
  %356 = vmatprep.subr.mxu0 0.0
  %357 = vmatpush2.msra.mxu0 0.0
  %358 = vmatprep.subr.mxu0 0.0
  %359 = vmatpush2.msra.mxu0 0.0
  %360 = vmatprep.subr.mxu0 0.0
  %361 = vmatpush2.msra.mxu0 0.0
  %362 = vmatprep.subr.mxu0 0.0
  %363 = vmatpush2.msra.mxu0 0.0
  %364 = vmatprep.subr.mxu0 0.0
  %365 = vmatpush2.msra.mxu0 0.0
  %366 = vmatprep.subr.mxu0 0.0
  %367 = vmatpush2.msra.mxu0 0.0
  %368 = vmatprep.subr.mxu0 0.0
  %369 = vmatpush2.msra.mxu0 0.0
  %370 = vmatprep.subr.mxu0 0.0
  %371 = vmatpush2.msra.mxu0 0.0
  %372 = vmatprep.mubr.f32.mxu0 0.0
  %373 = vmatmul.mubr.f32.gmra.mxu0 %v306
  %v374 = vpop.f32.mrf.mxu0
  %v375 = vadd.f32 0.0, %v374
  %v376 = vpop.f32.mrf.mxu0
  %377 = vdwg.mxu0
  %v378 = vld [vmem:[%s4] sm:$0xff]
  %s379 = scalar_lea.vmem %s7, 64
  %v380 = vld [vmem:[%s379] sm:$0xff]
  %v381 = vld [vmem:[%s379 + $0x8] sm:$0xff]
  %v382 = vld [vmem:[%s379 + $0x10] sm:$0xff]
  %v383 = vld [vmem:[%s379 + $0x18] sm:$0xff]
  %v384 = vld [vmem:[%s379 + $0x20] sm:$0xff]
  %v385 = vld [vmem:[%s379 + $0x28] sm:$0xff]
  %v386 = vld [vmem:[%s379 + $0x30] sm:$0xff]
  %v387 = vld [vmem:[%s379 + $0x38] sm:$0xff]
  %388 = vmatprep.subr.mxu0 0.0
  %389 = vmatpush1.msra.mxu0 0.0
  %390 = vmatprep.subr.mxu0 0.0
  %391 = vmatpush1.msra.mxu0 0.0
  %392 = vmatprep.subr.mxu0 0.0
  %393 = vmatpush1.msra.mxu0 0.0
  %394 = vmatprep.subr.mxu0 0.0
  %395 = vmatpush1.msra.mxu0 0.0
  %396 = vmatprep.subr.mxu0 0.0
  %397 = vmatpush1.msra.mxu0 0.0
  %398 = vmatprep.subr.mxu0 0.0
  %399 = vmatpush1.msra.mxu0 0.0
  %400 = vmatprep.subr.mxu0 0.0
  %401 = vmatpush1.msra.mxu0 0.0
  %402 = vmatprep.subr.mxu0 0.0
  %403 = vmatpush1.msra.mxu0 0.0
  %404 = vmatprep.subr.mxu0 0.0
  %405 = vmatpush1.msra.mxu0 %v387
  %406 = vmatprep.subr.mxu0 0.0
  %407 = vmatpush1.msra.mxu0 %v386
  %408 = vmatprep.subr.mxu0 0.0
  %409 = vmatpush1.msra.mxu0 %v385
  %410 = vmatprep.subr.mxu0 0.0
  %411 = vmatpush1.msra.mxu0 %v384
  %412 = vmatprep.subr.mxu0 0.0
  %413 = vmatpush1.msra.mxu0 %v383
  %414 = vmatprep.subr.mxu0 0.0
  %415 = vmatpush1.msra.mxu0 %v382
  %416 = vmatprep.subr.mxu0 0.0
  %417 = vmatpush1.msra.mxu0 %v381
  %418 = vmatprep.subr.mxu0 0.0
  %419 = vmatpush1.msra.mxu0 %v380
  %420 = vmatprep.subr.mxu0 0.0
  %421 = vmatpush2.msra.mxu0 0.0
  %422 = vmatprep.subr.mxu0 0.0
  %423 = vmatpush2.msra.mxu0 0.0
  %424 = vmatprep.subr.mxu0 0.0
  %425 = vmatpush2.msra.mxu0 0.0
  %426 = vmatprep.subr.mxu0 0.0
  %427 = vmatpush2.msra.mxu0 0.0
  %428 = vmatprep.subr.mxu0 0.0
  %429 = vmatpush2.msra.mxu0 0.0
  %430 = vmatprep.subr.mxu0 0.0
  %431 = vmatpush2.msra.mxu0 0.0
  %432 = vmatprep.subr.mxu0 0.0
  %433 = vmatpush2.msra.mxu0 0.0
  %434 = vmatprep.subr.mxu0 0.0
  %435 = vmatpush2.msra.mxu0 0.0
  %436 = vmatprep.subr.mxu0 0.0
  %437 = vmatpush2.msra.mxu0 0.0
  %438 = vmatprep.subr.mxu0 0.0
  %439 = vmatpush2.msra.mxu0 0.0
  %440 = vmatprep.subr.mxu0 0.0
  %441 = vmatpush2.msra.mxu0 0.0
  %442 = vmatprep.subr.mxu0 0.0
  %443 = vmatpush2.msra.mxu0 0.0
  %444 = vmatprep.subr.mxu0 0.0
  %445 = vmatpush2.msra.mxu0 0.0
  %446 = vmatprep.subr.mxu0 0.0
  %447 = vmatpush2.msra.mxu0 0.0
  %448 = vmatprep.subr.mxu0 0.0
  %449 = vmatpush2.msra.mxu0 0.0
  %450 = vmatprep.subr.mxu0 0.0
  %451 = vmatpush2.msra.mxu0 0.0
  %452 = vmatprep.mubr.f32.mxu0 0.0
  %453 = vmatmul.mubr.f32.gmra.mxu0 %v306
  %v454 = vpop.f32.mrf.mxu0
  %v455 = vadd.f32 0.0, %v454
  %v456 = vpop.f32.mrf.mxu0
  %457 = vdwg.mxu0
  %vm458 = vcmask 64512
  %v460 = vsel %vm458, %v378, 0
  %462 = vmatprep.subr.mxu0 0.0
  %463 = vmatpush1.msra.mxu0 0.0
  %464 = vmatprep.subr.mxu0 0.0
  %465 = vmatpush1.msra.mxu0 0.0
  %466 = vmatprep.subr.mxu0 0.0
  %467 = vmatpush1.msra.mxu0 0.0
  %468 = vmatprep.subr.mxu0 0.0
  %469 = vmatpush1.msra.mxu0 0.0
  %470 = vmatprep.subr.mxu0 0.0
  %471 = vmatpush1.msra.mxu0 0.0
  %472 = vmatprep.subr.mxu0 0.0
  %473 = vmatpush1.msra.mxu0 0.0
  %474 = vmatprep.subr.mxu0 0.0
  %475 = vmatpush1.msra.mxu0 0.0
  %476 = vmatprep.subr.mxu0 0.0
  %477 = vmatpush1.msra.mxu0 0.0
  %478 = vmatprep.subr.mxu0 0.0
  %479 = vmatpush1.msra.mxu0 0.0
  %480 = vmatprep.subr.mxu0 0.0
  %481 = vmatpush1.msra.mxu0 0.0
  %482 = vmatprep.subr.mxu0 0.0
  %483 = vmatpush1.msra.mxu0 0.0
  %484 = vmatprep.subr.mxu0 0.0
  %485 = vmatpush1.msra.mxu0 0.0
  %486 = vmatprep.subr.mxu0 0.0
  %487 = vmatpush1.msra.mxu0 0.0
  %488 = vmatprep.subr.mxu0 0.0
  %489 = vmatpush1.msra.mxu0 0.0
  %490 = vmatprep.subr.mxu0 0.0
  %491 = vmatpush1.msra.mxu0 0.0
  %492 = vmatprep.subr.mxu0 0.0
  %493 = vmatpush1.msra.mxu0 %v375
  %494 = vmatprep.subr.mxu0 0.0
  %495 = vmatpush2.msra.mxu0 0.0
  %496 = vmatprep.subr.mxu0 0.0
  %497 = vmatpush2.msra.mxu0 0.0
  %498 = vmatprep.subr.mxu0 0.0
  %499 = vmatpush2.msra.mxu0 0.0
  %500 = vmatprep.subr.mxu0 0.0
  %501 = vmatpush2.msra.mxu0 0.0
  %502 = vmatprep.subr.mxu0 0.0
  %503 = vmatpush2.msra.mxu0 0.0
  %504 = vmatprep.subr.mxu0 0.0
  %505 = vmatpush2.msra.mxu0 0.0
  %506 = vmatprep.subr.mxu0 0.0
  %507 = vmatpush2.msra.mxu0 0.0
  %508 = vmatprep.subr.mxu0 0.0
  %509 = vmatpush2.msra.mxu0 0.0
  %510 = vmatprep.subr.mxu0 0.0
  %511 = vmatpush2.msra.mxu0 0.0
  %512 = vmatprep.subr.mxu0 0.0
  %513 = vmatpush2.msra.mxu0 0.0
  %514 = vmatprep.subr.mxu0 0.0
  %515 = vmatpush2.msra.mxu0 0.0
  %516 = vmatprep.subr.mxu0 0.0
  %517 = vmatpush2.msra.mxu0 0.0
  %518 = vmatprep.subr.mxu0 0.0
  %519 = vmatpush2.msra.mxu0 0.0
  %520 = vmatprep.subr.mxu0 0.0
  %521 = vmatpush2.msra.mxu0 0.0
  %522 = vmatprep.subr.mxu0 0.0
  %523 = vmatpush2.msra.mxu0 0.0
  %524 = vmatprep.subr.mxu0 0.0
  %525 = vmatpush2.msra.mxu0 0.0
  %526 = vmatprep.mubr.f32.mxu0 0.0
  %527 = vmatmul.mubr.f32.gmra.mxu0 %v460
  %v528 = vpop.f32.mrf.mxu0
  %v529 = vadd.f32 %v455, %v528
  %v530 = vpop.f32.mrf.mxu0
  %531 = vdwg.mxu0
  %s532 = scalar_lea.vmem %s7, 128
  %v533 = vld [vmem:[%s532] sm:$0xff]
  %v534 = vld [vmem:[%s532 + $0x8] sm:$0xff]
  %v535 = vld [vmem:[%s532 + $0x10] sm:$0xff]
  %v536 = vld [vmem:[%s532 + $0x18] sm:$0xff]
  %v537 = vld [vmem:[%s532 + $0x20] sm:$0xff]
  %v538 = vld [vmem:[%s532 + $0x28] sm:$0xff]
  %v539 = vld [vmem:[%s532 + $0x30] sm:$0xff]
  %v540 = vld [vmem:[%s532 + $0x38] sm:$0xff]
  %541 = vmatprep.subr.mxu0 0.0
  %542 = vmatpush1.msra.mxu0 0.0
  %543 = vmatprep.subr.mxu0 0.0
  %544 = vmatpush1.msra.mxu0 0.0
  %545 = vmatprep.subr.mxu0 0.0
  %546 = vmatpush1.msra.mxu0 0.0
  %547 = vmatprep.subr.mxu0 0.0
  %548 = vmatpush1.msra.mxu0 0.0
  %549 = vmatprep.subr.mxu0 0.0
  %550 = vmatpush1.msra.mxu0 0.0
  %551 = vmatprep.subr.mxu0 0.0
  %552 = vmatpush1.msra.mxu0 0.0
  %553 = vmatprep.subr.mxu0 0.0
  %554 = vmatpush1.msra.mxu0 0.0
  %555 = vmatprep.subr.mxu0 0.0
  %556 = vmatpush1.msra.mxu0 0.0
  %557 = vmatprep.subr.mxu0 0.0
  %558 = vmatpush1.msra.mxu0 %v540
  %559 = vmatprep.subr.mxu0 0.0
  %560 = vmatpush1.msra.mxu0 %v539
  %561 = vmatprep.subr.mxu0 0.0
  %562 = vmatpush1.msra.mxu0 %v538
  %563 = vmatprep.subr.mxu0 0.0
  %564 = vmatpush1.msra.mxu0 %v537
  %565 = vmatprep.subr.mxu0 0.0
  %566 = vmatpush1.msra.mxu0 %v536
  %567 = vmatprep.subr.mxu0 0.0
  %568 = vmatpush1.msra.mxu0 %v535
  %569 = vmatprep.subr.mxu0 0.0
  %570 = vmatpush1.msra.mxu0 %v534
  %571 = vmatprep.subr.mxu0 0.0
  %572 = vmatpush1.msra.mxu0 %v533
  %573 = vmatprep.subr.mxu0 0.0
  %574 = vmatpush2.msra.mxu0 0.0
  %575 = vmatprep.subr.mxu0 0.0
  %576 = vmatpush2.msra.mxu0 0.0
  %577 = vmatprep.subr.mxu0 0.0
  %578 = vmatpush2.msra.mxu0 0.0
  %579 = vmatprep.subr.mxu0 0.0
  %580 = vmatpush2.msra.mxu0 0.0
  %581 = vmatprep.subr.mxu0 0.0
  %582 = vmatpush2.msra.mxu0 0.0
  %583 = vmatprep.subr.mxu0 0.0
  %584 = vmatpush2.msra.mxu0 0.0
  %585 = vmatprep.subr.mxu0 0.0
  %586 = vmatpush2.msra.mxu0 0.0
  %587 = vmatprep.subr.mxu0 0.0
  %588 = vmatpush2.msra.mxu0 0.0
  %589 = vmatprep.subr.mxu0 0.0
  %590 = vmatpush2.msra.mxu0 0.0
  %591 = vmatprep.subr.mxu0 0.0
  %592 = vmatpush2.msra.mxu0 0.0
  %593 = vmatprep.subr.mxu0 0.0
  %594 = vmatpush2.msra.mxu0 0.0
  %595 = vmatprep.subr.mxu0 0.0
  %596 = vmatpush2.msra.mxu0 0.0
  %597 = vmatprep.subr.mxu0 0.0
  %598 = vmatpush2.msra.mxu0 0.0
  %599 = vmatprep.subr.mxu0 0.0
  %600 = vmatpush2.msra.mxu0 0.0
  %601 = vmatprep.subr.mxu0 0.0
  %602 = vmatpush2.msra.mxu0 0.0
  %603 = vmatprep.subr.mxu0 0.0
  %604 = vmatpush2.msra.mxu0 0.0
  %605 = vmatprep.mubr.f32.mxu0 0.0
  %606 = vmatmul.mubr.f32.gmra.mxu0 %v306
  %v607 = vpop.f32.mrf.mxu0
  %v608 = vadd.f32 0.0, %v607
  %v609 = vpop.f32.mrf.mxu0
  %610 = vdwg.mxu0
  %s611 = scalar_lea.vmem %s4, 16
  %v612 = vld [vmem:[%s611] sm:$0xff]
  %v614 = vsel %vm458, %v612, 0
  %616 = vmatprep.subr.mxu0 0.0
  %617 = vmatpush1.msra.mxu0 0.0
  %618 = vmatprep.subr.mxu0 0.0
  %619 = vmatpush1.msra.mxu0 0.0
  %620 = vmatprep.subr.mxu0 0.0
  %621 = vmatpush1.msra.mxu0 0.0
  %622 = vmatprep.subr.mxu0 0.0
  %623 = vmatpush1.msra.mxu0 0.0
  %624 = vmatprep.subr.mxu0 0.0
  %625 = vmatpush1.msra.mxu0 0.0
  %626 = vmatprep.subr.mxu0 0.0
  %627 = vmatpush1.msra.mxu0 0.0
  %628 = vmatprep.subr.mxu0 0.0
  %629 = vmatpush1.msra.mxu0 0.0
  %630 = vmatprep.subr.mxu0 0.0
  %631 = vmatpush1.msra.mxu0 0.0
  %632 = vmatprep.subr.mxu0 0.0
  %633 = vmatpush1.msra.mxu0 0.0
  %634 = vmatprep.subr.mxu0 0.0
  %635 = vmatpush1.msra.mxu0 0.0
  %636 = vmatprep.subr.mxu0 0.0
  %637 = vmatpush1.msra.mxu0 0.0
  %638 = vmatprep.subr.mxu0 0.0
  %639 = vmatpush1.msra.mxu0 0.0
  %640 = vmatprep.subr.mxu0 0.0
  %641 = vmatpush1.msra.mxu0 0.0
  %642 = vmatprep.subr.mxu0 0.0
  %643 = vmatpush1.msra.mxu0 0.0
  %644 = vmatprep.subr.mxu0 0.0
  %645 = vmatpush1.msra.mxu0 0.0
  %646 = vmatprep.subr.mxu0 0.0
  %647 = vmatpush1.msra.mxu0 %v608
  %648 = vmatprep.subr.mxu0 0.0
  %649 = vmatpush2.msra.mxu0 0.0
  %650 = vmatprep.subr.mxu0 0.0
  %651 = vmatpush2.msra.mxu0 0.0
  %652 = vmatprep.subr.mxu0 0.0
  %653 = vmatpush2.msra.mxu0 0.0
  %654 = vmatprep.subr.mxu0 0.0
  %655 = vmatpush2.msra.mxu0 0.0
  %656 = vmatprep.subr.mxu0 0.0
  %657 = vmatpush2.msra.mxu0 0.0
  %658 = vmatprep.subr.mxu0 0.0
  %659 = vmatpush2.msra.mxu0 0.0
  %660 = vmatprep.subr.mxu0 0.0
  %661 = vmatpush2.msra.mxu0 0.0
  %662 = vmatprep.subr.mxu0 0.0
  %663 = vmatpush2.msra.mxu0 0.0
  %664 = vmatprep.subr.mxu0 0.0
  %665 = vmatpush2.msra.mxu0 0.0
  %666 = vmatprep.subr.mxu0 0.0
  %667 = vmatpush2.msra.mxu0 0.0
  %668 = vmatprep.subr.mxu0 0.0
  %669 = vmatpush2.msra.mxu0 0.0
  %670 = vmatprep.subr.mxu0 0.0
  %671 = vmatpush2.msra.mxu0 0.0
  %672 = vmatprep.subr.mxu0 0.0
  %673 = vmatpush2.msra.mxu0 0.0
  %674 = vmatprep.subr.mxu0 0.0
  %675 = vmatpush2.msra.mxu0 0.0
  %676 = vmatprep.subr.mxu0 0.0
  %677 = vmatpush2.msra.mxu0 0.0
  %678 = vmatprep.subr.mxu0 0.0
  %679 = vmatpush2.msra.mxu0 0.0
  %680 = vmatprep.mubr.f32.mxu0 0.0
  %681 = vmatmul.mubr.f32.gmra.mxu0 %v614
  %v682 = vpop.f32.mrf.mxu0
  %v683 = vadd.f32 0.0, %v682
  %v684 = vpop.f32.mrf.mxu0
  %685 = vdwg.mxu0
  %v686 = vadd.f32 %v529, %v683
  %v687 = vld [vmem:[%s8] sm:$0x1]
  %v689 = vlaneseq
  %v690 = vshrl.u32 %v689, 7
  %v691 = vsub.s32 0, %v690
  %v692 = vrot.slane %v687, %v691
  %v694 = vadd.f32 %v686, %v692
  %v695 = vld [vmem:[%s9] sm:$0xff]
  %v696 = vld [vmem:[%s9 + $0x8] sm:$0xff]
  %v697 = vld [vmem:[%s9 + $0x10] sm:$0xff]
  %v698 = vld [vmem:[%s9 + $0x18] sm:$0xff]
  %v699 = vld [vmem:[%s9 + $0x20] sm:$0xff]
  %v700 = vld [vmem:[%s9 + $0x28] sm:$0xff]
  %v701 = vld [vmem:[%s9 + $0x30] sm:$0xff]
  %v702 = vld [vmem:[%s9 + $0x38] sm:$0xff]
  %v703 = vld [vmem:[%s10] sm:$0x1]
  %v705 = vlaneseq
  %v706 = vshrl.u32 %v705, 7
  %v707 = vsub.s32 0, %v706
  %v708 = vrot.slane %v703, %v707
  %v711 = vsel %vm223, %v694, 0
  %713 = vmatprep.subr.mxu0 0.0
  %714 = vmatpush1.msra.mxu0 0.0
  %715 = vmatprep.subr.mxu0 0.0
  %716 = vmatpush1.msra.mxu0 0.0
  %717 = vmatprep.subr.mxu0 0.0
  %718 = vmatpush1.msra.mxu0 0.0
  %719 = vmatprep.subr.mxu0 0.0
  %720 = vmatpush1.msra.mxu0 0.0
  %721 = vmatprep.subr.mxu0 0.0
  %722 = vmatpush1.msra.mxu0 0.0
  %723 = vmatprep.subr.mxu0 0.0
  %724 = vmatpush1.msra.mxu0 0.0
  %725 = vmatprep.subr.mxu0 0.0
  %726 = vmatpush1.msra.mxu0 0.0
  %727 = vmatprep.subr.mxu0 0.0
  %728 = vmatpush1.msra.mxu0 0.0
  %729 = vmatprep.subr.mxu0 0.0
  %730 = vmatpush1.msra.mxu0 %v702
  %731 = vmatprep.subr.mxu0 0.0
  %732 = vmatpush1.msra.mxu0 %v701
  %733 = vmatprep.subr.mxu0 0.0
  %734 = vmatpush1.msra.mxu0 %v700
  %735 = vmatprep.subr.mxu0 0.0
  %736 = vmatpush1.msra.mxu0 %v699
  %737 = vmatprep.subr.mxu0 0.0
  %738 = vmatpush1.msra.mxu0 %v698
  %739 = vmatprep.subr.mxu0 0.0
  %740 = vmatpush1.msra.mxu0 %v697
  %741 = vmatprep.subr.mxu0 0.0
  %742 = vmatpush1.msra.mxu0 %v696
  %743 = vmatprep.subr.mxu0 0.0
  %744 = vmatpush1.msra.mxu0 %v695
  %745 = vmatprep.subr.mxu0 0.0
  %746 = vmatpush2.msra.mxu0 0.0
  %747 = vmatprep.subr.mxu0 0.0
  %748 = vmatpush2.msra.mxu0 0.0
  %749 = vmatprep.subr.mxu0 0.0
  %750 = vmatpush2.msra.mxu0 0.0
  %751 = vmatprep.subr.mxu0 0.0
  %752 = vmatpush2.msra.mxu0 0.0
  %753 = vmatprep.subr.mxu0 0.0
  %754 = vmatpush2.msra.mxu0 0.0
  %755 = vmatprep.subr.mxu0 0.0
  %756 = vmatpush2.msra.mxu0 0.0
  %757 = vmatprep.subr.mxu0 0.0
  %758 = vmatpush2.msra.mxu0 0.0
  %759 = vmatprep.subr.mxu0 0.0
  %760 = vmatpush2.msra.mxu0 0.0
  %761 = vmatprep.subr.mxu0 0.0
  %762 = vmatpush2.msra.mxu0 0.0
  %763 = vmatprep.subr.mxu0 0.0
  %764 = vmatpush2.msra.mxu0 0.0
  %765 = vmatprep.subr.mxu0 0.0
  %766 = vmatpush2.msra.mxu0 0.0
  %767 = vmatprep.subr.mxu0 0.0
  %768 = vmatpush2.msra.mxu0 0.0
  %769 = vmatprep.subr.mxu0 0.0
  %770 = vmatpush2.msra.mxu0 0.0
  %771 = vmatprep.subr.mxu0 0.0
  %772 = vmatpush2.msra.mxu0 0.0
  %773 = vmatprep.subr.mxu0 0.0
  %774 = vmatpush2.msra.mxu0 0.0
  %775 = vmatprep.subr.mxu0 0.0
  %776 = vmatpush2.msra.mxu0 0.0
  %777 = vmatprep.mubr.f32.mxu0 0.0
  %778 = vmatmul.mubr.f32.gmra.mxu0 %v711
  %v779 = vpop.f32.mrf.mxu0
  %v780 = vadd.f32 %v708, %v779
  %v781 = vpop.f32.mrf.mxu0
  %782 = vdwg.mxu0
  %v783 = vadd.f32 %v205, %v780
  %v784 = vmax.f32 %v783, 0.0
  %s785 = scalar_lea.vmem %s5, 64
  %v786 = vld [vmem:[%s785] sm:$0xff]
  %v787 = vld [vmem:[%s785 + $0x8] sm:$0xff]
  %v788 = vld [vmem:[%s785 + $0x10] sm:$0xff]
  %v789 = vld [vmem:[%s785 + $0x18] sm:$0xff]
  %v790 = vld [vmem:[%s785 + $0x20] sm:$0xff]
  %v791 = vld [vmem:[%s785 + $0x28] sm:$0xff]
  %v792 = vld [vmem:[%s785 + $0x30] sm:$0xff]
  %v793 = vld [vmem:[%s785 + $0x38] sm:$0xff]
  %s794 = scalar_lea.vmem %s6, 1
  %v795 = vld [vmem:[%s794] sm:$0x1]
  %v797 = vlaneseq
  %v798 = vshrl.u32 %v797, 7
  %v799 = vsub.s32 0, %v798
  %v800 = vrot.slane %v795, %v799
  %v803 = vsel %vm223, %v784, 0
  %805 = vmatprep.subr.mxu0 0.0
  %806 = vmatpush1.msra.mxu0 0.0
  %807 = vmatprep.subr.mxu0 0.0
  %808 = vmatpush1.msra.mxu0 0.0
  %809 = vmatprep.subr.mxu0 0.0
  %810 = vmatpush1.msra.mxu0 0.0
  %811 = vmatprep.subr.mxu0 0.0
  %812 = vmatpush1.msra.mxu0 0.0
  %813 = vmatprep.subr.mxu0 0.0
  %814 = vmatpush1.msra.mxu0 0.0
  %815 = vmatprep.subr.mxu0 0.0
  %816 = vmatpush1.msra.mxu0 0.0
  %817 = vmatprep.subr.mxu0 0.0
  %818 = vmatpush1.msra.mxu0 0.0
  %819 = vmatprep.subr.mxu0 0.0
  %820 = vmatpush1.msra.mxu0 0.0
  %821 = vmatprep.subr.mxu0 0.0
  %822 = vmatpush1.msra.mxu0 %v793
  %823 = vmatprep.subr.mxu0 0.0
  %824 = vmatpush1.msra.mxu0 %v792
  %825 = vmatprep.subr.mxu0 0.0
  %826 = vmatpush1.msra.mxu0 %v791
  %827 = vmatprep.subr.mxu0 0.0
  %828 = vmatpush1.msra.mxu0 %v790
  %829 = vmatprep.subr.mxu0 0.0
  %830 = vmatpush1.msra.mxu0 %v789
  %831 = vmatprep.subr.mxu0 0.0
  %832 = vmatpush1.msra.mxu0 %v788
  %833 = vmatprep.subr.mxu0 0.0
  %834 = vmatpush1.msra.mxu0 %v787
  %835 = vmatprep.subr.mxu0 0.0
  %836 = vmatpush1.msra.mxu0 %v786
  %837 = vmatprep.subr.mxu0 0.0
  %838 = vmatpush2.msra.mxu0 0.0
  %839 = vmatprep.subr.mxu0 0.0
  %840 = vmatpush2.msra.mxu0 0.0
  %841 = vmatprep.subr.mxu0 0.0
  %842 = vmatpush2.msra.mxu0 0.0
  %843 = vmatprep.subr.mxu0 0.0
  %844 = vmatpush2.msra.mxu0 0.0
  %845 = vmatprep.subr.mxu0 0.0
  %846 = vmatpush2.msra.mxu0 0.0
  %847 = vmatprep.subr.mxu0 0.0
  %848 = vmatpush2.msra.mxu0 0.0
  %849 = vmatprep.subr.mxu0 0.0
  %850 = vmatpush2.msra.mxu0 0.0
  %851 = vmatprep.subr.mxu0 0.0
  %852 = vmatpush2.msra.mxu0 0.0
  %853 = vmatprep.subr.mxu0 0.0
  %854 = vmatpush2.msra.mxu0 0.0
  %855 = vmatprep.subr.mxu0 0.0
  %856 = vmatpush2.msra.mxu0 0.0
  %857 = vmatprep.subr.mxu0 0.0
  %858 = vmatpush2.msra.mxu0 0.0
  %859 = vmatprep.subr.mxu0 0.0
  %860 = vmatpush2.msra.mxu0 0.0
  %861 = vmatprep.subr.mxu0 0.0
  %862 = vmatpush2.msra.mxu0 0.0
  %863 = vmatprep.subr.mxu0 0.0
  %864 = vmatpush2.msra.mxu0 0.0
  %865 = vmatprep.subr.mxu0 0.0
  %866 = vmatpush2.msra.mxu0 0.0
  %867 = vmatprep.subr.mxu0 0.0
  %868 = vmatpush2.msra.mxu0 0.0
  %869 = vmatprep.mubr.f32.mxu0 0.0
  %870 = vmatmul.mubr.f32.gmra.mxu0 %v803
  %v871 = vpop.f32.mrf.mxu0
  %v872 = vadd.f32 %v800, %v871
  %v873 = vpop.f32.mrf.mxu0
  %874 = vdwg.mxu0
  %s875 = scalar_lea.vmem %s7, 192
  %v876 = vld [vmem:[%s875] sm:$0xff]
  %v877 = vld [vmem:[%s875 + $0x8] sm:$0xff]
  %v878 = vld [vmem:[%s875 + $0x10] sm:$0xff]
  %v879 = vld [vmem:[%s875 + $0x18] sm:$0xff]
  %v880 = vld [vmem:[%s875 + $0x20] sm:$0xff]
  %v881 = vld [vmem:[%s875 + $0x28] sm:$0xff]
  %v882 = vld [vmem:[%s875 + $0x30] sm:$0xff]
  %v883 = vld [vmem:[%s875 + $0x38] sm:$0xff]
  %v885 = vsel %vm223, %v872, 0
  %887 = vmatprep.subr.mxu0 0.0
  %888 = vmatpush1.msra.mxu0 0.0
  %889 = vmatprep.subr.mxu0 0.0
  %890 = vmatpush1.msra.mxu0 0.0
  %891 = vmatprep.subr.mxu0 0.0
  %892 = vmatpush1.msra.mxu0 0.0
  %893 = vmatprep.subr.mxu0 0.0
  %894 = vmatpush1.msra.mxu0 0.0
  %895 = vmatprep.subr.mxu0 0.0
  %896 = vmatpush1.msra.mxu0 0.0
  %897 = vmatprep.subr.mxu0 0.0
  %898 = vmatpush1.msra.mxu0 0.0
  %899 = vmatprep.subr.mxu0 0.0
  %900 = vmatpush1.msra.mxu0 0.0
  %901 = vmatprep.subr.mxu0 0.0
  %902 = vmatpush1.msra.mxu0 0.0
  %903 = vmatprep.subr.mxu0 0.0
  %904 = vmatpush1.msra.mxu0 %v883
  %905 = vmatprep.subr.mxu0 0.0
  %906 = vmatpush1.msra.mxu0 %v882
  %907 = vmatprep.subr.mxu0 0.0
  %908 = vmatpush1.msra.mxu0 %v881
  %909 = vmatprep.subr.mxu0 0.0
  %910 = vmatpush1.msra.mxu0 %v880
  %911 = vmatprep.subr.mxu0 0.0
  %912 = vmatpush1.msra.mxu0 %v879
  %913 = vmatprep.subr.mxu0 0.0
  %914 = vmatpush1.msra.mxu0 %v878
  %915 = vmatprep.subr.mxu0 0.0
  %916 = vmatpush1.msra.mxu0 %v877
  %917 = vmatprep.subr.mxu0 0.0
  %918 = vmatpush1.msra.mxu0 %v876
  %919 = vmatprep.subr.mxu0 0.0
  %920 = vmatpush2.msra.mxu0 0.0
  %921 = vmatprep.subr.mxu0 0.0
  %922 = vmatpush2.msra.mxu0 0.0
  %923 = vmatprep.subr.mxu0 0.0
  %924 = vmatpush2.msra.mxu0 0.0
  %925 = vmatprep.subr.mxu0 0.0
  %926 = vmatpush2.msra.mxu0 0.0
  %927 = vmatprep.subr.mxu0 0.0
  %928 = vmatpush2.msra.mxu0 0.0
  %929 = vmatprep.subr.mxu0 0.0
  %930 = vmatpush2.msra.mxu0 0.0
  %931 = vmatprep.subr.mxu0 0.0
  %932 = vmatpush2.msra.mxu0 0.0
  %933 = vmatprep.subr.mxu0 0.0
  %934 = vmatpush2.msra.mxu0 0.0
  %935 = vmatprep.subr.mxu0 0.0
  %936 = vmatpush2.msra.mxu0 0.0
  %937 = vmatprep.subr.mxu0 0.0
  %938 = vmatpush2.msra.mxu0 0.0
  %939 = vmatprep.subr.mxu0 0.0
  %940 = vmatpush2.msra.mxu0 0.0
  %941 = vmatprep.subr.mxu0 0.0
  %942 = vmatpush2.msra.mxu0 0.0
  %943 = vmatprep.subr.mxu0 0.0
  %944 = vmatpush2.msra.mxu0 0.0
  %945 = vmatprep.subr.mxu0 0.0
  %946 = vmatpush2.msra.mxu0 0.0
  %947 = vmatprep.subr.mxu0 0.0
  %948 = vmatpush2.msra.mxu0 0.0
  %949 = vmatprep.subr.mxu0 0.0
  %950 = vmatpush2.msra.mxu0 0.0
  %951 = vmatprep.mubr.f32.mxu0 0.0
  %952 = vmatmul.mubr.f32.gmra.mxu0 %v885
  %v953 = vpop.f32.mrf.mxu0
  %v954 = vadd.f32 0.0, %v953
  %v955 = vpop.f32.mrf.mxu0
  %956 = vdwg.mxu0
  %s957 = scalar_lea.vmem %s7, 256
  %v958 = vld [vmem:[%s957] sm:$0xff]
  %v959 = vld [vmem:[%s957 + $0x8] sm:$0xff]
  %v960 = vld [vmem:[%s957 + $0x10] sm:$0xff]
  %v961 = vld [vmem:[%s957 + $0x18] sm:$0xff]
  %v962 = vld [vmem:[%s957 + $0x20] sm:$0xff]
  %v963 = vld [vmem:[%s957 + $0x28] sm:$0xff]
  %v964 = vld [vmem:[%s957 + $0x30] sm:$0xff]
  %v965 = vld [vmem:[%s957 + $0x38] sm:$0xff]
  %966 = vmatprep.subr.mxu0 0.0
  %967 = vmatpush1.msra.mxu0 0.0
  %968 = vmatprep.subr.mxu0 0.0
  %969 = vmatpush1.msra.mxu0 0.0
  %970 = vmatprep.subr.mxu0 0.0
  %971 = vmatpush1.msra.mxu0 0.0
  %972 = vmatprep.subr.mxu0 0.0
  %973 = vmatpush1.msra.mxu0 0.0
  %974 = vmatprep.subr.mxu0 0.0
  %975 = vmatpush1.msra.mxu0 0.0
  %976 = vmatprep.subr.mxu0 0.0
  %977 = vmatpush1.msra.mxu0 0.0
  %978 = vmatprep.subr.mxu0 0.0
  %979 = vmatpush1.msra.mxu0 0.0
  %980 = vmatprep.subr.mxu0 0.0
  %981 = vmatpush1.msra.mxu0 0.0
  %982 = vmatprep.subr.mxu0 0.0
  %983 = vmatpush1.msra.mxu0 %v965
  %984 = vmatprep.subr.mxu0 0.0
  %985 = vmatpush1.msra.mxu0 %v964
  %986 = vmatprep.subr.mxu0 0.0
  %987 = vmatpush1.msra.mxu0 %v963
  %988 = vmatprep.subr.mxu0 0.0
  %989 = vmatpush1.msra.mxu0 %v962
  %990 = vmatprep.subr.mxu0 0.0
  %991 = vmatpush1.msra.mxu0 %v961
  %992 = vmatprep.subr.mxu0 0.0
  %993 = vmatpush1.msra.mxu0 %v960
  %994 = vmatprep.subr.mxu0 0.0
  %995 = vmatpush1.msra.mxu0 %v959
  %996 = vmatprep.subr.mxu0 0.0
  %997 = vmatpush1.msra.mxu0 %v958
  %998 = vmatprep.subr.mxu0 0.0
  %999 = vmatpush2.msra.mxu0 0.0
  %1000 = vmatprep.subr.mxu0 0.0
  %1001 = vmatpush2.msra.mxu0 0.0
  %1002 = vmatprep.subr.mxu0 0.0
  %1003 = vmatpush2.msra.mxu0 0.0
  %1004 = vmatprep.subr.mxu0 0.0
  %1005 = vmatpush2.msra.mxu0 0.0
  %1006 = vmatprep.subr.mxu0 0.0
  %1007 = vmatpush2.msra.mxu0 0.0
  %1008 = vmatprep.subr.mxu0 0.0
  %1009 = vmatpush2.msra.mxu0 0.0
  %1010 = vmatprep.subr.mxu0 0.0
  %1011 = vmatpush2.msra.mxu0 0.0
  %1012 = vmatprep.subr.mxu0 0.0
  %1013 = vmatpush2.msra.mxu0 0.0
  %1014 = vmatprep.subr.mxu0 0.0
  %1015 = vmatpush2.msra.mxu0 0.0
  %1016 = vmatprep.subr.mxu0 0.0
  %1017 = vmatpush2.msra.mxu0 0.0
  %1018 = vmatprep.subr.mxu0 0.0
  %1019 = vmatpush2.msra.mxu0 0.0
  %1020 = vmatprep.subr.mxu0 0.0
  %1021 = vmatpush2.msra.mxu0 0.0
  %1022 = vmatprep.subr.mxu0 0.0
  %1023 = vmatpush2.msra.mxu0 0.0
  %1024 = vmatprep.subr.mxu0 0.0
  %1025 = vmatpush2.msra.mxu0 0.0
  %1026 = vmatprep.subr.mxu0 0.0
  %1027 = vmatpush2.msra.mxu0 0.0
  %1028 = vmatprep.subr.mxu0 0.0
  %1029 = vmatpush2.msra.mxu0 0.0
  %1030 = vmatprep.mubr.f32.mxu0 0.0
  %1031 = vmatmul.mubr.f32.gmra.mxu0 %v885
  %v1032 = vpop.f32.mrf.mxu0
  %v1033 = vadd.f32 0.0, %v1032
  %v1034 = vpop.f32.mrf.mxu0
  %1035 = vdwg.mxu0
  %1036 = vmatprep.subr.mxu0 0.0
  %1037 = vmatpush1.msra.mxu0 0.0
  %1038 = vmatprep.subr.mxu0 0.0
  %1039 = vmatpush1.msra.mxu0 0.0
  %1040 = vmatprep.subr.mxu0 0.0
  %1041 = vmatpush1.msra.mxu0 0.0
  %1042 = vmatprep.subr.mxu0 0.0
  %1043 = vmatpush1.msra.mxu0 0.0
  %1044 = vmatprep.subr.mxu0 0.0
  %1045 = vmatpush1.msra.mxu0 0.0
  %1046 = vmatprep.subr.mxu0 0.0
  %1047 = vmatpush1.msra.mxu0 0.0
  %1048 = vmatprep.subr.mxu0 0.0
  %1049 = vmatpush1.msra.mxu0 0.0
  %1050 = vmatprep.subr.mxu0 0.0
  %1051 = vmatpush1.msra.mxu0 0.0
  %1052 = vmatprep.subr.mxu0 0.0
  %1053 = vmatpush1.msra.mxu0 0.0
  %1054 = vmatprep.subr.mxu0 0.0
  %1055 = vmatpush1.msra.mxu0 0.0
  %1056 = vmatprep.subr.mxu0 0.0
  %1057 = vmatpush1.msra.mxu0 0.0
  %1058 = vmatprep.subr.mxu0 0.0
  %1059 = vmatpush1.msra.mxu0 0.0
  %1060 = vmatprep.subr.mxu0 0.0
  %1061 = vmatpush1.msra.mxu0 0.0
  %1062 = vmatprep.subr.mxu0 0.0
  %1063 = vmatpush1.msra.mxu0 0.0
  %1064 = vmatprep.subr.mxu0 0.0
  %1065 = vmatpush1.msra.mxu0 0.0
  %1066 = vmatprep.subr.mxu0 0.0
  %1067 = vmatpush1.msra.mxu0 %v954
  %1068 = vmatprep.subr.mxu0 0.0
  %1069 = vmatpush2.msra.mxu0 0.0
  %1070 = vmatprep.subr.mxu0 0.0
  %1071 = vmatpush2.msra.mxu0 0.0
  %1072 = vmatprep.subr.mxu0 0.0
  %1073 = vmatpush2.msra.mxu0 0.0
  %1074 = vmatprep.subr.mxu0 0.0
  %1075 = vmatpush2.msra.mxu0 0.0
  %1076 = vmatprep.subr.mxu0 0.0
  %1077 = vmatpush2.msra.mxu0 0.0
  %1078 = vmatprep.subr.mxu0 0.0
  %1079 = vmatpush2.msra.mxu0 0.0
  %1080 = vmatprep.subr.mxu0 0.0
  %1081 = vmatpush2.msra.mxu0 0.0
  %1082 = vmatprep.subr.mxu0 0.0
  %1083 = vmatpush2.msra.mxu0 0.0
  %1084 = vmatprep.subr.mxu0 0.0
  %1085 = vmatpush2.msra.mxu0 0.0
  %1086 = vmatprep.subr.mxu0 0.0
  %1087 = vmatpush2.msra.mxu0 0.0
  %1088 = vmatprep.subr.mxu0 0.0
  %1089 = vmatpush2.msra.mxu0 0.0
  %1090 = vmatprep.subr.mxu0 0.0
  %1091 = vmatpush2.msra.mxu0 0.0
  %1092 = vmatprep.subr.mxu0 0.0
  %1093 = vmatpush2.msra.mxu0 0.0
  %1094 = vmatprep.subr.mxu0 0.0
  %1095 = vmatpush2.msra.mxu0 0.0
  %1096 = vmatprep.subr.mxu0 0.0
  %1097 = vmatpush2.msra.mxu0 0.0
  %1098 = vmatprep.subr.mxu0 0.0
  %1099 = vmatpush2.msra.mxu0 0.0
  %1100 = vmatprep.mubr.f32.mxu0 0.0
  %1101 = vmatmul.mubr.f32.gmra.mxu0 %v460
  %v1102 = vpop.f32.mrf.mxu0
  %v1103 = vadd.f32 %v1033, %v1102
  %v1104 = vpop.f32.mrf.mxu0
  %1105 = vdwg.mxu0
  %s1106 = scalar_lea.vmem %s7, 320
  %v1107 = vld [vmem:[%s1106] sm:$0xff]
  %v1108 = vld [vmem:[%s1106 + $0x8] sm:$0xff]
  %v1109 = vld [vmem:[%s1106 + $0x10] sm:$0xff]
  %v1110 = vld [vmem:[%s1106 + $0x18] sm:$0xff]
  %v1111 = vld [vmem:[%s1106 + $0x20] sm:$0xff]
  %v1112 = vld [vmem:[%s1106 + $0x28] sm:$0xff]
  %v1113 = vld [vmem:[%s1106 + $0x30] sm:$0xff]
  %v1114 = vld [vmem:[%s1106 + $0x38] sm:$0xff]
  %1115 = vmatprep.subr.mxu0 0.0
  %1116 = vmatpush1.msra.mxu0 0.0
  %1117 = vmatprep.subr.mxu0 0.0
  %1118 = vmatpush1.msra.mxu0 0.0
  %1119 = vmatprep.subr.mxu0 0.0
  %1120 = vmatpush1.msra.mxu0 0.0
  %1121 = vmatprep.subr.mxu0 0.0
  %1122 = vmatpush1.msra.mxu0 0.0
  %1123 = vmatprep.subr.mxu0 0.0
  %1124 = vmatpush1.msra.mxu0 0.0
  %1125 = vmatprep.subr.mxu0 0.0
  %1126 = vmatpush1.msra.mxu0 0.0
  %1127 = vmatprep.subr.mxu0 0.0
  %1128 = vmatpush1.msra.mxu0 0.0
  %1129 = vmatprep.subr.mxu0 0.0
  %1130 = vmatpush1.msra.mxu0 0.0
  %1131 = vmatprep.subr.mxu0 0.0
  %1132 = vmatpush1.msra.mxu0 %v1114
  %1133 = vmatprep.subr.mxu0 0.0
  %1134 = vmatpush1.msra.mxu0 %v1113
  %1135 = vmatprep.subr.mxu0 0.0
  %1136 = vmatpush1.msra.mxu0 %v1112
  %1137 = vmatprep.subr.mxu0 0.0
  %1138 = vmatpush1.msra.mxu0 %v1111
  %1139 = vmatprep.subr.mxu0 0.0
  %1140 = vmatpush1.msra.mxu0 %v1110
  %1141 = vmatprep.subr.mxu0 0.0
  %1142 = vmatpush1.msra.mxu0 %v1109
  %1143 = vmatprep.subr.mxu0 0.0
  %1144 = vmatpush1.msra.mxu0 %v1108
  %1145 = vmatprep.subr.mxu0 0.0
  %1146 = vmatpush1.msra.mxu0 %v1107
  %1147 = vmatprep.subr.mxu0 0.0
  %1148 = vmatpush2.msra.mxu0 0.0
  %1149 = vmatprep.subr.mxu0 0.0
  %1150 = vmatpush2.msra.mxu0 0.0
  %1151 = vmatprep.subr.mxu0 0.0
  %1152 = vmatpush2.msra.mxu0 0.0
  %1153 = vmatprep.subr.mxu0 0.0
  %1154 = vmatpush2.msra.mxu0 0.0
  %1155 = vmatprep.subr.mxu0 0.0
  %1156 = vmatpush2.msra.mxu0 0.0
  %1157 = vmatprep.subr.mxu0 0.0
  %1158 = vmatpush2.msra.mxu0 0.0
  %1159 = vmatprep.subr.mxu0 0.0
  %1160 = vmatpush2.msra.mxu0 0.0
  %1161 = vmatprep.subr.mxu0 0.0
  %1162 = vmatpush2.msra.mxu0 0.0
  %1163 = vmatprep.subr.mxu0 0.0
  %1164 = vmatpush2.msra.mxu0 0.0
  %1165 = vmatprep.subr.mxu0 0.0
  %1166 = vmatpush2.msra.mxu0 0.0
  %1167 = vmatprep.subr.mxu0 0.0
  %1168 = vmatpush2.msra.mxu0 0.0
  %1169 = vmatprep.subr.mxu0 0.0
  %1170 = vmatpush2.msra.mxu0 0.0
  %1171 = vmatprep.subr.mxu0 0.0
  %1172 = vmatpush2.msra.mxu0 0.0
  %1173 = vmatprep.subr.mxu0 0.0
  %1174 = vmatpush2.msra.mxu0 0.0
  %1175 = vmatprep.subr.mxu0 0.0
  %1176 = vmatpush2.msra.mxu0 0.0
  %1177 = vmatprep.subr.mxu0 0.0
  %1178 = vmatpush2.msra.mxu0 0.0
  %1179 = vmatprep.mubr.f32.mxu0 0.0
  %1180 = vmatmul.mubr.f32.gmra.mxu0 %v885
  %v1181 = vpop.f32.mrf.mxu0
  %v1182 = vadd.f32 0.0, %v1181
  %v1183 = vpop.f32.mrf.mxu0
  %1184 = vdwg.mxu0
  %1185 = vmatprep.subr.mxu0 0.0
  %1186 = vmatpush1.msra.mxu0 0.0
  %1187 = vmatprep.subr.mxu0 0.0
  %1188 = vmatpush1.msra.mxu0 0.0
  %1189 = vmatprep.subr.mxu0 0.0
  %1190 = vmatpush1.msra.mxu0 0.0
  %1191 = vmatprep.subr.mxu0 0.0
  %1192 = vmatpush1.msra.mxu0 0.0
  %1193 = vmatprep.subr.mxu0 0.0
  %1194 = vmatpush1.msra.mxu0 0.0
  %1195 = vmatprep.subr.mxu0 0.0
  %1196 = vmatpush1.msra.mxu0 0.0
  %1197 = vmatprep.subr.mxu0 0.0
  %1198 = vmatpush1.msra.mxu0 0.0
  %1199 = vmatprep.subr.mxu0 0.0
  %1200 = vmatpush1.msra.mxu0 0.0
  %1201 = vmatprep.subr.mxu0 0.0
  %1202 = vmatpush1.msra.mxu0 0.0
  %1203 = vmatprep.subr.mxu0 0.0
  %1204 = vmatpush1.msra.mxu0 0.0
  %1205 = vmatprep.subr.mxu0 0.0
  %1206 = vmatpush1.msra.mxu0 0.0
  %1207 = vmatprep.subr.mxu0 0.0
  %1208 = vmatpush1.msra.mxu0 0.0
  %1209 = vmatprep.subr.mxu0 0.0
  %1210 = vmatpush1.msra.mxu0 0.0
  %1211 = vmatprep.subr.mxu0 0.0
  %1212 = vmatpush1.msra.mxu0 0.0
  %1213 = vmatprep.subr.mxu0 0.0
  %1214 = vmatpush1.msra.mxu0 0.0
  %1215 = vmatprep.subr.mxu0 0.0
  %1216 = vmatpush1.msra.mxu0 %v1182
  %1217 = vmatprep.subr.mxu0 0.0
  %1218 = vmatpush2.msra.mxu0 0.0
  %1219 = vmatprep.subr.mxu0 0.0
  %1220 = vmatpush2.msra.mxu0 0.0
  %1221 = vmatprep.subr.mxu0 0.0
  %1222 = vmatpush2.msra.mxu0 0.0
  %1223 = vmatprep.subr.mxu0 0.0
  %1224 = vmatpush2.msra.mxu0 0.0
  %1225 = vmatprep.subr.mxu0 0.0
  %1226 = vmatpush2.msra.mxu0 0.0
  %1227 = vmatprep.subr.mxu0 0.0
  %1228 = vmatpush2.msra.mxu0 0.0
  %1229 = vmatprep.subr.mxu0 0.0
  %1230 = vmatpush2.msra.mxu0 0.0
  %1231 = vmatprep.subr.mxu0 0.0
  %1232 = vmatpush2.msra.mxu0 0.0
  %1233 = vmatprep.subr.mxu0 0.0
  %1234 = vmatpush2.msra.mxu0 0.0
  %1235 = vmatprep.subr.mxu0 0.0
  %1236 = vmatpush2.msra.mxu0 0.0
  %1237 = vmatprep.subr.mxu0 0.0
  %1238 = vmatpush2.msra.mxu0 0.0
  %1239 = vmatprep.subr.mxu0 0.0
  %1240 = vmatpush2.msra.mxu0 0.0
  %1241 = vmatprep.subr.mxu0 0.0
  %1242 = vmatpush2.msra.mxu0 0.0
  %1243 = vmatprep.subr.mxu0 0.0
  %1244 = vmatpush2.msra.mxu0 0.0
  %1245 = vmatprep.subr.mxu0 0.0
  %1246 = vmatpush2.msra.mxu0 0.0
  %1247 = vmatprep.subr.mxu0 0.0
  %1248 = vmatpush2.msra.mxu0 0.0
  %1249 = vmatprep.mubr.f32.mxu0 0.0
  %1250 = vmatmul.mubr.f32.gmra.mxu0 %v614
  %v1251 = vpop.f32.mrf.mxu0
  %v1252 = vadd.f32 0.0, %v1251
  %v1253 = vpop.f32.mrf.mxu0
  %1254 = vdwg.mxu0
  %v1255 = vadd.f32 %v1103, %v1252
  %s1256 = scalar_lea.vmem %s8, 1
  %v1257 = vld [vmem:[%s1256] sm:$0x1]
  %v1259 = vlaneseq
  %v1260 = vshrl.u32 %v1259, 7
  %v1261 = vsub.s32 0, %v1260
  %v1262 = vrot.slane %v1257, %v1261
  %v1264 = vadd.f32 %v1255, %v1262
  %s1265 = scalar_lea.vmem %s9, 64
  %v1266 = vld [vmem:[%s1265] sm:$0xff]
  %v1267 = vld [vmem:[%s1265 + $0x8] sm:$0xff]
  %v1268 = vld [vmem:[%s1265 + $0x10] sm:$0xff]
  %v1269 = vld [vmem:[%s1265 + $0x18] sm:$0xff]
  %v1270 = vld [vmem:[%s1265 + $0x20] sm:$0xff]
  %v1271 = vld [vmem:[%s1265 + $0x28] sm:$0xff]
  %v1272 = vld [vmem:[%s1265 + $0x30] sm:$0xff]
  %v1273 = vld [vmem:[%s1265 + $0x38] sm:$0xff]
  %s1274 = scalar_lea.vmem %s10, 1
  %v1275 = vld [vmem:[%s1274] sm:$0x1]
  %v1277 = vlaneseq
  %v1278 = vshrl.u32 %v1277, 7
  %v1279 = vsub.s32 0, %v1278
  %v1280 = vrot.slane %v1275, %v1279
  %v1283 = vsel %vm223, %v1264, 0
  %1285 = vmatprep.subr.mxu0 0.0
  %1286 = vmatpush1.msra.mxu0 0.0
  %1287 = vmatprep.subr.mxu0 0.0
  %1288 = vmatpush1.msra.mxu0 0.0
  %1289 = vmatprep.subr.mxu0 0.0
  %1290 = vmatpush1.msra.mxu0 0.0
  %1291 = vmatprep.subr.mxu0 0.0
  %1292 = vmatpush1.msra.mxu0 0.0
  %1293 = vmatprep.subr.mxu0 0.0
  %1294 = vmatpush1.msra.mxu0 0.0
  %1295 = vmatprep.subr.mxu0 0.0
  %1296 = vmatpush1.msra.mxu0 0.0
  %1297 = vmatprep.subr.mxu0 0.0
  %1298 = vmatpush1.msra.mxu0 0.0
  %1299 = vmatprep.subr.mxu0 0.0
  %1300 = vmatpush1.msra.mxu0 0.0
  %1301 = vmatprep.subr.mxu0 0.0
  %1302 = vmatpush1.msra.mxu0 %v1273
  %1303 = vmatprep.subr.mxu0 0.0
  %1304 = vmatpush1.msra.mxu0 %v1272
  %1305 = vmatprep.subr.mxu0 0.0
  %1306 = vmatpush1.msra.mxu0 %v1271
  %1307 = vmatprep.subr.mxu0 0.0
  %1308 = vmatpush1.msra.mxu0 %v1270
  %1309 = vmatprep.subr.mxu0 0.0
  %1310 = vmatpush1.msra.mxu0 %v1269
  %1311 = vmatprep.subr.mxu0 0.0
  %1312 = vmatpush1.msra.mxu0 %v1268
  %1313 = vmatprep.subr.mxu0 0.0
  %1314 = vmatpush1.msra.mxu0 %v1267
  %1315 = vmatprep.subr.mxu0 0.0
  %1316 = vmatpush1.msra.mxu0 %v1266
  %1317 = vmatprep.subr.mxu0 0.0
  %1318 = vmatpush2.msra.mxu0 0.0
  %1319 = vmatprep.subr.mxu0 0.0
  %1320 = vmatpush2.msra.mxu0 0.0
  %1321 = vmatprep.subr.mxu0 0.0
  %1322 = vmatpush2.msra.mxu0 0.0
  %1323 = vmatprep.subr.mxu0 0.0
  %1324 = vmatpush2.msra.mxu0 0.0
  %1325 = vmatprep.subr.mxu0 0.0
  %1326 = vmatpush2.msra.mxu0 0.0
  %1327 = vmatprep.subr.mxu0 0.0
  %1328 = vmatpush2.msra.mxu0 0.0
  %1329 = vmatprep.subr.mxu0 0.0
  %1330 = vmatpush2.msra.mxu0 0.0
  %1331 = vmatprep.subr.mxu0 0.0
  %1332 = vmatpush2.msra.mxu0 0.0
  %1333 = vmatprep.subr.mxu0 0.0
  %1334 = vmatpush2.msra.mxu0 0.0
  %1335 = vmatprep.subr.mxu0 0.0
  %1336 = vmatpush2.msra.mxu0 0.0
  %1337 = vmatprep.subr.mxu0 0.0
  %1338 = vmatpush2.msra.mxu0 0.0
  %1339 = vmatprep.subr.mxu0 0.0
  %1340 = vmatpush2.msra.mxu0 0.0
  %1341 = vmatprep.subr.mxu0 0.0
  %1342 = vmatpush2.msra.mxu0 0.0
  %1343 = vmatprep.subr.mxu0 0.0
  %1344 = vmatpush2.msra.mxu0 0.0
  %1345 = vmatprep.subr.mxu0 0.0
  %1346 = vmatpush2.msra.mxu0 0.0
  %1347 = vmatprep.subr.mxu0 0.0
  %1348 = vmatpush2.msra.mxu0 0.0
  %1349 = vmatprep.mubr.f32.mxu0 0.0
  %1350 = vmatmul.mubr.f32.gmra.mxu0 %v1283
  %v1351 = vpop.f32.mrf.mxu0
  %v1352 = vadd.f32 %v1280, %v1351
  %v1353 = vpop.f32.mrf.mxu0
  %1354 = vdwg.mxu0
  %v1355 = vadd.f32 %v784, %v1352
  %v1356 = vmax.f32 %v1355, 0.0
  %1357 = vst.msk [vmem:[%s11] sm:$0xff] %vm223, %v1356
  // Predicated region
  $region46: #{downsample_forward.7} parent=0 // pred_check
    _
  $region47: #{downsample_forward.7} parent=0 // pred_check_branch
    %1359 = sbr.rel (0) target = $region49
  $region48: #{downsample_forward.7} parent=0 // pred_region
    _
  $region49: #{downsample_forward.7} parent=0 // pred_fallthru
    _
  // Predicated region
  $region50: #{downsample_forward.7} parent=0 // pred_check
    _
  $region51: #{downsample_forward.7} parent=0 // pred_check_branch
    %1361 = sbr.rel (0) target = $region53
  $region52: #{downsample_forward.7} parent=0 // pred_region
    _
  $region53: #{downsample_forward.7} parent=0 // pred_fallthru
    _

// kernel: downsample_forward.6
$region0: #{downsample_forward.6}
  #allocation0 [shape = 'u32[]', space=smem, size = 0x4, offset = 0x4, fixed_abs, tag = 'smem constant byte address 0x4 - core index']
  #allocation1 [shape = 'u32[144,128]{1,0:T(1,128)}', space=vmem, size = 0x12000, scoped, tag = 'internal scratch']
  %s0 = inlined_call_operand.vmem [shape: f32[32,128], index: 0, kind: input, shape index: {}]
  %s1 = inlined_call_operand.vmem [shape: f32[16,32], index: 1, kind: input, shape index: {}]
  %s2 = inlined_call_operand.vmem [shape: f32[128,128], index: 2, kind: input, shape index: {}]
  %s3 = inlined_call_operand.vmem [shape: f32[1,128], index: 3, kind: input, shape index: {}]
  %s4 = inlined_call_operand.vmem [shape: f32[3,16,16], index: 4, kind: input, shape index: {}]
  %s5 = inlined_call_operand.vmem [shape: f32[2,128,128], index: 5, kind: input, shape index: {}]
  %s6 = inlined_call_operand.vmem [shape: f32[2,1,128], index: 6, kind: input, shape index: {}]
  %s7 = inlined_call_operand.vmem [shape: f32[6,128,128], index: 7, kind: input, shape index: {}]
  %s8 = inlined_call_operand.vmem [shape: f32[2,1,128], index: 8, kind: input, shape index: {}]
  %s9 = inlined_call_operand.vmem [shape: f32[2,128,128], index: 9, kind: input, shape index: {}]
  %s10 = inlined_call_operand.vmem [shape: f32[2,1,128], index: 10, kind: input, shape index: {}]
  %s11 = inlined_call_operand.vmem [shape: f32[16,128], index: 11, kind: output, shape index: {}]
  %s12 = sld [smem:[#allocation0]]
  $region54: #{downsample_forward.6} parent=0
    _
  %s14 = ssub.s32 1, %s12
  %s15 = scalar_select 0, %s14, %s12
  // Predicated region
  $region2: #{downsample_forward.6} parent=0 // pred_check
    _
  $region3: #{downsample_forward.6} parent=0 // pred_check_branch
    %17 = sbr.rel (0) target = $region5
  $region4: #{downsample_forward.6} parent=0 // pred_region
    _
  $region5: #{downsample_forward.6} parent=0 // pred_fallthru
    _
  // Predicated region
  $region6: #{downsample_forward.6} parent=0 // pred_check
    _
  $region7: #{downsample_forward.6} parent=0 // pred_check_branch
    %19 = sbr.rel (0) target = $region9
  $region8: #{downsample_forward.6} parent=0 // pred_region
    _
  $region9: #{downsample_forward.6} parent=0 // pred_fallthru
    _
  // Predicated region
  $region10: #{downsample_forward.6} parent=0 // pred_check
    _
  $region11: #{downsample_forward.6} parent=0 // pred_check_branch
    %21 = sbr.rel (0) target = $region13
  $region12: #{downsample_forward.6} parent=0 // pred_region
    _
  $region13: #{downsample_forward.6} parent=0 // pred_fallthru
    _
  // Predicated region
  $region14: #{downsample_forward.6} parent=0 // pred_check
    _
  $region15: #{downsample_forward.6} parent=0 // pred_check_branch
    %23 = sbr.rel (0) target = $region17
  $region16: #{downsample_forward.6} parent=0 // pred_region
    _
  $region17: #{downsample_forward.6} parent=0 // pred_fallthru
    _
  // Predicated region
  $region18: #{downsample_forward.6} parent=0 // pred_check
    _
  $region19: #{downsample_forward.6} parent=0 // pred_check_branch
    %25 = sbr.rel (0) target = $region21
  $region20: #{downsample_forward.6} parent=0 // pred_region
    _
  $region21: #{downsample_forward.6} parent=0 // pred_fallthru
    _
  // Predicated region
  $region22: #{downsample_forward.6} parent=0 // pred_check
    _
  $region23: #{downsample_forward.6} parent=0 // pred_check_branch
    %27 = sbr.rel (0) target = $region25
  $region24: #{downsample_forward.6} parent=0 // pred_region
    _
  $region25: #{downsample_forward.6} parent=0 // pred_fallthru
    _
  // Predicated region
  $region26: #{downsample_forward.6} parent=0 // pred_check
    _
  $region27: #{downsample_forward.6} parent=0 // pred_check_branch
    %29 = sbr.rel (0) target = $region29
  $region28: #{downsample_forward.6} parent=0 // pred_region
    _
  $region29: #{downsample_forward.6} parent=0 // pred_fallthru
    _
  // Predicated region
  $region30: #{downsample_forward.6} parent=0 // pred_check
    _
  $region31: #{downsample_forward.6} parent=0 // pred_check_branch
    %31 = sbr.rel (0) target = $region33
  $region32: #{downsample_forward.6} parent=0 // pred_region
    _
  $region33: #{downsample_forward.6} parent=0 // pred_fallthru
    _
  // Predicated region
  $region34: #{downsample_forward.6} parent=0 // pred_check
    _
  $region35: #{downsample_forward.6} parent=0 // pred_check_branch
    %33 = sbr.rel (0) target = $region37
  $region36: #{downsample_forward.6} parent=0 // pred_region
    _
  $region37: #{downsample_forward.6} parent=0 // pred_fallthru
    _
  // Predicated region
  $region38: #{downsample_forward.6} parent=0 // pred_check
    _
  $region39: #{downsample_forward.6} parent=0 // pred_check_branch
    %35 = sbr.rel (0) target = $region41
  $region40: #{downsample_forward.6} parent=0 // pred_region
    _
  $region41: #{downsample_forward.6} parent=0 // pred_fallthru
    _
  // Predicated region
  $region42: #{downsample_forward.6} parent=0 // pred_check
    _
  $region43: #{downsample_forward.6} parent=0 // pred_check_branch
    %37 = sbr.rel (0) target = $region45
  $region44: #{downsample_forward.6} parent=0 // pred_region
    _
  $region45: #{downsample_forward.6} parent=0 // pred_fallthru
    _
  %v38 = vld [vmem:[%s1] sm:$0xff]
  %v39 = vld [vmem:[%s1 + $0x8] sm:$0xff]
  %v40 = vld [vmem:[%s0] sm:$0xff]
  %v41 = vld [vmem:[%s0 + $0x8] sm:$0xff]
  %v42 = vld [vmem:[%s0 + $0x10] sm:$0xff]
  %v43 = vld [vmem:[%s0 + $0x18] sm:$0xff]
  %vm44 = vcmask 261120
  %v46 = vsel %vm44, %v38, 0
  %v49 = vsel %vm44, %v39, 0
  %51 = vmatprep.subr.mxu0 0.0
  %52 = vmatpush1.msra.mxu0 0.0
  %53 = vmatprep.subr.mxu0 0.0
  %54 = vmatpush1.msra.mxu0 0.0
  %55 = vmatprep.subr.mxu0 0.0
  %56 = vmatpush1.msra.mxu0 0.0
  %57 = vmatprep.subr.mxu0 0.0
  %58 = vmatpush1.msra.mxu0 0.0
  %59 = vmatprep.subr.mxu0 0.0
  %60 = vmatpush1.msra.mxu0 0.0
  %61 = vmatprep.subr.mxu0 0.0
  %62 = vmatpush1.msra.mxu0 0.0
  %63 = vmatprep.subr.mxu0 0.0
  %64 = vmatpush1.msra.mxu0 0.0
  %65 = vmatprep.subr.mxu0 0.0
  %66 = vmatpush1.msra.mxu0 0.0
  %67 = vmatprep.subr.mxu0 0.0
  %68 = vmatpush1.msra.mxu0 0.0
  %69 = vmatprep.subr.mxu0 0.0
  %70 = vmatpush1.msra.mxu0 0.0
  %71 = vmatprep.subr.mxu0 0.0
  %72 = vmatpush1.msra.mxu0 0.0
  %73 = vmatprep.subr.mxu0 0.0
  %74 = vmatpush1.msra.mxu0 0.0
  %75 = vmatprep.subr.mxu0 0.0
  %76 = vmatpush1.msra.mxu0 %v43
  %77 = vmatprep.subr.mxu0 0.0
  %78 = vmatpush1.msra.mxu0 %v42
  %79 = vmatprep.subr.mxu0 0.0
  %80 = vmatpush1.msra.mxu0 %v41
  %81 = vmatprep.subr.mxu0 0.0
  %82 = vmatpush1.msra.mxu0 %v40
  %83 = vmatprep.subr.mxu0 0.0
  %84 = vmatpush2.msra.mxu0 0.0
  %85 = vmatprep.subr.mxu0 0.0
  %86 = vmatpush2.msra.mxu0 0.0
  %87 = vmatprep.subr.mxu0 0.0
  %88 = vmatpush2.msra.mxu0 0.0
  %89 = vmatprep.subr.mxu0 0.0
  %90 = vmatpush2.msra.mxu0 0.0
  %91 = vmatprep.subr.mxu0 0.0
  %92 = vmatpush2.msra.mxu0 0.0
  %93 = vmatprep.subr.mxu0 0.0
  %94 = vmatpush2.msra.mxu0 0.0
  %95 = vmatprep.subr.mxu0 0.0
  %96 = vmatpush2.msra.mxu0 0.0
  %97 = vmatprep.subr.mxu0 0.0
  %98 = vmatpush2.msra.mxu0 0.0
  %99 = vmatprep.subr.mxu0 0.0
  %100 = vmatpush2.msra.mxu0 0.0
  %101 = vmatprep.subr.mxu0 0.0
  %102 = vmatpush2.msra.mxu0 0.0
  %103 = vmatprep.subr.mxu0 0.0
  %104 = vmatpush2.msra.mxu0 0.0
  %105 = vmatprep.subr.mxu0 0.0
  %106 = vmatpush2.msra.mxu0 0.0
  %107 = vmatprep.subr.mxu0 0.0
  %108 = vmatpush2.msra.mxu0 0.0
  %109 = vmatprep.subr.mxu0 0.0
  %110 = vmatpush2.msra.mxu0 0.0
  %111 = vmatprep.subr.mxu0 0.0
  %112 = vmatpush2.msra.mxu0 0.0
  %113 = vmatprep.subr.mxu0 0.0
  %114 = vmatpush2.msra.mxu0 0.0
  %115 = vmatprep.mubr.f32.mxu0 0.0
  %116 = vmatmul.mubr.f32.gmra.mxu0 %v46
  %v117 = vpop.f32.mrf.mxu0
  %v118 = vadd.f32 0.0, %v117
  %v119 = vpop.f32.mrf.mxu0
  %120 = vmatprep.mubr.f32.mxu0 0.0
  %121 = vmatmul.mubr.f32.gmra.mxu0 %v49
  %v122 = vpop.f32.mrf.mxu0
  %v123 = vadd.f32 0.0, %v122
  %v124 = vpop.f32.mrf.mxu0
  %125 = vdwg.mxu0
  %v126 = vld [vmem:[%s2] sm:$0xff]
  %v127 = vld [vmem:[%s2 + $0x8] sm:$0xff]
  %v128 = vld [vmem:[%s2 + $0x10] sm:$0xff]
  %v129 = vld [vmem:[%s2 + $0x18] sm:$0xff]
  %v130 = vld [vmem:[%s2 + $0x20] sm:$0xff]
  %v131 = vld [vmem:[%s2 + $0x28] sm:$0xff]
  %v132 = vld [vmem:[%s2 + $0x30] sm:$0xff]
  %v133 = vld [vmem:[%s2 + $0x38] sm:$0xff]
  %v134 = vld [vmem:[%s2 + $0x40] sm:$0xff]
  %v135 = vld [vmem:[%s2 + $0x48] sm:$0xff]
  %v136 = vld [vmem:[%s2 + $0x50] sm:$0xff]
  %v137 = vld [vmem:[%s2 + $0x58] sm:$0xff]
  %v138 = vld [vmem:[%s2 + $0x60] sm:$0xff]
  %v139 = vld [vmem:[%s2 + $0x68] sm:$0xff]
  %v140 = vld [vmem:[%s2 + $0x70] sm:$0xff]
  %v141 = vld [vmem:[%s2 + $0x78] sm:$0xff]
  %v142 = vld [vmem:[%s3] sm:$0x1]
  %v144 = vlaneseq
  %v145 = vshrl.u32 %v144, 7
  %v146 = vsub.s32 0, %v145
  %v147 = vrot.slane %v142, %v146
  %149 = vmatprep.subr.mxu0 0.0
  %150 = vmatpush1.msra.mxu0 %v141
  %151 = vmatprep.subr.mxu0 0.0
  %152 = vmatpush1.msra.mxu0 %v140
  %153 = vmatprep.subr.mxu0 0.0
  %154 = vmatpush1.msra.mxu0 %v139
  %155 = vmatprep.subr.mxu0 0.0
  %156 = vmatpush1.msra.mxu0 %v138
  %157 = vmatprep.subr.mxu0 0.0
  %158 = vmatpush1.msra.mxu0 %v137
  %159 = vmatprep.subr.mxu0 0.0
  %160 = vmatpush1.msra.mxu0 %v136
  %161 = vmatprep.subr.mxu0 0.0
  %162 = vmatpush1.msra.mxu0 %v135
  %163 = vmatprep.subr.mxu0 0.0
  %164 = vmatpush1.msra.mxu0 %v134
  %165 = vmatprep.subr.mxu0 0.0
  %166 = vmatpush1.msra.mxu0 %v133
  %167 = vmatprep.subr.mxu0 0.0
  %168 = vmatpush1.msra.mxu0 %v132
  %169 = vmatprep.subr.mxu0 0.0
  %170 = vmatpush1.msra.mxu0 %v131
  %171 = vmatprep.subr.mxu0 0.0
  %172 = vmatpush1.msra.mxu0 %v130
  %173 = vmatprep.subr.mxu0 0.0
  %174 = vmatpush1.msra.mxu0 %v129
  %175 = vmatprep.subr.mxu0 0.0
  %176 = vmatpush1.msra.mxu0 %v128
  %177 = vmatprep.subr.mxu0 0.0
  %178 = vmatpush1.msra.mxu0 %v127
  %179 = vmatprep.subr.mxu0 0.0
  %180 = vmatpush1.msra.mxu0 %v126
  %181 = vmatprep.subr.mxu0 0.0
  %182 = vmatpush2.msra.mxu0 0.0
  %183 = vmatprep.subr.mxu0 0.0
  %184 = vmatpush2.msra.mxu0 0.0
  %185 = vmatprep.subr.mxu0 0.0
  %186 = vmatpush2.msra.mxu0 0.0
  %187 = vmatprep.subr.mxu0 0.0
  %188 = vmatpush2.msra.mxu0 0.0
  %189 = vmatprep.subr.mxu0 0.0
  %190 = vmatpush2.msra.mxu0 0.0
  %191 = vmatprep.subr.mxu0 0.0
  %192 = vmatpush2.msra.mxu0 0.0
  %193 = vmatprep.subr.mxu0 0.0
  %194 = vmatpush2.msra.mxu0 0.0
  %195 = vmatprep.subr.mxu0 0.0
  %196 = vmatpush2.msra.mxu0 0.0
  %197 = vmatprep.subr.mxu0 0.0
  %198 = vmatpush2.msra.mxu0 0.0
  %199 = vmatprep.subr.mxu0 0.0
  %200 = vmatpush2.msra.mxu0 0.0
  %201 = vmatprep.subr.mxu0 0.0
  %202 = vmatpush2.msra.mxu0 0.0
  %203 = vmatprep.subr.mxu0 0.0
  %204 = vmatpush2.msra.mxu0 0.0
  %205 = vmatprep.subr.mxu0 0.0
  %206 = vmatpush2.msra.mxu0 0.0
  %207 = vmatprep.subr.mxu0 0.0
  %208 = vmatpush2.msra.mxu0 0.0
  %209 = vmatprep.subr.mxu0 0.0
  %210 = vmatpush2.msra.mxu0 0.0
  %211 = vmatprep.subr.mxu0 0.0
  %212 = vmatpush2.msra.mxu0 0.0
  %213 = vmatprep.mubr.f32.mxu0 0.0
  %214 = vmatmul.mubr.f32.gmra.mxu0 %v118
  %v215 = vpop.f32.mrf.mxu0
  %v216 = vadd.f32 %v147, %v215
  %v217 = vpop.f32.mrf.mxu0
  %218 = vmatprep.mubr.f32.mxu0 0.0
  %219 = vmatmul.mubr.f32.gmra.mxu0 %v123
  %v220 = vpop.f32.mrf.mxu0
  %v221 = vadd.f32 %v147, %v220
  %v222 = vpop.f32.mrf.mxu0
  %223 = vdwg.mxu0
  %v224 = vld [vmem:[%s5] sm:$0xff]
  %v225 = vld [vmem:[%s5 + $0x8] sm:$0xff]
  %v226 = vld [vmem:[%s5 + $0x10] sm:$0xff]
  %v227 = vld [vmem:[%s5 + $0x18] sm:$0xff]
  %v228 = vld [vmem:[%s5 + $0x20] sm:$0xff]
  %v229 = vld [vmem:[%s5 + $0x28] sm:$0xff]
  %v230 = vld [vmem:[%s5 + $0x30] sm:$0xff]
  %v231 = vld [vmem:[%s5 + $0x38] sm:$0xff]
  %v232 = vld [vmem:[%s5 + $0x40] sm:$0xff]
  %v233 = vld [vmem:[%s5 + $0x48] sm:$0xff]
  %v234 = vld [vmem:[%s5 + $0x50] sm:$0xff]
  %v235 = vld [vmem:[%s5 + $0x58] sm:$0xff]
  %v236 = vld [vmem:[%s5 + $0x60] sm:$0xff]
  %v237 = vld [vmem:[%s5 + $0x68] sm:$0xff]
  %v238 = vld [vmem:[%s5 + $0x70] sm:$0xff]
  %v239 = vld [vmem:[%s5 + $0x78] sm:$0xff]
  %v240 = vld [vmem:[%s6] sm:$0x1]
  %v242 = vlaneseq
  %v243 = vshrl.u32 %v242, 7
  %v244 = vsub.s32 0, %v243
  %v245 = vrot.slane %v240, %v244
  %247 = vmatprep.subr.mxu0 0.0
  %248 = vmatpush1.msra.mxu0 %v239
  %249 = vmatprep.subr.mxu0 0.0
  %250 = vmatpush1.msra.mxu0 %v238
  %251 = vmatprep.subr.mxu0 0.0
  %252 = vmatpush1.msra.mxu0 %v237
  %253 = vmatprep.subr.mxu0 0.0
  %254 = vmatpush1.msra.mxu0 %v236
  %255 = vmatprep.subr.mxu0 0.0
  %256 = vmatpush1.msra.mxu0 %v235
  %257 = vmatprep.subr.mxu0 0.0
  %258 = vmatpush1.msra.mxu0 %v234
  %259 = vmatprep.subr.mxu0 0.0
  %260 = vmatpush1.msra.mxu0 %v233
  %261 = vmatprep.subr.mxu0 0.0
  %262 = vmatpush1.msra.mxu0 %v232
  %263 = vmatprep.subr.mxu0 0.0
  %264 = vmatpush1.msra.mxu0 %v231
  %265 = vmatprep.subr.mxu0 0.0
  %266 = vmatpush1.msra.mxu0 %v230
  %267 = vmatprep.subr.mxu0 0.0
  %268 = vmatpush1.msra.mxu0 %v229
  %269 = vmatprep.subr.mxu0 0.0
  %270 = vmatpush1.msra.mxu0 %v228
  %271 = vmatprep.subr.mxu0 0.0
  %272 = vmatpush1.msra.mxu0 %v227
  %273 = vmatprep.subr.mxu0 0.0
  %274 = vmatpush1.msra.mxu0 %v226
  %275 = vmatprep.subr.mxu0 0.0
  %276 = vmatpush1.msra.mxu0 %v225
  %277 = vmatprep.subr.mxu0 0.0
  %278 = vmatpush1.msra.mxu0 %v224
  %279 = vmatprep.subr.mxu0 0.0
  %280 = vmatpush2.msra.mxu0 0.0
  %281 = vmatprep.subr.mxu0 0.0
  %282 = vmatpush2.msra.mxu0 0.0
  %283 = vmatprep.subr.mxu0 0.0
  %284 = vmatpush2.msra.mxu0 0.0
  %285 = vmatprep.subr.mxu0 0.0
  %286 = vmatpush2.msra.mxu0 0.0
  %287 = vmatprep.subr.mxu0 0.0
  %288 = vmatpush2.msra.mxu0 0.0
  %289 = vmatprep.subr.mxu0 0.0
  %290 = vmatpush2.msra.mxu0 0.0
  %291 = vmatprep.subr.mxu0 0.0
  %292 = vmatpush2.msra.mxu0 0.0
  %293 = vmatprep.subr.mxu0 0.0
  %294 = vmatpush2.msra.mxu0 0.0
  %295 = vmatprep.subr.mxu0 0.0
  %296 = vmatpush2.msra.mxu0 0.0
  %297 = vmatprep.subr.mxu0 0.0
  %298 = vmatpush2.msra.mxu0 0.0
  %299 = vmatprep.subr.mxu0 0.0
  %300 = vmatpush2.msra.mxu0 0.0
  %301 = vmatprep.subr.mxu0 0.0
  %302 = vmatpush2.msra.mxu0 0.0
  %303 = vmatprep.subr.mxu0 0.0
  %304 = vmatpush2.msra.mxu0 0.0
  %305 = vmatprep.subr.mxu0 0.0
  %306 = vmatpush2.msra.mxu0 0.0
  %307 = vmatprep.subr.mxu0 0.0
  %308 = vmatpush2.msra.mxu0 0.0
  %309 = vmatprep.subr.mxu0 0.0
  %310 = vmatpush2.msra.mxu0 0.0
  %311 = vmatprep.mubr.f32.mxu0 0.0
  %312 = vmatmul.mubr.f32.gmra.mxu0 %v216
  %v313 = vpop.f32.mrf.mxu0
  %v314 = vadd.f32 %v245, %v313
  %v315 = vpop.f32.mrf.mxu0
  %316 = vmatprep.mubr.f32.mxu0 0.0
  %317 = vmatmul.mubr.f32.gmra.mxu0 %v221
  %v318 = vpop.f32.mrf.mxu0
  %v319 = vadd.f32 %v245, %v318
  %v320 = vpop.f32.mrf.mxu0
  %321 = vdwg.mxu0
  %v322 = vld [vmem:[%s7] sm:$0xff]
  %v323 = vld [vmem:[%s7 + $0x8] sm:$0xff]
  %v324 = vld [vmem:[%s7 + $0x10] sm:$0xff]
  %v325 = vld [vmem:[%s7 + $0x18] sm:$0xff]
  %v326 = vld [vmem:[%s7 + $0x20] sm:$0xff]
  %v327 = vld [vmem:[%s7 + $0x28] sm:$0xff]
  %v328 = vld [vmem:[%s7 + $0x30] sm:$0xff]
  %v329 = vld [vmem:[%s7 + $0x38] sm:$0xff]
  %v330 = vld [vmem:[%s7 + $0x40] sm:$0xff]
  %v331 = vld [vmem:[%s7 + $0x48] sm:$0xff]
  %v332 = vld [vmem:[%s7 + $0x50] sm:$0xff]
  %v333 = vld [vmem:[%s7 + $0x58] sm:$0xff]
  %v334 = vld [vmem:[%s7 + $0x60] sm:$0xff]
  %v335 = vld [vmem:[%s7 + $0x68] sm:$0xff]
  %v336 = vld [vmem:[%s7 + $0x70] sm:$0xff]
  %v337 = vld [vmem:[%s7 + $0x78] sm:$0xff]
  %338 = vmatprep.subr.mxu0 0.0
  %339 = vmatpush1.msra.mxu0 %v337
  %340 = vmatprep.subr.mxu0 0.0
  %341 = vmatpush1.msra.mxu0 %v336
  %342 = vmatprep.subr.mxu0 0.0
  %343 = vmatpush1.msra.mxu0 %v335
  %344 = vmatprep.subr.mxu0 0.0
  %345 = vmatpush1.msra.mxu0 %v334
  %346 = vmatprep.subr.mxu0 0.0
  %347 = vmatpush1.msra.mxu0 %v333
  %348 = vmatprep.subr.mxu0 0.0
  %349 = vmatpush1.msra.mxu0 %v332
  %350 = vmatprep.subr.mxu0 0.0
  %351 = vmatpush1.msra.mxu0 %v331
  %352 = vmatprep.subr.mxu0 0.0
  %353 = vmatpush1.msra.mxu0 %v330
  %354 = vmatprep.subr.mxu0 0.0
  %355 = vmatpush1.msra.mxu0 %v329
  %356 = vmatprep.subr.mxu0 0.0
  %357 = vmatpush1.msra.mxu0 %v328
  %358 = vmatprep.subr.mxu0 0.0
  %359 = vmatpush1.msra.mxu0 %v327
  %360 = vmatprep.subr.mxu0 0.0
  %361 = vmatpush1.msra.mxu0 %v326
  %362 = vmatprep.subr.mxu0 0.0
  %363 = vmatpush1.msra.mxu0 %v325
  %364 = vmatprep.subr.mxu0 0.0
  %365 = vmatpush1.msra.mxu0 %v324
  %366 = vmatprep.subr.mxu0 0.0
  %367 = vmatpush1.msra.mxu0 %v323
  %368 = vmatprep.subr.mxu0 0.0
  %369 = vmatpush1.msra.mxu0 %v322
  %370 = vmatprep.subr.mxu0 0.0
  %371 = vmatpush2.msra.mxu0 0.0
  %372 = vmatprep.subr.mxu0 0.0
  %373 = vmatpush2.msra.mxu0 0.0
  %374 = vmatprep.subr.mxu0 0.0
  %375 = vmatpush2.msra.mxu0 0.0
  %376 = vmatprep.subr.mxu0 0.0
  %377 = vmatpush2.msra.mxu0 0.0
  %378 = vmatprep.subr.mxu0 0.0
  %379 = vmatpush2.msra.mxu0 0.0
  %380 = vmatprep.subr.mxu0 0.0
  %381 = vmatpush2.msra.mxu0 0.0
  %382 = vmatprep.subr.mxu0 0.0
  %383 = vmatpush2.msra.mxu0 0.0
  %384 = vmatprep.subr.mxu0 0.0
  %385 = vmatpush2.msra.mxu0 0.0
  %386 = vmatprep.subr.mxu0 0.0
  %387 = vmatpush2.msra.mxu0 0.0
  %388 = vmatprep.subr.mxu0 0.0
  %389 = vmatpush2.msra.mxu0 0.0
  %390 = vmatprep.subr.mxu0 0.0
  %391 = vmatpush2.msra.mxu0 0.0
  %392 = vmatprep.subr.mxu0 0.0
  %393 = vmatpush2.msra.mxu0 0.0
  %394 = vmatprep.subr.mxu0 0.0
  %395 = vmatpush2.msra.mxu0 0.0
  %396 = vmatprep.subr.mxu0 0.0
  %397 = vmatpush2.msra.mxu0 0.0
  %398 = vmatprep.subr.mxu0 0.0
  %399 = vmatpush2.msra.mxu0 0.0
  %400 = vmatprep.subr.mxu0 0.0
  %401 = vmatpush2.msra.mxu0 0.0
  %402 = vmatprep.mubr.f32.mxu0 0.0
  %403 = vmatmul.mubr.f32.gmra.mxu0 %v314
  %v404 = vpop.f32.mrf.mxu0
  %v405 = vadd.f32 0.0, %v404
  %v406 = vpop.f32.mrf.mxu0
  %407 = vmatprep.mubr.f32.mxu0 0.0
  %408 = vmatmul.mubr.f32.gmra.mxu0 %v319
  %v409 = vpop.f32.mrf.mxu0
  %v410 = vadd.f32 0.0, %v409
  %v411 = vpop.f32.mrf.mxu0
  %412 = vdwg.mxu0
  %v413 = vld [vmem:[%s4] sm:$0xff]
  %v414 = vld [vmem:[%s4 + $0x8] sm:$0xff]
  %s415 = scalar_lea.vmem %s7, 128
  %v416 = vld [vmem:[%s415] sm:$0xff]
  %v417 = vld [vmem:[%s415 + $0x8] sm:$0xff]
  %v418 = vld [vmem:[%s415 + $0x10] sm:$0xff]
  %v419 = vld [vmem:[%s415 + $0x18] sm:$0xff]
  %v420 = vld [vmem:[%s415 + $0x20] sm:$0xff]
  %v421 = vld [vmem:[%s415 + $0x28] sm:$0xff]
  %v422 = vld [vmem:[%s415 + $0x30] sm:$0xff]
  %v423 = vld [vmem:[%s415 + $0x38] sm:$0xff]
  %v424 = vld [vmem:[%s415 + $0x40] sm:$0xff]
  %v425 = vld [vmem:[%s415 + $0x48] sm:$0xff]
  %v426 = vld [vmem:[%s415 + $0x50] sm:$0xff]
  %v427 = vld [vmem:[%s415 + $0x58] sm:$0xff]
  %v428 = vld [vmem:[%s415 + $0x60] sm:$0xff]
  %v429 = vld [vmem:[%s415 + $0x68] sm:$0xff]
  %v430 = vld [vmem:[%s415 + $0x70] sm:$0xff]
  %v431 = vld [vmem:[%s415 + $0x78] sm:$0xff]
  %432 = vmatprep.subr.mxu0 0.0
  %433 = vmatpush1.msra.mxu0 %v431
  %434 = vmatprep.subr.mxu0 0.0
  %435 = vmatpush1.msra.mxu0 %v430
  %436 = vmatprep.subr.mxu0 0.0
  %437 = vmatpush1.msra.mxu0 %v429
  %438 = vmatprep.subr.mxu0 0.0
  %439 = vmatpush1.msra.mxu0 %v428
  %440 = vmatprep.subr.mxu0 0.0
  %441 = vmatpush1.msra.mxu0 %v427
  %442 = vmatprep.subr.mxu0 0.0
  %443 = vmatpush1.msra.mxu0 %v426
  %444 = vmatprep.subr.mxu0 0.0
  %445 = vmatpush1.msra.mxu0 %v425
  %446 = vmatprep.subr.mxu0 0.0
  %447 = vmatpush1.msra.mxu0 %v424
  %448 = vmatprep.subr.mxu0 0.0
  %449 = vmatpush1.msra.mxu0 %v423
  %450 = vmatprep.subr.mxu0 0.0
  %451 = vmatpush1.msra.mxu0 %v422
  %452 = vmatprep.subr.mxu0 0.0
  %453 = vmatpush1.msra.mxu0 %v421
  %454 = vmatprep.subr.mxu0 0.0
  %455 = vmatpush1.msra.mxu0 %v420
  %456 = vmatprep.subr.mxu0 0.0
  %457 = vmatpush1.msra.mxu0 %v419
  %458 = vmatprep.subr.mxu0 0.0
  %459 = vmatpush1.msra.mxu0 %v418
  %460 = vmatprep.subr.mxu0 0.0
  %461 = vmatpush1.msra.mxu0 %v417
  %462 = vmatprep.subr.mxu0 0.0
  %463 = vmatpush1.msra.mxu0 %v416
  %464 = vmatprep.subr.mxu0 0.0
  %465 = vmatpush2.msra.mxu0 0.0
  %466 = vmatprep.subr.mxu0 0.0
  %467 = vmatpush2.msra.mxu0 0.0
  %468 = vmatprep.subr.mxu0 0.0
  %469 = vmatpush2.msra.mxu0 0.0
  %470 = vmatprep.subr.mxu0 0.0
  %471 = vmatpush2.msra.mxu0 0.0
  %472 = vmatprep.subr.mxu0 0.0
  %473 = vmatpush2.msra.mxu0 0.0
  %474 = vmatprep.subr.mxu0 0.0
  %475 = vmatpush2.msra.mxu0 0.0
  %476 = vmatprep.subr.mxu0 0.0
  %477 = vmatpush2.msra.mxu0 0.0
  %478 = vmatprep.subr.mxu0 0.0
  %479 = vmatpush2.msra.mxu0 0.0
  %480 = vmatprep.subr.mxu0 0.0
  %481 = vmatpush2.msra.mxu0 0.0
  %482 = vmatprep.subr.mxu0 0.0
  %483 = vmatpush2.msra.mxu0 0.0
  %484 = vmatprep.subr.mxu0 0.0
  %485 = vmatpush2.msra.mxu0 0.0
  %486 = vmatprep.subr.mxu0 0.0
  %487 = vmatpush2.msra.mxu0 0.0
  %488 = vmatprep.subr.mxu0 0.0
  %489 = vmatpush2.msra.mxu0 0.0
  %490 = vmatprep.subr.mxu0 0.0
  %491 = vmatpush2.msra.mxu0 0.0
  %492 = vmatprep.subr.mxu0 0.0
  %493 = vmatpush2.msra.mxu0 0.0
  %494 = vmatprep.subr.mxu0 0.0
  %495 = vmatpush2.msra.mxu0 0.0
  %496 = vmatprep.mubr.f32.mxu0 0.0
  %497 = vmatmul.mubr.f32.gmra.mxu0 %v314
  %v498 = vpop.f32.mrf.mxu0
  %v499 = vadd.f32 0.0, %v498
  %v500 = vpop.f32.mrf.mxu0
  %501 = vmatprep.mubr.f32.mxu0 0.0
  %502 = vmatmul.mubr.f32.gmra.mxu0 %v319
  %v503 = vpop.f32.mrf.mxu0
  %v504 = vadd.f32 0.0, %v503
  %v505 = vpop.f32.mrf.mxu0
  %506 = vdwg.mxu0
  %vm507 = vcmask 130048
  %v509 = vsel %vm507, %v413, 0
  %v512 = vsel %vm507, %v414, 0
  %514 = vmatprep.subr.mxu0 0.0
  %515 = vmatpush1.msra.mxu0 0.0
  %516 = vmatprep.subr.mxu0 0.0
  %517 = vmatpush1.msra.mxu0 0.0
  %518 = vmatprep.subr.mxu0 0.0
  %519 = vmatpush1.msra.mxu0 0.0
  %520 = vmatprep.subr.mxu0 0.0
  %521 = vmatpush1.msra.mxu0 0.0
  %522 = vmatprep.subr.mxu0 0.0
  %523 = vmatpush1.msra.mxu0 0.0
  %524 = vmatprep.subr.mxu0 0.0
  %525 = vmatpush1.msra.mxu0 0.0
  %526 = vmatprep.subr.mxu0 0.0
  %527 = vmatpush1.msra.mxu0 0.0
  %528 = vmatprep.subr.mxu0 0.0
  %529 = vmatpush1.msra.mxu0 0.0
  %530 = vmatprep.subr.mxu0 0.0
  %531 = vmatpush1.msra.mxu0 0.0
  %532 = vmatprep.subr.mxu0 0.0
  %533 = vmatpush1.msra.mxu0 0.0
  %534 = vmatprep.subr.mxu0 0.0
  %535 = vmatpush1.msra.mxu0 0.0
  %536 = vmatprep.subr.mxu0 0.0
  %537 = vmatpush1.msra.mxu0 0.0
  %538 = vmatprep.subr.mxu0 0.0
  %539 = vmatpush1.msra.mxu0 0.0
  %540 = vmatprep.subr.mxu0 0.0
  %541 = vmatpush1.msra.mxu0 0.0
  %542 = vmatprep.subr.mxu0 0.0
  %543 = vmatpush1.msra.mxu0 %v410
  %544 = vmatprep.subr.mxu0 0.0
  %545 = vmatpush1.msra.mxu0 %v405
  %546 = vmatprep.subr.mxu0 0.0
  %547 = vmatpush2.msra.mxu0 0.0
  %548 = vmatprep.subr.mxu0 0.0
  %549 = vmatpush2.msra.mxu0 0.0
  %550 = vmatprep.subr.mxu0 0.0
  %551 = vmatpush2.msra.mxu0 0.0
  %552 = vmatprep.subr.mxu0 0.0
  %553 = vmatpush2.msra.mxu0 0.0
  %554 = vmatprep.subr.mxu0 0.0
  %555 = vmatpush2.msra.mxu0 0.0
  %556 = vmatprep.subr.mxu0 0.0
  %557 = vmatpush2.msra.mxu0 0.0
  %558 = vmatprep.subr.mxu0 0.0
  %559 = vmatpush2.msra.mxu0 0.0
  %560 = vmatprep.subr.mxu0 0.0
  %561 = vmatpush2.msra.mxu0 0.0
  %562 = vmatprep.subr.mxu0 0.0
  %563 = vmatpush2.msra.mxu0 0.0
  %564 = vmatprep.subr.mxu0 0.0
  %565 = vmatpush2.msra.mxu0 0.0
  %566 = vmatprep.subr.mxu0 0.0
  %567 = vmatpush2.msra.mxu0 0.0
  %568 = vmatprep.subr.mxu0 0.0
  %569 = vmatpush2.msra.mxu0 0.0
  %570 = vmatprep.subr.mxu0 0.0
  %571 = vmatpush2.msra.mxu0 0.0
  %572 = vmatprep.subr.mxu0 0.0
  %573 = vmatpush2.msra.mxu0 0.0
  %574 = vmatprep.subr.mxu0 0.0
  %575 = vmatpush2.msra.mxu0 0.0
  %576 = vmatprep.subr.mxu0 0.0
  %577 = vmatpush2.msra.mxu0 0.0
  %578 = vmatprep.mubr.f32.mxu0 0.0
  %579 = vmatmul.mubr.f32.gmra.mxu0 %v509
  %v580 = vpop.f32.mrf.mxu0
  %v581 = vadd.f32 %v499, %v580
  %v582 = vpop.f32.mrf.mxu0
  %583 = vmatprep.mubr.f32.mxu0 0.0
  %584 = vmatmul.mubr.f32.gmra.mxu0 %v512
  %v585 = vpop.f32.mrf.mxu0
  %v586 = vadd.f32 %v504, %v585
  %v587 = vpop.f32.mrf.mxu0
  %588 = vdwg.mxu0
  %s589 = scalar_lea.vmem %s7, 256
  %v590 = vld [vmem:[%s589] sm:$0xff]
  %v591 = vld [vmem:[%s589 + $0x8] sm:$0xff]
  %v592 = vld [vmem:[%s589 + $0x10] sm:$0xff]
  %v593 = vld [vmem:[%s589 + $0x18] sm:$0xff]
  %v594 = vld [vmem:[%s589 + $0x20] sm:$0xff]
  %v595 = vld [vmem:[%s589 + $0x28] sm:$0xff]
  %v596 = vld [vmem:[%s589 + $0x30] sm:$0xff]
  %v597 = vld [vmem:[%s589 + $0x38] sm:$0xff]
  %v598 = vld [vmem:[%s589 + $0x40] sm:$0xff]
  %v599 = vld [vmem:[%s589 + $0x48] sm:$0xff]
  %v600 = vld [vmem:[%s589 + $0x50] sm:$0xff]
  %v601 = vld [vmem:[%s589 + $0x58] sm:$0xff]
  %v602 = vld [vmem:[%s589 + $0x60] sm:$0xff]
  %v603 = vld [vmem:[%s589 + $0x68] sm:$0xff]
  %v604 = vld [vmem:[%s589 + $0x70] sm:$0xff]
  %v605 = vld [vmem:[%s589 + $0x78] sm:$0xff]
  %606 = vmatprep.subr.mxu0 0.0
  %607 = vmatpush1.msra.mxu0 %v605
  %608 = vmatprep.subr.mxu0 0.0
  %609 = vmatpush1.msra.mxu0 %v604
  %610 = vmatprep.subr.mxu0 0.0
  %611 = vmatpush1.msra.mxu0 %v603
  %612 = vmatprep.subr.mxu0 0.0
  %613 = vmatpush1.msra.mxu0 %v602
  %614 = vmatprep.subr.mxu0 0.0
  %615 = vmatpush1.msra.mxu0 %v601
  %616 = vmatprep.subr.mxu0 0.0
  %617 = vmatpush1.msra.mxu0 %v600
  %618 = vmatprep.subr.mxu0 0.0
  %619 = vmatpush1.msra.mxu0 %v599
  %620 = vmatprep.subr.mxu0 0.0
  %621 = vmatpush1.msra.mxu0 %v598
  %622 = vmatprep.subr.mxu0 0.0
  %623 = vmatpush1.msra.mxu0 %v597
  %624 = vmatprep.subr.mxu0 0.0
  %625 = vmatpush1.msra.mxu0 %v596
  %626 = vmatprep.subr.mxu0 0.0
  %627 = vmatpush1.msra.mxu0 %v595
  %628 = vmatprep.subr.mxu0 0.0
  %629 = vmatpush1.msra.mxu0 %v594
  %630 = vmatprep.subr.mxu0 0.0
  %631 = vmatpush1.msra.mxu0 %v593
  %632 = vmatprep.subr.mxu0 0.0
  %633 = vmatpush1.msra.mxu0 %v592
  %634 = vmatprep.subr.mxu0 0.0
  %635 = vmatpush1.msra.mxu0 %v591
  %636 = vmatprep.subr.mxu0 0.0
  %637 = vmatpush1.msra.mxu0 %v590
  %638 = vmatprep.subr.mxu0 0.0
  %639 = vmatpush2.msra.mxu0 0.0
  %640 = vmatprep.subr.mxu0 0.0
  %641 = vmatpush2.msra.mxu0 0.0
  %642 = vmatprep.subr.mxu0 0.0
  %643 = vmatpush2.msra.mxu0 0.0
  %644 = vmatprep.subr.mxu0 0.0
  %645 = vmatpush2.msra.mxu0 0.0
  %646 = vmatprep.subr.mxu0 0.0
  %647 = vmatpush2.msra.mxu0 0.0
  %648 = vmatprep.subr.mxu0 0.0
  %649 = vmatpush2.msra.mxu0 0.0
  %650 = vmatprep.subr.mxu0 0.0
  %651 = vmatpush2.msra.mxu0 0.0
  %652 = vmatprep.subr.mxu0 0.0
  %653 = vmatpush2.msra.mxu0 0.0
  %654 = vmatprep.subr.mxu0 0.0
  %655 = vmatpush2.msra.mxu0 0.0
  %656 = vmatprep.subr.mxu0 0.0
  %657 = vmatpush2.msra.mxu0 0.0
  %658 = vmatprep.subr.mxu0 0.0
  %659 = vmatpush2.msra.mxu0 0.0
  %660 = vmatprep.subr.mxu0 0.0
  %661 = vmatpush2.msra.mxu0 0.0
  %662 = vmatprep.subr.mxu0 0.0
  %663 = vmatpush2.msra.mxu0 0.0
  %664 = vmatprep.subr.mxu0 0.0
  %665 = vmatpush2.msra.mxu0 0.0
  %666 = vmatprep.subr.mxu0 0.0
  %667 = vmatpush2.msra.mxu0 0.0
  %668 = vmatprep.subr.mxu0 0.0
  %669 = vmatpush2.msra.mxu0 0.0
  %670 = vmatprep.mubr.f32.mxu0 0.0
  %671 = vmatmul.mubr.f32.gmra.mxu0 %v314
  %v672 = vpop.f32.mrf.mxu0
  %v673 = vadd.f32 0.0, %v672
  %v674 = vpop.f32.mrf.mxu0
  %675 = vmatprep.mubr.f32.mxu0 0.0
  %676 = vmatmul.mubr.f32.gmra.mxu0 %v319
  %v677 = vpop.f32.mrf.mxu0
  %v678 = vadd.f32 0.0, %v677
  %v679 = vpop.f32.mrf.mxu0
  %680 = vdwg.mxu0
  %s681 = scalar_lea.vmem %s4, 32
  %v682 = vld [vmem:[%s681] sm:$0xff]
  %v683 = vld [vmem:[%s681 + $0x8] sm:$0xff]
  %v685 = vsel %vm507, %v682, 0
  %v688 = vsel %vm507, %v683, 0
  %690 = vmatprep.subr.mxu0 0.0
  %691 = vmatpush1.msra.mxu0 0.0
  %692 = vmatprep.subr.mxu0 0.0
  %693 = vmatpush1.msra.mxu0 0.0
  %694 = vmatprep.subr.mxu0 0.0
  %695 = vmatpush1.msra.mxu0 0.0
  %696 = vmatprep.subr.mxu0 0.0
  %697 = vmatpush1.msra.mxu0 0.0
  %698 = vmatprep.subr.mxu0 0.0
  %699 = vmatpush1.msra.mxu0 0.0
  %700 = vmatprep.subr.mxu0 0.0
  %701 = vmatpush1.msra.mxu0 0.0
  %702 = vmatprep.subr.mxu0 0.0
  %703 = vmatpush1.msra.mxu0 0.0
  %704 = vmatprep.subr.mxu0 0.0
  %705 = vmatpush1.msra.mxu0 0.0
  %706 = vmatprep.subr.mxu0 0.0
  %707 = vmatpush1.msra.mxu0 0.0
  %708 = vmatprep.subr.mxu0 0.0
  %709 = vmatpush1.msra.mxu0 0.0
  %710 = vmatprep.subr.mxu0 0.0
  %711 = vmatpush1.msra.mxu0 0.0
  %712 = vmatprep.subr.mxu0 0.0
  %713 = vmatpush1.msra.mxu0 0.0
  %714 = vmatprep.subr.mxu0 0.0
  %715 = vmatpush1.msra.mxu0 0.0
  %716 = vmatprep.subr.mxu0 0.0
  %717 = vmatpush1.msra.mxu0 0.0
  %718 = vmatprep.subr.mxu0 0.0
  %719 = vmatpush1.msra.mxu0 %v678
  %720 = vmatprep.subr.mxu0 0.0
  %721 = vmatpush1.msra.mxu0 %v673
  %722 = vmatprep.subr.mxu0 0.0
  %723 = vmatpush2.msra.mxu0 0.0
  %724 = vmatprep.subr.mxu0 0.0
  %725 = vmatpush2.msra.mxu0 0.0
  %726 = vmatprep.subr.mxu0 0.0
  %727 = vmatpush2.msra.mxu0 0.0
  %728 = vmatprep.subr.mxu0 0.0
  %729 = vmatpush2.msra.mxu0 0.0
  %730 = vmatprep.subr.mxu0 0.0
  %731 = vmatpush2.msra.mxu0 0.0
  %732 = vmatprep.subr.mxu0 0.0
  %733 = vmatpush2.msra.mxu0 0.0
  %734 = vmatprep.subr.mxu0 0.0
  %735 = vmatpush2.msra.mxu0 0.0
  %736 = vmatprep.subr.mxu0 0.0
  %737 = vmatpush2.msra.mxu0 0.0
  %738 = vmatprep.subr.mxu0 0.0
  %739 = vmatpush2.msra.mxu0 0.0
  %740 = vmatprep.subr.mxu0 0.0
  %741 = vmatpush2.msra.mxu0 0.0
  %742 = vmatprep.subr.mxu0 0.0
  %743 = vmatpush2.msra.mxu0 0.0
  %744 = vmatprep.subr.mxu0 0.0
  %745 = vmatpush2.msra.mxu0 0.0
  %746 = vmatprep.subr.mxu0 0.0
  %747 = vmatpush2.msra.mxu0 0.0
  %748 = vmatprep.subr.mxu0 0.0
  %749 = vmatpush2.msra.mxu0 0.0
  %750 = vmatprep.subr.mxu0 0.0
  %751 = vmatpush2.msra.mxu0 0.0
  %752 = vmatprep.subr.mxu0 0.0
  %753 = vmatpush2.msra.mxu0 0.0
  %754 = vmatprep.mubr.f32.mxu0 0.0
  %755 = vmatmul.mubr.f32.gmra.mxu0 %v685
  %v756 = vpop.f32.mrf.mxu0
  %v757 = vadd.f32 0.0, %v756
  %v758 = vpop.f32.mrf.mxu0
  %759 = vmatprep.mubr.f32.mxu0 0.0
  %760 = vmatmul.mubr.f32.gmra.mxu0 %v688
  %v761 = vpop.f32.mrf.mxu0
  %v762 = vadd.f32 0.0, %v761
  %v763 = vpop.f32.mrf.mxu0
  %764 = vdwg.mxu0
  %v765 = vadd.f32 %v581, %v757
  %v766 = vadd.f32 %v586, %v762
  %v767 = vld [vmem:[%s8] sm:$0x1]
  %v769 = vlaneseq
  %v770 = vshrl.u32 %v769, 7
  %v771 = vsub.s32 0, %v770
  %v772 = vrot.slane %v767, %v771
  %v774 = vadd.f32 %v765, %v772
  %v775 = vadd.f32 %v766, %v772
  %v776 = vld [vmem:[%s9] sm:$0xff]
  %v777 = vld [vmem:[%s9 + $0x8] sm:$0xff]
  %v778 = vld [vmem:[%s9 + $0x10] sm:$0xff]
  %v779 = vld [vmem:[%s9 + $0x18] sm:$0xff]
  %v780 = vld [vmem:[%s9 + $0x20] sm:$0xff]
  %v781 = vld [vmem:[%s9 + $0x28] sm:$0xff]
  %v782 = vld [vmem:[%s9 + $0x30] sm:$0xff]
  %v783 = vld [vmem:[%s9 + $0x38] sm:$0xff]
  %v784 = vld [vmem:[%s9 + $0x40] sm:$0xff]
  %v785 = vld [vmem:[%s9 + $0x48] sm:$0xff]
  %v786 = vld [vmem:[%s9 + $0x50] sm:$0xff]
  %v787 = vld [vmem:[%s9 + $0x58] sm:$0xff]
  %v788 = vld [vmem:[%s9 + $0x60] sm:$0xff]
  %v789 = vld [vmem:[%s9 + $0x68] sm:$0xff]
  %v790 = vld [vmem:[%s9 + $0x70] sm:$0xff]
  %v791 = vld [vmem:[%s9 + $0x78] sm:$0xff]
  %v792 = vld [vmem:[%s10] sm:$0x1]
  %v794 = vlaneseq
  %v795 = vshrl.u32 %v794, 7
  %v796 = vsub.s32 0, %v795
  %v797 = vrot.slane %v792, %v796
  %799 = vmatprep.subr.mxu0 0.0
  %800 = vmatpush1.msra.mxu0 %v791
  %801 = vmatprep.subr.mxu0 0.0
  %802 = vmatpush1.msra.mxu0 %v790
  %803 = vmatprep.subr.mxu0 0.0
  %804 = vmatpush1.msra.mxu0 %v789
  %805 = vmatprep.subr.mxu0 0.0
  %806 = vmatpush1.msra.mxu0 %v788
  %807 = vmatprep.subr.mxu0 0.0
  %808 = vmatpush1.msra.mxu0 %v787
  %809 = vmatprep.subr.mxu0 0.0
  %810 = vmatpush1.msra.mxu0 %v786
  %811 = vmatprep.subr.mxu0 0.0
  %812 = vmatpush1.msra.mxu0 %v785
  %813 = vmatprep.subr.mxu0 0.0
  %814 = vmatpush1.msra.mxu0 %v784
  %815 = vmatprep.subr.mxu0 0.0
  %816 = vmatpush1.msra.mxu0 %v783
  %817 = vmatprep.subr.mxu0 0.0
  %818 = vmatpush1.msra.mxu0 %v782
  %819 = vmatprep.subr.mxu0 0.0
  %820 = vmatpush1.msra.mxu0 %v781
  %821 = vmatprep.subr.mxu0 0.0
  %822 = vmatpush1.msra.mxu0 %v780
  %823 = vmatprep.subr.mxu0 0.0
  %824 = vmatpush1.msra.mxu0 %v779
  %825 = vmatprep.subr.mxu0 0.0
  %826 = vmatpush1.msra.mxu0 %v778
  %827 = vmatprep.subr.mxu0 0.0
  %828 = vmatpush1.msra.mxu0 %v777
  %829 = vmatprep.subr.mxu0 0.0
  %830 = vmatpush1.msra.mxu0 %v776
  %831 = vmatprep.subr.mxu0 0.0
  %832 = vmatpush2.msra.mxu0 0.0
  %833 = vmatprep.subr.mxu0 0.0
  %834 = vmatpush2.msra.mxu0 0.0
  %835 = vmatprep.subr.mxu0 0.0
  %836 = vmatpush2.msra.mxu0 0.0
  %837 = vmatprep.subr.mxu0 0.0
  %838 = vmatpush2.msra.mxu0 0.0
  %839 = vmatprep.subr.mxu0 0.0
  %840 = vmatpush2.msra.mxu0 0.0
  %841 = vmatprep.subr.mxu0 0.0
  %842 = vmatpush2.msra.mxu0 0.0
  %843 = vmatprep.subr.mxu0 0.0
  %844 = vmatpush2.msra.mxu0 0.0
  %845 = vmatprep.subr.mxu0 0.0
  %846 = vmatpush2.msra.mxu0 0.0
  %847 = vmatprep.subr.mxu0 0.0
  %848 = vmatpush2.msra.mxu0 0.0
  %849 = vmatprep.subr.mxu0 0.0
  %850 = vmatpush2.msra.mxu0 0.0
  %851 = vmatprep.subr.mxu0 0.0
  %852 = vmatpush2.msra.mxu0 0.0
  %853 = vmatprep.subr.mxu0 0.0
  %854 = vmatpush2.msra.mxu0 0.0
  %855 = vmatprep.subr.mxu0 0.0
  %856 = vmatpush2.msra.mxu0 0.0
  %857 = vmatprep.subr.mxu0 0.0
  %858 = vmatpush2.msra.mxu0 0.0
  %859 = vmatprep.subr.mxu0 0.0
  %860 = vmatpush2.msra.mxu0 0.0
  %861 = vmatprep.subr.mxu0 0.0
  %862 = vmatpush2.msra.mxu0 0.0
  %863 = vmatprep.mubr.f32.mxu0 0.0
  %864 = vmatmul.mubr.f32.gmra.mxu0 %v774
  %v865 = vpop.f32.mrf.mxu0
  %v866 = vadd.f32 %v797, %v865
  %v867 = vpop.f32.mrf.mxu0
  %868 = vmatprep.mubr.f32.mxu0 0.0
  %869 = vmatmul.mubr.f32.gmra.mxu0 %v775
  %v870 = vpop.f32.mrf.mxu0
  %v871 = vadd.f32 %v797, %v870
  %v872 = vpop.f32.mrf.mxu0
  %873 = vdwg.mxu0
  %v874 = vadd.f32 %v216, %v866
  %v875 = vadd.f32 %v221, %v871
  %v876 = vmax.f32 %v874, 0.0
  %v877 = vmax.f32 %v875, 0.0
  %s878 = scalar_lea.vmem %s5, 128
  %v879 = vld [vmem:[%s878] sm:$0xff]
  %v880 = vld [vmem:[%s878 + $0x8] sm:$0xff]
  %v881 = vld [vmem:[%s878 + $0x10] sm:$0xff]
  %v882 = vld [vmem:[%s878 + $0x18] sm:$0xff]
  %v883 = vld [vmem:[%s878 + $0x20] sm:$0xff]
  %v884 = vld [vmem:[%s878 + $0x28] sm:$0xff]
  %v885 = vld [vmem:[%s878 + $0x30] sm:$0xff]
  %v886 = vld [vmem:[%s878 + $0x38] sm:$0xff]
  %v887 = vld [vmem:[%s878 + $0x40] sm:$0xff]
  %v888 = vld [vmem:[%s878 + $0x48] sm:$0xff]
  %v889 = vld [vmem:[%s878 + $0x50] sm:$0xff]
  %v890 = vld [vmem:[%s878 + $0x58] sm:$0xff]
  %v891 = vld [vmem:[%s878 + $0x60] sm:$0xff]
  %v892 = vld [vmem:[%s878 + $0x68] sm:$0xff]
  %v893 = vld [vmem:[%s878 + $0x70] sm:$0xff]
  %v894 = vld [vmem:[%s878 + $0x78] sm:$0xff]
  %s895 = scalar_lea.vmem %s6, 1
  %v896 = vld [vmem:[%s895] sm:$0x1]
  %v898 = vlaneseq
  %v899 = vshrl.u32 %v898, 7
  %v900 = vsub.s32 0, %v899
  %v901 = vrot.slane %v896, %v900
  %903 = vmatprep.subr.mxu0 0.0
  %904 = vmatpush1.msra.mxu0 %v894
  %905 = vmatprep.subr.mxu0 0.0
  %906 = vmatpush1.msra.mxu0 %v893
  %907 = vmatprep.subr.mxu0 0.0
  %908 = vmatpush1.msra.mxu0 %v892
  %909 = vmatprep.subr.mxu0 0.0
  %910 = vmatpush1.msra.mxu0 %v891
  %911 = vmatprep.subr.mxu0 0.0
  %912 = vmatpush1.msra.mxu0 %v890
  %913 = vmatprep.subr.mxu0 0.0
  %914 = vmatpush1.msra.mxu0 %v889
  %915 = vmatprep.subr.mxu0 0.0
  %916 = vmatpush1.msra.mxu0 %v888
  %917 = vmatprep.subr.mxu0 0.0
  %918 = vmatpush1.msra.mxu0 %v887
  %919 = vmatprep.subr.mxu0 0.0
  %920 = vmatpush1.msra.mxu0 %v886
  %921 = vmatprep.subr.mxu0 0.0
  %922 = vmatpush1.msra.mxu0 %v885
  %923 = vmatprep.subr.mxu0 0.0
  %924 = vmatpush1.msra.mxu0 %v884
  %925 = vmatprep.subr.mxu0 0.0
  %926 = vmatpush1.msra.mxu0 %v883
  %927 = vmatprep.subr.mxu0 0.0
  %928 = vmatpush1.msra.mxu0 %v882
  %929 = vmatprep.subr.mxu0 0.0
  %930 = vmatpush1.msra.mxu0 %v881
  %931 = vmatprep.subr.mxu0 0.0
  %932 = vmatpush1.msra.mxu0 %v880
  %933 = vmatprep.subr.mxu0 0.0
  %934 = vmatpush1.msra.mxu0 %v879
  %935 = vmatprep.subr.mxu0 0.0
  %936 = vmatpush2.msra.mxu0 0.0
  %937 = vmatprep.subr.mxu0 0.0
  %938 = vmatpush2.msra.mxu0 0.0
  %939 = vmatprep.subr.mxu0 0.0
  %940 = vmatpush2.msra.mxu0 0.0
  %941 = vmatprep.subr.mxu0 0.0
  %942 = vmatpush2.msra.mxu0 0.0
  %943 = vmatprep.subr.mxu0 0.0
  %944 = vmatpush2.msra.mxu0 0.0
  %945 = vmatprep.subr.mxu0 0.0
  %946 = vmatpush2.msra.mxu0 0.0
  %947 = vmatprep.subr.mxu0 0.0
  %948 = vmatpush2.msra.mxu0 0.0
  %949 = vmatprep.subr.mxu0 0.0
  %950 = vmatpush2.msra.mxu0 0.0
  %951 = vmatprep.subr.mxu0 0.0
  %952 = vmatpush2.msra.mxu0 0.0
  %953 = vmatprep.subr.mxu0 0.0
  %954 = vmatpush2.msra.mxu0 0.0
  %955 = vmatprep.subr.mxu0 0.0
  %956 = vmatpush2.msra.mxu0 0.0
  %957 = vmatprep.subr.mxu0 0.0
  %958 = vmatpush2.msra.mxu0 0.0
  %959 = vmatprep.subr.mxu0 0.0
  %960 = vmatpush2.msra.mxu0 0.0
  %961 = vmatprep.subr.mxu0 0.0
  %962 = vmatpush2.msra.mxu0 0.0
  %963 = vmatprep.subr.mxu0 0.0
  %964 = vmatpush2.msra.mxu0 0.0
  %965 = vmatprep.subr.mxu0 0.0
  %966 = vmatpush2.msra.mxu0 0.0
  %967 = vmatprep.mubr.f32.mxu0 0.0
  %968 = vmatmul.mubr.f32.gmra.mxu0 %v876
  %v969 = vpop.f32.mrf.mxu0
  %v970 = vadd.f32 %v901, %v969
  %v971 = vpop.f32.mrf.mxu0
  %972 = vmatprep.mubr.f32.mxu0 0.0
  %973 = vmatmul.mubr.f32.gmra.mxu0 %v877
  %v974 = vpop.f32.mrf.mxu0
  %v975 = vadd.f32 %v901, %v974
  %v976 = vpop.f32.mrf.mxu0
  %977 = vdwg.mxu0
  %s978 = scalar_lea.vmem %s7, 384
  %v979 = vld [vmem:[%s978] sm:$0xff]
  %v980 = vld [vmem:[%s978 + $0x8] sm:$0xff]
  %v981 = vld [vmem:[%s978 + $0x10] sm:$0xff]
  %v982 = vld [vmem:[%s978 + $0x18] sm:$0xff]
  %v983 = vld [vmem:[%s978 + $0x20] sm:$0xff]
  %v984 = vld [vmem:[%s978 + $0x28] sm:$0xff]
  %v985 = vld [vmem:[%s978 + $0x30] sm:$0xff]
  %v986 = vld [vmem:[%s978 + $0x38] sm:$0xff]
  %v987 = vld [vmem:[%s978 + $0x40] sm:$0xff]
  %v988 = vld [vmem:[%s978 + $0x48] sm:$0xff]
  %v989 = vld [vmem:[%s978 + $0x50] sm:$0xff]
  %v990 = vld [vmem:[%s978 + $0x58] sm:$0xff]
  %v991 = vld [vmem:[%s978 + $0x60] sm:$0xff]
  %v992 = vld [vmem:[%s978 + $0x68] sm:$0xff]
  %v993 = vld [vmem:[%s978 + $0x70] sm:$0xff]
  %v994 = vld [vmem:[%s978 + $0x78] sm:$0xff]
  %995 = vmatprep.subr.mxu0 0.0
  %996 = vmatpush1.msra.mxu0 %v994
  %997 = vmatprep.subr.mxu0 0.0
  %998 = vmatpush1.msra.mxu0 %v993
  %999 = vmatprep.subr.mxu0 0.0
  %1000 = vmatpush1.msra.mxu0 %v992
  %1001 = vmatprep.subr.mxu0 0.0
  %1002 = vmatpush1.msra.mxu0 %v991
  %1003 = vmatprep.subr.mxu0 0.0
  %1004 = vmatpush1.msra.mxu0 %v990
  %1005 = vmatprep.subr.mxu0 0.0
  %1006 = vmatpush1.msra.mxu0 %v989
  %1007 = vmatprep.subr.mxu0 0.0
  %1008 = vmatpush1.msra.mxu0 %v988
  %1009 = vmatprep.subr.mxu0 0.0
  %1010 = vmatpush1.msra.mxu0 %v987
  %1011 = vmatprep.subr.mxu0 0.0
  %1012 = vmatpush1.msra.mxu0 %v986
  %1013 = vmatprep.subr.mxu0 0.0
  %1014 = vmatpush1.msra.mxu0 %v985
  %1015 = vmatprep.subr.mxu0 0.0
  %1016 = vmatpush1.msra.mxu0 %v984
  %1017 = vmatprep.subr.mxu0 0.0
  %1018 = vmatpush1.msra.mxu0 %v983
  %1019 = vmatprep.subr.mxu0 0.0
  %1020 = vmatpush1.msra.mxu0 %v982
  %1021 = vmatprep.subr.mxu0 0.0
  %1022 = vmatpush1.msra.mxu0 %v981
  %1023 = vmatprep.subr.mxu0 0.0
  %1024 = vmatpush1.msra.mxu0 %v980
  %1025 = vmatprep.subr.mxu0 0.0
  %1026 = vmatpush1.msra.mxu0 %v979
  %1027 = vmatprep.subr.mxu0 0.0
  %1028 = vmatpush2.msra.mxu0 0.0
  %1029 = vmatprep.subr.mxu0 0.0
  %1030 = vmatpush2.msra.mxu0 0.0
  %1031 = vmatprep.subr.mxu0 0.0
  %1032 = vmatpush2.msra.mxu0 0.0
  %1033 = vmatprep.subr.mxu0 0.0
  %1034 = vmatpush2.msra.mxu0 0.0
  %1035 = vmatprep.subr.mxu0 0.0
  %1036 = vmatpush2.msra.mxu0 0.0
  %1037 = vmatprep.subr.mxu0 0.0
  %1038 = vmatpush2.msra.mxu0 0.0
  %1039 = vmatprep.subr.mxu0 0.0
  %1040 = vmatpush2.msra.mxu0 0.0
  %1041 = vmatprep.subr.mxu0 0.0
  %1042 = vmatpush2.msra.mxu0 0.0
  %1043 = vmatprep.subr.mxu0 0.0
  %1044 = vmatpush2.msra.mxu0 0.0
  %1045 = vmatprep.subr.mxu0 0.0
  %1046 = vmatpush2.msra.mxu0 0.0
  %1047 = vmatprep.subr.mxu0 0.0
  %1048 = vmatpush2.msra.mxu0 0.0
  %1049 = vmatprep.subr.mxu0 0.0
  %1050 = vmatpush2.msra.mxu0 0.0
  %1051 = vmatprep.subr.mxu0 0.0
  %1052 = vmatpush2.msra.mxu0 0.0
  %1053 = vmatprep.subr.mxu0 0.0
  %1054 = vmatpush2.msra.mxu0 0.0
  %1055 = vmatprep.subr.mxu0 0.0
  %1056 = vmatpush2.msra.mxu0 0.0
  %1057 = vmatprep.subr.mxu0 0.0
  %1058 = vmatpush2.msra.mxu0 0.0
  %1059 = vmatprep.mubr.f32.mxu0 0.0
  %1060 = vmatmul.mubr.f32.gmra.mxu0 %v970
  %v1061 = vpop.f32.mrf.mxu0
  %v1062 = vadd.f32 0.0, %v1061
  %v1063 = vpop.f32.mrf.mxu0
  %1064 = vmatprep.mubr.f32.mxu0 0.0
  %1065 = vmatmul.mubr.f32.gmra.mxu0 %v975
  %v1066 = vpop.f32.mrf.mxu0
  %v1067 = vadd.f32 0.0, %v1066
  %v1068 = vpop.f32.mrf.mxu0
  %1069 = vdwg.mxu0
  %s1070 = scalar_lea.vmem %s7, 512
  %v1071 = vld [vmem:[%s1070] sm:$0xff]
  %v1072 = vld [vmem:[%s1070 + $0x8] sm:$0xff]
  %v1073 = vld [vmem:[%s1070 + $0x10] sm:$0xff]
  %v1074 = vld [vmem:[%s1070 + $0x18] sm:$0xff]
  %v1075 = vld [vmem:[%s1070 + $0x20] sm:$0xff]
  %v1076 = vld [vmem:[%s1070 + $0x28] sm:$0xff]
  %v1077 = vld [vmem:[%s1070 + $0x30] sm:$0xff]
  %v1078 = vld [vmem:[%s1070 + $0x38] sm:$0xff]
  %v1079 = vld [vmem:[%s1070 + $0x40] sm:$0xff]
  %v1080 = vld [vmem:[%s1070 + $0x48] sm:$0xff]
  %v1081 = vld [vmem:[%s1070 + $0x50] sm:$0xff]
  %v1082 = vld [vmem:[%s1070 + $0x58] sm:$0xff]
  %v1083 = vld [vmem:[%s1070 + $0x60] sm:$0xff]
  %v1084 = vld [vmem:[%s1070 + $0x68] sm:$0xff]
  %v1085 = vld [vmem:[%s1070 + $0x70] sm:$0xff]
  %v1086 = vld [vmem:[%s1070 + $0x78] sm:$0xff]
  %1087 = vmatprep.subr.mxu0 0.0
  %1088 = vmatpush1.msra.mxu0 %v1086
  %1089 = vmatprep.subr.mxu0 0.0
  %1090 = vmatpush1.msra.mxu0 %v1085
  %1091 = vmatprep.subr.mxu0 0.0
  %1092 = vmatpush1.msra.mxu0 %v1084
  %1093 = vmatprep.subr.mxu0 0.0
  %1094 = vmatpush1.msra.mxu0 %v1083
  %1095 = vmatprep.subr.mxu0 0.0
  %1096 = vmatpush1.msra.mxu0 %v1082
  %1097 = vmatprep.subr.mxu0 0.0
  %1098 = vmatpush1.msra.mxu0 %v1081
  %1099 = vmatprep.subr.mxu0 0.0
  %1100 = vmatpush1.msra.mxu0 %v1080
  %1101 = vmatprep.subr.mxu0 0.0
  %1102 = vmatpush1.msra.mxu0 %v1079
  %1103 = vmatprep.subr.mxu0 0.0
  %1104 = vmatpush1.msra.mxu0 %v1078
  %1105 = vmatprep.subr.mxu0 0.0
  %1106 = vmatpush1.msra.mxu0 %v1077
  %1107 = vmatprep.subr.mxu0 0.0
  %1108 = vmatpush1.msra.mxu0 %v1076
  %1109 = vmatprep.subr.mxu0 0.0
  %1110 = vmatpush1.msra.mxu0 %v1075
  %1111 = vmatprep.subr.mxu0 0.0
  %1112 = vmatpush1.msra.mxu0 %v1074
  %1113 = vmatprep.subr.mxu0 0.0
  %1114 = vmatpush1.msra.mxu0 %v1073
  %1115 = vmatprep.subr.mxu0 0.0
  %1116 = vmatpush1.msra.mxu0 %v1072
  %1117 = vmatprep.subr.mxu0 0.0
  %1118 = vmatpush1.msra.mxu0 %v1071
  %1119 = vmatprep.subr.mxu0 0.0
  %1120 = vmatpush2.msra.mxu0 0.0
  %1121 = vmatprep.subr.mxu0 0.0
  %1122 = vmatpush2.msra.mxu0 0.0
  %1123 = vmatprep.subr.mxu0 0.0
  %1124 = vmatpush2.msra.mxu0 0.0
  %1125 = vmatprep.subr.mxu0 0.0
  %1126 = vmatpush2.msra.mxu0 0.0
  %1127 = vmatprep.subr.mxu0 0.0
  %1128 = vmatpush2.msra.mxu0 0.0
  %1129 = vmatprep.subr.mxu0 0.0
  %1130 = vmatpush2.msra.mxu0 0.0
  %1131 = vmatprep.subr.mxu0 0.0
  %1132 = vmatpush2.msra.mxu0 0.0
  %1133 = vmatprep.subr.mxu0 0.0
  %1134 = vmatpush2.msra.mxu0 0.0
  %1135 = vmatprep.subr.mxu0 0.0
  %1136 = vmatpush2.msra.mxu0 0.0
  %1137 = vmatprep.subr.mxu0 0.0
  %1138 = vmatpush2.msra.mxu0 0.0
  %1139 = vmatprep.subr.mxu0 0.0
  %1140 = vmatpush2.msra.mxu0 0.0
  %1141 = vmatprep.subr.mxu0 0.0
  %1142 = vmatpush2.msra.mxu0 0.0
  %1143 = vmatprep.subr.mxu0 0.0
  %1144 = vmatpush2.msra.mxu0 0.0
  %1145 = vmatprep.subr.mxu0 0.0
  %1146 = vmatpush2.msra.mxu0 0.0
  %1147 = vmatprep.subr.mxu0 0.0
  %1148 = vmatpush2.msra.mxu0 0.0
  %1149 = vmatprep.subr.mxu0 0.0
  %1150 = vmatpush2.msra.mxu0 0.0
  %1151 = vmatprep.mubr.f32.mxu0 0.0
  %1152 = vmatmul.mubr.f32.gmra.mxu0 %v970
  %v1153 = vpop.f32.mrf.mxu0
  %v1154 = vadd.f32 0.0, %v1153
  %v1155 = vpop.f32.mrf.mxu0
  %1156 = vmatprep.mubr.f32.mxu0 0.0
  %1157 = vmatmul.mubr.f32.gmra.mxu0 %v975
  %v1158 = vpop.f32.mrf.mxu0
  %v1159 = vadd.f32 0.0, %v1158
  %v1160 = vpop.f32.mrf.mxu0
  %1161 = vdwg.mxu0
  %1162 = vmatprep.subr.mxu0 0.0
  %1163 = vmatpush1.msra.mxu0 0.0
  %1164 = vmatprep.subr.mxu0 0.0
  %1165 = vmatpush1.msra.mxu0 0.0
  %1166 = vmatprep.subr.mxu0 0.0
  %1167 = vmatpush1.msra.mxu0 0.0
  %1168 = vmatprep.subr.mxu0 0.0
  %1169 = vmatpush1.msra.mxu0 0.0
  %1170 = vmatprep.subr.mxu0 0.0
  %1171 = vmatpush1.msra.mxu0 0.0
  %1172 = vmatprep.subr.mxu0 0.0
  %1173 = vmatpush1.msra.mxu0 0.0
  %1174 = vmatprep.subr.mxu0 0.0
  %1175 = vmatpush1.msra.mxu0 0.0
  %1176 = vmatprep.subr.mxu0 0.0
  %1177 = vmatpush1.msra.mxu0 0.0
  %1178 = vmatprep.subr.mxu0 0.0
  %1179 = vmatpush1.msra.mxu0 0.0
  %1180 = vmatprep.subr.mxu0 0.0
  %1181 = vmatpush1.msra.mxu0 0.0
  %1182 = vmatprep.subr.mxu0 0.0
  %1183 = vmatpush1.msra.mxu0 0.0
  %1184 = vmatprep.subr.mxu0 0.0
  %1185 = vmatpush1.msra.mxu0 0.0
  %1186 = vmatprep.subr.mxu0 0.0
  %1187 = vmatpush1.msra.mxu0 0.0
  %1188 = vmatprep.subr.mxu0 0.0
  %1189 = vmatpush1.msra.mxu0 0.0
  %1190 = vmatprep.subr.mxu0 0.0
  %1191 = vmatpush1.msra.mxu0 %v1067
  %1192 = vmatprep.subr.mxu0 0.0
  %1193 = vmatpush1.msra.mxu0 %v1062
  %1194 = vmatprep.subr.mxu0 0.0
  %1195 = vmatpush2.msra.mxu0 0.0
  %1196 = vmatprep.subr.mxu0 0.0
  %1197 = vmatpush2.msra.mxu0 0.0
  %1198 = vmatprep.subr.mxu0 0.0
  %1199 = vmatpush2.msra.mxu0 0.0
  %1200 = vmatprep.subr.mxu0 0.0
  %1201 = vmatpush2.msra.mxu0 0.0
  %1202 = vmatprep.subr.mxu0 0.0
  %1203 = vmatpush2.msra.mxu0 0.0
  %1204 = vmatprep.subr.mxu0 0.0
  %1205 = vmatpush2.msra.mxu0 0.0
  %1206 = vmatprep.subr.mxu0 0.0
  %1207 = vmatpush2.msra.mxu0 0.0
  %1208 = vmatprep.subr.mxu0 0.0
  %1209 = vmatpush2.msra.mxu0 0.0
  %1210 = vmatprep.subr.mxu0 0.0
  %1211 = vmatpush2.msra.mxu0 0.0
  %1212 = vmatprep.subr.mxu0 0.0
  %1213 = vmatpush2.msra.mxu0 0.0
  %1214 = vmatprep.subr.mxu0 0.0
  %1215 = vmatpush2.msra.mxu0 0.0
  %1216 = vmatprep.subr.mxu0 0.0
  %1217 = vmatpush2.msra.mxu0 0.0
  %1218 = vmatprep.subr.mxu0 0.0
  %1219 = vmatpush2.msra.mxu0 0.0
  %1220 = vmatprep.subr.mxu0 0.0
  %1221 = vmatpush2.msra.mxu0 0.0
  %1222 = vmatprep.subr.mxu0 0.0
  %1223 = vmatpush2.msra.mxu0 0.0
  %1224 = vmatprep.subr.mxu0 0.0
  %1225 = vmatpush2.msra.mxu0 0.0
  %1226 = vmatprep.mubr.f32.mxu0 0.0
  %1227 = vmatmul.mubr.f32.gmra.mxu0 %v509
  %v1228 = vpop.f32.mrf.mxu0
  %v1229 = vadd.f32 %v1154, %v1228
  %v1230 = vpop.f32.mrf.mxu0
  %1231 = vmatprep.mubr.f32.mxu0 0.0
  %1232 = vmatmul.mubr.f32.gmra.mxu0 %v512
  %v1233 = vpop.f32.mrf.mxu0
  %v1234 = vadd.f32 %v1159, %v1233
  %v1235 = vpop.f32.mrf.mxu0
  %1236 = vdwg.mxu0
  %s1237 = scalar_lea.vmem %s7, 640
  %v1238 = vld [vmem:[%s1237] sm:$0xff]
  %v1239 = vld [vmem:[%s1237 + $0x8] sm:$0xff]
  %v1240 = vld [vmem:[%s1237 + $0x10] sm:$0xff]
  %v1241 = vld [vmem:[%s1237 + $0x18] sm:$0xff]
  %v1242 = vld [vmem:[%s1237 + $0x20] sm:$0xff]
  %v1243 = vld [vmem:[%s1237 + $0x28] sm:$0xff]
  %v1244 = vld [vmem:[%s1237 + $0x30] sm:$0xff]
  %v1245 = vld [vmem:[%s1237 + $0x38] sm:$0xff]
  %v1246 = vld [vmem:[%s1237 + $0x40] sm:$0xff]
  %v1247 = vld [vmem:[%s1237 + $0x48] sm:$0xff]
  %v1248 = vld [vmem:[%s1237 + $0x50] sm:$0xff]
  %v1249 = vld [vmem:[%s1237 + $0x58] sm:$0xff]
  %v1250 = vld [vmem:[%s1237 + $0x60] sm:$0xff]
  %v1251 = vld [vmem:[%s1237 + $0x68] sm:$0xff]
  %v1252 = vld [vmem:[%s1237 + $0x70] sm:$0xff]
  %v1253 = vld [vmem:[%s1237 + $0x78] sm:$0xff]
  %1254 = vmatprep.subr.mxu0 0.0
  %1255 = vmatpush1.msra.mxu0 %v1253
  %1256 = vmatprep.subr.mxu0 0.0
  %1257 = vmatpush1.msra.mxu0 %v1252
  %1258 = vmatprep.subr.mxu0 0.0
  %1259 = vmatpush1.msra.mxu0 %v1251
  %1260 = vmatprep.subr.mxu0 0.0
  %1261 = vmatpush1.msra.mxu0 %v1250
  %1262 = vmatprep.subr.mxu0 0.0
  %1263 = vmatpush1.msra.mxu0 %v1249
  %1264 = vmatprep.subr.mxu0 0.0
  %1265 = vmatpush1.msra.mxu0 %v1248
  %1266 = vmatprep.subr.mxu0 0.0
  %1267 = vmatpush1.msra.mxu0 %v1247
  %1268 = vmatprep.subr.mxu0 0.0
  %1269 = vmatpush1.msra.mxu0 %v1246
  %1270 = vmatprep.subr.mxu0 0.0
  %1271 = vmatpush1.msra.mxu0 %v1245
  %1272 = vmatprep.subr.mxu0 0.0
  %1273 = vmatpush1.msra.mxu0 %v1244
  %1274 = vmatprep.subr.mxu0 0.0
  %1275 = vmatpush1.msra.mxu0 %v1243
  %1276 = vmatprep.subr.mxu0 0.0
  %1277 = vmatpush1.msra.mxu0 %v1242
  %1278 = vmatprep.subr.mxu0 0.0
  %1279 = vmatpush1.msra.mxu0 %v1241
  %1280 = vmatprep.subr.mxu0 0.0
  %1281 = vmatpush1.msra.mxu0 %v1240
  %1282 = vmatprep.subr.mxu0 0.0
  %1283 = vmatpush1.msra.mxu0 %v1239
  %1284 = vmatprep.subr.mxu0 0.0
  %1285 = vmatpush1.msra.mxu0 %v1238
  %1286 = vmatprep.subr.mxu0 0.0
  %1287 = vmatpush2.msra.mxu0 0.0
  %1288 = vmatprep.subr.mxu0 0.0
  %1289 = vmatpush2.msra.mxu0 0.0
  %1290 = vmatprep.subr.mxu0 0.0
  %1291 = vmatpush2.msra.mxu0 0.0
  %1292 = vmatprep.subr.mxu0 0.0
  %1293 = vmatpush2.msra.mxu0 0.0
  %1294 = vmatprep.subr.mxu0 0.0
  %1295 = vmatpush2.msra.mxu0 0.0
  %1296 = vmatprep.subr.mxu0 0.0
  %1297 = vmatpush2.msra.mxu0 0.0
  %1298 = vmatprep.subr.mxu0 0.0
  %1299 = vmatpush2.msra.mxu0 0.0
  %1300 = vmatprep.subr.mxu0 0.0
  %1301 = vmatpush2.msra.mxu0 0.0
  %1302 = vmatprep.subr.mxu0 0.0
  %1303 = vmatpush2.msra.mxu0 0.0
  %1304 = vmatprep.subr.mxu0 0.0
  %1305 = vmatpush2.msra.mxu0 0.0
  %1306 = vmatprep.subr.mxu0 0.0
  %1307 = vmatpush2.msra.mxu0 0.0
  %1308 = vmatprep.subr.mxu0 0.0
  %1309 = vmatpush2.msra.mxu0 0.0
  %1310 = vmatprep.subr.mxu0 0.0
  %1311 = vmatpush2.msra.mxu0 0.0
  %1312 = vmatprep.subr.mxu0 0.0
  %1313 = vmatpush2.msra.mxu0 0.0
  %1314 = vmatprep.subr.mxu0 0.0
  %1315 = vmatpush2.msra.mxu0 0.0
  %1316 = vmatprep.subr.mxu0 0.0
  %1317 = vmatpush2.msra.mxu0 0.0
  %1318 = vmatprep.mubr.f32.mxu0 0.0
  %1319 = vmatmul.mubr.f32.gmra.mxu0 %v970
  %v1320 = vpop.f32.mrf.mxu0
  %v1321 = vadd.f32 0.0, %v1320
  %v1322 = vpop.f32.mrf.mxu0
  %1323 = vmatprep.mubr.f32.mxu0 0.0
  %1324 = vmatmul.mubr.f32.gmra.mxu0 %v975
  %v1325 = vpop.f32.mrf.mxu0
  %v1326 = vadd.f32 0.0, %v1325
  %v1327 = vpop.f32.mrf.mxu0
  %1328 = vdwg.mxu0
  %1329 = vmatprep.subr.mxu0 0.0
  %1330 = vmatpush1.msra.mxu0 0.0
  %1331 = vmatprep.subr.mxu0 0.0
  %1332 = vmatpush1.msra.mxu0 0.0
  %1333 = vmatprep.subr.mxu0 0.0
  %1334 = vmatpush1.msra.mxu0 0.0
  %1335 = vmatprep.subr.mxu0 0.0
  %1336 = vmatpush1.msra.mxu0 0.0
  %1337 = vmatprep.subr.mxu0 0.0
  %1338 = vmatpush1.msra.mxu0 0.0
  %1339 = vmatprep.subr.mxu0 0.0
  %1340 = vmatpush1.msra.mxu0 0.0
  %1341 = vmatprep.subr.mxu0 0.0
  %1342 = vmatpush1.msra.mxu0 0.0
  %1343 = vmatprep.subr.mxu0 0.0
  %1344 = vmatpush1.msra.mxu0 0.0
  %1345 = vmatprep.subr.mxu0 0.0
  %1346 = vmatpush1.msra.mxu0 0.0
  %1347 = vmatprep.subr.mxu0 0.0
  %1348 = vmatpush1.msra.mxu0 0.0
  %1349 = vmatprep.subr.mxu0 0.0
  %1350 = vmatpush1.msra.mxu0 0.0
  %1351 = vmatprep.subr.mxu0 0.0
  %1352 = vmatpush1.msra.mxu0 0.0
  %1353 = vmatprep.subr.mxu0 0.0
  %1354 = vmatpush1.msra.mxu0 0.0
  %1355 = vmatprep.subr.mxu0 0.0
  %1356 = vmatpush1.msra.mxu0 0.0
  %1357 = vmatprep.subr.mxu0 0.0
  %1358 = vmatpush1.msra.mxu0 %v1326
  %1359 = vmatprep.subr.mxu0 0.0
  %1360 = vmatpush1.msra.mxu0 %v1321
  %1361 = vmatprep.subr.mxu0 0.0
  %1362 = vmatpush2.msra.mxu0 0.0
  %1363 = vmatprep.subr.mxu0 0.0
  %1364 = vmatpush2.msra.mxu0 0.0
  %1365 = vmatprep.subr.mxu0 0.0
  %1366 = vmatpush2.msra.mxu0 0.0
  %1367 = vmatprep.subr.mxu0 0.0
  %1368 = vmatpush2.msra.mxu0 0.0
  %1369 = vmatprep.subr.mxu0 0.0
  %1370 = vmatpush2.msra.mxu0 0.0
  %1371 = vmatprep.subr.mxu0 0.0
  %1372 = vmatpush2.msra.mxu0 0.0
  %1373 = vmatprep.subr.mxu0 0.0
  %1374 = vmatpush2.msra.mxu0 0.0
  %1375 = vmatprep.subr.mxu0 0.0
  %1376 = vmatpush2.msra.mxu0 0.0
  %1377 = vmatprep.subr.mxu0 0.0
  %1378 = vmatpush2.msra.mxu0 0.0
  %1379 = vmatprep.subr.mxu0 0.0
  %1380 = vmatpush2.msra.mxu0 0.0
  %1381 = vmatprep.subr.mxu0 0.0
  %1382 = vmatpush2.msra.mxu0 0.0
  %1383 = vmatprep.subr.mxu0 0.0
  %1384 = vmatpush2.msra.mxu0 0.0
  %1385 = vmatprep.subr.mxu0 0.0
  %1386 = vmatpush2.msra.mxu0 0.0
  %1387 = vmatprep.subr.mxu0 0.0
  %1388 = vmatpush2.msra.mxu0 0.0
  %1389 = vmatprep.subr.mxu0 0.0
  %1390 = vmatpush2.msra.mxu0 0.0
  %1391 = vmatprep.subr.mxu0 0.0
  %1392 = vmatpush2.msra.mxu0 0.0
  %1393 = vmatprep.mubr.f32.mxu0 0.0
  %1394 = vmatmul.mubr.f32.gmra.mxu0 %v685
  %v1395 = vpop.f32.mrf.mxu0
  %v1396 = vadd.f32 0.0, %v1395
  %v1397 = vpop.f32.mrf.mxu0
  %1398 = vmatprep.mubr.f32.mxu0 0.0
  %1399 = vmatmul.mubr.f32.gmra.mxu0 %v688
  %v1400 = vpop.f32.mrf.mxu0
  %v1401 = vadd.f32 0.0, %v1400
  %v1402 = vpop.f32.mrf.mxu0
  %1403 = vdwg.mxu0
  %v1404 = vadd.f32 %v1229, %v1396
  %v1405 = vadd.f32 %v1234, %v1401
  %s1406 = scalar_lea.vmem %s8, 1
  %v1407 = vld [vmem:[%s1406] sm:$0x1]
  %v1409 = vlaneseq
  %v1410 = vshrl.u32 %v1409, 7
  %v1411 = vsub.s32 0, %v1410
  %v1412 = vrot.slane %v1407, %v1411
  %v1414 = vadd.f32 %v1404, %v1412
  %v1415 = vadd.f32 %v1405, %v1412
  %s1416 = scalar_lea.vmem %s9, 128
  %v1417 = vld [vmem:[%s1416] sm:$0xff]
  %v1418 = vld [vmem:[%s1416 + $0x8] sm:$0xff]
  %v1419 = vld [vmem:[%s1416 + $0x10] sm:$0xff]
  %v1420 = vld [vmem:[%s1416 + $0x18] sm:$0xff]
  %v1421 = vld [vmem:[%s1416 + $0x20] sm:$0xff]
  %v1422 = vld [vmem:[%s1416 + $0x28] sm:$0xff]
  %v1423 = vld [vmem:[%s1416 + $0x30] sm:$0xff]
  %v1424 = vld [vmem:[%s1416 + $0x38] sm:$0xff]
  %v1425 = vld [vmem:[%s1416 + $0x40] sm:$0xff]
  %v1426 = vld [vmem:[%s1416 + $0x48] sm:$0xff]
  %v1427 = vld [vmem:[%s1416 + $0x50] sm:$0xff]
  %v1428 = vld [vmem:[%s1416 + $0x58] sm:$0xff]
  %v1429 = vld [vmem:[%s1416 + $0x60] sm:$0xff]
  %v1430 = vld [vmem:[%s1416 + $0x68] sm:$0xff]
  %v1431 = vld [vmem:[%s1416 + $0x70] sm:$0xff]
  %v1432 = vld [vmem:[%s1416 + $0x78] sm:$0xff]
  %s1433 = scalar_lea.vmem %s10, 1
  %v1434 = vld [vmem:[%s1433] sm:$0x1]
  %v1436 = vlaneseq
  %v1437 = vshrl.u32 %v1436, 7
  %v1438 = vsub.s32 0, %v1437
  %v1439 = vrot.slane %v1434, %v1438
  %1441 = vmatprep.subr.mxu0 0.0
  %1442 = vmatpush1.msra.mxu0 %v1432
  %1443 = vmatprep.subr.mxu0 0.0
  %1444 = vmatpush1.msra.mxu0 %v1431
  %1445 = vmatprep.subr.mxu0 0.0
  %1446 = vmatpush1.msra.mxu0 %v1430
  %1447 = vmatprep.subr.mxu0 0.0
  %1448 = vmatpush1.msra.mxu0 %v1429
  %1449 = vmatprep.subr.mxu0 0.0
  %1450 = vmatpush1.msra.mxu0 %v1428
  %1451 = vmatprep.subr.mxu0 0.0
  %1452 = vmatpush1.msra.mxu0 %v1427
  %1453 = vmatprep.subr.mxu0 0.0
  %1454 = vmatpush1.msra.mxu0 %v1426
  %1455 = vmatprep.subr.mxu0 0.0
  %1456 = vmatpush1.msra.mxu0 %v1425
  %1457 = vmatprep.subr.mxu0 0.0
  %1458 = vmatpush1.msra.mxu0 %v1424
  %1459 = vmatprep.subr.mxu0 0.0
  %1460 = vmatpush1.msra.mxu0 %v1423
  %1461 = vmatprep.subr.mxu0 0.0
  %1462 = vmatpush1.msra.mxu0 %v1422
  %1463 = vmatprep.subr.mxu0 0.0
  %1464 = vmatpush1.msra.mxu0 %v1421
  %1465 = vmatprep.subr.mxu0 0.0
  %1466 = vmatpush1.msra.mxu0 %v1420
  %1467 = vmatprep.subr.mxu0 0.0
  %1468 = vmatpush1.msra.mxu0 %v1419
  %1469 = vmatprep.subr.mxu0 0.0
  %1470 = vmatpush1.msra.mxu0 %v1418
  %1471 = vmatprep.subr.mxu0 0.0
  %1472 = vmatpush1.msra.mxu0 %v1417
  %1473 = vmatprep.subr.mxu0 0.0
  %1474 = vmatpush2.msra.mxu0 0.0
  %1475 = vmatprep.subr.mxu0 0.0
  %1476 = vmatpush2.msra.mxu0 0.0
  %1477 = vmatprep.subr.mxu0 0.0
  %1478 = vmatpush2.msra.mxu0 0.0
  %1479 = vmatprep.subr.mxu0 0.0
  %1480 = vmatpush2.msra.mxu0 0.0
  %1481 = vmatprep.subr.mxu0 0.0
  %1482 = vmatpush2.msra.mxu0 0.0
  %1483 = vmatprep.subr.mxu0 0.0
  %1484 = vmatpush2.msra.mxu0 0.0
  %1485 = vmatprep.subr.mxu0 0.0
  %1486 = vmatpush2.msra.mxu0 0.0
  %1487 = vmatprep.subr.mxu0 0.0
  %1488 = vmatpush2.msra.mxu0 0.0
  %1489 = vmatprep.subr.mxu0 0.0
  %1490 = vmatpush2.msra.mxu0 0.0
  %1491 = vmatprep.subr.mxu0 0.0
  %1492 = vmatpush2.msra.mxu0 0.0
  %1493 = vmatprep.subr.mxu0 0.0
  %1494 = vmatpush2.msra.mxu0 0.0
  %1495 = vmatprep.subr.mxu0 0.0
  %1496 = vmatpush2.msra.mxu0 0.0
  %1497 = vmatprep.subr.mxu0 0.0
  %1498 = vmatpush2.msra.mxu0 0.0
  %1499 = vmatprep.subr.mxu0 0.0
  %1500 = vmatpush2.msra.mxu0 0.0
  %1501 = vmatprep.subr.mxu0 0.0
  %1502 = vmatpush2.msra.mxu0 0.0
  %1503 = vmatprep.subr.mxu0 0.0
  %1504 = vmatpush2.msra.mxu0 0.0
  %1505 = vmatprep.mubr.f32.mxu0 0.0
  %1506 = vmatmul.mubr.f32.gmra.mxu0 %v1414
  %v1507 = vpop.f32.mrf.mxu0
  %v1508 = vadd.f32 %v1439, %v1507
  %v1509 = vpop.f32.mrf.mxu0
  %1510 = vmatprep.mubr.f32.mxu0 0.0
  %1511 = vmatmul.mubr.f32.gmra.mxu0 %v1415
  %v1512 = vpop.f32.mrf.mxu0
  %v1513 = vadd.f32 %v1439, %v1512
  %v1514 = vpop.f32.mrf.mxu0
  %1515 = vdwg.mxu0
  %v1516 = vadd.f32 %v876, %v1508
  %v1517 = vadd.f32 %v877, %v1513
  %v1518 = vmax.f32 %v1516, 0.0
  %v1519 = vmax.f32 %v1517, 0.0
  %1520 = vst [vmem:[%s11] sm:$0xff] %v1518
  %1521 = vst [vmem:[%s11 + $0x8] sm:$0xff] %v1519
  // Predicated region
  $region46: #{downsample_forward.6} parent=0 // pred_check
    _
  $region47: #{downsample_forward.6} parent=0 // pred_check_branch
    %1523 = sbr.rel (0) target = $region49
  $region48: #{downsample_forward.6} parent=0 // pred_region
    _
  $region49: #{downsample_forward.6} parent=0 // pred_fallthru
    _
  // Predicated region
  $region50: #{downsample_forward.6} parent=0 // pred_check
    _
  $region51: #{downsample_forward.6} parent=0 // pred_check_branch
    %1525 = sbr.rel (0) target = $region53
  $region52: #{downsample_forward.6} parent=0 // pred_region
    _
  $region53: #{downsample_forward.6} parent=0 // pred_fallthru
    _

// kernel: downsample_forward.5
$region0: #{downsample_forward.5}
  #allocation0 [shape = 'u32[]', space=smem, size = 0x4, offset = 0x4, fixed_abs, tag = 'smem constant byte address 0x4 - core index']
  #allocation1 [shape = 'u32[144,128]{1,0:T(1,128)}', space=vmem, size = 0x12000, scoped, tag = 'internal scratch']
  %s0 = inlined_call_operand.vmem [shape: f32[64,32], index: 0, kind: input, shape index: {}]
  %s1 = inlined_call_operand.hbm [shape: f32[32,64], index: 1, kind: input, shape index: {}]
  %s2 = inlined_call_operand.hbm [shape: f32[32,128], index: 2, kind: input, shape index: {}]
  %s3 = inlined_call_operand.vmem [shape: f32[1,128], index: 3, kind: input, shape index: {}]
  %s4 = inlined_call_operand.hbm [shape: f32[3,32,32], index: 4, kind: input, shape index: {}]
  %s5 = inlined_call_operand.hbm [shape: f32[2,128,128], index: 5, kind: input, shape index: {}]
  %s6 = inlined_call_operand.vmem [shape: f32[2,1,128], index: 6, kind: input, shape index: {}]
  %s7 = inlined_call_operand.hbm [shape: f32[6,128,128], index: 7, kind: input, shape index: {}]
  %s8 = inlined_call_operand.vmem [shape: f32[2,1,128], index: 8, kind: input, shape index: {}]
  %s9 = inlined_call_operand.hbm [shape: f32[2,128,128], index: 9, kind: input, shape index: {}]
  %s10 = inlined_call_operand.vmem [shape: f32[2,1,128], index: 10, kind: input, shape index: {}]
  %s11 = inlined_call_operand.vmem [shape: f32[32,128], index: 11, kind: output, shape index: {}]
  %s12 = sld [smem:[#allocation0]]
  $region78: #{downsample_forward.5} parent=0
    _
  %s14 = ssub.s32 1, %s12
  %s15 = scalar_select 0, %s14, %s12
  $region1: #{downsample_forward.5} parent=0
    #allocation2 [shape = 'u8[16384]{0}', space=vmem, size = 0x4000, scoped, tag = 'input window, operand 1, single buffered']
    #allocation3 [shape = 's32[1]{0}', space=sflag, size = 0x4, scoped, tag = 'scoped memory for downsample_forward.5']
    #allocation4 [shape = 'u8[16384]{0}', space=vmem, size = 0x4000, scoped, tag = 'input window, operand 2, single buffered']
    #allocation5 [shape = 's32[1]{0}', space=sflag, size = 0x4, scoped, tag = 'scoped memory for downsample_forward.5']
    #allocation6 [shape = 'u8[49152]{0}', space=vmem, size = 0xc000, scoped, tag = 'input window, operand 4, single buffered']
    #allocation7 [shape = 'u8[131072]{0}', space=vmem, size = 0x20000, scoped, tag = 'input window, operand 5, single buffered']
    #allocation8 [shape = 's32[1]{0}', space=sflag, size = 0x4, scoped, tag = 'scoped memory for downsample_forward.5']
    #allocation9 [shape = 'u8[393216]{0}', space=vmem, size = 0x60000, scoped, tag = 'input window, operand 7, single buffered']
    #allocation10 [shape = 'u8[131072]{0}', space=vmem, size = 0x20000, scoped, tag = 'input window, operand 9, single buffered']
    #allocation11 [shape = 's32[1]{0}', space=sflag, size = 0x4, scoped, tag = 'scoped memory for downsample_forward.5']
    %16 = vsyncpa [#allocation3], 0
    %17 = vsyncpa [#allocation5], 0
    %18 = vsyncpa [#allocation8], 0
    %19 = vsyncpa [#allocation11], 0
    // Predicated region
    $region2: #{downsample_forward.5} parent=1 // pred_check
      _
    $region3: #{downsample_forward.5} parent=1 // pred_check_branch
      %21 = sbr.rel (0) target = $region5
    $region4: #{downsample_forward.5} parent=1 // pred_region
      _
    $region5: #{downsample_forward.5} parent=1 // pred_fallthru
      _
    // Predicated region
    $region6: #{downsample_forward.5} parent=1 // pred_check
      _
    $region7: #{downsample_forward.5} parent=1 // pred_check_branch
      %23 = sbr.rel (0) target = $region9
    $region8: #{downsample_forward.5} parent=1 // pred_region
      %s25 = ssub.s32 512, 512
      %26 = vsyncadd [#allocation3], %s25
      %s27 = sshll.u32 [#allocation2], 4
      %s28 = int_to_ptr.vmem [resolvable:$true] %s27
      %33 = dma.hbm_to_vmem [thread:$0]  %s1, 512, %s28, [#allocation3], 128, 128, 8
    $region9: #{downsample_forward.5} parent=1 // pred_fallthru
      _
    // Predicated region
    $region10: #{downsample_forward.5} parent=1 // pred_check
      _
    $region11: #{downsample_forward.5} parent=1 // pred_check_branch
      %35 = sbr.rel (0) target = $region13
    $region12: #{downsample_forward.5} parent=1 // pred_region
      %s37 = ssub.s32 512, 512
      %38 = vsyncadd [#allocation5], %s37
      %s39 = sshll.u32 [#allocation4], 4
      %s40 = int_to_ptr.vmem [resolvable:$true] %s39
      %45 = dma.hbm_to_vmem [thread:$0]  %s2, 512, %s40, [#allocation5], 128, 128, 8
    $region13: #{downsample_forward.5} parent=1 // pred_fallthru
      _
    // Predicated region
    $region14: #{downsample_forward.5} parent=1 // pred_check
      _
    $region15: #{downsample_forward.5} parent=1 // pred_check_branch
      %47 = sbr.rel (0) target = $region17
    $region16: #{downsample_forward.5} parent=1 // pred_region
      _
    $region17: #{downsample_forward.5} parent=1 // pred_fallthru
      _
    // Predicated region
    $region18: #{downsample_forward.5} parent=1 // pred_check
      _
    $region19: #{downsample_forward.5} parent=1 // pred_check_branch
      %49 = sbr.rel (0) target = $region21
    $region20: #{downsample_forward.5} parent=1 // pred_region
      %s51 = ssub.s32 1536, 1536
      %52 = vsyncadd [#allocation5], %s51
      %s53 = sshll.u32 [#allocation6], 4
      %s54 = int_to_ptr.vmem [resolvable:$true] %s53
      %59 = dma.hbm_to_vmem [thread:$0]  %s4, 1536, %s54, [#allocation5], 128, 128, 8
    $region21: #{downsample_forward.5} parent=1 // pred_fallthru
      _
    // Predicated region
    $region22: #{downsample_forward.5} parent=1 // pred_check
      _
    $region23: #{downsample_forward.5} parent=1 // pred_check_branch
      %61 = sbr.rel (0) target = $region25
    $region24: #{downsample_forward.5} parent=1 // pred_region
      %s63 = ssub.s32 4096, 4096
      %64 = vsyncadd [#allocation8], %s63
      %s65 = sshll.u32 [#allocation7], 4
      %s66 = int_to_ptr.vmem [resolvable:$true] %s65
      %71 = dma.hbm_to_vmem [thread:$0]  %s5, 4096, %s66, [#allocation8], 128, 128, 8
    $region25: #{downsample_forward.5} parent=1 // pred_fallthru
      _
    // Predicated region
    $region26: #{downsample_forward.5} parent=1 // pred_check
      _
    $region27: #{downsample_forward.5} parent=1 // pred_check_branch
      %73 = sbr.rel (0) target = $region29
    $region28: #{downsample_forward.5} parent=1 // pred_region
      _
    $region29: #{downsample_forward.5} parent=1 // pred_fallthru
      _
    // Predicated region
    $region30: #{downsample_forward.5} parent=1 // pred_check
      _
    $region31: #{downsample_forward.5} parent=1 // pred_check_branch
      %75 = sbr.rel (0) target = $region33
    $region32: #{downsample_forward.5} parent=1 // pred_region
      %s77 = ssub.s32 12288, 12288
      %78 = vsyncadd [#allocation8], %s77
      %s79 = sshll.u32 [#allocation9], 4
      %s80 = int_to_ptr.vmem [resolvable:$true] %s79
      %85 = dma.hbm_to_vmem [thread:$0]  %s7, 12288, %s80, [#allocation8], 128, 128, 8
    $region33: #{downsample_forward.5} parent=1 // pred_fallthru
      _
    // Predicated region
    $region34: #{downsample_forward.5} parent=1 // pred_check
      _
    $region35: #{downsample_forward.5} parent=1 // pred_check_branch
      %87 = sbr.rel (0) target = $region37
    $region36: #{downsample_forward.5} parent=1 // pred_region
      _
    $region37: #{downsample_forward.5} parent=1 // pred_fallthru
      _
    // Predicated region
    $region38: #{downsample_forward.5} parent=1 // pred_check
      _
    $region39: #{downsample_forward.5} parent=1 // pred_check_branch
      %89 = sbr.rel (0) target = $region41
    $region40: #{downsample_forward.5} parent=1 // pred_region
      %s91 = ssub.s32 4096, 4096
      %92 = vsyncadd [#allocation11], %s91
      %s93 = sshll.u32 [#allocation10], 4
      %s94 = int_to_ptr.vmem [resolvable:$true] %s93
      %99 = dma.hbm_to_vmem [thread:$0]  %s9, 4096, %s94, [#allocation11], 128, 128, 8
    $region41: #{downsample_forward.5} parent=1 // pred_fallthru
      _
    // Predicated region
    $region42: #{downsample_forward.5} parent=1 // pred_check
      _
    $region43: #{downsample_forward.5} parent=1 // pred_check_branch
      %101 = sbr.rel (0) target = $region45
    $region44: #{downsample_forward.5} parent=1 // pred_region
      _
    $region45: #{downsample_forward.5} parent=1 // pred_fallthru
      _
    // Predicated region
    $region46: #{downsample_forward.5} parent=1 // pred_check
      _
    $region47: #{downsample_forward.5} parent=1 // pred_check_branch
      %103 = sbr.rel (0) target = $region49
    $region48: #{downsample_forward.5} parent=1 // pred_region
      %104 = dma.done [#allocation3], 512
    $region49: #{downsample_forward.5} parent=1 // pred_fallthru
      _
    // Predicated region
    $region50: #{downsample_forward.5} parent=1 // pred_check
      _
    $region51: #{downsample_forward.5} parent=1 // pred_check_branch
      %106 = sbr.rel (0) target = $region53
    $region52: #{downsample_forward.5} parent=1 // pred_region
      %107 = dma.done [#allocation5], 512
    $region53: #{downsample_forward.5} parent=1 // pred_fallthru
      _
    // Predicated region
    $region54: #{downsample_forward.5} parent=1 // pred_check
      _
    $region55: #{downsample_forward.5} parent=1 // pred_check_branch
      %109 = sbr.rel (0) target = $region57
    $region56: #{downsample_forward.5} parent=1 // pred_region
      %110 = dma.done [#allocation5], 1536
    $region57: #{downsample_forward.5} parent=1 // pred_fallthru
      _
    // Predicated region
    $region58: #{downsample_forward.5} parent=1 // pred_check
      _
    $region59: #{downsample_forward.5} parent=1 // pred_check_branch
      %112 = sbr.rel (0) target = $region61
    $region60: #{downsample_forward.5} parent=1 // pred_region
      %113 = dma.done [#allocation8], 4096
    $region61: #{downsample_forward.5} parent=1 // pred_fallthru
      _
    // Predicated region
    $region62: #{downsample_forward.5} parent=1 // pred_check
      _
    $region63: #{downsample_forward.5} parent=1 // pred_check_branch
      %115 = sbr.rel (0) target = $region65
    $region64: #{downsample_forward.5} parent=1 // pred_region
      %116 = dma.done [#allocation8], 12288
    $region65: #{downsample_forward.5} parent=1 // pred_fallthru
      _
    // Predicated region
    $region66: #{downsample_forward.5} parent=1 // pred_check
      _
    $region67: #{downsample_forward.5} parent=1 // pred_check_branch
      %118 = sbr.rel (0) target = $region69
    $region68: #{downsample_forward.5} parent=1 // pred_region
      %119 = dma.done [#allocation11], 4096
    $region69: #{downsample_forward.5} parent=1 // pred_fallthru
      _
    %v120 = vld [vmem:[#allocation2] sm:$0xff]
    %v121 = vld [vmem:[#allocation2 + $0x8] sm:$0xff]
    %v122 = vld [vmem:[#allocation2 + $0x10] sm:$0xff]
    %v123 = vld [vmem:[#allocation2 + $0x18] sm:$0xff]
    %v124 = vld [vmem:[%s0] sm:$0xff]
    %v125 = vld [vmem:[%s0 + $0x8] sm:$0xff]
    %v126 = vld [vmem:[%s0 + $0x10] sm:$0xff]
    %v127 = vld [vmem:[%s0 + $0x18] sm:$0xff]
    %v128 = vld [vmem:[%s0 + $0x20] sm:$0xff]
    %v129 = vld [vmem:[%s0 + $0x28] sm:$0xff]
    %v130 = vld [vmem:[%s0 + $0x30] sm:$0xff]
    %v131 = vld [vmem:[%s0 + $0x38] sm:$0xff]
    %vm132 = vcmask 523264
    %v134 = vsel %vm132, %v120, 0
    %v137 = vsel %vm132, %v121, 0
    %v140 = vsel %vm132, %v122, 0
    %v143 = vsel %vm132, %v123, 0
    %145 = vmatprep.subr.mxu0 0.0
    %146 = vmatpush1.msra.mxu0 0.0
    %147 = vmatprep.subr.mxu0 0.0
    %148 = vmatpush1.msra.mxu0 0.0
    %149 = vmatprep.subr.mxu0 0.0
    %150 = vmatpush1.msra.mxu0 0.0
    %151 = vmatprep.subr.mxu0 0.0
    %152 = vmatpush1.msra.mxu0 0.0
    %153 = vmatprep.subr.mxu0 0.0
    %154 = vmatpush1.msra.mxu0 0.0
    %155 = vmatprep.subr.mxu0 0.0
    %156 = vmatpush1.msra.mxu0 0.0
    %157 = vmatprep.subr.mxu0 0.0
    %158 = vmatpush1.msra.mxu0 0.0
    %159 = vmatprep.subr.mxu0 0.0
    %160 = vmatpush1.msra.mxu0 0.0
    %161 = vmatprep.subr.mxu0 0.0
    %162 = vmatpush1.msra.mxu0 %v131
    %163 = vmatprep.subr.mxu0 0.0
    %164 = vmatpush1.msra.mxu0 %v130
    %165 = vmatprep.subr.mxu0 0.0
    %166 = vmatpush1.msra.mxu0 %v129
    %167 = vmatprep.subr.mxu0 0.0
    %168 = vmatpush1.msra.mxu0 %v128
    %169 = vmatprep.subr.mxu0 0.0
    %170 = vmatpush1.msra.mxu0 %v127
    %171 = vmatprep.subr.mxu0 0.0
    %172 = vmatpush1.msra.mxu0 %v126
    %173 = vmatprep.subr.mxu0 0.0
    %174 = vmatpush1.msra.mxu0 %v125
    %175 = vmatprep.subr.mxu0 0.0
    %176 = vmatpush1.msra.mxu0 %v124
    %177 = vmatprep.subr.mxu0 0.0
    %178 = vmatpush2.msra.mxu0 0.0
    %179 = vmatprep.subr.mxu0 0.0
    %180 = vmatpush2.msra.mxu0 0.0
    %181 = vmatprep.subr.mxu0 0.0
    %182 = vmatpush2.msra.mxu0 0.0
    %183 = vmatprep.subr.mxu0 0.0
    %184 = vmatpush2.msra.mxu0 0.0
    %185 = vmatprep.subr.mxu0 0.0
    %186 = vmatpush2.msra.mxu0 0.0
    %187 = vmatprep.subr.mxu0 0.0
    %188 = vmatpush2.msra.mxu0 0.0
    %189 = vmatprep.subr.mxu0 0.0
    %190 = vmatpush2.msra.mxu0 0.0
    %191 = vmatprep.subr.mxu0 0.0
    %192 = vmatpush2.msra.mxu0 0.0
    %193 = vmatprep.subr.mxu0 0.0
    %194 = vmatpush2.msra.mxu0 0.0
    %195 = vmatprep.subr.mxu0 0.0
    %196 = vmatpush2.msra.mxu0 0.0
    %197 = vmatprep.subr.mxu0 0.0
    %198 = vmatpush2.msra.mxu0 0.0
    %199 = vmatprep.subr.mxu0 0.0
    %200 = vmatpush2.msra.mxu0 0.0
    %201 = vmatprep.subr.mxu0 0.0
    %202 = vmatpush2.msra.mxu0 0.0
    %203 = vmatprep.subr.mxu0 0.0
    %204 = vmatpush2.msra.mxu0 0.0
    %205 = vmatprep.subr.mxu0 0.0
    %206 = vmatpush2.msra.mxu0 0.0
    %207 = vmatprep.subr.mxu0 0.0
    %208 = vmatpush2.msra.mxu0 0.0
    %209 = vmatprep.mubr.f32.mxu0 0.0
    %210 = vmatmul.mubr.f32.gmra.mxu0 %v134
    %v211 = vpop.f32.mrf.mxu0
    %v212 = vadd.f32 0.0, %v211
    %v213 = vpop.f32.mrf.mxu0
    %214 = vmatprep.mubr.f32.mxu0 0.0
    %215 = vmatmul.mubr.f32.gmra.mxu0 %v137
    %v216 = vpop.f32.mrf.mxu0
    %v217 = vadd.f32 0.0, %v216
    %v218 = vpop.f32.mrf.mxu0
    %219 = vmatprep.mubr.f32.mxu0 0.0
    %220 = vmatmul.mubr.f32.gmra.mxu0 %v140
    %v221 = vpop.f32.mrf.mxu0
    %v222 = vadd.f32 0.0, %v221
    %v223 = vpop.f32.mrf.mxu0
    %224 = vmatprep.mubr.f32.mxu0 0.0
    %225 = vmatmul.mubr.f32.gmra.mxu0 %v143
    %v226 = vpop.f32.mrf.mxu0
    %v227 = vadd.f32 0.0, %v226
    %v228 = vpop.f32.mrf.mxu0
    %229 = vdwg.mxu0
    %v230 = vld [vmem:[#allocation4] sm:$0xff]
    %v231 = vld [vmem:[#allocation4 + $0x8] sm:$0xff]
    %v232 = vld [vmem:[#allocation4 + $0x10] sm:$0xff]
    %v233 = vld [vmem:[#allocation4 + $0x18] sm:$0xff]
    %v234 = vld [vmem:[%s3] sm:$0x1]
    %v236 = vlaneseq
    %v237 = vshrl.u32 %v236, 7
    %v238 = vsub.s32 0, %v237
    %v239 = vrot.slane %v234, %v238
    %vm241 = vcmask 261120
    %v243 = vsel %vm241, %v212, 0
    %v246 = vsel %vm241, %v217, 0
    %v249 = vsel %vm241, %v222, 0
    %v252 = vsel %vm241, %v227, 0
    %254 = vmatprep.subr.mxu0 0.0
    %255 = vmatpush1.msra.mxu0 0.0
    %256 = vmatprep.subr.mxu0 0.0
    %257 = vmatpush1.msra.mxu0 0.0
    %258 = vmatprep.subr.mxu0 0.0
    %259 = vmatpush1.msra.mxu0 0.0
    %260 = vmatprep.subr.mxu0 0.0
    %261 = vmatpush1.msra.mxu0 0.0
    %262 = vmatprep.subr.mxu0 0.0
    %263 = vmatpush1.msra.mxu0 0.0
    %264 = vmatprep.subr.mxu0 0.0
    %265 = vmatpush1.msra.mxu0 0.0
    %266 = vmatprep.subr.mxu0 0.0
    %267 = vmatpush1.msra.mxu0 0.0
    %268 = vmatprep.subr.mxu0 0.0
    %269 = vmatpush1.msra.mxu0 0.0
    %270 = vmatprep.subr.mxu0 0.0
    %271 = vmatpush1.msra.mxu0 0.0
    %272 = vmatprep.subr.mxu0 0.0
    %273 = vmatpush1.msra.mxu0 0.0
    %274 = vmatprep.subr.mxu0 0.0
    %275 = vmatpush1.msra.mxu0 0.0
    %276 = vmatprep.subr.mxu0 0.0
    %277 = vmatpush1.msra.mxu0 0.0
    %278 = vmatprep.subr.mxu0 0.0
    %279 = vmatpush1.msra.mxu0 %v233
    %280 = vmatprep.subr.mxu0 0.0
    %281 = vmatpush1.msra.mxu0 %v232
    %282 = vmatprep.subr.mxu0 0.0
    %283 = vmatpush1.msra.mxu0 %v231
    %284 = vmatprep.subr.mxu0 0.0
    %285 = vmatpush1.msra.mxu0 %v230
    %286 = vmatprep.subr.mxu0 0.0
    %287 = vmatpush2.msra.mxu0 0.0
    %288 = vmatprep.subr.mxu0 0.0
    %289 = vmatpush2.msra.mxu0 0.0
    %290 = vmatprep.subr.mxu0 0.0
    %291 = vmatpush2.msra.mxu0 0.0
    %292 = vmatprep.subr.mxu0 0.0
    %293 = vmatpush2.msra.mxu0 0.0
    %294 = vmatprep.subr.mxu0 0.0
    %295 = vmatpush2.msra.mxu0 0.0
    %296 = vmatprep.subr.mxu0 0.0
    %297 = vmatpush2.msra.mxu0 0.0
    %298 = vmatprep.subr.mxu0 0.0
    %299 = vmatpush2.msra.mxu0 0.0
    %300 = vmatprep.subr.mxu0 0.0
    %301 = vmatpush2.msra.mxu0 0.0
    %302 = vmatprep.subr.mxu0 0.0
    %303 = vmatpush2.msra.mxu0 0.0
    %304 = vmatprep.subr.mxu0 0.0
    %305 = vmatpush2.msra.mxu0 0.0
    %306 = vmatprep.subr.mxu0 0.0
    %307 = vmatpush2.msra.mxu0 0.0
    %308 = vmatprep.subr.mxu0 0.0
    %309 = vmatpush2.msra.mxu0 0.0
    %310 = vmatprep.subr.mxu0 0.0
    %311 = vmatpush2.msra.mxu0 0.0
    %312 = vmatprep.subr.mxu0 0.0
    %313 = vmatpush2.msra.mxu0 0.0
    %314 = vmatprep.subr.mxu0 0.0
    %315 = vmatpush2.msra.mxu0 0.0
    %316 = vmatprep.subr.mxu0 0.0
    %317 = vmatpush2.msra.mxu0 0.0
    %318 = vmatprep.mubr.f32.mxu0 0.0
    %319 = vmatmul.mubr.f32.gmra.mxu0 %v243
    %v320 = vpop.f32.mrf.mxu0
    %v321 = vadd.f32 %v239, %v320
    %v322 = vpop.f32.mrf.mxu0
    %323 = vmatprep.mubr.f32.mxu0 0.0
    %324 = vmatmul.mubr.f32.gmra.mxu0 %v246
    %v325 = vpop.f32.mrf.mxu0
    %v326 = vadd.f32 %v239, %v325
    %v327 = vpop.f32.mrf.mxu0
    %328 = vmatprep.mubr.f32.mxu0 0.0
    %329 = vmatmul.mubr.f32.gmra.mxu0 %v249
    %v330 = vpop.f32.mrf.mxu0
    %v331 = vadd.f32 %v239, %v330
    %v332 = vpop.f32.mrf.mxu0
    %333 = vmatprep.mubr.f32.mxu0 0.0
    %334 = vmatmul.mubr.f32.gmra.mxu0 %v252
    %v335 = vpop.f32.mrf.mxu0
    %v336 = vadd.f32 %v239, %v335
    %v337 = vpop.f32.mrf.mxu0
    %338 = vdwg.mxu0
    %v339 = vld [vmem:[#allocation7] sm:$0xff]
    %v340 = vld [vmem:[#allocation7 + $0x8] sm:$0xff]
    %v341 = vld [vmem:[#allocation7 + $0x10] sm:$0xff]
    %v342 = vld [vmem:[#allocation7 + $0x18] sm:$0xff]
    %v343 = vld [vmem:[#allocation7 + $0x20] sm:$0xff]
    %v344 = vld [vmem:[#allocation7 + $0x28] sm:$0xff]
    %v345 = vld [vmem:[#allocation7 + $0x30] sm:$0xff]
    %v346 = vld [vmem:[#allocation7 + $0x38] sm:$0xff]
    %v347 = vld [vmem:[#allocation7 + $0x40] sm:$0xff]
    %v348 = vld [vmem:[#allocation7 + $0x48] sm:$0xff]
    %v349 = vld [vmem:[#allocation7 + $0x50] sm:$0xff]
    %v350 = vld [vmem:[#allocation7 + $0x58] sm:$0xff]
    %v351 = vld [vmem:[#allocation7 + $0x60] sm:$0xff]
    %v352 = vld [vmem:[#allocation7 + $0x68] sm:$0xff]
    %v353 = vld [vmem:[#allocation7 + $0x70] sm:$0xff]
    %v354 = vld [vmem:[#allocation7 + $0x78] sm:$0xff]
    %v355 = vld [vmem:[%s6] sm:$0x1]
    %v357 = vlaneseq
    %v358 = vshrl.u32 %v357, 7
    %v359 = vsub.s32 0, %v358
    %v360 = vrot.slane %v355, %v359
    %362 = vmatprep.subr.mxu0 0.0
    %363 = vmatpush1.msra.mxu0 %v354
    %364 = vmatprep.subr.mxu0 0.0
    %365 = vmatpush1.msra.mxu0 %v353
    %366 = vmatprep.subr.mxu0 0.0
    %367 = vmatpush1.msra.mxu0 %v352
    %368 = vmatprep.subr.mxu0 0.0
    %369 = vmatpush1.msra.mxu0 %v351
    %370 = vmatprep.subr.mxu0 0.0
    %371 = vmatpush1.msra.mxu0 %v350
    %372 = vmatprep.subr.mxu0 0.0
    %373 = vmatpush1.msra.mxu0 %v349
    %374 = vmatprep.subr.mxu0 0.0
    %375 = vmatpush1.msra.mxu0 %v348
    %376 = vmatprep.subr.mxu0 0.0
    %377 = vmatpush1.msra.mxu0 %v347
    %378 = vmatprep.subr.mxu0 0.0
    %379 = vmatpush1.msra.mxu0 %v346
    %380 = vmatprep.subr.mxu0 0.0
    %381 = vmatpush1.msra.mxu0 %v345
    %382 = vmatprep.subr.mxu0 0.0
    %383 = vmatpush1.msra.mxu0 %v344
    %384 = vmatprep.subr.mxu0 0.0
    %385 = vmatpush1.msra.mxu0 %v343
    %386 = vmatprep.subr.mxu0 0.0
    %387 = vmatpush1.msra.mxu0 %v342
    %388 = vmatprep.subr.mxu0 0.0
    %389 = vmatpush1.msra.mxu0 %v341
    %390 = vmatprep.subr.mxu0 0.0
    %391 = vmatpush1.msra.mxu0 %v340
    %392 = vmatprep.subr.mxu0 0.0
    %393 = vmatpush1.msra.mxu0 %v339
    %394 = vmatprep.subr.mxu0 0.0
    %395 = vmatpush2.msra.mxu0 0.0
    %396 = vmatprep.subr.mxu0 0.0
    %397 = vmatpush2.msra.mxu0 0.0
    %398 = vmatprep.subr.mxu0 0.0
    %399 = vmatpush2.msra.mxu0 0.0
    %400 = vmatprep.subr.mxu0 0.0
    %401 = vmatpush2.msra.mxu0 0.0
    %402 = vmatprep.subr.mxu0 0.0
    %403 = vmatpush2.msra.mxu0 0.0
    %404 = vmatprep.subr.mxu0 0.0
    %405 = vmatpush2.msra.mxu0 0.0
    %406 = vmatprep.subr.mxu0 0.0
    %407 = vmatpush2.msra.mxu0 0.0
    %408 = vmatprep.subr.mxu0 0.0
    %409 = vmatpush2.msra.mxu0 0.0
    %410 = vmatprep.subr.mxu0 0.0
    %411 = vmatpush2.msra.mxu0 0.0
    %412 = vmatprep.subr.mxu0 0.0
    %413 = vmatpush2.msra.mxu0 0.0
    %414 = vmatprep.subr.mxu0 0.0
    %415 = vmatpush2.msra.mxu0 0.0
    %416 = vmatprep.subr.mxu0 0.0
    %417 = vmatpush2.msra.mxu0 0.0
    %418 = vmatprep.subr.mxu0 0.0
    %419 = vmatpush2.msra.mxu0 0.0
    %420 = vmatprep.subr.mxu0 0.0
    %421 = vmatpush2.msra.mxu0 0.0
    %422 = vmatprep.subr.mxu0 0.0
    %423 = vmatpush2.msra.mxu0 0.0
    %424 = vmatprep.subr.mxu0 0.0
    %425 = vmatpush2.msra.mxu0 0.0
    %426 = vmatprep.mubr.f32.mxu0 0.0
    %427 = vmatmul.mubr.f32.gmra.mxu0 %v321
    %v428 = vpop.f32.mrf.mxu0
    %v429 = vadd.f32 %v360, %v428
    %v430 = vpop.f32.mrf.mxu0
    %431 = vmatprep.mubr.f32.mxu0 0.0
    %432 = vmatmul.mubr.f32.gmra.mxu0 %v326
    %v433 = vpop.f32.mrf.mxu0
    %v434 = vadd.f32 %v360, %v433
    %v435 = vpop.f32.mrf.mxu0
    %436 = vmatprep.mubr.f32.mxu0 0.0
    %437 = vmatmul.mubr.f32.gmra.mxu0 %v331
    %v438 = vpop.f32.mrf.mxu0
    %v439 = vadd.f32 %v360, %v438
    %v440 = vpop.f32.mrf.mxu0
    %441 = vmatprep.mubr.f32.mxu0 0.0
    %442 = vmatmul.mubr.f32.gmra.mxu0 %v336
    %v443 = vpop.f32.mrf.mxu0
    %v444 = vadd.f32 %v360, %v443
    %v445 = vpop.f32.mrf.mxu0
    %446 = vdwg.mxu0
    %v447 = vld [vmem:[#allocation9] sm:$0xff]
    %v448 = vld [vmem:[#allocation9 + $0x8] sm:$0xff]
    %v449 = vld [vmem:[#allocation9 + $0x10] sm:$0xff]
    %v450 = vld [vmem:[#allocation9 + $0x18] sm:$0xff]
    %v451 = vld [vmem:[#allocation9 + $0x20] sm:$0xff]
    %v452 = vld [vmem:[#allocation9 + $0x28] sm:$0xff]
    %v453 = vld [vmem:[#allocation9 + $0x30] sm:$0xff]
    %v454 = vld [vmem:[#allocation9 + $0x38] sm:$0xff]
    %v455 = vld [vmem:[#allocation9 + $0x40] sm:$0xff]
    %v456 = vld [vmem:[#allocation9 + $0x48] sm:$0xff]
    %v457 = vld [vmem:[#allocation9 + $0x50] sm:$0xff]
    %v458 = vld [vmem:[#allocation9 + $0x58] sm:$0xff]
    %v459 = vld [vmem:[#allocation9 + $0x60] sm:$0xff]
    %v460 = vld [vmem:[#allocation9 + $0x68] sm:$0xff]
    %v461 = vld [vmem:[#allocation9 + $0x70] sm:$0xff]
    %v462 = vld [vmem:[#allocation9 + $0x78] sm:$0xff]
    %463 = vmatprep.subr.mxu0 0.0
    %464 = vmatpush1.msra.mxu0 %v462
    %465 = vmatprep.subr.mxu0 0.0
    %466 = vmatpush1.msra.mxu0 %v461
    %467 = vmatprep.subr.mxu0 0.0
    %468 = vmatpush1.msra.mxu0 %v460
    %469 = vmatprep.subr.mxu0 0.0
    %470 = vmatpush1.msra.mxu0 %v459
    %471 = vmatprep.subr.mxu0 0.0
    %472 = vmatpush1.msra.mxu0 %v458
    %473 = vmatprep.subr.mxu0 0.0
    %474 = vmatpush1.msra.mxu0 %v457
    %475 = vmatprep.subr.mxu0 0.0
    %476 = vmatpush1.msra.mxu0 %v456
    %477 = vmatprep.subr.mxu0 0.0
    %478 = vmatpush1.msra.mxu0 %v455
    %479 = vmatprep.subr.mxu0 0.0
    %480 = vmatpush1.msra.mxu0 %v454
    %481 = vmatprep.subr.mxu0 0.0
    %482 = vmatpush1.msra.mxu0 %v453
    %483 = vmatprep.subr.mxu0 0.0
    %484 = vmatpush1.msra.mxu0 %v452
    %485 = vmatprep.subr.mxu0 0.0
    %486 = vmatpush1.msra.mxu0 %v451
    %487 = vmatprep.subr.mxu0 0.0
    %488 = vmatpush1.msra.mxu0 %v450
    %489 = vmatprep.subr.mxu0 0.0
    %490 = vmatpush1.msra.mxu0 %v449
    %491 = vmatprep.subr.mxu0 0.0
    %492 = vmatpush1.msra.mxu0 %v448
    %493 = vmatprep.subr.mxu0 0.0
    %494 = vmatpush1.msra.mxu0 %v447
    %495 = vmatprep.subr.mxu0 0.0
    %496 = vmatpush2.msra.mxu0 0.0
    %497 = vmatprep.subr.mxu0 0.0
    %498 = vmatpush2.msra.mxu0 0.0
    %499 = vmatprep.subr.mxu0 0.0
    %500 = vmatpush2.msra.mxu0 0.0
    %501 = vmatprep.subr.mxu0 0.0
    %502 = vmatpush2.msra.mxu0 0.0
    %503 = vmatprep.subr.mxu0 0.0
    %504 = vmatpush2.msra.mxu0 0.0
    %505 = vmatprep.subr.mxu0 0.0
    %506 = vmatpush2.msra.mxu0 0.0
    %507 = vmatprep.subr.mxu0 0.0
    %508 = vmatpush2.msra.mxu0 0.0
    %509 = vmatprep.subr.mxu0 0.0
    %510 = vmatpush2.msra.mxu0 0.0
    %511 = vmatprep.subr.mxu0 0.0
    %512 = vmatpush2.msra.mxu0 0.0
    %513 = vmatprep.subr.mxu0 0.0
    %514 = vmatpush2.msra.mxu0 0.0
    %515 = vmatprep.subr.mxu0 0.0
    %516 = vmatpush2.msra.mxu0 0.0
    %517 = vmatprep.subr.mxu0 0.0
    %518 = vmatpush2.msra.mxu0 0.0
    %519 = vmatprep.subr.mxu0 0.0
    %520 = vmatpush2.msra.mxu0 0.0
    %521 = vmatprep.subr.mxu0 0.0
    %522 = vmatpush2.msra.mxu0 0.0
    %523 = vmatprep.subr.mxu0 0.0
    %524 = vmatpush2.msra.mxu0 0.0
    %525 = vmatprep.subr.mxu0 0.0
    %526 = vmatpush2.msra.mxu0 0.0
    %527 = vmatprep.mubr.f32.mxu0 0.0
    %528 = vmatmul.mubr.f32.gmra.mxu0 %v429
    %v529 = vpop.f32.mrf.mxu0
    %v530 = vadd.f32 0.0, %v529
    %v531 = vpop.f32.mrf.mxu0
    %532 = vmatprep.mubr.f32.mxu0 0.0
    %533 = vmatmul.mubr.f32.gmra.mxu0 %v434
    %v534 = vpop.f32.mrf.mxu0
    %v535 = vadd.f32 0.0, %v534
    %v536 = vpop.f32.mrf.mxu0
    %537 = vmatprep.mubr.f32.mxu0 0.0
    %538 = vmatmul.mubr.f32.gmra.mxu0 %v439
    %v539 = vpop.f32.mrf.mxu0
    %v540 = vadd.f32 0.0, %v539
    %v541 = vpop.f32.mrf.mxu0
    %542 = vmatprep.mubr.f32.mxu0 0.0
    %543 = vmatmul.mubr.f32.gmra.mxu0 %v444
    %v544 = vpop.f32.mrf.mxu0
    %v545 = vadd.f32 0.0, %v544
    %v546 = vpop.f32.mrf.mxu0
    %547 = vdwg.mxu0
    %v548 = vld [vmem:[#allocation6] sm:$0xff]
    %v549 = vld [vmem:[#allocation6 + $0x8] sm:$0xff]
    %v550 = vld [vmem:[#allocation6 + $0x10] sm:$0xff]
    %v551 = vld [vmem:[#allocation6 + $0x18] sm:$0xff]
    %s552 = scalar_lea.vmem [#allocation9], 128
    %v553 = vld [vmem:[%s552] sm:$0xff]
    %v554 = vld [vmem:[%s552 + $0x8] sm:$0xff]
    %v555 = vld [vmem:[%s552 + $0x10] sm:$0xff]
    %v556 = vld [vmem:[%s552 + $0x18] sm:$0xff]
    %v557 = vld [vmem:[%s552 + $0x20] sm:$0xff]
    %v558 = vld [vmem:[%s552 + $0x28] sm:$0xff]
    %v559 = vld [vmem:[%s552 + $0x30] sm:$0xff]
    %v560 = vld [vmem:[%s552 + $0x38] sm:$0xff]
    %v561 = vld [vmem:[%s552 + $0x40] sm:$0xff]
    %v562 = vld [vmem:[%s552 + $0x48] sm:$0xff]
    %v563 = vld [vmem:[%s552 + $0x50] sm:$0xff]
    %v564 = vld [vmem:[%s552 + $0x58] sm:$0xff]
    %v565 = vld [vmem:[%s552 + $0x60] sm:$0xff]
    %v566 = vld [vmem:[%s552 + $0x68] sm:$0xff]
    %v567 = vld [vmem:[%s552 + $0x70] sm:$0xff]
    %v568 = vld [vmem:[%s552 + $0x78] sm:$0xff]
    %569 = vmatprep.subr.mxu0 0.0
    %570 = vmatpush1.msra.mxu0 %v568
    %571 = vmatprep.subr.mxu0 0.0
    %572 = vmatpush1.msra.mxu0 %v567
    %573 = vmatprep.subr.mxu0 0.0
    %574 = vmatpush1.msra.mxu0 %v566
    %575 = vmatprep.subr.mxu0 0.0
    %576 = vmatpush1.msra.mxu0 %v565
    %577 = vmatprep.subr.mxu0 0.0
    %578 = vmatpush1.msra.mxu0 %v564
    %579 = vmatprep.subr.mxu0 0.0
    %580 = vmatpush1.msra.mxu0 %v563
    %581 = vmatprep.subr.mxu0 0.0
    %582 = vmatpush1.msra.mxu0 %v562
    %583 = vmatprep.subr.mxu0 0.0
    %584 = vmatpush1.msra.mxu0 %v561
    %585 = vmatprep.subr.mxu0 0.0
    %586 = vmatpush1.msra.mxu0 %v560
    %587 = vmatprep.subr.mxu0 0.0
    %588 = vmatpush1.msra.mxu0 %v559
    %589 = vmatprep.subr.mxu0 0.0
    %590 = vmatpush1.msra.mxu0 %v558
    %591 = vmatprep.subr.mxu0 0.0
    %592 = vmatpush1.msra.mxu0 %v557
    %593 = vmatprep.subr.mxu0 0.0
    %594 = vmatpush1.msra.mxu0 %v556
    %595 = vmatprep.subr.mxu0 0.0
    %596 = vmatpush1.msra.mxu0 %v555
    %597 = vmatprep.subr.mxu0 0.0
    %598 = vmatpush1.msra.mxu0 %v554
    %599 = vmatprep.subr.mxu0 0.0
    %600 = vmatpush1.msra.mxu0 %v553
    %601 = vmatprep.subr.mxu0 0.0
    %602 = vmatpush2.msra.mxu0 0.0
    %603 = vmatprep.subr.mxu0 0.0
    %604 = vmatpush2.msra.mxu0 0.0
    %605 = vmatprep.subr.mxu0 0.0
    %606 = vmatpush2.msra.mxu0 0.0
    %607 = vmatprep.subr.mxu0 0.0
    %608 = vmatpush2.msra.mxu0 0.0
    %609 = vmatprep.subr.mxu0 0.0
    %610 = vmatpush2.msra.mxu0 0.0
    %611 = vmatprep.subr.mxu0 0.0
    %612 = vmatpush2.msra.mxu0 0.0
    %613 = vmatprep.subr.mxu0 0.0
    %614 = vmatpush2.msra.mxu0 0.0
    %615 = vmatprep.subr.mxu0 0.0
    %616 = vmatpush2.msra.mxu0 0.0
    %617 = vmatprep.subr.mxu0 0.0
    %618 = vmatpush2.msra.mxu0 0.0
    %619 = vmatprep.subr.mxu0 0.0
    %620 = vmatpush2.msra.mxu0 0.0
    %621 = vmatprep.subr.mxu0 0.0
    %622 = vmatpush2.msra.mxu0 0.0
    %623 = vmatprep.subr.mxu0 0.0
    %624 = vmatpush2.msra.mxu0 0.0
    %625 = vmatprep.subr.mxu0 0.0
    %626 = vmatpush2.msra.mxu0 0.0
    %627 = vmatprep.subr.mxu0 0.0
    %628 = vmatpush2.msra.mxu0 0.0
    %629 = vmatprep.subr.mxu0 0.0
    %630 = vmatpush2.msra.mxu0 0.0
    %631 = vmatprep.subr.mxu0 0.0
    %632 = vmatpush2.msra.mxu0 0.0
    %633 = vmatprep.mubr.f32.mxu0 0.0
    %634 = vmatmul.mubr.f32.gmra.mxu0 %v429
    %v635 = vpop.f32.mrf.mxu0
    %v636 = vadd.f32 0.0, %v635
    %v637 = vpop.f32.mrf.mxu0
    %638 = vmatprep.mubr.f32.mxu0 0.0
    %639 = vmatmul.mubr.f32.gmra.mxu0 %v434
    %v640 = vpop.f32.mrf.mxu0
    %v641 = vadd.f32 0.0, %v640
    %v642 = vpop.f32.mrf.mxu0
    %643 = vmatprep.mubr.f32.mxu0 0.0
    %644 = vmatmul.mubr.f32.gmra.mxu0 %v439
    %v645 = vpop.f32.mrf.mxu0
    %v646 = vadd.f32 0.0, %v645
    %v647 = vpop.f32.mrf.mxu0
    %648 = vmatprep.mubr.f32.mxu0 0.0
    %649 = vmatmul.mubr.f32.gmra.mxu0 %v444
    %v650 = vpop.f32.mrf.mxu0
    %v651 = vadd.f32 0.0, %v650
    %v652 = vpop.f32.mrf.mxu0
    %653 = vdwg.mxu0
    %v655 = vsel %vm241, %v548, 0
    %v658 = vsel %vm241, %v549, 0
    %v661 = vsel %vm241, %v550, 0
    %v664 = vsel %vm241, %v551, 0
    %666 = vmatprep.subr.mxu0 0.0
    %667 = vmatpush1.msra.mxu0 0.0
    %668 = vmatprep.subr.mxu0 0.0
    %669 = vmatpush1.msra.mxu0 0.0
    %670 = vmatprep.subr.mxu0 0.0
    %671 = vmatpush1.msra.mxu0 0.0
    %672 = vmatprep.subr.mxu0 0.0
    %673 = vmatpush1.msra.mxu0 0.0
    %674 = vmatprep.subr.mxu0 0.0
    %675 = vmatpush1.msra.mxu0 0.0
    %676 = vmatprep.subr.mxu0 0.0
    %677 = vmatpush1.msra.mxu0 0.0
    %678 = vmatprep.subr.mxu0 0.0
    %679 = vmatpush1.msra.mxu0 0.0
    %680 = vmatprep.subr.mxu0 0.0
    %681 = vmatpush1.msra.mxu0 0.0
    %682 = vmatprep.subr.mxu0 0.0
    %683 = vmatpush1.msra.mxu0 0.0
    %684 = vmatprep.subr.mxu0 0.0
    %685 = vmatpush1.msra.mxu0 0.0
    %686 = vmatprep.subr.mxu0 0.0
    %687 = vmatpush1.msra.mxu0 0.0
    %688 = vmatprep.subr.mxu0 0.0
    %689 = vmatpush1.msra.mxu0 0.0
    %690 = vmatprep.subr.mxu0 0.0
    %691 = vmatpush1.msra.mxu0 %v545
    %692 = vmatprep.subr.mxu0 0.0
    %693 = vmatpush1.msra.mxu0 %v540
    %694 = vmatprep.subr.mxu0 0.0
    %695 = vmatpush1.msra.mxu0 %v535
    %696 = vmatprep.subr.mxu0 0.0
    %697 = vmatpush1.msra.mxu0 %v530
    %698 = vmatprep.subr.mxu0 0.0
    %699 = vmatpush2.msra.mxu0 0.0
    %700 = vmatprep.subr.mxu0 0.0
    %701 = vmatpush2.msra.mxu0 0.0
    %702 = vmatprep.subr.mxu0 0.0
    %703 = vmatpush2.msra.mxu0 0.0
    %704 = vmatprep.subr.mxu0 0.0
    %705 = vmatpush2.msra.mxu0 0.0
    %706 = vmatprep.subr.mxu0 0.0
    %707 = vmatpush2.msra.mxu0 0.0
    %708 = vmatprep.subr.mxu0 0.0
    %709 = vmatpush2.msra.mxu0 0.0
    %710 = vmatprep.subr.mxu0 0.0
    %711 = vmatpush2.msra.mxu0 0.0
    %712 = vmatprep.subr.mxu0 0.0
    %713 = vmatpush2.msra.mxu0 0.0
    %714 = vmatprep.subr.mxu0 0.0
    %715 = vmatpush2.msra.mxu0 0.0
    %716 = vmatprep.subr.mxu0 0.0
    %717 = vmatpush2.msra.mxu0 0.0
    %718 = vmatprep.subr.mxu0 0.0
    %719 = vmatpush2.msra.mxu0 0.0
    %720 = vmatprep.subr.mxu0 0.0
    %721 = vmatpush2.msra.mxu0 0.0
    %722 = vmatprep.subr.mxu0 0.0
    %723 = vmatpush2.msra.mxu0 0.0
    %724 = vmatprep.subr.mxu0 0.0
    %725 = vmatpush2.msra.mxu0 0.0
    %726 = vmatprep.subr.mxu0 0.0
    %727 = vmatpush2.msra.mxu0 0.0
    %728 = vmatprep.subr.mxu0 0.0
    %729 = vmatpush2.msra.mxu0 0.0
    %730 = vmatprep.mubr.f32.mxu0 0.0
    %731 = vmatmul.mubr.f32.gmra.mxu0 %v655
    %v732 = vpop.f32.mrf.mxu0
    %v733 = vadd.f32 %v636, %v732
    %v734 = vpop.f32.mrf.mxu0
    %735 = vmatprep.mubr.f32.mxu0 0.0
    %736 = vmatmul.mubr.f32.gmra.mxu0 %v658
    %v737 = vpop.f32.mrf.mxu0
    %v738 = vadd.f32 %v641, %v737
    %v739 = vpop.f32.mrf.mxu0
    %740 = vmatprep.mubr.f32.mxu0 0.0
    %741 = vmatmul.mubr.f32.gmra.mxu0 %v661
    %v742 = vpop.f32.mrf.mxu0
    %v743 = vadd.f32 %v646, %v742
    %v744 = vpop.f32.mrf.mxu0
    %745 = vmatprep.mubr.f32.mxu0 0.0
    %746 = vmatmul.mubr.f32.gmra.mxu0 %v664
    %v747 = vpop.f32.mrf.mxu0
    %v748 = vadd.f32 %v651, %v747
    %v749 = vpop.f32.mrf.mxu0
    %750 = vdwg.mxu0
    %s751 = scalar_lea.vmem [#allocation9], 256
    %v752 = vld [vmem:[%s751] sm:$0xff]
    %v753 = vld [vmem:[%s751 + $0x8] sm:$0xff]
    %v754 = vld [vmem:[%s751 + $0x10] sm:$0xff]
    %v755 = vld [vmem:[%s751 + $0x18] sm:$0xff]
    %v756 = vld [vmem:[%s751 + $0x20] sm:$0xff]
    %v757 = vld [vmem:[%s751 + $0x28] sm:$0xff]
    %v758 = vld [vmem:[%s751 + $0x30] sm:$0xff]
    %v759 = vld [vmem:[%s751 + $0x38] sm:$0xff]
    %v760 = vld [vmem:[%s751 + $0x40] sm:$0xff]
    %v761 = vld [vmem:[%s751 + $0x48] sm:$0xff]
    %v762 = vld [vmem:[%s751 + $0x50] sm:$0xff]
    %v763 = vld [vmem:[%s751 + $0x58] sm:$0xff]
    %v764 = vld [vmem:[%s751 + $0x60] sm:$0xff]
    %v765 = vld [vmem:[%s751 + $0x68] sm:$0xff]
    %v766 = vld [vmem:[%s751 + $0x70] sm:$0xff]
    %v767 = vld [vmem:[%s751 + $0x78] sm:$0xff]
    %768 = vmatprep.subr.mxu0 0.0
    %769 = vmatpush1.msra.mxu0 %v767
    %770 = vmatprep.subr.mxu0 0.0
    %771 = vmatpush1.msra.mxu0 %v766
    %772 = vmatprep.subr.mxu0 0.0
    %773 = vmatpush1.msra.mxu0 %v765
    %774 = vmatprep.subr.mxu0 0.0
    %775 = vmatpush1.msra.mxu0 %v764
    %776 = vmatprep.subr.mxu0 0.0
    %777 = vmatpush1.msra.mxu0 %v763
    %778 = vmatprep.subr.mxu0 0.0
    %779 = vmatpush1.msra.mxu0 %v762
    %780 = vmatprep.subr.mxu0 0.0
    %781 = vmatpush1.msra.mxu0 %v761
    %782 = vmatprep.subr.mxu0 0.0
    %783 = vmatpush1.msra.mxu0 %v760
    %784 = vmatprep.subr.mxu0 0.0
    %785 = vmatpush1.msra.mxu0 %v759
    %786 = vmatprep.subr.mxu0 0.0
    %787 = vmatpush1.msra.mxu0 %v758
    %788 = vmatprep.subr.mxu0 0.0
    %789 = vmatpush1.msra.mxu0 %v757
    %790 = vmatprep.subr.mxu0 0.0
    %791 = vmatpush1.msra.mxu0 %v756
    %792 = vmatprep.subr.mxu0 0.0
    %793 = vmatpush1.msra.mxu0 %v755
    %794 = vmatprep.subr.mxu0 0.0
    %795 = vmatpush1.msra.mxu0 %v754
    %796 = vmatprep.subr.mxu0 0.0
    %797 = vmatpush1.msra.mxu0 %v753
    %798 = vmatprep.subr.mxu0 0.0
    %799 = vmatpush1.msra.mxu0 %v752
    %800 = vmatprep.subr.mxu0 0.0
    %801 = vmatpush2.msra.mxu0 0.0
    %802 = vmatprep.subr.mxu0 0.0
    %803 = vmatpush2.msra.mxu0 0.0
    %804 = vmatprep.subr.mxu0 0.0
    %805 = vmatpush2.msra.mxu0 0.0
    %806 = vmatprep.subr.mxu0 0.0
    %807 = vmatpush2.msra.mxu0 0.0
    %808 = vmatprep.subr.mxu0 0.0
    %809 = vmatpush2.msra.mxu0 0.0
    %810 = vmatprep.subr.mxu0 0.0
    %811 = vmatpush2.msra.mxu0 0.0
    %812 = vmatprep.subr.mxu0 0.0
    %813 = vmatpush2.msra.mxu0 0.0
    %814 = vmatprep.subr.mxu0 0.0
    %815 = vmatpush2.msra.mxu0 0.0
    %816 = vmatprep.subr.mxu0 0.0
    %817 = vmatpush2.msra.mxu0 0.0
    %818 = vmatprep.subr.mxu0 0.0
    %819 = vmatpush2.msra.mxu0 0.0
    %820 = vmatprep.subr.mxu0 0.0
    %821 = vmatpush2.msra.mxu0 0.0
    %822 = vmatprep.subr.mxu0 0.0
    %823 = vmatpush2.msra.mxu0 0.0
    %824 = vmatprep.subr.mxu0 0.0
    %825 = vmatpush2.msra.mxu0 0.0
    %826 = vmatprep.subr.mxu0 0.0
    %827 = vmatpush2.msra.mxu0 0.0
    %828 = vmatprep.subr.mxu0 0.0
    %829 = vmatpush2.msra.mxu0 0.0
    %830 = vmatprep.subr.mxu0 0.0
    %831 = vmatpush2.msra.mxu0 0.0
    %832 = vmatprep.mubr.f32.mxu0 0.0
    %833 = vmatmul.mubr.f32.gmra.mxu0 %v429
    %v834 = vpop.f32.mrf.mxu0
    %v835 = vadd.f32 0.0, %v834
    %v836 = vpop.f32.mrf.mxu0
    %837 = vmatprep.mubr.f32.mxu0 0.0
    %838 = vmatmul.mubr.f32.gmra.mxu0 %v434
    %v839 = vpop.f32.mrf.mxu0
    %v840 = vadd.f32 0.0, %v839
    %v841 = vpop.f32.mrf.mxu0
    %842 = vmatprep.mubr.f32.mxu0 0.0
    %843 = vmatmul.mubr.f32.gmra.mxu0 %v439
    %v844 = vpop.f32.mrf.mxu0
    %v845 = vadd.f32 0.0, %v844
    %v846 = vpop.f32.mrf.mxu0
    %847 = vmatprep.mubr.f32.mxu0 0.0
    %848 = vmatmul.mubr.f32.gmra.mxu0 %v444
    %v849 = vpop.f32.mrf.mxu0
    %v850 = vadd.f32 0.0, %v849
    %v851 = vpop.f32.mrf.mxu0
    %852 = vdwg.mxu0
    %s853 = scalar_lea.vmem [#allocation6], 64
    %v854 = vld [vmem:[%s853] sm:$0xff]
    %v855 = vld [vmem:[%s853 + $0x8] sm:$0xff]
    %v856 = vld [vmem:[%s853 + $0x10] sm:$0xff]
    %v857 = vld [vmem:[%s853 + $0x18] sm:$0xff]
    %v859 = vsel %vm241, %v854, 0
    %v862 = vsel %vm241, %v855, 0
    %v865 = vsel %vm241, %v856, 0
    %v868 = vsel %vm241, %v857, 0
    %870 = vmatprep.subr.mxu0 0.0
    %871 = vmatpush1.msra.mxu0 0.0
    %872 = vmatprep.subr.mxu0 0.0
    %873 = vmatpush1.msra.mxu0 0.0
    %874 = vmatprep.subr.mxu0 0.0
    %875 = vmatpush1.msra.mxu0 0.0
    %876 = vmatprep.subr.mxu0 0.0
    %877 = vmatpush1.msra.mxu0 0.0
    %878 = vmatprep.subr.mxu0 0.0
    %879 = vmatpush1.msra.mxu0 0.0
    %880 = vmatprep.subr.mxu0 0.0
    %881 = vmatpush1.msra.mxu0 0.0
    %882 = vmatprep.subr.mxu0 0.0
    %883 = vmatpush1.msra.mxu0 0.0
    %884 = vmatprep.subr.mxu0 0.0
    %885 = vmatpush1.msra.mxu0 0.0
    %886 = vmatprep.subr.mxu0 0.0
    %887 = vmatpush1.msra.mxu0 0.0
    %888 = vmatprep.subr.mxu0 0.0
    %889 = vmatpush1.msra.mxu0 0.0
    %890 = vmatprep.subr.mxu0 0.0
    %891 = vmatpush1.msra.mxu0 0.0
    %892 = vmatprep.subr.mxu0 0.0
    %893 = vmatpush1.msra.mxu0 0.0
    %894 = vmatprep.subr.mxu0 0.0
    %895 = vmatpush1.msra.mxu0 %v850
    %896 = vmatprep.subr.mxu0 0.0
    %897 = vmatpush1.msra.mxu0 %v845
    %898 = vmatprep.subr.mxu0 0.0
    %899 = vmatpush1.msra.mxu0 %v840
    %900 = vmatprep.subr.mxu0 0.0
    %901 = vmatpush1.msra.mxu0 %v835
    %902 = vmatprep.subr.mxu0 0.0
    %903 = vmatpush2.msra.mxu0 0.0
    %904 = vmatprep.subr.mxu0 0.0
    %905 = vmatpush2.msra.mxu0 0.0
    %906 = vmatprep.subr.mxu0 0.0
    %907 = vmatpush2.msra.mxu0 0.0
    %908 = vmatprep.subr.mxu0 0.0
    %909 = vmatpush2.msra.mxu0 0.0
    %910 = vmatprep.subr.mxu0 0.0
    %911 = vmatpush2.msra.mxu0 0.0
    %912 = vmatprep.subr.mxu0 0.0
    %913 = vmatpush2.msra.mxu0 0.0
    %914 = vmatprep.subr.mxu0 0.0
    %915 = vmatpush2.msra.mxu0 0.0
    %916 = vmatprep.subr.mxu0 0.0
    %917 = vmatpush2.msra.mxu0 0.0
    %918 = vmatprep.subr.mxu0 0.0
    %919 = vmatpush2.msra.mxu0 0.0
    %920 = vmatprep.subr.mxu0 0.0
    %921 = vmatpush2.msra.mxu0 0.0
    %922 = vmatprep.subr.mxu0 0.0
    %923 = vmatpush2.msra.mxu0 0.0
    %924 = vmatprep.subr.mxu0 0.0
    %925 = vmatpush2.msra.mxu0 0.0
    %926 = vmatprep.subr.mxu0 0.0
    %927 = vmatpush2.msra.mxu0 0.0
    %928 = vmatprep.subr.mxu0 0.0
    %929 = vmatpush2.msra.mxu0 0.0
    %930 = vmatprep.subr.mxu0 0.0
    %931 = vmatpush2.msra.mxu0 0.0
    %932 = vmatprep.subr.mxu0 0.0
    %933 = vmatpush2.msra.mxu0 0.0
    %934 = vmatprep.mubr.f32.mxu0 0.0
    %935 = vmatmul.mubr.f32.gmra.mxu0 %v859
    %v936 = vpop.f32.mrf.mxu0
    %v937 = vadd.f32 0.0, %v936
    %v938 = vpop.f32.mrf.mxu0
    %939 = vmatprep.mubr.f32.mxu0 0.0
    %940 = vmatmul.mubr.f32.gmra.mxu0 %v862
    %v941 = vpop.f32.mrf.mxu0
    %v942 = vadd.f32 0.0, %v941
    %v943 = vpop.f32.mrf.mxu0
    %944 = vmatprep.mubr.f32.mxu0 0.0
    %945 = vmatmul.mubr.f32.gmra.mxu0 %v865
    %v946 = vpop.f32.mrf.mxu0
    %v947 = vadd.f32 0.0, %v946
    %v948 = vpop.f32.mrf.mxu0
    %949 = vmatprep.mubr.f32.mxu0 0.0
    %950 = vmatmul.mubr.f32.gmra.mxu0 %v868
    %v951 = vpop.f32.mrf.mxu0
    %v952 = vadd.f32 0.0, %v951
    %v953 = vpop.f32.mrf.mxu0
    %954 = vdwg.mxu0
    %v955 = vadd.f32 %v733, %v937
    %v956 = vadd.f32 %v738, %v942
    %v957 = vadd.f32 %v743, %v947
    %v958 = vadd.f32 %v748, %v952
    %v959 = vld [vmem:[%s8] sm:$0x1]
    %v961 = vlaneseq
    %v962 = vshrl.u32 %v961, 7
    %v963 = vsub.s32 0, %v962
    %v964 = vrot.slane %v959, %v963
    %v966 = vadd.f32 %v955, %v964
    %v967 = vadd.f32 %v956, %v964
    %v968 = vadd.f32 %v957, %v964
    %v969 = vadd.f32 %v958, %v964
    %v970 = vld [vmem:[#allocation10] sm:$0xff]
    %v971 = vld [vmem:[#allocation10 + $0x8] sm:$0xff]
    %v972 = vld [vmem:[#allocation10 + $0x10] sm:$0xff]
    %v973 = vld [vmem:[#allocation10 + $0x18] sm:$0xff]
    %v974 = vld [vmem:[#allocation10 + $0x20] sm:$0xff]
    %v975 = vld [vmem:[#allocation10 + $0x28] sm:$0xff]
    %v976 = vld [vmem:[#allocation10 + $0x30] sm:$0xff]
    %v977 = vld [vmem:[#allocation10 + $0x38] sm:$0xff]
    %v978 = vld [vmem:[#allocation10 + $0x40] sm:$0xff]
    %v979 = vld [vmem:[#allocation10 + $0x48] sm:$0xff]
    %v980 = vld [vmem:[#allocation10 + $0x50] sm:$0xff]
    %v981 = vld [vmem:[#allocation10 + $0x58] sm:$0xff]
    %v982 = vld [vmem:[#allocation10 + $0x60] sm:$0xff]
    %v983 = vld [vmem:[#allocation10 + $0x68] sm:$0xff]
    %v984 = vld [vmem:[#allocation10 + $0x70] sm:$0xff]
    %v985 = vld [vmem:[#allocation10 + $0x78] sm:$0xff]
    %v986 = vld [vmem:[%s10] sm:$0x1]
    %v988 = vlaneseq
    %v989 = vshrl.u32 %v988, 7
    %v990 = vsub.s32 0, %v989
    %v991 = vrot.slane %v986, %v990
    %993 = vmatprep.subr.mxu0 0.0
    %994 = vmatpush1.msra.mxu0 %v985
    %995 = vmatprep.subr.mxu0 0.0
    %996 = vmatpush1.msra.mxu0 %v984
    %997 = vmatprep.subr.mxu0 0.0
    %998 = vmatpush1.msra.mxu0 %v983
    %999 = vmatprep.subr.mxu0 0.0
    %1000 = vmatpush1.msra.mxu0 %v982
    %1001 = vmatprep.subr.mxu0 0.0
    %1002 = vmatpush1.msra.mxu0 %v981
    %1003 = vmatprep.subr.mxu0 0.0
    %1004 = vmatpush1.msra.mxu0 %v980
    %1005 = vmatprep.subr.mxu0 0.0
    %1006 = vmatpush1.msra.mxu0 %v979
    %1007 = vmatprep.subr.mxu0 0.0
    %1008 = vmatpush1.msra.mxu0 %v978
    %1009 = vmatprep.subr.mxu0 0.0
    %1010 = vmatpush1.msra.mxu0 %v977
    %1011 = vmatprep.subr.mxu0 0.0
    %1012 = vmatpush1.msra.mxu0 %v976
    %1013 = vmatprep.subr.mxu0 0.0
    %1014 = vmatpush1.msra.mxu0 %v975
    %1015 = vmatprep.subr.mxu0 0.0
    %1016 = vmatpush1.msra.mxu0 %v974
    %1017 = vmatprep.subr.mxu0 0.0
    %1018 = vmatpush1.msra.mxu0 %v973
    %1019 = vmatprep.subr.mxu0 0.0
    %1020 = vmatpush1.msra.mxu0 %v972
    %1021 = vmatprep.subr.mxu0 0.0
    %1022 = vmatpush1.msra.mxu0 %v971
    %1023 = vmatprep.subr.mxu0 0.0
    %1024 = vmatpush1.msra.mxu0 %v970
    %1025 = vmatprep.subr.mxu0 0.0
    %1026 = vmatpush2.msra.mxu0 0.0
    %1027 = vmatprep.subr.mxu0 0.0
    %1028 = vmatpush2.msra.mxu0 0.0
    %1029 = vmatprep.subr.mxu0 0.0
    %1030 = vmatpush2.msra.mxu0 0.0
    %1031 = vmatprep.subr.mxu0 0.0
    %1032 = vmatpush2.msra.mxu0 0.0
    %1033 = vmatprep.subr.mxu0 0.0
    %1034 = vmatpush2.msra.mxu0 0.0
    %1035 = vmatprep.subr.mxu0 0.0
    %1036 = vmatpush2.msra.mxu0 0.0
    %1037 = vmatprep.subr.mxu0 0.0
    %1038 = vmatpush2.msra.mxu0 0.0
    %1039 = vmatprep.subr.mxu0 0.0
    %1040 = vmatpush2.msra.mxu0 0.0
    %1041 = vmatprep.subr.mxu0 0.0
    %1042 = vmatpush2.msra.mxu0 0.0
    %1043 = vmatprep.subr.mxu0 0.0
    %1044 = vmatpush2.msra.mxu0 0.0
    %1045 = vmatprep.subr.mxu0 0.0
    %1046 = vmatpush2.msra.mxu0 0.0
    %1047 = vmatprep.subr.mxu0 0.0
    %1048 = vmatpush2.msra.mxu0 0.0
    %1049 = vmatprep.subr.mxu0 0.0
    %1050 = vmatpush2.msra.mxu0 0.0
    %1051 = vmatprep.subr.mxu0 0.0
    %1052 = vmatpush2.msra.mxu0 0.0
    %1053 = vmatprep.subr.mxu0 0.0
    %1054 = vmatpush2.msra.mxu0 0.0
    %1055 = vmatprep.subr.mxu0 0.0
    %1056 = vmatpush2.msra.mxu0 0.0
    %1057 = vmatprep.mubr.f32.mxu0 0.0
    %1058 = vmatmul.mubr.f32.gmra.mxu0 %v966
    %v1059 = vpop.f32.mrf.mxu0
    %v1060 = vadd.f32 %v991, %v1059
    %v1061 = vpop.f32.mrf.mxu0
    %1062 = vmatprep.mubr.f32.mxu0 0.0
    %1063 = vmatmul.mubr.f32.gmra.mxu0 %v967
    %v1064 = vpop.f32.mrf.mxu0
    %v1065 = vadd.f32 %v991, %v1064
    %v1066 = vpop.f32.mrf.mxu0
    %1067 = vmatprep.mubr.f32.mxu0 0.0
    %1068 = vmatmul.mubr.f32.gmra.mxu0 %v968
    %v1069 = vpop.f32.mrf.mxu0
    %v1070 = vadd.f32 %v991, %v1069
    %v1071 = vpop.f32.mrf.mxu0
    %1072 = vmatprep.mubr.f32.mxu0 0.0
    %1073 = vmatmul.mubr.f32.gmra.mxu0 %v969
    %v1074 = vpop.f32.mrf.mxu0
    %v1075 = vadd.f32 %v991, %v1074
    %v1076 = vpop.f32.mrf.mxu0
    %1077 = vdwg.mxu0
    %v1078 = vadd.f32 %v321, %v1060
    %v1079 = vadd.f32 %v326, %v1065
    %v1080 = vadd.f32 %v331, %v1070
    %v1081 = vadd.f32 %v336, %v1075
    %v1082 = vmax.f32 %v1078, 0.0
    %v1083 = vmax.f32 %v1079, 0.0
    %v1084 = vmax.f32 %v1080, 0.0
    %v1085 = vmax.f32 %v1081, 0.0
    %s1086 = scalar_lea.vmem [#allocation7], 128
    %v1087 = vld [vmem:[%s1086] sm:$0xff]
    %v1088 = vld [vmem:[%s1086 + $0x8] sm:$0xff]
    %v1089 = vld [vmem:[%s1086 + $0x10] sm:$0xff]
    %v1090 = vld [vmem:[%s1086 + $0x18] sm:$0xff]
    %v1091 = vld [vmem:[%s1086 + $0x20] sm:$0xff]
    %v1092 = vld [vmem:[%s1086 + $0x28] sm:$0xff]
    %v1093 = vld [vmem:[%s1086 + $0x30] sm:$0xff]
    %v1094 = vld [vmem:[%s1086 + $0x38] sm:$0xff]
    %v1095 = vld [vmem:[%s1086 + $0x40] sm:$0xff]
    %v1096 = vld [vmem:[%s1086 + $0x48] sm:$0xff]
    %v1097 = vld [vmem:[%s1086 + $0x50] sm:$0xff]
    %v1098 = vld [vmem:[%s1086 + $0x58] sm:$0xff]
    %v1099 = vld [vmem:[%s1086 + $0x60] sm:$0xff]
    %v1100 = vld [vmem:[%s1086 + $0x68] sm:$0xff]
    %v1101 = vld [vmem:[%s1086 + $0x70] sm:$0xff]
    %v1102 = vld [vmem:[%s1086 + $0x78] sm:$0xff]
    %s1103 = scalar_lea.vmem %s6, 1
    %v1104 = vld [vmem:[%s1103] sm:$0x1]
    %v1106 = vlaneseq
    %v1107 = vshrl.u32 %v1106, 7
    %v1108 = vsub.s32 0, %v1107
    %v1109 = vrot.slane %v1104, %v1108
    %1111 = vmatprep.subr.mxu0 0.0
    %1112 = vmatpush1.msra.mxu0 %v1102
    %1113 = vmatprep.subr.mxu0 0.0
    %1114 = vmatpush1.msra.mxu0 %v1101
    %1115 = vmatprep.subr.mxu0 0.0
    %1116 = vmatpush1.msra.mxu0 %v1100
    %1117 = vmatprep.subr.mxu0 0.0
    %1118 = vmatpush1.msra.mxu0 %v1099
    %1119 = vmatprep.subr.mxu0 0.0
    %1120 = vmatpush1.msra.mxu0 %v1098
    %1121 = vmatprep.subr.mxu0 0.0
    %1122 = vmatpush1.msra.mxu0 %v1097
    %1123 = vmatprep.subr.mxu0 0.0
    %1124 = vmatpush1.msra.mxu0 %v1096
    %1125 = vmatprep.subr.mxu0 0.0
    %1126 = vmatpush1.msra.mxu0 %v1095
    %1127 = vmatprep.subr.mxu0 0.0
    %1128 = vmatpush1.msra.mxu0 %v1094
    %1129 = vmatprep.subr.mxu0 0.0
    %1130 = vmatpush1.msra.mxu0 %v1093
    %1131 = vmatprep.subr.mxu0 0.0
    %1132 = vmatpush1.msra.mxu0 %v1092
    %1133 = vmatprep.subr.mxu0 0.0
    %1134 = vmatpush1.msra.mxu0 %v1091
    %1135 = vmatprep.subr.mxu0 0.0
    %1136 = vmatpush1.msra.mxu0 %v1090
    %1137 = vmatprep.subr.mxu0 0.0
    %1138 = vmatpush1.msra.mxu0 %v1089
    %1139 = vmatprep.subr.mxu0 0.0
    %1140 = vmatpush1.msra.mxu0 %v1088
    %1141 = vmatprep.subr.mxu0 0.0
    %1142 = vmatpush1.msra.mxu0 %v1087
    %1143 = vmatprep.subr.mxu0 0.0
    %1144 = vmatpush2.msra.mxu0 0.0
    %1145 = vmatprep.subr.mxu0 0.0
    %1146 = vmatpush2.msra.mxu0 0.0
    %1147 = vmatprep.subr.mxu0 0.0
    %1148 = vmatpush2.msra.mxu0 0.0
    %1149 = vmatprep.subr.mxu0 0.0
    %1150 = vmatpush2.msra.mxu0 0.0
    %1151 = vmatprep.subr.mxu0 0.0
    %1152 = vmatpush2.msra.mxu0 0.0
    %1153 = vmatprep.subr.mxu0 0.0
    %1154 = vmatpush2.msra.mxu0 0.0
    %1155 = vmatprep.subr.mxu0 0.0
    %1156 = vmatpush2.msra.mxu0 0.0
    %1157 = vmatprep.subr.mxu0 0.0
    %1158 = vmatpush2.msra.mxu0 0.0
    %1159 = vmatprep.subr.mxu0 0.0
    %1160 = vmatpush2.msra.mxu0 0.0
    %1161 = vmatprep.subr.mxu0 0.0
    %1162 = vmatpush2.msra.mxu0 0.0
    %1163 = vmatprep.subr.mxu0 0.0
    %1164 = vmatpush2.msra.mxu0 0.0
    %1165 = vmatprep.subr.mxu0 0.0
    %1166 = vmatpush2.msra.mxu0 0.0
    %1167 = vmatprep.subr.mxu0 0.0
    %1168 = vmatpush2.msra.mxu0 0.0
    %1169 = vmatprep.subr.mxu0 0.0
    %1170 = vmatpush2.msra.mxu0 0.0
    %1171 = vmatprep.subr.mxu0 0.0
    %1172 = vmatpush2.msra.mxu0 0.0
    %1173 = vmatprep.subr.mxu0 0.0
    %1174 = vmatpush2.msra.mxu0 0.0
    %1175 = vmatprep.mubr.f32.mxu0 0.0
    %1176 = vmatmul.mubr.f32.gmra.mxu0 %v1082
    %v1177 = vpop.f32.mrf.mxu0
    %v1178 = vadd.f32 %v1109, %v1177
    %v1179 = vpop.f32.mrf.mxu0
    %1180 = vmatprep.mubr.f32.mxu0 0.0
    %1181 = vmatmul.mubr.f32.gmra.mxu0 %v1083
    %v1182 = vpop.f32.mrf.mxu0
    %v1183 = vadd.f32 %v1109, %v1182
    %v1184 = vpop.f32.mrf.mxu0
    %1185 = vmatprep.mubr.f32.mxu0 0.0
    %1186 = vmatmul.mubr.f32.gmra.mxu0 %v1084
    %v1187 = vpop.f32.mrf.mxu0
    %v1188 = vadd.f32 %v1109, %v1187
    %v1189 = vpop.f32.mrf.mxu0
    %1190 = vmatprep.mubr.f32.mxu0 0.0
    %1191 = vmatmul.mubr.f32.gmra.mxu0 %v1085
    %v1192 = vpop.f32.mrf.mxu0
    %v1193 = vadd.f32 %v1109, %v1192
    %v1194 = vpop.f32.mrf.mxu0
    %1195 = vdwg.mxu0
    %s1196 = scalar_lea.vmem [#allocation9], 384
    %v1197 = vld [vmem:[%s1196] sm:$0xff]
    %v1198 = vld [vmem:[%s1196 + $0x8] sm:$0xff]
    %v1199 = vld [vmem:[%s1196 + $0x10] sm:$0xff]
    %v1200 = vld [vmem:[%s1196 + $0x18] sm:$0xff]
    %v1201 = vld [vmem:[%s1196 + $0x20] sm:$0xff]
    %v1202 = vld [vmem:[%s1196 + $0x28] sm:$0xff]
    %v1203 = vld [vmem:[%s1196 + $0x30] sm:$0xff]
    %v1204 = vld [vmem:[%s1196 + $0x38] sm:$0xff]
    %v1205 = vld [vmem:[%s1196 + $0x40] sm:$0xff]
    %v1206 = vld [vmem:[%s1196 + $0x48] sm:$0xff]
    %v1207 = vld [vmem:[%s1196 + $0x50] sm:$0xff]
    %v1208 = vld [vmem:[%s1196 + $0x58] sm:$0xff]
    %v1209 = vld [vmem:[%s1196 + $0x60] sm:$0xff]
    %v1210 = vld [vmem:[%s1196 + $0x68] sm:$0xff]
    %v1211 = vld [vmem:[%s1196 + $0x70] sm:$0xff]
    %v1212 = vld [vmem:[%s1196 + $0x78] sm:$0xff]
    %1213 = vmatprep.subr.mxu0 0.0
    %1214 = vmatpush1.msra.mxu0 %v1212
    %1215 = vmatprep.subr.mxu0 0.0
    %1216 = vmatpush1.msra.mxu0 %v1211
    %1217 = vmatprep.subr.mxu0 0.0
    %1218 = vmatpush1.msra.mxu0 %v1210
    %1219 = vmatprep.subr.mxu0 0.0
    %1220 = vmatpush1.msra.mxu0 %v1209
    %1221 = vmatprep.subr.mxu0 0.0
    %1222 = vmatpush1.msra.mxu0 %v1208
    %1223 = vmatprep.subr.mxu0 0.0
    %1224 = vmatpush1.msra.mxu0 %v1207
    %1225 = vmatprep.subr.mxu0 0.0
    %1226 = vmatpush1.msra.mxu0 %v1206
    %1227 = vmatprep.subr.mxu0 0.0
    %1228 = vmatpush1.msra.mxu0 %v1205
    %1229 = vmatprep.subr.mxu0 0.0
    %1230 = vmatpush1.msra.mxu0 %v1204
    %1231 = vmatprep.subr.mxu0 0.0
    %1232 = vmatpush1.msra.mxu0 %v1203
    %1233 = vmatprep.subr.mxu0 0.0
    %1234 = vmatpush1.msra.mxu0 %v1202
    %1235 = vmatprep.subr.mxu0 0.0
    %1236 = vmatpush1.msra.mxu0 %v1201
    %1237 = vmatprep.subr.mxu0 0.0
    %1238 = vmatpush1.msra.mxu0 %v1200
    %1239 = vmatprep.subr.mxu0 0.0
    %1240 = vmatpush1.msra.mxu0 %v1199
    %1241 = vmatprep.subr.mxu0 0.0
    %1242 = vmatpush1.msra.mxu0 %v1198
    %1243 = vmatprep.subr.mxu0 0.0
    %1244 = vmatpush1.msra.mxu0 %v1197
    %1245 = vmatprep.subr.mxu0 0.0
    %1246 = vmatpush2.msra.mxu0 0.0
    %1247 = vmatprep.subr.mxu0 0.0
    %1248 = vmatpush2.msra.mxu0 0.0
    %1249 = vmatprep.subr.mxu0 0.0
    %1250 = vmatpush2.msra.mxu0 0.0
    %1251 = vmatprep.subr.mxu0 0.0
    %1252 = vmatpush2.msra.mxu0 0.0
    %1253 = vmatprep.subr.mxu0 0.0
    %1254 = vmatpush2.msra.mxu0 0.0
    %1255 = vmatprep.subr.mxu0 0.0
    %1256 = vmatpush2.msra.mxu0 0.0
    %1257 = vmatprep.subr.mxu0 0.0
    %1258 = vmatpush2.msra.mxu0 0.0
    %1259 = vmatprep.subr.mxu0 0.0
    %1260 = vmatpush2.msra.mxu0 0.0
    %1261 = vmatprep.subr.mxu0 0.0
    %1262 = vmatpush2.msra.mxu0 0.0
    %1263 = vmatprep.subr.mxu0 0.0
    %1264 = vmatpush2.msra.mxu0 0.0
    %1265 = vmatprep.subr.mxu0 0.0
    %1266 = vmatpush2.msra.mxu0 0.0
    %1267 = vmatprep.subr.mxu0 0.0
    %1268 = vmatpush2.msra.mxu0 0.0
    %1269 = vmatprep.subr.mxu0 0.0
    %1270 = vmatpush2.msra.mxu0 0.0
    %1271 = vmatprep.subr.mxu0 0.0
    %1272 = vmatpush2.msra.mxu0 0.0
    %1273 = vmatprep.subr.mxu0 0.0
    %1274 = vmatpush2.msra.mxu0 0.0
    %1275 = vmatprep.subr.mxu0 0.0
    %1276 = vmatpush2.msra.mxu0 0.0
    %1277 = vmatprep.mubr.f32.mxu0 0.0
    %1278 = vmatmul.mubr.f32.gmra.mxu0 %v1178
    %v1279 = vpop.f32.mrf.mxu0
    %v1280 = vadd.f32 0.0, %v1279
    %v1281 = vpop.f32.mrf.mxu0
    %1282 = vmatprep.mubr.f32.mxu0 0.0
    %1283 = vmatmul.mubr.f32.gmra.mxu0 %v1183
    %v1284 = vpop.f32.mrf.mxu0
    %v1285 = vadd.f32 0.0, %v1284
    %v1286 = vpop.f32.mrf.mxu0
    %1287 = vmatprep.mubr.f32.mxu0 0.0
    %1288 = vmatmul.mubr.f32.gmra.mxu0 %v1188
    %v1289 = vpop.f32.mrf.mxu0
    %v1290 = vadd.f32 0.0, %v1289
    %v1291 = vpop.f32.mrf.mxu0
    %1292 = vmatprep.mubr.f32.mxu0 0.0
    %1293 = vmatmul.mubr.f32.gmra.mxu0 %v1193
    %v1294 = vpop.f32.mrf.mxu0
    %v1295 = vadd.f32 0.0, %v1294
    %v1296 = vpop.f32.mrf.mxu0
    %1297 = vdwg.mxu0
    %s1298 = scalar_lea.vmem [#allocation9], 512
    %v1299 = vld [vmem:[%s1298] sm:$0xff]
    %v1300 = vld [vmem:[%s1298 + $0x8] sm:$0xff]
    %v1301 = vld [vmem:[%s1298 + $0x10] sm:$0xff]
    %v1302 = vld [vmem:[%s1298 + $0x18] sm:$0xff]
    %v1303 = vld [vmem:[%s1298 + $0x20] sm:$0xff]
    %v1304 = vld [vmem:[%s1298 + $0x28] sm:$0xff]
    %v1305 = vld [vmem:[%s1298 + $0x30] sm:$0xff]
    %v1306 = vld [vmem:[%s1298 + $0x38] sm:$0xff]
    %v1307 = vld [vmem:[%s1298 + $0x40] sm:$0xff]
    %v1308 = vld [vmem:[%s1298 + $0x48] sm:$0xff]
    %v1309 = vld [vmem:[%s1298 + $0x50] sm:$0xff]
    %v1310 = vld [vmem:[%s1298 + $0x58] sm:$0xff]
    %v1311 = vld [vmem:[%s1298 + $0x60] sm:$0xff]
    %v1312 = vld [vmem:[%s1298 + $0x68] sm:$0xff]
    %v1313 = vld [vmem:[%s1298 + $0x70] sm:$0xff]
    %v1314 = vld [vmem:[%s1298 + $0x78] sm:$0xff]
    %1315 = vmatprep.subr.mxu0 0.0
    %1316 = vmatpush1.msra.mxu0 %v1314
    %1317 = vmatprep.subr.mxu0 0.0
    %1318 = vmatpush1.msra.mxu0 %v1313
    %1319 = vmatprep.subr.mxu0 0.0
    %1320 = vmatpush1.msra.mxu0 %v1312
    %1321 = vmatprep.subr.mxu0 0.0
    %1322 = vmatpush1.msra.mxu0 %v1311
    %1323 = vmatprep.subr.mxu0 0.0
    %1324 = vmatpush1.msra.mxu0 %v1310
    %1325 = vmatprep.subr.mxu0 0.0
    %1326 = vmatpush1.msra.mxu0 %v1309
    %1327 = vmatprep.subr.mxu0 0.0
    %1328 = vmatpush1.msra.mxu0 %v1308
    %1329 = vmatprep.subr.mxu0 0.0
    %1330 = vmatpush1.msra.mxu0 %v1307
    %1331 = vmatprep.subr.mxu0 0.0
    %1332 = vmatpush1.msra.mxu0 %v1306
    %1333 = vmatprep.subr.mxu0 0.0
    %1334 = vmatpush1.msra.mxu0 %v1305
    %1335 = vmatprep.subr.mxu0 0.0
    %1336 = vmatpush1.msra.mxu0 %v1304
    %1337 = vmatprep.subr.mxu0 0.0
    %1338 = vmatpush1.msra.mxu0 %v1303
    %1339 = vmatprep.subr.mxu0 0.0
    %1340 = vmatpush1.msra.mxu0 %v1302
    %1341 = vmatprep.subr.mxu0 0.0
    %1342 = vmatpush1.msra.mxu0 %v1301
    %1343 = vmatprep.subr.mxu0 0.0
    %1344 = vmatpush1.msra.mxu0 %v1300
    %1345 = vmatprep.subr.mxu0 0.0
    %1346 = vmatpush1.msra.mxu0 %v1299
    %1347 = vmatprep.subr.mxu0 0.0
    %1348 = vmatpush2.msra.mxu0 0.0
    %1349 = vmatprep.subr.mxu0 0.0
    %1350 = vmatpush2.msra.mxu0 0.0
    %1351 = vmatprep.subr.mxu0 0.0
    %1352 = vmatpush2.msra.mxu0 0.0
    %1353 = vmatprep.subr.mxu0 0.0
    %1354 = vmatpush2.msra.mxu0 0.0
    %1355 = vmatprep.subr.mxu0 0.0
    %1356 = vmatpush2.msra.mxu0 0.0
    %1357 = vmatprep.subr.mxu0 0.0
    %1358 = vmatpush2.msra.mxu0 0.0
    %1359 = vmatprep.subr.mxu0 0.0
    %1360 = vmatpush2.msra.mxu0 0.0
    %1361 = vmatprep.subr.mxu0 0.0
    %1362 = vmatpush2.msra.mxu0 0.0
    %1363 = vmatprep.subr.mxu0 0.0
    %1364 = vmatpush2.msra.mxu0 0.0
    %1365 = vmatprep.subr.mxu0 0.0
    %1366 = vmatpush2.msra.mxu0 0.0
    %1367 = vmatprep.subr.mxu0 0.0
    %1368 = vmatpush2.msra.mxu0 0.0
    %1369 = vmatprep.subr.mxu0 0.0
    %1370 = vmatpush2.msra.mxu0 0.0
    %1371 = vmatprep.subr.mxu0 0.0
    %1372 = vmatpush2.msra.mxu0 0.0
    %1373 = vmatprep.subr.mxu0 0.0
    %1374 = vmatpush2.msra.mxu0 0.0
    %1375 = vmatprep.subr.mxu0 0.0
    %1376 = vmatpush2.msra.mxu0 0.0
    %1377 = vmatprep.subr.mxu0 0.0
    %1378 = vmatpush2.msra.mxu0 0.0
    %1379 = vmatprep.mubr.f32.mxu0 0.0
    %1380 = vmatmul.mubr.f32.gmra.mxu0 %v1178
    %v1381 = vpop.f32.mrf.mxu0
    %v1382 = vadd.f32 0.0, %v1381
    %v1383 = vpop.f32.mrf.mxu0
    %1384 = vmatprep.mubr.f32.mxu0 0.0
    %1385 = vmatmul.mubr.f32.gmra.mxu0 %v1183
    %v1386 = vpop.f32.mrf.mxu0
    %v1387 = vadd.f32 0.0, %v1386
    %v1388 = vpop.f32.mrf.mxu0
    %1389 = vmatprep.mubr.f32.mxu0 0.0
    %1390 = vmatmul.mubr.f32.gmra.mxu0 %v1188
    %v1391 = vpop.f32.mrf.mxu0
    %v1392 = vadd.f32 0.0, %v1391
    %v1393 = vpop.f32.mrf.mxu0
    %1394 = vmatprep.mubr.f32.mxu0 0.0
    %1395 = vmatmul.mubr.f32.gmra.mxu0 %v1193
    %v1396 = vpop.f32.mrf.mxu0
    %v1397 = vadd.f32 0.0, %v1396
    %v1398 = vpop.f32.mrf.mxu0
    %1399 = vdwg.mxu0
    %1400 = vmatprep.subr.mxu0 0.0
    %1401 = vmatpush1.msra.mxu0 0.0
    %1402 = vmatprep.subr.mxu0 0.0
    %1403 = vmatpush1.msra.mxu0 0.0
    %1404 = vmatprep.subr.mxu0 0.0
    %1405 = vmatpush1.msra.mxu0 0.0
    %1406 = vmatprep.subr.mxu0 0.0
    %1407 = vmatpush1.msra.mxu0 0.0
    %1408 = vmatprep.subr.mxu0 0.0
    %1409 = vmatpush1.msra.mxu0 0.0
    %1410 = vmatprep.subr.mxu0 0.0
    %1411 = vmatpush1.msra.mxu0 0.0
    %1412 = vmatprep.subr.mxu0 0.0
    %1413 = vmatpush1.msra.mxu0 0.0
    %1414 = vmatprep.subr.mxu0 0.0
    %1415 = vmatpush1.msra.mxu0 0.0
    %1416 = vmatprep.subr.mxu0 0.0
    %1417 = vmatpush1.msra.mxu0 0.0
    %1418 = vmatprep.subr.mxu0 0.0
    %1419 = vmatpush1.msra.mxu0 0.0
    %1420 = vmatprep.subr.mxu0 0.0
    %1421 = vmatpush1.msra.mxu0 0.0
    %1422 = vmatprep.subr.mxu0 0.0
    %1423 = vmatpush1.msra.mxu0 0.0
    %1424 = vmatprep.subr.mxu0 0.0
    %1425 = vmatpush1.msra.mxu0 %v1295
    %1426 = vmatprep.subr.mxu0 0.0
    %1427 = vmatpush1.msra.mxu0 %v1290
    %1428 = vmatprep.subr.mxu0 0.0
    %1429 = vmatpush1.msra.mxu0 %v1285
    %1430 = vmatprep.subr.mxu0 0.0
    %1431 = vmatpush1.msra.mxu0 %v1280
    %1432 = vmatprep.subr.mxu0 0.0
    %1433 = vmatpush2.msra.mxu0 0.0
    %1434 = vmatprep.subr.mxu0 0.0
    %1435 = vmatpush2.msra.mxu0 0.0
    %1436 = vmatprep.subr.mxu0 0.0
    %1437 = vmatpush2.msra.mxu0 0.0
    %1438 = vmatprep.subr.mxu0 0.0
    %1439 = vmatpush2.msra.mxu0 0.0
    %1440 = vmatprep.subr.mxu0 0.0
    %1441 = vmatpush2.msra.mxu0 0.0
    %1442 = vmatprep.subr.mxu0 0.0
    %1443 = vmatpush2.msra.mxu0 0.0
    %1444 = vmatprep.subr.mxu0 0.0
    %1445 = vmatpush2.msra.mxu0 0.0
    %1446 = vmatprep.subr.mxu0 0.0
    %1447 = vmatpush2.msra.mxu0 0.0
    %1448 = vmatprep.subr.mxu0 0.0
    %1449 = vmatpush2.msra.mxu0 0.0
    %1450 = vmatprep.subr.mxu0 0.0
    %1451 = vmatpush2.msra.mxu0 0.0
    %1452 = vmatprep.subr.mxu0 0.0
    %1453 = vmatpush2.msra.mxu0 0.0
    %1454 = vmatprep.subr.mxu0 0.0
    %1455 = vmatpush2.msra.mxu0 0.0
    %1456 = vmatprep.subr.mxu0 0.0
    %1457 = vmatpush2.msra.mxu0 0.0
    %1458 = vmatprep.subr.mxu0 0.0
    %1459 = vmatpush2.msra.mxu0 0.0
    %1460 = vmatprep.subr.mxu0 0.0
    %1461 = vmatpush2.msra.mxu0 0.0
    %1462 = vmatprep.subr.mxu0 0.0
    %1463 = vmatpush2.msra.mxu0 0.0
    %1464 = vmatprep.mubr.f32.mxu0 0.0
    %1465 = vmatmul.mubr.f32.gmra.mxu0 %v655
    %v1466 = vpop.f32.mrf.mxu0
    %v1467 = vadd.f32 %v1382, %v1466
    %v1468 = vpop.f32.mrf.mxu0
    %1469 = vmatprep.mubr.f32.mxu0 0.0
    %1470 = vmatmul.mubr.f32.gmra.mxu0 %v658
    %v1471 = vpop.f32.mrf.mxu0
    %v1472 = vadd.f32 %v1387, %v1471
    %v1473 = vpop.f32.mrf.mxu0
    %1474 = vmatprep.mubr.f32.mxu0 0.0
    %1475 = vmatmul.mubr.f32.gmra.mxu0 %v661
    %v1476 = vpop.f32.mrf.mxu0
    %v1477 = vadd.f32 %v1392, %v1476
    %v1478 = vpop.f32.mrf.mxu0
    %1479 = vmatprep.mubr.f32.mxu0 0.0
    %1480 = vmatmul.mubr.f32.gmra.mxu0 %v664
    %v1481 = vpop.f32.mrf.mxu0
    %v1482 = vadd.f32 %v1397, %v1481
    %v1483 = vpop.f32.mrf.mxu0
    %1484 = vdwg.mxu0
    %s1485 = scalar_lea.vmem [#allocation9], 640
    %v1486 = vld [vmem:[%s1485] sm:$0xff]
    %v1487 = vld [vmem:[%s1485 + $0x8] sm:$0xff]
    %v1488 = vld [vmem:[%s1485 + $0x10] sm:$0xff]
    %v1489 = vld [vmem:[%s1485 + $0x18] sm:$0xff]
    %v1490 = vld [vmem:[%s1485 + $0x20] sm:$0xff]
    %v1491 = vld [vmem:[%s1485 + $0x28] sm:$0xff]
    %v1492 = vld [vmem:[%s1485 + $0x30] sm:$0xff]
    %v1493 = vld [vmem:[%s1485 + $0x38] sm:$0xff]
    %v1494 = vld [vmem:[%s1485 + $0x40] sm:$0xff]
    %v1495 = vld [vmem:[%s1485 + $0x48] sm:$0xff]
    %v1496 = vld [vmem:[%s1485 + $0x50] sm:$0xff]
    %v1497 = vld [vmem:[%s1485 + $0x58] sm:$0xff]
    %v1498 = vld [vmem:[%s1485 + $0x60] sm:$0xff]
    %v1499 = vld [vmem:[%s1485 + $0x68] sm:$0xff]
    %v1500 = vld [vmem:[%s1485 + $0x70] sm:$0xff]
    %v1501 = vld [vmem:[%s1485 + $0x78] sm:$0xff]
    %1502 = vmatprep.subr.mxu0 0.0
    %1503 = vmatpush1.msra.mxu0 %v1501
    %1504 = vmatprep.subr.mxu0 0.0
    %1505 = vmatpush1.msra.mxu0 %v1500
    %1506 = vmatprep.subr.mxu0 0.0
    %1507 = vmatpush1.msra.mxu0 %v1499
    %1508 = vmatprep.subr.mxu0 0.0
    %1509 = vmatpush1.msra.mxu0 %v1498
    %1510 = vmatprep.subr.mxu0 0.0
    %1511 = vmatpush1.msra.mxu0 %v1497
    %1512 = vmatprep.subr.mxu0 0.0
    %1513 = vmatpush1.msra.mxu0 %v1496
    %1514 = vmatprep.subr.mxu0 0.0
    %1515 = vmatpush1.msra.mxu0 %v1495
    %1516 = vmatprep.subr.mxu0 0.0
    %1517 = vmatpush1.msra.mxu0 %v1494
    %1518 = vmatprep.subr.mxu0 0.0
    %1519 = vmatpush1.msra.mxu0 %v1493
    %1520 = vmatprep.subr.mxu0 0.0
    %1521 = vmatpush1.msra.mxu0 %v1492
    %1522 = vmatprep.subr.mxu0 0.0
    %1523 = vmatpush1.msra.mxu0 %v1491
    %1524 = vmatprep.subr.mxu0 0.0
    %1525 = vmatpush1.msra.mxu0 %v1490
    %1526 = vmatprep.subr.mxu0 0.0
    %1527 = vmatpush1.msra.mxu0 %v1489
    %1528 = vmatprep.subr.mxu0 0.0
    %1529 = vmatpush1.msra.mxu0 %v1488
    %1530 = vmatprep.subr.mxu0 0.0
    %1531 = vmatpush1.msra.mxu0 %v1487
    %1532 = vmatprep.subr.mxu0 0.0
    %1533 = vmatpush1.msra.mxu0 %v1486
    %1534 = vmatprep.subr.mxu0 0.0
    %1535 = vmatpush2.msra.mxu0 0.0
    %1536 = vmatprep.subr.mxu0 0.0
    %1537 = vmatpush2.msra.mxu0 0.0
    %1538 = vmatprep.subr.mxu0 0.0
    %1539 = vmatpush2.msra.mxu0 0.0
    %1540 = vmatprep.subr.mxu0 0.0
    %1541 = vmatpush2.msra.mxu0 0.0
    %1542 = vmatprep.subr.mxu0 0.0
    %1543 = vmatpush2.msra.mxu0 0.0
    %1544 = vmatprep.subr.mxu0 0.0
    %1545 = vmatpush2.msra.mxu0 0.0
    %1546 = vmatprep.subr.mxu0 0.0
    %1547 = vmatpush2.msra.mxu0 0.0
    %1548 = vmatprep.subr.mxu0 0.0
    %1549 = vmatpush2.msra.mxu0 0.0
    %1550 = vmatprep.subr.mxu0 0.0
    %1551 = vmatpush2.msra.mxu0 0.0
    %1552 = vmatprep.subr.mxu0 0.0
    %1553 = vmatpush2.msra.mxu0 0.0
    %1554 = vmatprep.subr.mxu0 0.0
    %1555 = vmatpush2.msra.mxu0 0.0
    %1556 = vmatprep.subr.mxu0 0.0
    %1557 = vmatpush2.msra.mxu0 0.0
    %1558 = vmatprep.subr.mxu0 0.0
    %1559 = vmatpush2.msra.mxu0 0.0
    %1560 = vmatprep.subr.mxu0 0.0
    %1561 = vmatpush2.msra.mxu0 0.0
    %1562 = vmatprep.subr.mxu0 0.0
    %1563 = vmatpush2.msra.mxu0 0.0
    %1564 = vmatprep.subr.mxu0 0.0
    %1565 = vmatpush2.msra.mxu0 0.0
    %1566 = vmatprep.mubr.f32.mxu0 0.0
    %1567 = vmatmul.mubr.f32.gmra.mxu0 %v1178
    %v1568 = vpop.f32.mrf.mxu0
    %v1569 = vadd.f32 0.0, %v1568
    %v1570 = vpop.f32.mrf.mxu0
    %1571 = vmatprep.mubr.f32.mxu0 0.0
    %1572 = vmatmul.mubr.f32.gmra.mxu0 %v1183
    %v1573 = vpop.f32.mrf.mxu0
    %v1574 = vadd.f32 0.0, %v1573
    %v1575 = vpop.f32.mrf.mxu0
    %1576 = vmatprep.mubr.f32.mxu0 0.0
    %1577 = vmatmul.mubr.f32.gmra.mxu0 %v1188
    %v1578 = vpop.f32.mrf.mxu0
    %v1579 = vadd.f32 0.0, %v1578
    %v1580 = vpop.f32.mrf.mxu0
    %1581 = vmatprep.mubr.f32.mxu0 0.0
    %1582 = vmatmul.mubr.f32.gmra.mxu0 %v1193
    %v1583 = vpop.f32.mrf.mxu0
    %v1584 = vadd.f32 0.0, %v1583
    %v1585 = vpop.f32.mrf.mxu0
    %1586 = vdwg.mxu0
    %1587 = vmatprep.subr.mxu0 0.0
    %1588 = vmatpush1.msra.mxu0 0.0
    %1589 = vmatprep.subr.mxu0 0.0
    %1590 = vmatpush1.msra.mxu0 0.0
    %1591 = vmatprep.subr.mxu0 0.0
    %1592 = vmatpush1.msra.mxu0 0.0
    %1593 = vmatprep.subr.mxu0 0.0
    %1594 = vmatpush1.msra.mxu0 0.0
    %1595 = vmatprep.subr.mxu0 0.0
    %1596 = vmatpush1.msra.mxu0 0.0
    %1597 = vmatprep.subr.mxu0 0.0
    %1598 = vmatpush1.msra.mxu0 0.0
    %1599 = vmatprep.subr.mxu0 0.0
    %1600 = vmatpush1.msra.mxu0 0.0
    %1601 = vmatprep.subr.mxu0 0.0
    %1602 = vmatpush1.msra.mxu0 0.0
    %1603 = vmatprep.subr.mxu0 0.0
    %1604 = vmatpush1.msra.mxu0 0.0
    %1605 = vmatprep.subr.mxu0 0.0
    %1606 = vmatpush1.msra.mxu0 0.0
    %1607 = vmatprep.subr.mxu0 0.0
    %1608 = vmatpush1.msra.mxu0 0.0
    %1609 = vmatprep.subr.mxu0 0.0
    %1610 = vmatpush1.msra.mxu0 0.0
    %1611 = vmatprep.subr.mxu0 0.0
    %1612 = vmatpush1.msra.mxu0 %v1584
    %1613 = vmatprep.subr.mxu0 0.0
    %1614 = vmatpush1.msra.mxu0 %v1579
    %1615 = vmatprep.subr.mxu0 0.0
    %1616 = vmatpush1.msra.mxu0 %v1574
    %1617 = vmatprep.subr.mxu0 0.0
    %1618 = vmatpush1.msra.mxu0 %v1569
    %1619 = vmatprep.subr.mxu0 0.0
    %1620 = vmatpush2.msra.mxu0 0.0
    %1621 = vmatprep.subr.mxu0 0.0
    %1622 = vmatpush2.msra.mxu0 0.0
    %1623 = vmatprep.subr.mxu0 0.0
    %1624 = vmatpush2.msra.mxu0 0.0
    %1625 = vmatprep.subr.mxu0 0.0
    %1626 = vmatpush2.msra.mxu0 0.0
    %1627 = vmatprep.subr.mxu0 0.0
    %1628 = vmatpush2.msra.mxu0 0.0
    %1629 = vmatprep.subr.mxu0 0.0
    %1630 = vmatpush2.msra.mxu0 0.0
    %1631 = vmatprep.subr.mxu0 0.0
    %1632 = vmatpush2.msra.mxu0 0.0
    %1633 = vmatprep.subr.mxu0 0.0
    %1634 = vmatpush2.msra.mxu0 0.0
    %1635 = vmatprep.subr.mxu0 0.0
    %1636 = vmatpush2.msra.mxu0 0.0
    %1637 = vmatprep.subr.mxu0 0.0
    %1638 = vmatpush2.msra.mxu0 0.0
    %1639 = vmatprep.subr.mxu0 0.0
    %1640 = vmatpush2.msra.mxu0 0.0
    %1641 = vmatprep.subr.mxu0 0.0
    %1642 = vmatpush2.msra.mxu0 0.0
    %1643 = vmatprep.subr.mxu0 0.0
    %1644 = vmatpush2.msra.mxu0 0.0
    %1645 = vmatprep.subr.mxu0 0.0
    %1646 = vmatpush2.msra.mxu0 0.0
    %1647 = vmatprep.subr.mxu0 0.0
    %1648 = vmatpush2.msra.mxu0 0.0
    %1649 = vmatprep.subr.mxu0 0.0
    %1650 = vmatpush2.msra.mxu0 0.0
    %1651 = vmatprep.mubr.f32.mxu0 0.0
    %1652 = vmatmul.mubr.f32.gmra.mxu0 %v859
    %v1653 = vpop.f32.mrf.mxu0
    %v1654 = vadd.f32 0.0, %v1653
    %v1655 = vpop.f32.mrf.mxu0
    %1656 = vmatprep.mubr.f32.mxu0 0.0
    %1657 = vmatmul.mubr.f32.gmra.mxu0 %v862
    %v1658 = vpop.f32.mrf.mxu0
    %v1659 = vadd.f32 0.0, %v1658
    %v1660 = vpop.f32.mrf.mxu0
    %1661 = vmatprep.mubr.f32.mxu0 0.0
    %1662 = vmatmul.mubr.f32.gmra.mxu0 %v865
    %v1663 = vpop.f32.mrf.mxu0
    %v1664 = vadd.f32 0.0, %v1663
    %v1665 = vpop.f32.mrf.mxu0
    %1666 = vmatprep.mubr.f32.mxu0 0.0
    %1667 = vmatmul.mubr.f32.gmra.mxu0 %v868
    %v1668 = vpop.f32.mrf.mxu0
    %v1669 = vadd.f32 0.0, %v1668
    %v1670 = vpop.f32.mrf.mxu0
    %1671 = vdwg.mxu0
    %v1672 = vadd.f32 %v1467, %v1654
    %v1673 = vadd.f32 %v1472, %v1659
    %v1674 = vadd.f32 %v1477, %v1664
    %v1675 = vadd.f32 %v1482, %v1669
    %s1676 = scalar_lea.vmem %s8, 1
    %v1677 = vld [vmem:[%s1676] sm:$0x1]
    %v1679 = vlaneseq
    %v1680 = vshrl.u32 %v1679, 7
    %v1681 = vsub.s32 0, %v1680
    %v1682 = vrot.slane %v1677, %v1681
    %v1684 = vadd.f32 %v1672, %v1682
    %v1685 = vadd.f32 %v1673, %v1682
    %v1686 = vadd.f32 %v1674, %v1682
    %v1687 = vadd.f32 %v1675, %v1682
    %s1688 = scalar_lea.vmem [#allocation10], 128
    %v1689 = vld [vmem:[%s1688] sm:$0xff]
    %v1690 = vld [vmem:[%s1688 + $0x8] sm:$0xff]
    %v1691 = vld [vmem:[%s1688 + $0x10] sm:$0xff]
    %v1692 = vld [vmem:[%s1688 + $0x18] sm:$0xff]
    %v1693 = vld [vmem:[%s1688 + $0x20] sm:$0xff]
    %v1694 = vld [vmem:[%s1688 + $0x28] sm:$0xff]
    %v1695 = vld [vmem:[%s1688 + $0x30] sm:$0xff]
    %v1696 = vld [vmem:[%s1688 + $0x38] sm:$0xff]
    %v1697 = vld [vmem:[%s1688 + $0x40] sm:$0xff]
    %v1698 = vld [vmem:[%s1688 + $0x48] sm:$0xff]
    %v1699 = vld [vmem:[%s1688 + $0x50] sm:$0xff]
    %v1700 = vld [vmem:[%s1688 + $0x58] sm:$0xff]
    %v1701 = vld [vmem:[%s1688 + $0x60] sm:$0xff]
    %v1702 = vld [vmem:[%s1688 + $0x68] sm:$0xff]
    %v1703 = vld [vmem:[%s1688 + $0x70] sm:$0xff]
    %v1704 = vld [vmem:[%s1688 + $0x78] sm:$0xff]
    %s1705 = scalar_lea.vmem %s10, 1
    %v1706 = vld [vmem:[%s1705] sm:$0x1]
    %v1708 = vlaneseq
    %v1709 = vshrl.u32 %v1708, 7
    %v1710 = vsub.s32 0, %v1709
    %v1711 = vrot.slane %v1706, %v1710
    %1713 = vmatprep.subr.mxu0 0.0
    %1714 = vmatpush1.msra.mxu0 %v1704
    %1715 = vmatprep.subr.mxu0 0.0
    %1716 = vmatpush1.msra.mxu0 %v1703
    %1717 = vmatprep.subr.mxu0 0.0
    %1718 = vmatpush1.msra.mxu0 %v1702
    %1719 = vmatprep.subr.mxu0 0.0
    %1720 = vmatpush1.msra.mxu0 %v1701
    %1721 = vmatprep.subr.mxu0 0.0
    %1722 = vmatpush1.msra.mxu0 %v1700
    %1723 = vmatprep.subr.mxu0 0.0
    %1724 = vmatpush1.msra.mxu0 %v1699
    %1725 = vmatprep.subr.mxu0 0.0
    %1726 = vmatpush1.msra.mxu0 %v1698
    %1727 = vmatprep.subr.mxu0 0.0
    %1728 = vmatpush1.msra.mxu0 %v1697
    %1729 = vmatprep.subr.mxu0 0.0
    %1730 = vmatpush1.msra.mxu0 %v1696
    %1731 = vmatprep.subr.mxu0 0.0
    %1732 = vmatpush1.msra.mxu0 %v1695
    %1733 = vmatprep.subr.mxu0 0.0
    %1734 = vmatpush1.msra.mxu0 %v1694
    %1735 = vmatprep.subr.mxu0 0.0
    %1736 = vmatpush1.msra.mxu0 %v1693
    %1737 = vmatprep.subr.mxu0 0.0
    %1738 = vmatpush1.msra.mxu0 %v1692
    %1739 = vmatprep.subr.mxu0 0.0
    %1740 = vmatpush1.msra.mxu0 %v1691
    %1741 = vmatprep.subr.mxu0 0.0
    %1742 = vmatpush1.msra.mxu0 %v1690
    %1743 = vmatprep.subr.mxu0 0.0
    %1744 = vmatpush1.msra.mxu0 %v1689
    %1745 = vmatprep.subr.mxu0 0.0
    %1746 = vmatpush2.msra.mxu0 0.0
    %1747 = vmatprep.subr.mxu0 0.0
    %1748 = vmatpush2.msra.mxu0 0.0
    %1749 = vmatprep.subr.mxu0 0.0
    %1750 = vmatpush2.msra.mxu0 0.0
    %1751 = vmatprep.subr.mxu0 0.0
    %1752 = vmatpush2.msra.mxu0 0.0
    %1753 = vmatprep.subr.mxu0 0.0
    %1754 = vmatpush2.msra.mxu0 0.0
    %1755 = vmatprep.subr.mxu0 0.0
    %1756 = vmatpush2.msra.mxu0 0.0
    %1757 = vmatprep.subr.mxu0 0.0
    %1758 = vmatpush2.msra.mxu0 0.0
    %1759 = vmatprep.subr.mxu0 0.0
    %1760 = vmatpush2.msra.mxu0 0.0
    %1761 = vmatprep.subr.mxu0 0.0
    %1762 = vmatpush2.msra.mxu0 0.0
    %1763 = vmatprep.subr.mxu0 0.0
    %1764 = vmatpush2.msra.mxu0 0.0
    %1765 = vmatprep.subr.mxu0 0.0
    %1766 = vmatpush2.msra.mxu0 0.0
    %1767 = vmatprep.subr.mxu0 0.0
    %1768 = vmatpush2.msra.mxu0 0.0
    %1769 = vmatprep.subr.mxu0 0.0
    %1770 = vmatpush2.msra.mxu0 0.0
    %1771 = vmatprep.subr.mxu0 0.0
    %1772 = vmatpush2.msra.mxu0 0.0
    %1773 = vmatprep.subr.mxu0 0.0
    %1774 = vmatpush2.msra.mxu0 0.0
    %1775 = vmatprep.subr.mxu0 0.0
    %1776 = vmatpush2.msra.mxu0 0.0
    %1777 = vmatprep.mubr.f32.mxu0 0.0
    %1778 = vmatmul.mubr.f32.gmra.mxu0 %v1684
    %v1779 = vpop.f32.mrf.mxu0
    %v1780 = vadd.f32 %v1711, %v1779
    %v1781 = vpop.f32.mrf.mxu0
    %1782 = vmatprep.mubr.f32.mxu0 0.0
    %1783 = vmatmul.mubr.f32.gmra.mxu0 %v1685
    %v1784 = vpop.f32.mrf.mxu0
    %v1785 = vadd.f32 %v1711, %v1784
    %v1786 = vpop.f32.mrf.mxu0
    %1787 = vmatprep.mubr.f32.mxu0 0.0
    %1788 = vmatmul.mubr.f32.gmra.mxu0 %v1686
    %v1789 = vpop.f32.mrf.mxu0
    %v1790 = vadd.f32 %v1711, %v1789
    %v1791 = vpop.f32.mrf.mxu0
    %1792 = vmatprep.mubr.f32.mxu0 0.0
    %1793 = vmatmul.mubr.f32.gmra.mxu0 %v1687
    %v1794 = vpop.f32.mrf.mxu0
    %v1795 = vadd.f32 %v1711, %v1794
    %v1796 = vpop.f32.mrf.mxu0
    %1797 = vdwg.mxu0
    %v1798 = vadd.f32 %v1082, %v1780
    %v1799 = vadd.f32 %v1083, %v1785
    %v1800 = vadd.f32 %v1084, %v1790
    %v1801 = vadd.f32 %v1085, %v1795
    %v1802 = vmax.f32 %v1798, 0.0
    %v1803 = vmax.f32 %v1799, 0.0
    %v1804 = vmax.f32 %v1800, 0.0
    %v1805 = vmax.f32 %v1801, 0.0
    %1806 = vst [vmem:[%s11] sm:$0xff] %v1802
    %1807 = vst [vmem:[%s11 + $0x8] sm:$0xff] %v1803
    %1808 = vst [vmem:[%s11 + $0x10] sm:$0xff] %v1804
    %1809 = vst [vmem:[%s11 + $0x18] sm:$0xff] %v1805
    // Predicated region
    $region70: #{downsample_forward.5} parent=1 // pred_check
      _
    $region71: #{downsample_forward.5} parent=1 // pred_check_branch
      %1811 = sbr.rel (0) target = $region73
    $region72: #{downsample_forward.5} parent=1 // pred_region
      _
    $region73: #{downsample_forward.5} parent=1 // pred_fallthru
      _
    // Predicated region
    $region74: #{downsample_forward.5} parent=1 // pred_check
      _
    $region75: #{downsample_forward.5} parent=1 // pred_check_branch
      %1813 = sbr.rel (0) target = $region77
    $region76: #{downsample_forward.5} parent=1 // pred_region
      _
    $region77: #{downsample_forward.5} parent=1 // pred_fallthru
      _
    %1814 = vsyncpa [#allocation3], 1
    %1815 = vsyncpa [#allocation5], 1
    %1816 = vsyncpa [#allocation8], 1
    %1817 = vsyncpa [#allocation11], 1

// kernel: downsample_forward.8
$region0: #{downsample_forward.8}
  #allocation0 [shape = 'u32[]', space=smem, size = 0x4, offset = 0x4, fixed_abs, tag = 'smem constant byte address 0x4 - core index']
  #allocation1 [shape = 'u32[144,128]{1,0:T(1,128)}', space=vmem, size = 0x12000, scoped, tag = 'internal scratch']
  %s0 = inlined_call_operand.vmem [shape: f32[8,64], index: 0, kind: input, shape index: {}]
  %s1 = inlined_call_operand.vmem [shape: f32[4,8], index: 1, kind: input, shape index: {}]
  %s2 = inlined_call_operand.vmem [shape: f32[64,64], index: 2, kind: input, shape index: {}]
  %s3 = inlined_call_operand.vmem [shape: f32[1,64], index: 3, kind: input, shape index: {}]
  %s4 = inlined_call_operand.vmem [shape: f32[3,4,4], index: 4, kind: input, shape index: {}]
  %s5 = inlined_call_operand.vmem [shape: f32[2,64,64], index: 5, kind: input, shape index: {}]
  %s6 = inlined_call_operand.vmem [shape: f32[2,1,64], index: 6, kind: input, shape index: {}]
  %s7 = inlined_call_operand.vmem [shape: f32[6,64,64], index: 7, kind: input, shape index: {}]
  %s8 = inlined_call_operand.vmem [shape: f32[2,1,64], index: 8, kind: input, shape index: {}]
  %s9 = inlined_call_operand.vmem [shape: f32[2,64,64], index: 9, kind: input, shape index: {}]
  %s10 = inlined_call_operand.vmem [shape: f32[2,1,64], index: 10, kind: input, shape index: {}]
  %s11 = inlined_call_operand.vmem [shape: f32[4,64], index: 11, kind: output, shape index: {}]
  %s12 = sld [smem:[#allocation0]]
  $region54: #{downsample_forward.8} parent=0
    _
  %s14 = ssub.s32 1, %s12
  %s15 = scalar_select 0, %s14, %s12
  // Predicated region
  $region2: #{downsample_forward.8} parent=0 // pred_check
    _
  $region3: #{downsample_forward.8} parent=0 // pred_check_branch
    %17 = sbr.rel (0) target = $region5
  $region4: #{downsample_forward.8} parent=0 // pred_region
    _
  $region5: #{downsample_forward.8} parent=0 // pred_fallthru
    _
  // Predicated region
  $region6: #{downsample_forward.8} parent=0 // pred_check
    _
  $region7: #{downsample_forward.8} parent=0 // pred_check_branch
    %19 = sbr.rel (0) target = $region9
  $region8: #{downsample_forward.8} parent=0 // pred_region
    _
  $region9: #{downsample_forward.8} parent=0 // pred_fallthru
    _
  // Predicated region
  $region10: #{downsample_forward.8} parent=0 // pred_check
    _
  $region11: #{downsample_forward.8} parent=0 // pred_check_branch
    %21 = sbr.rel (0) target = $region13
  $region12: #{downsample_forward.8} parent=0 // pred_region
    _
  $region13: #{downsample_forward.8} parent=0 // pred_fallthru
    _
  // Predicated region
  $region14: #{downsample_forward.8} parent=0 // pred_check
    _
  $region15: #{downsample_forward.8} parent=0 // pred_check_branch
    %23 = sbr.rel (0) target = $region17
  $region16: #{downsample_forward.8} parent=0 // pred_region
    _
  $region17: #{downsample_forward.8} parent=0 // pred_fallthru
    _
  // Predicated region
  $region18: #{downsample_forward.8} parent=0 // pred_check
    _
  $region19: #{downsample_forward.8} parent=0 // pred_check_branch
    %25 = sbr.rel (0) target = $region21
  $region20: #{downsample_forward.8} parent=0 // pred_region
    _
  $region21: #{downsample_forward.8} parent=0 // pred_fallthru
    _
  // Predicated region
  $region22: #{downsample_forward.8} parent=0 // pred_check
    _
  $region23: #{downsample_forward.8} parent=0 // pred_check_branch
    %27 = sbr.rel (0) target = $region25
  $region24: #{downsample_forward.8} parent=0 // pred_region
    _
  $region25: #{downsample_forward.8} parent=0 // pred_fallthru
    _
  // Predicated region
  $region26: #{downsample_forward.8} parent=0 // pred_check
    _
  $region27: #{downsample_forward.8} parent=0 // pred_check_branch
    %29 = sbr.rel (0) target = $region29
  $region28: #{downsample_forward.8} parent=0 // pred_region
    _
  $region29: #{downsample_forward.8} parent=0 // pred_fallthru
    _
  // Predicated region
  $region30: #{downsample_forward.8} parent=0 // pred_check
    _
  $region31: #{downsample_forward.8} parent=0 // pred_check_branch
    %31 = sbr.rel (0) target = $region33
  $region32: #{downsample_forward.8} parent=0 // pred_region
    _
  $region33: #{downsample_forward.8} parent=0 // pred_fallthru
    _
  // Predicated region
  $region34: #{downsample_forward.8} parent=0 // pred_check
    _
  $region35: #{downsample_forward.8} parent=0 // pred_check_branch
    %33 = sbr.rel (0) target = $region37
  $region36: #{downsample_forward.8} parent=0 // pred_region
    _
  $region37: #{downsample_forward.8} parent=0 // pred_fallthru
    _
  // Predicated region
  $region38: #{downsample_forward.8} parent=0 // pred_check
    _
  $region39: #{downsample_forward.8} parent=0 // pred_check_branch
    %35 = sbr.rel (0) target = $region41
  $region40: #{downsample_forward.8} parent=0 // pred_region
    _
  $region41: #{downsample_forward.8} parent=0 // pred_fallthru
    _
  // Predicated region
  $region42: #{downsample_forward.8} parent=0 // pred_check
    _
  $region43: #{downsample_forward.8} parent=0 // pred_check_branch
    %37 = sbr.rel (0) target = $region45
  $region44: #{downsample_forward.8} parent=0 // pred_region
    _
  $region45: #{downsample_forward.8} parent=0 // pred_fallthru
    _
  %v38 = vld [vmem:[%s1] sm:$0xf]
  %v39 = vld [vmem:[%s0] sm:$0xff]
  %vm40 = vcmask 64512
  %v42 = vsel %vm40, %v38, 0
  %44 = vmatprep.subr.mxu0 0.0
  %45 = vmatpush1.msra.mxu0 0.0
  %46 = vmatprep.subr.mxu0 0.0
  %47 = vmatpush1.msra.mxu0 0.0
  %48 = vmatprep.subr.mxu0 0.0
  %49 = vmatpush1.msra.mxu0 0.0
  %50 = vmatprep.subr.mxu0 0.0
  %51 = vmatpush1.msra.mxu0 0.0
  %52 = vmatprep.subr.mxu0 0.0
  %53 = vmatpush1.msra.mxu0 0.0
  %54 = vmatprep.subr.mxu0 0.0
  %55 = vmatpush1.msra.mxu0 0.0
  %56 = vmatprep.subr.mxu0 0.0
  %57 = vmatpush1.msra.mxu0 0.0
  %58 = vmatprep.subr.mxu0 0.0
  %59 = vmatpush1.msra.mxu0 0.0
  %60 = vmatprep.subr.mxu0 0.0
  %61 = vmatpush1.msra.mxu0 0.0
  %62 = vmatprep.subr.mxu0 0.0
  %63 = vmatpush1.msra.mxu0 0.0
  %64 = vmatprep.subr.mxu0 0.0
  %65 = vmatpush1.msra.mxu0 0.0
  %66 = vmatprep.subr.mxu0 0.0
  %67 = vmatpush1.msra.mxu0 0.0
  %68 = vmatprep.subr.mxu0 0.0
  %69 = vmatpush1.msra.mxu0 0.0
  %70 = vmatprep.subr.mxu0 0.0
  %71 = vmatpush1.msra.mxu0 0.0
  %72 = vmatprep.subr.mxu0 0.0
  %73 = vmatpush1.msra.mxu0 0.0
  %74 = vmatprep.subr.mxu0 0.0
  %75 = vmatpush1.msra.mxu0 %v39
  %76 = vmatprep.subr.mxu0 0.0
  %77 = vmatpush2.msra.mxu0 0.0
  %78 = vmatprep.subr.mxu0 0.0
  %79 = vmatpush2.msra.mxu0 0.0
  %80 = vmatprep.subr.mxu0 0.0
  %81 = vmatpush2.msra.mxu0 0.0
  %82 = vmatprep.subr.mxu0 0.0
  %83 = vmatpush2.msra.mxu0 0.0
  %84 = vmatprep.subr.mxu0 0.0
  %85 = vmatpush2.msra.mxu0 0.0
  %86 = vmatprep.subr.mxu0 0.0
  %87 = vmatpush2.msra.mxu0 0.0
  %88 = vmatprep.subr.mxu0 0.0
  %89 = vmatpush2.msra.mxu0 0.0
  %90 = vmatprep.subr.mxu0 0.0
  %91 = vmatpush2.msra.mxu0 0.0
  %92 = vmatprep.subr.mxu0 0.0
  %93 = vmatpush2.msra.mxu0 0.0
  %94 = vmatprep.subr.mxu0 0.0
  %95 = vmatpush2.msra.mxu0 0.0
  %96 = vmatprep.subr.mxu0 0.0
  %97 = vmatpush2.msra.mxu0 0.0
  %98 = vmatprep.subr.mxu0 0.0
  %99 = vmatpush2.msra.mxu0 0.0
  %100 = vmatprep.subr.mxu0 0.0
  %101 = vmatpush2.msra.mxu0 0.0
  %102 = vmatprep.subr.mxu0 0.0
  %103 = vmatpush2.msra.mxu0 0.0
  %104 = vmatprep.subr.mxu0 0.0
  %105 = vmatpush2.msra.mxu0 0.0
  %106 = vmatprep.subr.mxu0 0.0
  %107 = vmatpush2.msra.mxu0 0.0
  %108 = vmatprep.mubr.f32.mxu0 0.0
  %109 = vmatmul.mubr.f32.gmra.mxu0 %v42
  %v110 = vpop.f32.mrf.mxu0
  %v111 = vadd.f32 0.0, %v110
  %v112 = vpop.f32.mrf.mxu0
  %113 = vdwg.mxu0
  %v114 = vld [vmem:[%s2] sm:$0xff]
  %v115 = vld [vmem:[%s2 + $0x8] sm:$0xff]
  %v116 = vld [vmem:[%s2 + $0x10] sm:$0xff]
  %v117 = vld [vmem:[%s2 + $0x18] sm:$0xff]
  %v118 = vld [vmem:[%s2 + $0x20] sm:$0xff]
  %v119 = vld [vmem:[%s2 + $0x28] sm:$0xff]
  %v120 = vld [vmem:[%s2 + $0x30] sm:$0xff]
  %v121 = vld [vmem:[%s2 + $0x38] sm:$0xff]
  %v122 = vld [vmem:[%s3] sm:$0x1]
  %v124 = vlaneseq
  %v125 = vshrl.u32 %v124, 7
  %v126 = vsub.s32 0, %v125
  %v127 = vrot.slane %v122, %v126
  %vm129 = vcmask 523264
  %v131 = vsel %vm129, %v111, 0
  %133 = vmatprep.subr.mxu0 0.0
  %134 = vmatpush1.msra.mxu0 0.0
  %135 = vmatprep.subr.mxu0 0.0
  %136 = vmatpush1.msra.mxu0 0.0
  %137 = vmatprep.subr.mxu0 0.0
  %138 = vmatpush1.msra.mxu0 0.0
  %139 = vmatprep.subr.mxu0 0.0
  %140 = vmatpush1.msra.mxu0 0.0
  %141 = vmatprep.subr.mxu0 0.0
  %142 = vmatpush1.msra.mxu0 0.0
  %143 = vmatprep.subr.mxu0 0.0
  %144 = vmatpush1.msra.mxu0 0.0
  %145 = vmatprep.subr.mxu0 0.0
  %146 = vmatpush1.msra.mxu0 0.0
  %147 = vmatprep.subr.mxu0 0.0
  %148 = vmatpush1.msra.mxu0 0.0
  %149 = vmatprep.subr.mxu0 0.0
  %150 = vmatpush1.msra.mxu0 %v121
  %151 = vmatprep.subr.mxu0 0.0
  %152 = vmatpush1.msra.mxu0 %v120
  %153 = vmatprep.subr.mxu0 0.0
  %154 = vmatpush1.msra.mxu0 %v119
  %155 = vmatprep.subr.mxu0 0.0
  %156 = vmatpush1.msra.mxu0 %v118
  %157 = vmatprep.subr.mxu0 0.0
  %158 = vmatpush1.msra.mxu0 %v117
  %159 = vmatprep.subr.mxu0 0.0
  %160 = vmatpush1.msra.mxu0 %v116
  %161 = vmatprep.subr.mxu0 0.0
  %162 = vmatpush1.msra.mxu0 %v115
  %163 = vmatprep.subr.mxu0 0.0
  %164 = vmatpush1.msra.mxu0 %v114
  %165 = vmatprep.subr.mxu0 0.0
  %166 = vmatpush2.msra.mxu0 0.0
  %167 = vmatprep.subr.mxu0 0.0
  %168 = vmatpush2.msra.mxu0 0.0
  %169 = vmatprep.subr.mxu0 0.0
  %170 = vmatpush2.msra.mxu0 0.0
  %171 = vmatprep.subr.mxu0 0.0
  %172 = vmatpush2.msra.mxu0 0.0
  %173 = vmatprep.subr.mxu0 0.0
  %174 = vmatpush2.msra.mxu0 0.0
  %175 = vmatprep.subr.mxu0 0.0
  %176 = vmatpush2.msra.mxu0 0.0
  %177 = vmatprep.subr.mxu0 0.0
  %178 = vmatpush2.msra.mxu0 0.0
  %179 = vmatprep.subr.mxu0 0.0
  %180 = vmatpush2.msra.mxu0 0.0
  %181 = vmatprep.subr.mxu0 0.0
  %182 = vmatpush2.msra.mxu0 0.0
  %183 = vmatprep.subr.mxu0 0.0
  %184 = vmatpush2.msra.mxu0 0.0
  %185 = vmatprep.subr.mxu0 0.0
  %186 = vmatpush2.msra.mxu0 0.0
  %187 = vmatprep.subr.mxu0 0.0
  %188 = vmatpush2.msra.mxu0 0.0
  %189 = vmatprep.subr.mxu0 0.0
  %190 = vmatpush2.msra.mxu0 0.0
  %191 = vmatprep.subr.mxu0 0.0
  %192 = vmatpush2.msra.mxu0 0.0
  %193 = vmatprep.subr.mxu0 0.0
  %194 = vmatpush2.msra.mxu0 0.0
  %195 = vmatprep.subr.mxu0 0.0
  %196 = vmatpush2.msra.mxu0 0.0
  %197 = vmatprep.mubr.f32.mxu0 0.0
  %198 = vmatmul.mubr.f32.gmra.mxu0 %v131
  %v199 = vpop.f32.mrf.mxu0
  %v200 = vadd.f32 %v127, %v199
  %v201 = vpop.f32.mrf.mxu0
  %202 = vdwg.mxu0
  %v203 = vld [vmem:[%s5] sm:$0xff]
  %v204 = vld [vmem:[%s5 + $0x8] sm:$0xff]
  %v205 = vld [vmem:[%s5 + $0x10] sm:$0xff]
  %v206 = vld [vmem:[%s5 + $0x18] sm:$0xff]
  %v207 = vld [vmem:[%s5 + $0x20] sm:$0xff]
  %v208 = vld [vmem:[%s5 + $0x28] sm:$0xff]
  %v209 = vld [vmem:[%s5 + $0x30] sm:$0xff]
  %v210 = vld [vmem:[%s5 + $0x38] sm:$0xff]
  %v211 = vld [vmem:[%s6] sm:$0x1]
  %v213 = vlaneseq
  %v214 = vshrl.u32 %v213, 7
  %v215 = vsub.s32 0, %v214
  %v216 = vrot.slane %v211, %v215
  %v219 = vsel %vm129, %v200, 0
  %221 = vmatprep.subr.mxu0 0.0
  %222 = vmatpush1.msra.mxu0 0.0
  %223 = vmatprep.subr.mxu0 0.0
  %224 = vmatpush1.msra.mxu0 0.0
  %225 = vmatprep.subr.mxu0 0.0
  %226 = vmatpush1.msra.mxu0 0.0
  %227 = vmatprep.subr.mxu0 0.0
  %228 = vmatpush1.msra.mxu0 0.0
  %229 = vmatprep.subr.mxu0 0.0
  %230 = vmatpush1.msra.mxu0 0.0
  %231 = vmatprep.subr.mxu0 0.0
  %232 = vmatpush1.msra.mxu0 0.0
  %233 = vmatprep.subr.mxu0 0.0
  %234 = vmatpush1.msra.mxu0 0.0
  %235 = vmatprep.subr.mxu0 0.0
  %236 = vmatpush1.msra.mxu0 0.0
  %237 = vmatprep.subr.mxu0 0.0
  %238 = vmatpush1.msra.mxu0 %v210
  %239 = vmatprep.subr.mxu0 0.0
  %240 = vmatpush1.msra.mxu0 %v209
  %241 = vmatprep.subr.mxu0 0.0
  %242 = vmatpush1.msra.mxu0 %v208
  %243 = vmatprep.subr.mxu0 0.0
  %244 = vmatpush1.msra.mxu0 %v207
  %245 = vmatprep.subr.mxu0 0.0
  %246 = vmatpush1.msra.mxu0 %v206
  %247 = vmatprep.subr.mxu0 0.0
  %248 = vmatpush1.msra.mxu0 %v205
  %249 = vmatprep.subr.mxu0 0.0
  %250 = vmatpush1.msra.mxu0 %v204
  %251 = vmatprep.subr.mxu0 0.0
  %252 = vmatpush1.msra.mxu0 %v203
  %253 = vmatprep.subr.mxu0 0.0
  %254 = vmatpush2.msra.mxu0 0.0
  %255 = vmatprep.subr.mxu0 0.0
  %256 = vmatpush2.msra.mxu0 0.0
  %257 = vmatprep.subr.mxu0 0.0
  %258 = vmatpush2.msra.mxu0 0.0
  %259 = vmatprep.subr.mxu0 0.0
  %260 = vmatpush2.msra.mxu0 0.0
  %261 = vmatprep.subr.mxu0 0.0
  %262 = vmatpush2.msra.mxu0 0.0
  %263 = vmatprep.subr.mxu0 0.0
  %264 = vmatpush2.msra.mxu0 0.0
  %265 = vmatprep.subr.mxu0 0.0
  %266 = vmatpush2.msra.mxu0 0.0
  %267 = vmatprep.subr.mxu0 0.0
  %268 = vmatpush2.msra.mxu0 0.0
  %269 = vmatprep.subr.mxu0 0.0
  %270 = vmatpush2.msra.mxu0 0.0
  %271 = vmatprep.subr.mxu0 0.0
  %272 = vmatpush2.msra.mxu0 0.0
  %273 = vmatprep.subr.mxu0 0.0
  %274 = vmatpush2.msra.mxu0 0.0
  %275 = vmatprep.subr.mxu0 0.0
  %276 = vmatpush2.msra.mxu0 0.0
  %277 = vmatprep.subr.mxu0 0.0
  %278 = vmatpush2.msra.mxu0 0.0
  %279 = vmatprep.subr.mxu0 0.0
  %280 = vmatpush2.msra.mxu0 0.0
  %281 = vmatprep.subr.mxu0 0.0
  %282 = vmatpush2.msra.mxu0 0.0
  %283 = vmatprep.subr.mxu0 0.0
  %284 = vmatpush2.msra.mxu0 0.0
  %285 = vmatprep.mubr.f32.mxu0 0.0
  %286 = vmatmul.mubr.f32.gmra.mxu0 %v219
  %v287 = vpop.f32.mrf.mxu0
  %v288 = vadd.f32 %v216, %v287
  %v289 = vpop.f32.mrf.mxu0
  %290 = vdwg.mxu0
  %v291 = vld [vmem:[%s7] sm:$0xff]
  %v292 = vld [vmem:[%s7 + $0x8] sm:$0xff]
  %v293 = vld [vmem:[%s7 + $0x10] sm:$0xff]
  %v294 = vld [vmem:[%s7 + $0x18] sm:$0xff]
  %v295 = vld [vmem:[%s7 + $0x20] sm:$0xff]
  %v296 = vld [vmem:[%s7 + $0x28] sm:$0xff]
  %v297 = vld [vmem:[%s7 + $0x30] sm:$0xff]
  %v298 = vld [vmem:[%s7 + $0x38] sm:$0xff]
  %v300 = vsel %vm129, %v288, 0
  %302 = vmatprep.subr.mxu0 0.0
  %303 = vmatpush1.msra.mxu0 0.0
  %304 = vmatprep.subr.mxu0 0.0
  %305 = vmatpush1.msra.mxu0 0.0
  %306 = vmatprep.subr.mxu0 0.0
  %307 = vmatpush1.msra.mxu0 0.0
  %308 = vmatprep.subr.mxu0 0.0
  %309 = vmatpush1.msra.mxu0 0.0
  %310 = vmatprep.subr.mxu0 0.0
  %311 = vmatpush1.msra.mxu0 0.0
  %312 = vmatprep.subr.mxu0 0.0
  %313 = vmatpush1.msra.mxu0 0.0
  %314 = vmatprep.subr.mxu0 0.0
  %315 = vmatpush1.msra.mxu0 0.0
  %316 = vmatprep.subr.mxu0 0.0
  %317 = vmatpush1.msra.mxu0 0.0
  %318 = vmatprep.subr.mxu0 0.0
  %319 = vmatpush1.msra.mxu0 %v298
  %320 = vmatprep.subr.mxu0 0.0
  %321 = vmatpush1.msra.mxu0 %v297
  %322 = vmatprep.subr.mxu0 0.0
  %323 = vmatpush1.msra.mxu0 %v296
  %324 = vmatprep.subr.mxu0 0.0
  %325 = vmatpush1.msra.mxu0 %v295
  %326 = vmatprep.subr.mxu0 0.0
  %327 = vmatpush1.msra.mxu0 %v294
  %328 = vmatprep.subr.mxu0 0.0
  %329 = vmatpush1.msra.mxu0 %v293
  %330 = vmatprep.subr.mxu0 0.0
  %331 = vmatpush1.msra.mxu0 %v292
  %332 = vmatprep.subr.mxu0 0.0
  %333 = vmatpush1.msra.mxu0 %v291
  %334 = vmatprep.subr.mxu0 0.0
  %335 = vmatpush2.msra.mxu0 0.0
  %336 = vmatprep.subr.mxu0 0.0
  %337 = vmatpush2.msra.mxu0 0.0
  %338 = vmatprep.subr.mxu0 0.0
  %339 = vmatpush2.msra.mxu0 0.0
  %340 = vmatprep.subr.mxu0 0.0
  %341 = vmatpush2.msra.mxu0 0.0
  %342 = vmatprep.subr.mxu0 0.0
  %343 = vmatpush2.msra.mxu0 0.0
  %344 = vmatprep.subr.mxu0 0.0
  %345 = vmatpush2.msra.mxu0 0.0
  %346 = vmatprep.subr.mxu0 0.0
  %347 = vmatpush2.msra.mxu0 0.0
  %348 = vmatprep.subr.mxu0 0.0
  %349 = vmatpush2.msra.mxu0 0.0
  %350 = vmatprep.subr.mxu0 0.0
  %351 = vmatpush2.msra.mxu0 0.0
  %352 = vmatprep.subr.mxu0 0.0
  %353 = vmatpush2.msra.mxu0 0.0
  %354 = vmatprep.subr.mxu0 0.0
  %355 = vmatpush2.msra.mxu0 0.0
  %356 = vmatprep.subr.mxu0 0.0
  %357 = vmatpush2.msra.mxu0 0.0
  %358 = vmatprep.subr.mxu0 0.0
  %359 = vmatpush2.msra.mxu0 0.0
  %360 = vmatprep.subr.mxu0 0.0
  %361 = vmatpush2.msra.mxu0 0.0
  %362 = vmatprep.subr.mxu0 0.0
  %363 = vmatpush2.msra.mxu0 0.0
  %364 = vmatprep.subr.mxu0 0.0
  %365 = vmatpush2.msra.mxu0 0.0
  %366 = vmatprep.mubr.f32.mxu0 0.0
  %367 = vmatmul.mubr.f32.gmra.mxu0 %v300
  %v368 = vpop.f32.mrf.mxu0
  %v369 = vadd.f32 0.0, %v368
  %v370 = vpop.f32.mrf.mxu0
  %371 = vdwg.mxu0
  %v372 = vld [vmem:[%s4] sm:$0xf]
  %s373 = scalar_lea.vmem %s7, 64
  %v374 = vld [vmem:[%s373] sm:$0xff]
  %v375 = vld [vmem:[%s373 + $0x8] sm:$0xff]
  %v376 = vld [vmem:[%s373 + $0x10] sm:$0xff]
  %v377 = vld [vmem:[%s373 + $0x18] sm:$0xff]
  %v378 = vld [vmem:[%s373 + $0x20] sm:$0xff]
  %v379 = vld [vmem:[%s373 + $0x28] sm:$0xff]
  %v380 = vld [vmem:[%s373 + $0x30] sm:$0xff]
  %v381 = vld [vmem:[%s373 + $0x38] sm:$0xff]
  %382 = vmatprep.subr.mxu0 0.0
  %383 = vmatpush1.msra.mxu0 0.0
  %384 = vmatprep.subr.mxu0 0.0
  %385 = vmatpush1.msra.mxu0 0.0
  %386 = vmatprep.subr.mxu0 0.0
  %387 = vmatpush1.msra.mxu0 0.0
  %388 = vmatprep.subr.mxu0 0.0
  %389 = vmatpush1.msra.mxu0 0.0
  %390 = vmatprep.subr.mxu0 0.0
  %391 = vmatpush1.msra.mxu0 0.0
  %392 = vmatprep.subr.mxu0 0.0
  %393 = vmatpush1.msra.mxu0 0.0
  %394 = vmatprep.subr.mxu0 0.0
  %395 = vmatpush1.msra.mxu0 0.0
  %396 = vmatprep.subr.mxu0 0.0
  %397 = vmatpush1.msra.mxu0 0.0
  %398 = vmatprep.subr.mxu0 0.0
  %399 = vmatpush1.msra.mxu0 %v381
  %400 = vmatprep.subr.mxu0 0.0
  %401 = vmatpush1.msra.mxu0 %v380
  %402 = vmatprep.subr.mxu0 0.0
  %403 = vmatpush1.msra.mxu0 %v379
  %404 = vmatprep.subr.mxu0 0.0
  %405 = vmatpush1.msra.mxu0 %v378
  %406 = vmatprep.subr.mxu0 0.0
  %407 = vmatpush1.msra.mxu0 %v377
  %408 = vmatprep.subr.mxu0 0.0
  %409 = vmatpush1.msra.mxu0 %v376
  %410 = vmatprep.subr.mxu0 0.0
  %411 = vmatpush1.msra.mxu0 %v375
  %412 = vmatprep.subr.mxu0 0.0
  %413 = vmatpush1.msra.mxu0 %v374
  %414 = vmatprep.subr.mxu0 0.0
  %415 = vmatpush2.msra.mxu0 0.0
  %416 = vmatprep.subr.mxu0 0.0
  %417 = vmatpush2.msra.mxu0 0.0
  %418 = vmatprep.subr.mxu0 0.0
  %419 = vmatpush2.msra.mxu0 0.0
  %420 = vmatprep.subr.mxu0 0.0
  %421 = vmatpush2.msra.mxu0 0.0
  %422 = vmatprep.subr.mxu0 0.0
  %423 = vmatpush2.msra.mxu0 0.0
  %424 = vmatprep.subr.mxu0 0.0
  %425 = vmatpush2.msra.mxu0 0.0
  %426 = vmatprep.subr.mxu0 0.0
  %427 = vmatpush2.msra.mxu0 0.0
  %428 = vmatprep.subr.mxu0 0.0
  %429 = vmatpush2.msra.mxu0 0.0
  %430 = vmatprep.subr.mxu0 0.0
  %431 = vmatpush2.msra.mxu0 0.0
  %432 = vmatprep.subr.mxu0 0.0
  %433 = vmatpush2.msra.mxu0 0.0
  %434 = vmatprep.subr.mxu0 0.0
  %435 = vmatpush2.msra.mxu0 0.0
  %436 = vmatprep.subr.mxu0 0.0
  %437 = vmatpush2.msra.mxu0 0.0
  %438 = vmatprep.subr.mxu0 0.0
  %439 = vmatpush2.msra.mxu0 0.0
  %440 = vmatprep.subr.mxu0 0.0
  %441 = vmatpush2.msra.mxu0 0.0
  %442 = vmatprep.subr.mxu0 0.0
  %443 = vmatpush2.msra.mxu0 0.0
  %444 = vmatprep.subr.mxu0 0.0
  %445 = vmatpush2.msra.mxu0 0.0
  %446 = vmatprep.mubr.f32.mxu0 0.0
  %447 = vmatmul.mubr.f32.gmra.mxu0 %v300
  %v448 = vpop.f32.mrf.mxu0
  %v449 = vadd.f32 0.0, %v448
  %v450 = vpop.f32.mrf.mxu0
  %451 = vdwg.mxu0
  %vm452 = vcmask 31744
  %v454 = vsel %vm452, %v372, 0
  %vm456 = vcmask 1043456
  %v458 = vsel %vm456, %v369, 0
  %460 = vmatprep.subr.mxu0 0.0
  %461 = vmatpush1.msra.mxu0 0.0
  %462 = vmatprep.subr.mxu0 0.0
  %463 = vmatpush1.msra.mxu0 0.0
  %464 = vmatprep.subr.mxu0 0.0
  %465 = vmatpush1.msra.mxu0 0.0
  %466 = vmatprep.subr.mxu0 0.0
  %467 = vmatpush1.msra.mxu0 0.0
  %468 = vmatprep.subr.mxu0 0.0
  %469 = vmatpush1.msra.mxu0 0.0
  %470 = vmatprep.subr.mxu0 0.0
  %471 = vmatpush1.msra.mxu0 0.0
  %472 = vmatprep.subr.mxu0 0.0
  %473 = vmatpush1.msra.mxu0 0.0
  %474 = vmatprep.subr.mxu0 0.0
  %475 = vmatpush1.msra.mxu0 0.0
  %476 = vmatprep.subr.mxu0 0.0
  %477 = vmatpush1.msra.mxu0 0.0
  %478 = vmatprep.subr.mxu0 0.0
  %479 = vmatpush1.msra.mxu0 0.0
  %480 = vmatprep.subr.mxu0 0.0
  %481 = vmatpush1.msra.mxu0 0.0
  %482 = vmatprep.subr.mxu0 0.0
  %483 = vmatpush1.msra.mxu0 0.0
  %484 = vmatprep.subr.mxu0 0.0
  %485 = vmatpush1.msra.mxu0 0.0
  %486 = vmatprep.subr.mxu0 0.0
  %487 = vmatpush1.msra.mxu0 0.0
  %488 = vmatprep.subr.mxu0 0.0
  %489 = vmatpush1.msra.mxu0 0.0
  %490 = vmatprep.subr.mxu0 0.0
  %491 = vmatpush1.msra.mxu0 %v458
  %492 = vmatprep.subr.mxu0 0.0
  %493 = vmatpush2.msra.mxu0 0.0
  %494 = vmatprep.subr.mxu0 0.0
  %495 = vmatpush2.msra.mxu0 0.0
  %496 = vmatprep.subr.mxu0 0.0
  %497 = vmatpush2.msra.mxu0 0.0
  %498 = vmatprep.subr.mxu0 0.0
  %499 = vmatpush2.msra.mxu0 0.0
  %500 = vmatprep.subr.mxu0 0.0
  %501 = vmatpush2.msra.mxu0 0.0
  %502 = vmatprep.subr.mxu0 0.0
  %503 = vmatpush2.msra.mxu0 0.0
  %504 = vmatprep.subr.mxu0 0.0
  %505 = vmatpush2.msra.mxu0 0.0
  %506 = vmatprep.subr.mxu0 0.0
  %507 = vmatpush2.msra.mxu0 0.0
  %508 = vmatprep.subr.mxu0 0.0
  %509 = vmatpush2.msra.mxu0 0.0
  %510 = vmatprep.subr.mxu0 0.0
  %511 = vmatpush2.msra.mxu0 0.0
  %512 = vmatprep.subr.mxu0 0.0
  %513 = vmatpush2.msra.mxu0 0.0
  %514 = vmatprep.subr.mxu0 0.0
  %515 = vmatpush2.msra.mxu0 0.0
  %516 = vmatprep.subr.mxu0 0.0
  %517 = vmatpush2.msra.mxu0 0.0
  %518 = vmatprep.subr.mxu0 0.0
  %519 = vmatpush2.msra.mxu0 0.0
  %520 = vmatprep.subr.mxu0 0.0
  %521 = vmatpush2.msra.mxu0 0.0
  %522 = vmatprep.subr.mxu0 0.0
  %523 = vmatpush2.msra.mxu0 0.0
  %524 = vmatprep.mubr.f32.mxu0 0.0
  %525 = vmatmul.mubr.f32.gmra.mxu0 %v454
  %v526 = vpop.f32.mrf.mxu0
  %v527 = vadd.f32 %v449, %v526
  %v528 = vpop.f32.mrf.mxu0
  %529 = vdwg.mxu0
  %s530 = scalar_lea.vmem %s7, 128
  %v531 = vld [vmem:[%s530] sm:$0xff]
  %v532 = vld [vmem:[%s530 + $0x8] sm:$0xff]
  %v533 = vld [vmem:[%s530 + $0x10] sm:$0xff]
  %v534 = vld [vmem:[%s530 + $0x18] sm:$0xff]
  %v535 = vld [vmem:[%s530 + $0x20] sm:$0xff]
  %v536 = vld [vmem:[%s530 + $0x28] sm:$0xff]
  %v537 = vld [vmem:[%s530 + $0x30] sm:$0xff]
  %v538 = vld [vmem:[%s530 + $0x38] sm:$0xff]
  %539 = vmatprep.subr.mxu0 0.0
  %540 = vmatpush1.msra.mxu0 0.0
  %541 = vmatprep.subr.mxu0 0.0
  %542 = vmatpush1.msra.mxu0 0.0
  %543 = vmatprep.subr.mxu0 0.0
  %544 = vmatpush1.msra.mxu0 0.0
  %545 = vmatprep.subr.mxu0 0.0
  %546 = vmatpush1.msra.mxu0 0.0
  %547 = vmatprep.subr.mxu0 0.0
  %548 = vmatpush1.msra.mxu0 0.0
  %549 = vmatprep.subr.mxu0 0.0
  %550 = vmatpush1.msra.mxu0 0.0
  %551 = vmatprep.subr.mxu0 0.0
  %552 = vmatpush1.msra.mxu0 0.0
  %553 = vmatprep.subr.mxu0 0.0
  %554 = vmatpush1.msra.mxu0 0.0
  %555 = vmatprep.subr.mxu0 0.0
  %556 = vmatpush1.msra.mxu0 %v538
  %557 = vmatprep.subr.mxu0 0.0
  %558 = vmatpush1.msra.mxu0 %v537
  %559 = vmatprep.subr.mxu0 0.0
  %560 = vmatpush1.msra.mxu0 %v536
  %561 = vmatprep.subr.mxu0 0.0
  %562 = vmatpush1.msra.mxu0 %v535
  %563 = vmatprep.subr.mxu0 0.0
  %564 = vmatpush1.msra.mxu0 %v534
  %565 = vmatprep.subr.mxu0 0.0
  %566 = vmatpush1.msra.mxu0 %v533
  %567 = vmatprep.subr.mxu0 0.0
  %568 = vmatpush1.msra.mxu0 %v532
  %569 = vmatprep.subr.mxu0 0.0
  %570 = vmatpush1.msra.mxu0 %v531
  %571 = vmatprep.subr.mxu0 0.0
  %572 = vmatpush2.msra.mxu0 0.0
  %573 = vmatprep.subr.mxu0 0.0
  %574 = vmatpush2.msra.mxu0 0.0
  %575 = vmatprep.subr.mxu0 0.0
  %576 = vmatpush2.msra.mxu0 0.0
  %577 = vmatprep.subr.mxu0 0.0
  %578 = vmatpush2.msra.mxu0 0.0
  %579 = vmatprep.subr.mxu0 0.0
  %580 = vmatpush2.msra.mxu0 0.0
  %581 = vmatprep.subr.mxu0 0.0
  %582 = vmatpush2.msra.mxu0 0.0
  %583 = vmatprep.subr.mxu0 0.0
  %584 = vmatpush2.msra.mxu0 0.0
  %585 = vmatprep.subr.mxu0 0.0
  %586 = vmatpush2.msra.mxu0 0.0
  %587 = vmatprep.subr.mxu0 0.0
  %588 = vmatpush2.msra.mxu0 0.0
  %589 = vmatprep.subr.mxu0 0.0
  %590 = vmatpush2.msra.mxu0 0.0
  %591 = vmatprep.subr.mxu0 0.0
  %592 = vmatpush2.msra.mxu0 0.0
  %593 = vmatprep.subr.mxu0 0.0
  %594 = vmatpush2.msra.mxu0 0.0
  %595 = vmatprep.subr.mxu0 0.0
  %596 = vmatpush2.msra.mxu0 0.0
  %597 = vmatprep.subr.mxu0 0.0
  %598 = vmatpush2.msra.mxu0 0.0
  %599 = vmatprep.subr.mxu0 0.0
  %600 = vmatpush2.msra.mxu0 0.0
  %601 = vmatprep.subr.mxu0 0.0
  %602 = vmatpush2.msra.mxu0 0.0
  %603 = vmatprep.mubr.f32.mxu0 0.0
  %604 = vmatmul.mubr.f32.gmra.mxu0 %v300
  %v605 = vpop.f32.mrf.mxu0
  %v606 = vadd.f32 0.0, %v605
  %v607 = vpop.f32.mrf.mxu0
  %608 = vdwg.mxu0
  %s609 = scalar_lea.vmem %s4, 8
  %v610 = vld [vmem:[%s609] sm:$0xf]
  %v612 = vsel %vm452, %v610, 0
  %v615 = vsel %vm456, %v606, 0
  %617 = vmatprep.subr.mxu0 0.0
  %618 = vmatpush1.msra.mxu0 0.0
  %619 = vmatprep.subr.mxu0 0.0
  %620 = vmatpush1.msra.mxu0 0.0
  %621 = vmatprep.subr.mxu0 0.0
  %622 = vmatpush1.msra.mxu0 0.0
  %623 = vmatprep.subr.mxu0 0.0
  %624 = vmatpush1.msra.mxu0 0.0
  %625 = vmatprep.subr.mxu0 0.0
  %626 = vmatpush1.msra.mxu0 0.0
  %627 = vmatprep.subr.mxu0 0.0
  %628 = vmatpush1.msra.mxu0 0.0
  %629 = vmatprep.subr.mxu0 0.0
  %630 = vmatpush1.msra.mxu0 0.0
  %631 = vmatprep.subr.mxu0 0.0
  %632 = vmatpush1.msra.mxu0 0.0
  %633 = vmatprep.subr.mxu0 0.0
  %634 = vmatpush1.msra.mxu0 0.0
  %635 = vmatprep.subr.mxu0 0.0
  %636 = vmatpush1.msra.mxu0 0.0
  %637 = vmatprep.subr.mxu0 0.0
  %638 = vmatpush1.msra.mxu0 0.0
  %639 = vmatprep.subr.mxu0 0.0
  %640 = vmatpush1.msra.mxu0 0.0
  %641 = vmatprep.subr.mxu0 0.0
  %642 = vmatpush1.msra.mxu0 0.0
  %643 = vmatprep.subr.mxu0 0.0
  %644 = vmatpush1.msra.mxu0 0.0
  %645 = vmatprep.subr.mxu0 0.0
  %646 = vmatpush1.msra.mxu0 0.0
  %647 = vmatprep.subr.mxu0 0.0
  %648 = vmatpush1.msra.mxu0 %v615
  %649 = vmatprep.subr.mxu0 0.0
  %650 = vmatpush2.msra.mxu0 0.0
  %651 = vmatprep.subr.mxu0 0.0
  %652 = vmatpush2.msra.mxu0 0.0
  %653 = vmatprep.subr.mxu0 0.0
  %654 = vmatpush2.msra.mxu0 0.0
  %655 = vmatprep.subr.mxu0 0.0
  %656 = vmatpush2.msra.mxu0 0.0
  %657 = vmatprep.subr.mxu0 0.0
  %658 = vmatpush2.msra.mxu0 0.0
  %659 = vmatprep.subr.mxu0 0.0
  %660 = vmatpush2.msra.mxu0 0.0
  %661 = vmatprep.subr.mxu0 0.0
  %662 = vmatpush2.msra.mxu0 0.0
  %663 = vmatprep.subr.mxu0 0.0
  %664 = vmatpush2.msra.mxu0 0.0
  %665 = vmatprep.subr.mxu0 0.0
  %666 = vmatpush2.msra.mxu0 0.0
  %667 = vmatprep.subr.mxu0 0.0
  %668 = vmatpush2.msra.mxu0 0.0
  %669 = vmatprep.subr.mxu0 0.0
  %670 = vmatpush2.msra.mxu0 0.0
  %671 = vmatprep.subr.mxu0 0.0
  %672 = vmatpush2.msra.mxu0 0.0
  %673 = vmatprep.subr.mxu0 0.0
  %674 = vmatpush2.msra.mxu0 0.0
  %675 = vmatprep.subr.mxu0 0.0
  %676 = vmatpush2.msra.mxu0 0.0
  %677 = vmatprep.subr.mxu0 0.0
  %678 = vmatpush2.msra.mxu0 0.0
  %679 = vmatprep.subr.mxu0 0.0
  %680 = vmatpush2.msra.mxu0 0.0
  %681 = vmatprep.mubr.f32.mxu0 0.0
  %682 = vmatmul.mubr.f32.gmra.mxu0 %v612
  %v683 = vpop.f32.mrf.mxu0
  %v684 = vadd.f32 0.0, %v683
  %v685 = vpop.f32.mrf.mxu0
  %686 = vdwg.mxu0
  %v687 = vadd.f32 %v527, %v684
  %v688 = vld [vmem:[%s8] sm:$0x1]
  %v690 = vlaneseq
  %v691 = vshrl.u32 %v690, 7
  %v692 = vsub.s32 0, %v691
  %v693 = vrot.slane %v688, %v692
  %v695 = vadd.f32 %v687, %v693
  %v696 = vld [vmem:[%s9] sm:$0xff]
  %v697 = vld [vmem:[%s9 + $0x8] sm:$0xff]
  %v698 = vld [vmem:[%s9 + $0x10] sm:$0xff]
  %v699 = vld [vmem:[%s9 + $0x18] sm:$0xff]
  %v700 = vld [vmem:[%s9 + $0x20] sm:$0xff]
  %v701 = vld [vmem:[%s9 + $0x28] sm:$0xff]
  %v702 = vld [vmem:[%s9 + $0x30] sm:$0xff]
  %v703 = vld [vmem:[%s9 + $0x38] sm:$0xff]
  %v704 = vld [vmem:[%s10] sm:$0x1]
  %v706 = vlaneseq
  %v707 = vshrl.u32 %v706, 7
  %v708 = vsub.s32 0, %v707
  %v709 = vrot.slane %v704, %v708
  %v712 = vsel %vm129, %v695, 0
  %714 = vmatprep.subr.mxu0 0.0
  %715 = vmatpush1.msra.mxu0 0.0
  %716 = vmatprep.subr.mxu0 0.0
  %717 = vmatpush1.msra.mxu0 0.0
  %718 = vmatprep.subr.mxu0 0.0
  %719 = vmatpush1.msra.mxu0 0.0
  %720 = vmatprep.subr.mxu0 0.0
  %721 = vmatpush1.msra.mxu0 0.0
  %722 = vmatprep.subr.mxu0 0.0
  %723 = vmatpush1.msra.mxu0 0.0
  %724 = vmatprep.subr.mxu0 0.0
  %725 = vmatpush1.msra.mxu0 0.0
  %726 = vmatprep.subr.mxu0 0.0
  %727 = vmatpush1.msra.mxu0 0.0
  %728 = vmatprep.subr.mxu0 0.0
  %729 = vmatpush1.msra.mxu0 0.0
  %730 = vmatprep.subr.mxu0 0.0
  %731 = vmatpush1.msra.mxu0 %v703
  %732 = vmatprep.subr.mxu0 0.0
  %733 = vmatpush1.msra.mxu0 %v702
  %734 = vmatprep.subr.mxu0 0.0
  %735 = vmatpush1.msra.mxu0 %v701
  %736 = vmatprep.subr.mxu0 0.0
  %737 = vmatpush1.msra.mxu0 %v700
  %738 = vmatprep.subr.mxu0 0.0
  %739 = vmatpush1.msra.mxu0 %v699
  %740 = vmatprep.subr.mxu0 0.0
  %741 = vmatpush1.msra.mxu0 %v698
  %742 = vmatprep.subr.mxu0 0.0
  %743 = vmatpush1.msra.mxu0 %v697
  %744 = vmatprep.subr.mxu0 0.0
  %745 = vmatpush1.msra.mxu0 %v696
  %746 = vmatprep.subr.mxu0 0.0
  %747 = vmatpush2.msra.mxu0 0.0
  %748 = vmatprep.subr.mxu0 0.0
  %749 = vmatpush2.msra.mxu0 0.0
  %750 = vmatprep.subr.mxu0 0.0
  %751 = vmatpush2.msra.mxu0 0.0
  %752 = vmatprep.subr.mxu0 0.0
  %753 = vmatpush2.msra.mxu0 0.0
  %754 = vmatprep.subr.mxu0 0.0
  %755 = vmatpush2.msra.mxu0 0.0
  %756 = vmatprep.subr.mxu0 0.0
  %757 = vmatpush2.msra.mxu0 0.0
  %758 = vmatprep.subr.mxu0 0.0
  %759 = vmatpush2.msra.mxu0 0.0
  %760 = vmatprep.subr.mxu0 0.0
  %761 = vmatpush2.msra.mxu0 0.0
  %762 = vmatprep.subr.mxu0 0.0
  %763 = vmatpush2.msra.mxu0 0.0
  %764 = vmatprep.subr.mxu0 0.0
  %765 = vmatpush2.msra.mxu0 0.0
  %766 = vmatprep.subr.mxu0 0.0
  %767 = vmatpush2.msra.mxu0 0.0
  %768 = vmatprep.subr.mxu0 0.0
  %769 = vmatpush2.msra.mxu0 0.0
  %770 = vmatprep.subr.mxu0 0.0
  %771 = vmatpush2.msra.mxu0 0.0
  %772 = vmatprep.subr.mxu0 0.0
  %773 = vmatpush2.msra.mxu0 0.0
  %774 = vmatprep.subr.mxu0 0.0
  %775 = vmatpush2.msra.mxu0 0.0
  %776 = vmatprep.subr.mxu0 0.0
  %777 = vmatpush2.msra.mxu0 0.0
  %778 = vmatprep.mubr.f32.mxu0 0.0
  %779 = vmatmul.mubr.f32.gmra.mxu0 %v712
  %v780 = vpop.f32.mrf.mxu0
  %v781 = vadd.f32 %v709, %v780
  %v782 = vpop.f32.mrf.mxu0
  %783 = vdwg.mxu0
  %v784 = vadd.f32 %v200, %v781
  %v785 = vmax.f32 %v784, 0.0
  %s786 = scalar_lea.vmem %s5, 64
  %v787 = vld [vmem:[%s786] sm:$0xff]
  %v788 = vld [vmem:[%s786 + $0x8] sm:$0xff]
  %v789 = vld [vmem:[%s786 + $0x10] sm:$0xff]
  %v790 = vld [vmem:[%s786 + $0x18] sm:$0xff]
  %v791 = vld [vmem:[%s786 + $0x20] sm:$0xff]
  %v792 = vld [vmem:[%s786 + $0x28] sm:$0xff]
  %v793 = vld [vmem:[%s786 + $0x30] sm:$0xff]
  %v794 = vld [vmem:[%s786 + $0x38] sm:$0xff]
  %s795 = scalar_lea.vmem %s6, 1
  %v796 = vld [vmem:[%s795] sm:$0x1]
  %v798 = vlaneseq
  %v799 = vshrl.u32 %v798, 7
  %v800 = vsub.s32 0, %v799
  %v801 = vrot.slane %v796, %v800
  %v804 = vsel %vm129, %v785, 0
  %806 = vmatprep.subr.mxu0 0.0
  %807 = vmatpush1.msra.mxu0 0.0
  %808 = vmatprep.subr.mxu0 0.0
  %809 = vmatpush1.msra.mxu0 0.0
  %810 = vmatprep.subr.mxu0 0.0
  %811 = vmatpush1.msra.mxu0 0.0
  %812 = vmatprep.subr.mxu0 0.0
  %813 = vmatpush1.msra.mxu0 0.0
  %814 = vmatprep.subr.mxu0 0.0
  %815 = vmatpush1.msra.mxu0 0.0
  %816 = vmatprep.subr.mxu0 0.0
  %817 = vmatpush1.msra.mxu0 0.0
  %818 = vmatprep.subr.mxu0 0.0
  %819 = vmatpush1.msra.mxu0 0.0
  %820 = vmatprep.subr.mxu0 0.0
  %821 = vmatpush1.msra.mxu0 0.0
  %822 = vmatprep.subr.mxu0 0.0
  %823 = vmatpush1.msra.mxu0 %v794
  %824 = vmatprep.subr.mxu0 0.0
  %825 = vmatpush1.msra.mxu0 %v793
  %826 = vmatprep.subr.mxu0 0.0
  %827 = vmatpush1.msra.mxu0 %v792
  %828 = vmatprep.subr.mxu0 0.0
  %829 = vmatpush1.msra.mxu0 %v791
  %830 = vmatprep.subr.mxu0 0.0
  %831 = vmatpush1.msra.mxu0 %v790
  %832 = vmatprep.subr.mxu0 0.0
  %833 = vmatpush1.msra.mxu0 %v789
  %834 = vmatprep.subr.mxu0 0.0
  %835 = vmatpush1.msra.mxu0 %v788
  %836 = vmatprep.subr.mxu0 0.0
  %837 = vmatpush1.msra.mxu0 %v787
  %838 = vmatprep.subr.mxu0 0.0
  %839 = vmatpush2.msra.mxu0 0.0
  %840 = vmatprep.subr.mxu0 0.0
  %841 = vmatpush2.msra.mxu0 0.0
  %842 = vmatprep.subr.mxu0 0.0
  %843 = vmatpush2.msra.mxu0 0.0
  %844 = vmatprep.subr.mxu0 0.0
  %845 = vmatpush2.msra.mxu0 0.0
  %846 = vmatprep.subr.mxu0 0.0
  %847 = vmatpush2.msra.mxu0 0.0
  %848 = vmatprep.subr.mxu0 0.0
  %849 = vmatpush2.msra.mxu0 0.0
  %850 = vmatprep.subr.mxu0 0.0
  %851 = vmatpush2.msra.mxu0 0.0
  %852 = vmatprep.subr.mxu0 0.0
  %853 = vmatpush2.msra.mxu0 0.0
  %854 = vmatprep.subr.mxu0 0.0
  %855 = vmatpush2.msra.mxu0 0.0
  %856 = vmatprep.subr.mxu0 0.0
  %857 = vmatpush2.msra.mxu0 0.0
  %858 = vmatprep.subr.mxu0 0.0
  %859 = vmatpush2.msra.mxu0 0.0
  %860 = vmatprep.subr.mxu0 0.0
  %861 = vmatpush2.msra.mxu0 0.0
  %862 = vmatprep.subr.mxu0 0.0
  %863 = vmatpush2.msra.mxu0 0.0
  %864 = vmatprep.subr.mxu0 0.0
  %865 = vmatpush2.msra.mxu0 0.0
  %866 = vmatprep.subr.mxu0 0.0
  %867 = vmatpush2.msra.mxu0 0.0
  %868 = vmatprep.subr.mxu0 0.0
  %869 = vmatpush2.msra.mxu0 0.0
  %870 = vmatprep.mubr.f32.mxu0 0.0
  %871 = vmatmul.mubr.f32.gmra.mxu0 %v804
  %v872 = vpop.f32.mrf.mxu0
  %v873 = vadd.f32 %v801, %v872
  %v874 = vpop.f32.mrf.mxu0
  %875 = vdwg.mxu0
  %s876 = scalar_lea.vmem %s7, 192
  %v877 = vld [vmem:[%s876] sm:$0xff]
  %v878 = vld [vmem:[%s876 + $0x8] sm:$0xff]
  %v879 = vld [vmem:[%s876 + $0x10] sm:$0xff]
  %v880 = vld [vmem:[%s876 + $0x18] sm:$0xff]
  %v881 = vld [vmem:[%s876 + $0x20] sm:$0xff]
  %v882 = vld [vmem:[%s876 + $0x28] sm:$0xff]
  %v883 = vld [vmem:[%s876 + $0x30] sm:$0xff]
  %v884 = vld [vmem:[%s876 + $0x38] sm:$0xff]
  %v886 = vsel %vm129, %v873, 0
  %888 = vmatprep.subr.mxu0 0.0
  %889 = vmatpush1.msra.mxu0 0.0
  %890 = vmatprep.subr.mxu0 0.0
  %891 = vmatpush1.msra.mxu0 0.0
  %892 = vmatprep.subr.mxu0 0.0
  %893 = vmatpush1.msra.mxu0 0.0
  %894 = vmatprep.subr.mxu0 0.0
  %895 = vmatpush1.msra.mxu0 0.0
  %896 = vmatprep.subr.mxu0 0.0
  %897 = vmatpush1.msra.mxu0 0.0
  %898 = vmatprep.subr.mxu0 0.0
  %899 = vmatpush1.msra.mxu0 0.0
  %900 = vmatprep.subr.mxu0 0.0
  %901 = vmatpush1.msra.mxu0 0.0
  %902 = vmatprep.subr.mxu0 0.0
  %903 = vmatpush1.msra.mxu0 0.0
  %904 = vmatprep.subr.mxu0 0.0
  %905 = vmatpush1.msra.mxu0 %v884
  %906 = vmatprep.subr.mxu0 0.0
  %907 = vmatpush1.msra.mxu0 %v883
  %908 = vmatprep.subr.mxu0 0.0
  %909 = vmatpush1.msra.mxu0 %v882
  %910 = vmatprep.subr.mxu0 0.0
  %911 = vmatpush1.msra.mxu0 %v881
  %912 = vmatprep.subr.mxu0 0.0
  %913 = vmatpush1.msra.mxu0 %v880
  %914 = vmatprep.subr.mxu0 0.0
  %915 = vmatpush1.msra.mxu0 %v879
  %916 = vmatprep.subr.mxu0 0.0
  %917 = vmatpush1.msra.mxu0 %v878
  %918 = vmatprep.subr.mxu0 0.0
  %919 = vmatpush1.msra.mxu0 %v877
  %920 = vmatprep.subr.mxu0 0.0
  %921 = vmatpush2.msra.mxu0 0.0
  %922 = vmatprep.subr.mxu0 0.0
  %923 = vmatpush2.msra.mxu0 0.0
  %924 = vmatprep.subr.mxu0 0.0
  %925 = vmatpush2.msra.mxu0 0.0
  %926 = vmatprep.subr.mxu0 0.0
  %927 = vmatpush2.msra.mxu0 0.0
  %928 = vmatprep.subr.mxu0 0.0
  %929 = vmatpush2.msra.mxu0 0.0
  %930 = vmatprep.subr.mxu0 0.0
  %931 = vmatpush2.msra.mxu0 0.0
  %932 = vmatprep.subr.mxu0 0.0
  %933 = vmatpush2.msra.mxu0 0.0
  %934 = vmatprep.subr.mxu0 0.0
  %935 = vmatpush2.msra.mxu0 0.0
  %936 = vmatprep.subr.mxu0 0.0
  %937 = vmatpush2.msra.mxu0 0.0
  %938 = vmatprep.subr.mxu0 0.0
  %939 = vmatpush2.msra.mxu0 0.0
  %940 = vmatprep.subr.mxu0 0.0
  %941 = vmatpush2.msra.mxu0 0.0
  %942 = vmatprep.subr.mxu0 0.0
  %943 = vmatpush2.msra.mxu0 0.0
  %944 = vmatprep.subr.mxu0 0.0
  %945 = vmatpush2.msra.mxu0 0.0
  %946 = vmatprep.subr.mxu0 0.0
  %947 = vmatpush2.msra.mxu0 0.0
  %948 = vmatprep.subr.mxu0 0.0
  %949 = vmatpush2.msra.mxu0 0.0
  %950 = vmatprep.subr.mxu0 0.0
  %951 = vmatpush2.msra.mxu0 0.0
  %952 = vmatprep.mubr.f32.mxu0 0.0
  %953 = vmatmul.mubr.f32.gmra.mxu0 %v886
  %v954 = vpop.f32.mrf.mxu0
  %v955 = vadd.f32 0.0, %v954
  %v956 = vpop.f32.mrf.mxu0
  %957 = vdwg.mxu0
  %s958 = scalar_lea.vmem %s7, 256
  %v959 = vld [vmem:[%s958] sm:$0xff]
  %v960 = vld [vmem:[%s958 + $0x8] sm:$0xff]
  %v961 = vld [vmem:[%s958 + $0x10] sm:$0xff]
  %v962 = vld [vmem:[%s958 + $0x18] sm:$0xff]
  %v963 = vld [vmem:[%s958 + $0x20] sm:$0xff]
  %v964 = vld [vmem:[%s958 + $0x28] sm:$0xff]
  %v965 = vld [vmem:[%s958 + $0x30] sm:$0xff]
  %v966 = vld [vmem:[%s958 + $0x38] sm:$0xff]
  %967 = vmatprep.subr.mxu0 0.0
  %968 = vmatpush1.msra.mxu0 0.0
  %969 = vmatprep.subr.mxu0 0.0
  %970 = vmatpush1.msra.mxu0 0.0
  %971 = vmatprep.subr.mxu0 0.0
  %972 = vmatpush1.msra.mxu0 0.0
  %973 = vmatprep.subr.mxu0 0.0
  %974 = vmatpush1.msra.mxu0 0.0
  %975 = vmatprep.subr.mxu0 0.0
  %976 = vmatpush1.msra.mxu0 0.0
  %977 = vmatprep.subr.mxu0 0.0
  %978 = vmatpush1.msra.mxu0 0.0
  %979 = vmatprep.subr.mxu0 0.0
  %980 = vmatpush1.msra.mxu0 0.0
  %981 = vmatprep.subr.mxu0 0.0
  %982 = vmatpush1.msra.mxu0 0.0
  %983 = vmatprep.subr.mxu0 0.0
  %984 = vmatpush1.msra.mxu0 %v966
  %985 = vmatprep.subr.mxu0 0.0
  %986 = vmatpush1.msra.mxu0 %v965
  %987 = vmatprep.subr.mxu0 0.0
  %988 = vmatpush1.msra.mxu0 %v964
  %989 = vmatprep.subr.mxu0 0.0
  %990 = vmatpush1.msra.mxu0 %v963
  %991 = vmatprep.subr.mxu0 0.0
  %992 = vmatpush1.msra.mxu0 %v962
  %993 = vmatprep.subr.mxu0 0.0
  %994 = vmatpush1.msra.mxu0 %v961
  %995 = vmatprep.subr.mxu0 0.0
  %996 = vmatpush1.msra.mxu0 %v960
  %997 = vmatprep.subr.mxu0 0.0
  %998 = vmatpush1.msra.mxu0 %v959
  %999 = vmatprep.subr.mxu0 0.0
  %1000 = vmatpush2.msra.mxu0 0.0
  %1001 = vmatprep.subr.mxu0 0.0
  %1002 = vmatpush2.msra.mxu0 0.0
  %1003 = vmatprep.subr.mxu0 0.0
  %1004 = vmatpush2.msra.mxu0 0.0
  %1005 = vmatprep.subr.mxu0 0.0
  %1006 = vmatpush2.msra.mxu0 0.0
  %1007 = vmatprep.subr.mxu0 0.0
  %1008 = vmatpush2.msra.mxu0 0.0
  %1009 = vmatprep.subr.mxu0 0.0
  %1010 = vmatpush2.msra.mxu0 0.0
  %1011 = vmatprep.subr.mxu0 0.0
  %1012 = vmatpush2.msra.mxu0 0.0
  %1013 = vmatprep.subr.mxu0 0.0
  %1014 = vmatpush2.msra.mxu0 0.0
  %1015 = vmatprep.subr.mxu0 0.0
  %1016 = vmatpush2.msra.mxu0 0.0
  %1017 = vmatprep.subr.mxu0 0.0
  %1018 = vmatpush2.msra.mxu0 0.0
  %1019 = vmatprep.subr.mxu0 0.0
  %1020 = vmatpush2.msra.mxu0 0.0
  %1021 = vmatprep.subr.mxu0 0.0
  %1022 = vmatpush2.msra.mxu0 0.0
  %1023 = vmatprep.subr.mxu0 0.0
  %1024 = vmatpush2.msra.mxu0 0.0
  %1025 = vmatprep.subr.mxu0 0.0
  %1026 = vmatpush2.msra.mxu0 0.0
  %1027 = vmatprep.subr.mxu0 0.0
  %1028 = vmatpush2.msra.mxu0 0.0
  %1029 = vmatprep.subr.mxu0 0.0
  %1030 = vmatpush2.msra.mxu0 0.0
  %1031 = vmatprep.mubr.f32.mxu0 0.0
  %1032 = vmatmul.mubr.f32.gmra.mxu0 %v886
  %v1033 = vpop.f32.mrf.mxu0
  %v1034 = vadd.f32 0.0, %v1033
  %v1035 = vpop.f32.mrf.mxu0
  %1036 = vdwg.mxu0
  %v1038 = vsel %vm456, %v955, 0
  %1040 = vmatprep.subr.mxu0 0.0
  %1041 = vmatpush1.msra.mxu0 0.0
  %1042 = vmatprep.subr.mxu0 0.0
  %1043 = vmatpush1.msra.mxu0 0.0
  %1044 = vmatprep.subr.mxu0 0.0
  %1045 = vmatpush1.msra.mxu0 0.0
  %1046 = vmatprep.subr.mxu0 0.0
  %1047 = vmatpush1.msra.mxu0 0.0
  %1048 = vmatprep.subr.mxu0 0.0
  %1049 = vmatpush1.msra.mxu0 0.0
  %1050 = vmatprep.subr.mxu0 0.0
  %1051 = vmatpush1.msra.mxu0 0.0
  %1052 = vmatprep.subr.mxu0 0.0
  %1053 = vmatpush1.msra.mxu0 0.0
  %1054 = vmatprep.subr.mxu0 0.0
  %1055 = vmatpush1.msra.mxu0 0.0
  %1056 = vmatprep.subr.mxu0 0.0
  %1057 = vmatpush1.msra.mxu0 0.0
  %1058 = vmatprep.subr.mxu0 0.0
  %1059 = vmatpush1.msra.mxu0 0.0
  %1060 = vmatprep.subr.mxu0 0.0
  %1061 = vmatpush1.msra.mxu0 0.0
  %1062 = vmatprep.subr.mxu0 0.0
  %1063 = vmatpush1.msra.mxu0 0.0
  %1064 = vmatprep.subr.mxu0 0.0
  %1065 = vmatpush1.msra.mxu0 0.0
  %1066 = vmatprep.subr.mxu0 0.0
  %1067 = vmatpush1.msra.mxu0 0.0
  %1068 = vmatprep.subr.mxu0 0.0
  %1069 = vmatpush1.msra.mxu0 0.0
  %1070 = vmatprep.subr.mxu0 0.0
  %1071 = vmatpush1.msra.mxu0 %v1038
  %1072 = vmatprep.subr.mxu0 0.0
  %1073 = vmatpush2.msra.mxu0 0.0
  %1074 = vmatprep.subr.mxu0 0.0
  %1075 = vmatpush2.msra.mxu0 0.0
  %1076 = vmatprep.subr.mxu0 0.0
  %1077 = vmatpush2.msra.mxu0 0.0
  %1078 = vmatprep.subr.mxu0 0.0
  %1079 = vmatpush2.msra.mxu0 0.0
  %1080 = vmatprep.subr.mxu0 0.0
  %1081 = vmatpush2.msra.mxu0 0.0
  %1082 = vmatprep.subr.mxu0 0.0
  %1083 = vmatpush2.msra.mxu0 0.0
  %1084 = vmatprep.subr.mxu0 0.0
  %1085 = vmatpush2.msra.mxu0 0.0
  %1086 = vmatprep.subr.mxu0 0.0
  %1087 = vmatpush2.msra.mxu0 0.0
  %1088 = vmatprep.subr.mxu0 0.0
  %1089 = vmatpush2.msra.mxu0 0.0
  %1090 = vmatprep.subr.mxu0 0.0
  %1091 = vmatpush2.msra.mxu0 0.0
  %1092 = vmatprep.subr.mxu0 0.0
  %1093 = vmatpush2.msra.mxu0 0.0
  %1094 = vmatprep.subr.mxu0 0.0
  %1095 = vmatpush2.msra.mxu0 0.0
  %1096 = vmatprep.subr.mxu0 0.0
  %1097 = vmatpush2.msra.mxu0 0.0
  %1098 = vmatprep.subr.mxu0 0.0
  %1099 = vmatpush2.msra.mxu0 0.0
  %1100 = vmatprep.subr.mxu0 0.0
  %1101 = vmatpush2.msra.mxu0 0.0
  %1102 = vmatprep.subr.mxu0 0.0
  %1103 = vmatpush2.msra.mxu0 0.0
  %1104 = vmatprep.mubr.f32.mxu0 0.0
  %1105 = vmatmul.mubr.f32.gmra.mxu0 %v454
  %v1106 = vpop.f32.mrf.mxu0
  %v1107 = vadd.f32 %v1034, %v1106
  %v1108 = vpop.f32.mrf.mxu0
  %1109 = vdwg.mxu0
  %s1110 = scalar_lea.vmem %s7, 320
  %v1111 = vld [vmem:[%s1110] sm:$0xff]
  %v1112 = vld [vmem:[%s1110 + $0x8] sm:$0xff]
  %v1113 = vld [vmem:[%s1110 + $0x10] sm:$0xff]
  %v1114 = vld [vmem:[%s1110 + $0x18] sm:$0xff]
  %v1115 = vld [vmem:[%s1110 + $0x20] sm:$0xff]
  %v1116 = vld [vmem:[%s1110 + $0x28] sm:$0xff]
  %v1117 = vld [vmem:[%s1110 + $0x30] sm:$0xff]
  %v1118 = vld [vmem:[%s1110 + $0x38] sm:$0xff]
  %1119 = vmatprep.subr.mxu0 0.0
  %1120 = vmatpush1.msra.mxu0 0.0
  %1121 = vmatprep.subr.mxu0 0.0
  %1122 = vmatpush1.msra.mxu0 0.0
  %1123 = vmatprep.subr.mxu0 0.0
  %1124 = vmatpush1.msra.mxu0 0.0
  %1125 = vmatprep.subr.mxu0 0.0
  %1126 = vmatpush1.msra.mxu0 0.0
  %1127 = vmatprep.subr.mxu0 0.0
  %1128 = vmatpush1.msra.mxu0 0.0
  %1129 = vmatprep.subr.mxu0 0.0
  %1130 = vmatpush1.msra.mxu0 0.0
  %1131 = vmatprep.subr.mxu0 0.0
  %1132 = vmatpush1.msra.mxu0 0.0
  %1133 = vmatprep.subr.mxu0 0.0
  %1134 = vmatpush1.msra.mxu0 0.0
  %1135 = vmatprep.subr.mxu0 0.0
  %1136 = vmatpush1.msra.mxu0 %v1118
  %1137 = vmatprep.subr.mxu0 0.0
  %1138 = vmatpush1.msra.mxu0 %v1117
  %1139 = vmatprep.subr.mxu0 0.0
  %1140 = vmatpush1.msra.mxu0 %v1116
  %1141 = vmatprep.subr.mxu0 0.0
  %1142 = vmatpush1.msra.mxu0 %v1115
  %1143 = vmatprep.subr.mxu0 0.0
  %1144 = vmatpush1.msra.mxu0 %v1114
  %1145 = vmatprep.subr.mxu0 0.0
  %1146 = vmatpush1.msra.mxu0 %v1113
  %1147 = vmatprep.subr.mxu0 0.0
  %1148 = vmatpush1.msra.mxu0 %v1112
  %1149 = vmatprep.subr.mxu0 0.0
  %1150 = vmatpush1.msra.mxu0 %v1111
  %1151 = vmatprep.subr.mxu0 0.0
  %1152 = vmatpush2.msra.mxu0 0.0
  %1153 = vmatprep.subr.mxu0 0.0
  %1154 = vmatpush2.msra.mxu0 0.0
  %1155 = vmatprep.subr.mxu0 0.0
  %1156 = vmatpush2.msra.mxu0 0.0
  %1157 = vmatprep.subr.mxu0 0.0
  %1158 = vmatpush2.msra.mxu0 0.0
  %1159 = vmatprep.subr.mxu0 0.0
  %1160 = vmatpush2.msra.mxu0 0.0
  %1161 = vmatprep.subr.mxu0 0.0
  %1162 = vmatpush2.msra.mxu0 0.0
  %1163 = vmatprep.subr.mxu0 0.0
  %1164 = vmatpush2.msra.mxu0 0.0
  %1165 = vmatprep.subr.mxu0 0.0
  %1166 = vmatpush2.msra.mxu0 0.0
  %1167 = vmatprep.subr.mxu0 0.0
  %1168 = vmatpush2.msra.mxu0 0.0
  %1169 = vmatprep.subr.mxu0 0.0
  %1170 = vmatpush2.msra.mxu0 0.0
  %1171 = vmatprep.subr.mxu0 0.0
  %1172 = vmatpush2.msra.mxu0 0.0
  %1173 = vmatprep.subr.mxu0 0.0
  %1174 = vmatpush2.msra.mxu0 0.0
  %1175 = vmatprep.subr.mxu0 0.0
  %1176 = vmatpush2.msra.mxu0 0.0
  %1177 = vmatprep.subr.mxu0 0.0
  %1178 = vmatpush2.msra.mxu0 0.0
  %1179 = vmatprep.subr.mxu0 0.0
  %1180 = vmatpush2.msra.mxu0 0.0
  %1181 = vmatprep.subr.mxu0 0.0
  %1182 = vmatpush2.msra.mxu0 0.0
  %1183 = vmatprep.mubr.f32.mxu0 0.0
  %1184 = vmatmul.mubr.f32.gmra.mxu0 %v886
  %v1185 = vpop.f32.mrf.mxu0
  %v1186 = vadd.f32 0.0, %v1185
  %v1187 = vpop.f32.mrf.mxu0
  %1188 = vdwg.mxu0
  %v1190 = vsel %vm456, %v1186, 0
  %1192 = vmatprep.subr.mxu0 0.0
  %1193 = vmatpush1.msra.mxu0 0.0
  %1194 = vmatprep.subr.mxu0 0.0
  %1195 = vmatpush1.msra.mxu0 0.0
  %1196 = vmatprep.subr.mxu0 0.0
  %1197 = vmatpush1.msra.mxu0 0.0
  %1198 = vmatprep.subr.mxu0 0.0
  %1199 = vmatpush1.msra.mxu0 0.0
  %1200 = vmatprep.subr.mxu0 0.0
  %1201 = vmatpush1.msra.mxu0 0.0
  %1202 = vmatprep.subr.mxu0 0.0
  %1203 = vmatpush1.msra.mxu0 0.0
  %1204 = vmatprep.subr.mxu0 0.0
  %1205 = vmatpush1.msra.mxu0 0.0
  %1206 = vmatprep.subr.mxu0 0.0
  %1207 = vmatpush1.msra.mxu0 0.0
  %1208 = vmatprep.subr.mxu0 0.0
  %1209 = vmatpush1.msra.mxu0 0.0
  %1210 = vmatprep.subr.mxu0 0.0
  %1211 = vmatpush1.msra.mxu0 0.0
  %1212 = vmatprep.subr.mxu0 0.0
  %1213 = vmatpush1.msra.mxu0 0.0
  %1214 = vmatprep.subr.mxu0 0.0
  %1215 = vmatpush1.msra.mxu0 0.0
  %1216 = vmatprep.subr.mxu0 0.0
  %1217 = vmatpush1.msra.mxu0 0.0
  %1218 = vmatprep.subr.mxu0 0.0
  %1219 = vmatpush1.msra.mxu0 0.0
  %1220 = vmatprep.subr.mxu0 0.0
  %1221 = vmatpush1.msra.mxu0 0.0
  %1222 = vmatprep.subr.mxu0 0.0
  %1223 = vmatpush1.msra.mxu0 %v1190
  %1224 = vmatprep.subr.mxu0 0.0
  %1225 = vmatpush2.msra.mxu0 0.0
  %1226 = vmatprep.subr.mxu0 0.0
  %1227 = vmatpush2.msra.mxu0 0.0
  %1228 = vmatprep.subr.mxu0 0.0
  %1229 = vmatpush2.msra.mxu0 0.0
  %1230 = vmatprep.subr.mxu0 0.0
  %1231 = vmatpush2.msra.mxu0 0.0
  %1232 = vmatprep.subr.mxu0 0.0
  %1233 = vmatpush2.msra.mxu0 0.0
  %1234 = vmatprep.subr.mxu0 0.0
  %1235 = vmatpush2.msra.mxu0 0.0
  %1236 = vmatprep.subr.mxu0 0.0
  %1237 = vmatpush2.msra.mxu0 0.0
  %1238 = vmatprep.subr.mxu0 0.0
  %1239 = vmatpush2.msra.mxu0 0.0
  %1240 = vmatprep.subr.mxu0 0.0
  %1241 = vmatpush2.msra.mxu0 0.0
  %1242 = vmatprep.subr.mxu0 0.0
  %1243 = vmatpush2.msra.mxu0 0.0
  %1244 = vmatprep.subr.mxu0 0.0
  %1245 = vmatpush2.msra.mxu0 0.0
  %1246 = vmatprep.subr.mxu0 0.0
  %1247 = vmatpush2.msra.mxu0 0.0
  %1248 = vmatprep.subr.mxu0 0.0
  %1249 = vmatpush2.msra.mxu0 0.0
  %1250 = vmatprep.subr.mxu0 0.0
  %1251 = vmatpush2.msra.mxu0 0.0
  %1252 = vmatprep.subr.mxu0 0.0
  %1253 = vmatpush2.msra.mxu0 0.0
  %1254 = vmatprep.subr.mxu0 0.0
  %1255 = vmatpush2.msra.mxu0 0.0
  %1256 = vmatprep.mubr.f32.mxu0 0.0
  %1257 = vmatmul.mubr.f32.gmra.mxu0 %v612
  %v1258 = vpop.f32.mrf.mxu0
  %v1259 = vadd.f32 0.0, %v1258
  %v1260 = vpop.f32.mrf.mxu0
  %1261 = vdwg.mxu0
  %v1262 = vadd.f32 %v1107, %v1259
  %s1263 = scalar_lea.vmem %s8, 1
  %v1264 = vld [vmem:[%s1263] sm:$0x1]
  %v1266 = vlaneseq
  %v1267 = vshrl.u32 %v1266, 7
  %v1268 = vsub.s32 0, %v1267
  %v1269 = vrot.slane %v1264, %v1268
  %v1271 = vadd.f32 %v1262, %v1269
  %s1272 = scalar_lea.vmem %s9, 64
  %v1273 = vld [vmem:[%s1272] sm:$0xff]
  %v1274 = vld [vmem:[%s1272 + $0x8] sm:$0xff]
  %v1275 = vld [vmem:[%s1272 + $0x10] sm:$0xff]
  %v1276 = vld [vmem:[%s1272 + $0x18] sm:$0xff]
  %v1277 = vld [vmem:[%s1272 + $0x20] sm:$0xff]
  %v1278 = vld [vmem:[%s1272 + $0x28] sm:$0xff]
  %v1279 = vld [vmem:[%s1272 + $0x30] sm:$0xff]
  %v1280 = vld [vmem:[%s1272 + $0x38] sm:$0xff]
  %s1281 = scalar_lea.vmem %s10, 1
  %v1282 = vld [vmem:[%s1281] sm:$0x1]
  %v1284 = vlaneseq
  %v1285 = vshrl.u32 %v1284, 7
  %v1286 = vsub.s32 0, %v1285
  %v1287 = vrot.slane %v1282, %v1286
  %v1290 = vsel %vm129, %v1271, 0
  %1292 = vmatprep.subr.mxu0 0.0
  %1293 = vmatpush1.msra.mxu0 0.0
  %1294 = vmatprep.subr.mxu0 0.0
  %1295 = vmatpush1.msra.mxu0 0.0
  %1296 = vmatprep.subr.mxu0 0.0
  %1297 = vmatpush1.msra.mxu0 0.0
  %1298 = vmatprep.subr.mxu0 0.0
  %1299 = vmatpush1.msra.mxu0 0.0
  %1300 = vmatprep.subr.mxu0 0.0
  %1301 = vmatpush1.msra.mxu0 0.0
  %1302 = vmatprep.subr.mxu0 0.0
  %1303 = vmatpush1.msra.mxu0 0.0
  %1304 = vmatprep.subr.mxu0 0.0
  %1305 = vmatpush1.msra.mxu0 0.0
  %1306 = vmatprep.subr.mxu0 0.0
  %1307 = vmatpush1.msra.mxu0 0.0
  %1308 = vmatprep.subr.mxu0 0.0
  %1309 = vmatpush1.msra.mxu0 %v1280
  %1310 = vmatprep.subr.mxu0 0.0
  %1311 = vmatpush1.msra.mxu0 %v1279
  %1312 = vmatprep.subr.mxu0 0.0
  %1313 = vmatpush1.msra.mxu0 %v1278
  %1314 = vmatprep.subr.mxu0 0.0
  %1315 = vmatpush1.msra.mxu0 %v1277
  %1316 = vmatprep.subr.mxu0 0.0
  %1317 = vmatpush1.msra.mxu0 %v1276
  %1318 = vmatprep.subr.mxu0 0.0
  %1319 = vmatpush1.msra.mxu0 %v1275
  %1320 = vmatprep.subr.mxu0 0.0
  %1321 = vmatpush1.msra.mxu0 %v1274
  %1322 = vmatprep.subr.mxu0 0.0
  %1323 = vmatpush1.msra.mxu0 %v1273
  %1324 = vmatprep.subr.mxu0 0.0
  %1325 = vmatpush2.msra.mxu0 0.0
  %1326 = vmatprep.subr.mxu0 0.0
  %1327 = vmatpush2.msra.mxu0 0.0
  %1328 = vmatprep.subr.mxu0 0.0
  %1329 = vmatpush2.msra.mxu0 0.0
  %1330 = vmatprep.subr.mxu0 0.0
  %1331 = vmatpush2.msra.mxu0 0.0
  %1332 = vmatprep.subr.mxu0 0.0
  %1333 = vmatpush2.msra.mxu0 0.0
  %1334 = vmatprep.subr.mxu0 0.0
  %1335 = vmatpush2.msra.mxu0 0.0
  %1336 = vmatprep.subr.mxu0 0.0
  %1337 = vmatpush2.msra.mxu0 0.0
  %1338 = vmatprep.subr.mxu0 0.0
  %1339 = vmatpush2.msra.mxu0 0.0
  %1340 = vmatprep.subr.mxu0 0.0
  %1341 = vmatpush2.msra.mxu0 0.0
  %1342 = vmatprep.subr.mxu0 0.0
  %1343 = vmatpush2.msra.mxu0 0.0
  %1344 = vmatprep.subr.mxu0 0.0
  %1345 = vmatpush2.msra.mxu0 0.0
  %1346 = vmatprep.subr.mxu0 0.0
  %1347 = vmatpush2.msra.mxu0 0.0
  %1348 = vmatprep.subr.mxu0 0.0
  %1349 = vmatpush2.msra.mxu0 0.0
  %1350 = vmatprep.subr.mxu0 0.0
  %1351 = vmatpush2.msra.mxu0 0.0
  %1352 = vmatprep.subr.mxu0 0.0
  %1353 = vmatpush2.msra.mxu0 0.0
  %1354 = vmatprep.subr.mxu0 0.0
  %1355 = vmatpush2.msra.mxu0 0.0
  %1356 = vmatprep.mubr.f32.mxu0 0.0
  %1357 = vmatmul.mubr.f32.gmra.mxu0 %v1290
  %v1358 = vpop.f32.mrf.mxu0
  %v1359 = vadd.f32 %v1287, %v1358
  %v1360 = vpop.f32.mrf.mxu0
  %1361 = vdwg.mxu0
  %v1362 = vadd.f32 %v785, %v1359
  %v1363 = vmax.f32 %v1362, 0.0
  %vm1364 = vcmask 519168
  %1365 = vst.msk [vmem:[%s11] sm:$0xf] %vm1364, %v1363
  // Predicated region
  $region46: #{downsample_forward.8} parent=0 // pred_check
    _
  $region47: #{downsample_forward.8} parent=0 // pred_check_branch
    %1367 = sbr.rel (0) target = $region49
  $region48: #{downsample_forward.8} parent=0 // pred_region
    _
  $region49: #{downsample_forward.8} parent=0 // pred_fallthru
    _
  // Predicated region
  $region50: #{downsample_forward.8} parent=0 // pred_check
    _
  $region51: #{downsample_forward.8} parent=0 // pred_check_branch
    %1369 = sbr.rel (0) target = $region53
  $region52: #{downsample_forward.8} parent=0 // pred_region
    _
  $region53: #{downsample_forward.8} parent=0 // pred_fallthru
    _

// kernel: downsample_forward.9
$region0: #{downsample_forward.9}
  #allocation0 [shape = 'u32[]', space=smem, size = 0x4, offset = 0x4, fixed_abs, tag = 'smem constant byte address 0x4 - core index']
  #allocation1 [shape = 'u32[144,128]{1,0:T(1,128)}', space=vmem, size = 0x12000, scoped, tag = 'internal scratch']
  %s0 = inlined_call_operand.vmem [shape: f32[4,64], index: 0, kind: input, shape index: {}]
  %s1 = inlined_call_operand.vmem [shape: f32[2,4], index: 1, kind: input, shape index: {}]
  %s2 = inlined_call_operand.vmem [shape: f32[64,32], index: 2, kind: input, shape index: {}]
  %s3 = inlined_call_operand.vmem [shape: f32[1,32], index: 3, kind: input, shape index: {}]
  %s4 = inlined_call_operand.vmem [shape: f32[3,2,2], index: 4, kind: input, shape index: {}]
  %s5 = inlined_call_operand.vmem [shape: f32[2,32,32], index: 5, kind: input, shape index: {}]
  %s6 = inlined_call_operand.vmem [shape: f32[2,1,32], index: 6, kind: input, shape index: {}]
  %s7 = inlined_call_operand.vmem [shape: f32[6,32,32], index: 7, kind: input, shape index: {}]
  %s8 = inlined_call_operand.vmem [shape: f32[2,1,32], index: 8, kind: input, shape index: {}]
  %s9 = inlined_call_operand.vmem [shape: f32[2,32,32], index: 9, kind: input, shape index: {}]
  %s10 = inlined_call_operand.vmem [shape: f32[2,1,32], index: 10, kind: input, shape index: {}]
  %s11 = inlined_call_operand.hbm [shape: f32[2,32], index: 11, kind: output, shape index: {}]
  %s12 = sld [smem:[#allocation0]]
  $region54: #{downsample_forward.9} parent=0
    _
  %s14 = ssub.s32 1, %s12
  %s15 = scalar_select 0, %s14, %s12
  $region1: #{downsample_forward.9} parent=0
    #allocation2 [shape = 'u8[1024]{0}', space=vmem, size = 0x400, scoped, tag = 'output window, operand 0, single buffered']
    #allocation3 [shape = 's32[1]{0}', space=sflag, size = 0x4, scoped, tag = 'scoped memory for downsample_forward.9']
    %16 = vsyncpa [#allocation3], 0
    // Predicated region
    $region2: #{downsample_forward.9} parent=1 // pred_check
      _
    $region3: #{downsample_forward.9} parent=1 // pred_check_branch
      %18 = sbr.rel (0) target = $region5
    $region4: #{downsample_forward.9} parent=1 // pred_region
      _
    $region5: #{downsample_forward.9} parent=1 // pred_fallthru
      _
    // Predicated region
    $region6: #{downsample_forward.9} parent=1 // pred_check
      _
    $region7: #{downsample_forward.9} parent=1 // pred_check_branch
      %20 = sbr.rel (0) target = $region9
    $region8: #{downsample_forward.9} parent=1 // pred_region
      _
    $region9: #{downsample_forward.9} parent=1 // pred_fallthru
      _
    // Predicated region
    $region10: #{downsample_forward.9} parent=1 // pred_check
      _
    $region11: #{downsample_forward.9} parent=1 // pred_check_branch
      %22 = sbr.rel (0) target = $region13
    $region12: #{downsample_forward.9} parent=1 // pred_region
      _
    $region13: #{downsample_forward.9} parent=1 // pred_fallthru
      _
    // Predicated region
    $region14: #{downsample_forward.9} parent=1 // pred_check
      _
    $region15: #{downsample_forward.9} parent=1 // pred_check_branch
      %24 = sbr.rel (0) target = $region17
    $region16: #{downsample_forward.9} parent=1 // pred_region
      _
    $region17: #{downsample_forward.9} parent=1 // pred_fallthru
      _
    // Predicated region
    $region18: #{downsample_forward.9} parent=1 // pred_check
      _
    $region19: #{downsample_forward.9} parent=1 // pred_check_branch
      %26 = sbr.rel (0) target = $region21
    $region20: #{downsample_forward.9} parent=1 // pred_region
      _
    $region21: #{downsample_forward.9} parent=1 // pred_fallthru
      _
    // Predicated region
    $region22: #{downsample_forward.9} parent=1 // pred_check
      _
    $region23: #{downsample_forward.9} parent=1 // pred_check_branch
      %28 = sbr.rel (0) target = $region25
    $region24: #{downsample_forward.9} parent=1 // pred_region
      _
    $region25: #{downsample_forward.9} parent=1 // pred_fallthru
      _
    // Predicated region
    $region26: #{downsample_forward.9} parent=1 // pred_check
      _
    $region27: #{downsample_forward.9} parent=1 // pred_check_branch
      %30 = sbr.rel (0) target = $region29
    $region28: #{downsample_forward.9} parent=1 // pred_region
      _
    $region29: #{downsample_forward.9} parent=1 // pred_fallthru
      _
    // Predicated region
    $region30: #{downsample_forward.9} parent=1 // pred_check
      _
    $region31: #{downsample_forward.9} parent=1 // pred_check_branch
      %32 = sbr.rel (0) target = $region33
    $region32: #{downsample_forward.9} parent=1 // pred_region
      _
    $region33: #{downsample_forward.9} parent=1 // pred_fallthru
      _
    // Predicated region
    $region34: #{downsample_forward.9} parent=1 // pred_check
      _
    $region35: #{downsample_forward.9} parent=1 // pred_check_branch
      %34 = sbr.rel (0) target = $region37
    $region36: #{downsample_forward.9} parent=1 // pred_region
      _
    $region37: #{downsample_forward.9} parent=1 // pred_fallthru
      _
    // Predicated region
    $region38: #{downsample_forward.9} parent=1 // pred_check
      _
    $region39: #{downsample_forward.9} parent=1 // pred_check_branch
      %36 = sbr.rel (0) target = $region41
    $region40: #{downsample_forward.9} parent=1 // pred_region
      _
    $region41: #{downsample_forward.9} parent=1 // pred_fallthru
      _
    // Predicated region
    $region42: #{downsample_forward.9} parent=1 // pred_check
      _
    $region43: #{downsample_forward.9} parent=1 // pred_check_branch
      %38 = sbr.rel (0) target = $region45
    $region44: #{downsample_forward.9} parent=1 // pred_region
      _
    $region45: #{downsample_forward.9} parent=1 // pred_fallthru
      _
    %v39 = vld [vmem:[%s1] sm:$0x3]
    %v40 = vld [vmem:[%s0] sm:$0xf]
    %vm41 = vcmask 31744
    %v43 = vsel %vm41, %v39, 0
    %vm45 = vcmask 1043456
    %v47 = vsel %vm45, %v40, 0
    %49 = vmatprep.subr.mxu0 0.0
    %50 = vmatpush1.msra.mxu0 0.0
    %51 = vmatprep.subr.mxu0 0.0
    %52 = vmatpush1.msra.mxu0 0.0
    %53 = vmatprep.subr.mxu0 0.0
    %54 = vmatpush1.msra.mxu0 0.0
    %55 = vmatprep.subr.mxu0 0.0
    %56 = vmatpush1.msra.mxu0 0.0
    %57 = vmatprep.subr.mxu0 0.0
    %58 = vmatpush1.msra.mxu0 0.0
    %59 = vmatprep.subr.mxu0 0.0
    %60 = vmatpush1.msra.mxu0 0.0
    %61 = vmatprep.subr.mxu0 0.0
    %62 = vmatpush1.msra.mxu0 0.0
    %63 = vmatprep.subr.mxu0 0.0
    %64 = vmatpush1.msra.mxu0 0.0
    %65 = vmatprep.subr.mxu0 0.0
    %66 = vmatpush1.msra.mxu0 0.0
    %67 = vmatprep.subr.mxu0 0.0
    %68 = vmatpush1.msra.mxu0 0.0
    %69 = vmatprep.subr.mxu0 0.0
    %70 = vmatpush1.msra.mxu0 0.0
    %71 = vmatprep.subr.mxu0 0.0
    %72 = vmatpush1.msra.mxu0 0.0
    %73 = vmatprep.subr.mxu0 0.0
    %74 = vmatpush1.msra.mxu0 0.0
    %75 = vmatprep.subr.mxu0 0.0
    %76 = vmatpush1.msra.mxu0 0.0
    %77 = vmatprep.subr.mxu0 0.0
    %78 = vmatpush1.msra.mxu0 0.0
    %79 = vmatprep.subr.mxu0 0.0
    %80 = vmatpush1.msra.mxu0 %v47
    %81 = vmatprep.subr.mxu0 0.0
    %82 = vmatpush2.msra.mxu0 0.0
    %83 = vmatprep.subr.mxu0 0.0
    %84 = vmatpush2.msra.mxu0 0.0
    %85 = vmatprep.subr.mxu0 0.0
    %86 = vmatpush2.msra.mxu0 0.0
    %87 = vmatprep.subr.mxu0 0.0
    %88 = vmatpush2.msra.mxu0 0.0
    %89 = vmatprep.subr.mxu0 0.0
    %90 = vmatpush2.msra.mxu0 0.0
    %91 = vmatprep.subr.mxu0 0.0
    %92 = vmatpush2.msra.mxu0 0.0
    %93 = vmatprep.subr.mxu0 0.0
    %94 = vmatpush2.msra.mxu0 0.0
    %95 = vmatprep.subr.mxu0 0.0
    %96 = vmatpush2.msra.mxu0 0.0
    %97 = vmatprep.subr.mxu0 0.0
    %98 = vmatpush2.msra.mxu0 0.0
    %99 = vmatprep.subr.mxu0 0.0
    %100 = vmatpush2.msra.mxu0 0.0
    %101 = vmatprep.subr.mxu0 0.0
    %102 = vmatpush2.msra.mxu0 0.0
    %103 = vmatprep.subr.mxu0 0.0
    %104 = vmatpush2.msra.mxu0 0.0
    %105 = vmatprep.subr.mxu0 0.0
    %106 = vmatpush2.msra.mxu0 0.0
    %107 = vmatprep.subr.mxu0 0.0
    %108 = vmatpush2.msra.mxu0 0.0
    %109 = vmatprep.subr.mxu0 0.0
    %110 = vmatpush2.msra.mxu0 0.0
    %111 = vmatprep.subr.mxu0 0.0
    %112 = vmatpush2.msra.mxu0 0.0
    %113 = vmatprep.mubr.f32.mxu0 0.0
    %114 = vmatmul.mubr.f32.gmra.mxu0 %v43
    %v115 = vpop.f32.mrf.mxu0
    %v116 = vadd.f32 0.0, %v115
    %v117 = vpop.f32.mrf.mxu0
    %118 = vdwg.mxu0
    %v119 = vld [vmem:[%s2] sm:$0xff]
    %v120 = vld [vmem:[%s2 + $0x8] sm:$0xff]
    %v121 = vld [vmem:[%s2 + $0x10] sm:$0xff]
    %v122 = vld [vmem:[%s2 + $0x18] sm:$0xff]
    %v123 = vld [vmem:[%s2 + $0x20] sm:$0xff]
    %v124 = vld [vmem:[%s2 + $0x28] sm:$0xff]
    %v125 = vld [vmem:[%s2 + $0x30] sm:$0xff]
    %v126 = vld [vmem:[%s2 + $0x38] sm:$0xff]
    %v127 = vld [vmem:[%s3] sm:$0x1]
    %v129 = vlaneseq
    %v130 = vshrl.u32 %v129, 7
    %v131 = vsub.s32 0, %v130
    %v132 = vrot.slane %v127, %v131
    %vm134 = vcmask 523264
    %v136 = vsel %vm134, %v116, 0
    %138 = vmatprep.subr.mxu0 0.0
    %139 = vmatpush1.msra.mxu0 0.0
    %140 = vmatprep.subr.mxu0 0.0
    %141 = vmatpush1.msra.mxu0 0.0
    %142 = vmatprep.subr.mxu0 0.0
    %143 = vmatpush1.msra.mxu0 0.0
    %144 = vmatprep.subr.mxu0 0.0
    %145 = vmatpush1.msra.mxu0 0.0
    %146 = vmatprep.subr.mxu0 0.0
    %147 = vmatpush1.msra.mxu0 0.0
    %148 = vmatprep.subr.mxu0 0.0
    %149 = vmatpush1.msra.mxu0 0.0
    %150 = vmatprep.subr.mxu0 0.0
    %151 = vmatpush1.msra.mxu0 0.0
    %152 = vmatprep.subr.mxu0 0.0
    %153 = vmatpush1.msra.mxu0 0.0
    %154 = vmatprep.subr.mxu0 0.0
    %155 = vmatpush1.msra.mxu0 %v126
    %156 = vmatprep.subr.mxu0 0.0
    %157 = vmatpush1.msra.mxu0 %v125
    %158 = vmatprep.subr.mxu0 0.0
    %159 = vmatpush1.msra.mxu0 %v124
    %160 = vmatprep.subr.mxu0 0.0
    %161 = vmatpush1.msra.mxu0 %v123
    %162 = vmatprep.subr.mxu0 0.0
    %163 = vmatpush1.msra.mxu0 %v122
    %164 = vmatprep.subr.mxu0 0.0
    %165 = vmatpush1.msra.mxu0 %v121
    %166 = vmatprep.subr.mxu0 0.0
    %167 = vmatpush1.msra.mxu0 %v120
    %168 = vmatprep.subr.mxu0 0.0
    %169 = vmatpush1.msra.mxu0 %v119
    %170 = vmatprep.subr.mxu0 0.0
    %171 = vmatpush2.msra.mxu0 0.0
    %172 = vmatprep.subr.mxu0 0.0
    %173 = vmatpush2.msra.mxu0 0.0
    %174 = vmatprep.subr.mxu0 0.0
    %175 = vmatpush2.msra.mxu0 0.0
    %176 = vmatprep.subr.mxu0 0.0
    %177 = vmatpush2.msra.mxu0 0.0
    %178 = vmatprep.subr.mxu0 0.0
    %179 = vmatpush2.msra.mxu0 0.0
    %180 = vmatprep.subr.mxu0 0.0
    %181 = vmatpush2.msra.mxu0 0.0
    %182 = vmatprep.subr.mxu0 0.0
    %183 = vmatpush2.msra.mxu0 0.0
    %184 = vmatprep.subr.mxu0 0.0
    %185 = vmatpush2.msra.mxu0 0.0
    %186 = vmatprep.subr.mxu0 0.0
    %187 = vmatpush2.msra.mxu0 0.0
    %188 = vmatprep.subr.mxu0 0.0
    %189 = vmatpush2.msra.mxu0 0.0
    %190 = vmatprep.subr.mxu0 0.0
    %191 = vmatpush2.msra.mxu0 0.0
    %192 = vmatprep.subr.mxu0 0.0
    %193 = vmatpush2.msra.mxu0 0.0
    %194 = vmatprep.subr.mxu0 0.0
    %195 = vmatpush2.msra.mxu0 0.0
    %196 = vmatprep.subr.mxu0 0.0
    %197 = vmatpush2.msra.mxu0 0.0
    %198 = vmatprep.subr.mxu0 0.0
    %199 = vmatpush2.msra.mxu0 0.0
    %200 = vmatprep.subr.mxu0 0.0
    %201 = vmatpush2.msra.mxu0 0.0
    %202 = vmatprep.mubr.f32.mxu0 0.0
    %203 = vmatmul.mubr.f32.gmra.mxu0 %v136
    %v204 = vpop.f32.mrf.mxu0
    %v205 = vadd.f32 %v132, %v204
    %v206 = vpop.f32.mrf.mxu0
    %207 = vdwg.mxu0
    %v208 = vld [vmem:[%s5] sm:$0xff]
    %v209 = vld [vmem:[%s5 + $0x8] sm:$0xff]
    %v210 = vld [vmem:[%s5 + $0x10] sm:$0xff]
    %v211 = vld [vmem:[%s5 + $0x18] sm:$0xff]
    %v212 = vld [vmem:[%s6] sm:$0x1]
    %v214 = vlaneseq
    %v215 = vshrl.u32 %v214, 7
    %v216 = vsub.s32 0, %v215
    %v217 = vrot.slane %v212, %v216
    %vm219 = vcmask 261120
    %v221 = vsel %vm219, %v205, 0
    %223 = vmatprep.subr.mxu0 0.0
    %224 = vmatpush1.msra.mxu0 0.0
    %225 = vmatprep.subr.mxu0 0.0
    %226 = vmatpush1.msra.mxu0 0.0
    %227 = vmatprep.subr.mxu0 0.0
    %228 = vmatpush1.msra.mxu0 0.0
    %229 = vmatprep.subr.mxu0 0.0
    %230 = vmatpush1.msra.mxu0 0.0
    %231 = vmatprep.subr.mxu0 0.0
    %232 = vmatpush1.msra.mxu0 0.0
    %233 = vmatprep.subr.mxu0 0.0
    %234 = vmatpush1.msra.mxu0 0.0
    %235 = vmatprep.subr.mxu0 0.0
    %236 = vmatpush1.msra.mxu0 0.0
    %237 = vmatprep.subr.mxu0 0.0
    %238 = vmatpush1.msra.mxu0 0.0
    %239 = vmatprep.subr.mxu0 0.0
    %240 = vmatpush1.msra.mxu0 0.0
    %241 = vmatprep.subr.mxu0 0.0
    %242 = vmatpush1.msra.mxu0 0.0
    %243 = vmatprep.subr.mxu0 0.0
    %244 = vmatpush1.msra.mxu0 0.0
    %245 = vmatprep.subr.mxu0 0.0
    %246 = vmatpush1.msra.mxu0 0.0
    %247 = vmatprep.subr.mxu0 0.0
    %248 = vmatpush1.msra.mxu0 %v211
    %249 = vmatprep.subr.mxu0 0.0
    %250 = vmatpush1.msra.mxu0 %v210
    %251 = vmatprep.subr.mxu0 0.0
    %252 = vmatpush1.msra.mxu0 %v209
    %253 = vmatprep.subr.mxu0 0.0
    %254 = vmatpush1.msra.mxu0 %v208
    %255 = vmatprep.subr.mxu0 0.0
    %256 = vmatpush2.msra.mxu0 0.0
    %257 = vmatprep.subr.mxu0 0.0
    %258 = vmatpush2.msra.mxu0 0.0
    %259 = vmatprep.subr.mxu0 0.0
    %260 = vmatpush2.msra.mxu0 0.0
    %261 = vmatprep.subr.mxu0 0.0
    %262 = vmatpush2.msra.mxu0 0.0
    %263 = vmatprep.subr.mxu0 0.0
    %264 = vmatpush2.msra.mxu0 0.0
    %265 = vmatprep.subr.mxu0 0.0
    %266 = vmatpush2.msra.mxu0 0.0
    %267 = vmatprep.subr.mxu0 0.0
    %268 = vmatpush2.msra.mxu0 0.0
    %269 = vmatprep.subr.mxu0 0.0
    %270 = vmatpush2.msra.mxu0 0.0
    %271 = vmatprep.subr.mxu0 0.0
    %272 = vmatpush2.msra.mxu0 0.0
    %273 = vmatprep.subr.mxu0 0.0
    %274 = vmatpush2.msra.mxu0 0.0
    %275 = vmatprep.subr.mxu0 0.0
    %276 = vmatpush2.msra.mxu0 0.0
    %277 = vmatprep.subr.mxu0 0.0
    %278 = vmatpush2.msra.mxu0 0.0
    %279 = vmatprep.subr.mxu0 0.0
    %280 = vmatpush2.msra.mxu0 0.0
    %281 = vmatprep.subr.mxu0 0.0
    %282 = vmatpush2.msra.mxu0 0.0
    %283 = vmatprep.subr.mxu0 0.0
    %284 = vmatpush2.msra.mxu0 0.0
    %285 = vmatprep.subr.mxu0 0.0
    %286 = vmatpush2.msra.mxu0 0.0
    %287 = vmatprep.mubr.f32.mxu0 0.0
    %288 = vmatmul.mubr.f32.gmra.mxu0 %v221
    %v289 = vpop.f32.mrf.mxu0
    %v290 = vadd.f32 %v217, %v289
    %v291 = vpop.f32.mrf.mxu0
    %292 = vdwg.mxu0
    %v293 = vld [vmem:[%s7] sm:$0xff]
    %v294 = vld [vmem:[%s7 + $0x8] sm:$0xff]
    %v295 = vld [vmem:[%s7 + $0x10] sm:$0xff]
    %v296 = vld [vmem:[%s7 + $0x18] sm:$0xff]
    %v298 = vsel %vm219, %v290, 0
    %300 = vmatprep.subr.mxu0 0.0
    %301 = vmatpush1.msra.mxu0 0.0
    %302 = vmatprep.subr.mxu0 0.0
    %303 = vmatpush1.msra.mxu0 0.0
    %304 = vmatprep.subr.mxu0 0.0
    %305 = vmatpush1.msra.mxu0 0.0
    %306 = vmatprep.subr.mxu0 0.0
    %307 = vmatpush1.msra.mxu0 0.0
    %308 = vmatprep.subr.mxu0 0.0
    %309 = vmatpush1.msra.mxu0 0.0
    %310 = vmatprep.subr.mxu0 0.0
    %311 = vmatpush1.msra.mxu0 0.0
    %312 = vmatprep.subr.mxu0 0.0
    %313 = vmatpush1.msra.mxu0 0.0
    %314 = vmatprep.subr.mxu0 0.0
    %315 = vmatpush1.msra.mxu0 0.0
    %316 = vmatprep.subr.mxu0 0.0
    %317 = vmatpush1.msra.mxu0 0.0
    %318 = vmatprep.subr.mxu0 0.0
    %319 = vmatpush1.msra.mxu0 0.0
    %320 = vmatprep.subr.mxu0 0.0
    %321 = vmatpush1.msra.mxu0 0.0
    %322 = vmatprep.subr.mxu0 0.0
    %323 = vmatpush1.msra.mxu0 0.0
    %324 = vmatprep.subr.mxu0 0.0
    %325 = vmatpush1.msra.mxu0 %v296
    %326 = vmatprep.subr.mxu0 0.0
    %327 = vmatpush1.msra.mxu0 %v295
    %328 = vmatprep.subr.mxu0 0.0
    %329 = vmatpush1.msra.mxu0 %v294
    %330 = vmatprep.subr.mxu0 0.0
    %331 = vmatpush1.msra.mxu0 %v293
    %332 = vmatprep.subr.mxu0 0.0
    %333 = vmatpush2.msra.mxu0 0.0
    %334 = vmatprep.subr.mxu0 0.0
    %335 = vmatpush2.msra.mxu0 0.0
    %336 = vmatprep.subr.mxu0 0.0
    %337 = vmatpush2.msra.mxu0 0.0
    %338 = vmatprep.subr.mxu0 0.0
    %339 = vmatpush2.msra.mxu0 0.0
    %340 = vmatprep.subr.mxu0 0.0
    %341 = vmatpush2.msra.mxu0 0.0
    %342 = vmatprep.subr.mxu0 0.0
    %343 = vmatpush2.msra.mxu0 0.0
    %344 = vmatprep.subr.mxu0 0.0
    %345 = vmatpush2.msra.mxu0 0.0
    %346 = vmatprep.subr.mxu0 0.0
    %347 = vmatpush2.msra.mxu0 0.0
    %348 = vmatprep.subr.mxu0 0.0
    %349 = vmatpush2.msra.mxu0 0.0
    %350 = vmatprep.subr.mxu0 0.0
    %351 = vmatpush2.msra.mxu0 0.0
    %352 = vmatprep.subr.mxu0 0.0
    %353 = vmatpush2.msra.mxu0 0.0
    %354 = vmatprep.subr.mxu0 0.0
    %355 = vmatpush2.msra.mxu0 0.0
    %356 = vmatprep.subr.mxu0 0.0
    %357 = vmatpush2.msra.mxu0 0.0
    %358 = vmatprep.subr.mxu0 0.0
    %359 = vmatpush2.msra.mxu0 0.0
    %360 = vmatprep.subr.mxu0 0.0
    %361 = vmatpush2.msra.mxu0 0.0
    %362 = vmatprep.subr.mxu0 0.0
    %363 = vmatpush2.msra.mxu0 0.0
    %364 = vmatprep.mubr.f32.mxu0 0.0
    %365 = vmatmul.mubr.f32.gmra.mxu0 %v298
    %v366 = vpop.f32.mrf.mxu0
    %v367 = vadd.f32 0.0, %v366
    %v368 = vpop.f32.mrf.mxu0
    %369 = vdwg.mxu0
    %v370 = vld [vmem:[%s4] sm:$0x3]
    %s371 = scalar_lea.vmem %s7, 32
    %v372 = vld [vmem:[%s371] sm:$0xff]
    %v373 = vld [vmem:[%s371 + $0x8] sm:$0xff]
    %v374 = vld [vmem:[%s371 + $0x10] sm:$0xff]
    %v375 = vld [vmem:[%s371 + $0x18] sm:$0xff]
    %376 = vmatprep.subr.mxu0 0.0
    %377 = vmatpush1.msra.mxu0 0.0
    %378 = vmatprep.subr.mxu0 0.0
    %379 = vmatpush1.msra.mxu0 0.0
    %380 = vmatprep.subr.mxu0 0.0
    %381 = vmatpush1.msra.mxu0 0.0
    %382 = vmatprep.subr.mxu0 0.0
    %383 = vmatpush1.msra.mxu0 0.0
    %384 = vmatprep.subr.mxu0 0.0
    %385 = vmatpush1.msra.mxu0 0.0
    %386 = vmatprep.subr.mxu0 0.0
    %387 = vmatpush1.msra.mxu0 0.0
    %388 = vmatprep.subr.mxu0 0.0
    %389 = vmatpush1.msra.mxu0 0.0
    %390 = vmatprep.subr.mxu0 0.0
    %391 = vmatpush1.msra.mxu0 0.0
    %392 = vmatprep.subr.mxu0 0.0
    %393 = vmatpush1.msra.mxu0 0.0
    %394 = vmatprep.subr.mxu0 0.0
    %395 = vmatpush1.msra.mxu0 0.0
    %396 = vmatprep.subr.mxu0 0.0
    %397 = vmatpush1.msra.mxu0 0.0
    %398 = vmatprep.subr.mxu0 0.0
    %399 = vmatpush1.msra.mxu0 0.0
    %400 = vmatprep.subr.mxu0 0.0
    %401 = vmatpush1.msra.mxu0 %v375
    %402 = vmatprep.subr.mxu0 0.0
    %403 = vmatpush1.msra.mxu0 %v374
    %404 = vmatprep.subr.mxu0 0.0
    %405 = vmatpush1.msra.mxu0 %v373
    %406 = vmatprep.subr.mxu0 0.0
    %407 = vmatpush1.msra.mxu0 %v372
    %408 = vmatprep.subr.mxu0 0.0
    %409 = vmatpush2.msra.mxu0 0.0
    %410 = vmatprep.subr.mxu0 0.0
    %411 = vmatpush2.msra.mxu0 0.0
    %412 = vmatprep.subr.mxu0 0.0
    %413 = vmatpush2.msra.mxu0 0.0
    %414 = vmatprep.subr.mxu0 0.0
    %415 = vmatpush2.msra.mxu0 0.0
    %416 = vmatprep.subr.mxu0 0.0
    %417 = vmatpush2.msra.mxu0 0.0
    %418 = vmatprep.subr.mxu0 0.0
    %419 = vmatpush2.msra.mxu0 0.0
    %420 = vmatprep.subr.mxu0 0.0
    %421 = vmatpush2.msra.mxu0 0.0
    %422 = vmatprep.subr.mxu0 0.0
    %423 = vmatpush2.msra.mxu0 0.0
    %424 = vmatprep.subr.mxu0 0.0
    %425 = vmatpush2.msra.mxu0 0.0
    %426 = vmatprep.subr.mxu0 0.0
    %427 = vmatpush2.msra.mxu0 0.0
    %428 = vmatprep.subr.mxu0 0.0
    %429 = vmatpush2.msra.mxu0 0.0
    %430 = vmatprep.subr.mxu0 0.0
    %431 = vmatpush2.msra.mxu0 0.0
    %432 = vmatprep.subr.mxu0 0.0
    %433 = vmatpush2.msra.mxu0 0.0
    %434 = vmatprep.subr.mxu0 0.0
    %435 = vmatpush2.msra.mxu0 0.0
    %436 = vmatprep.subr.mxu0 0.0
    %437 = vmatpush2.msra.mxu0 0.0
    %438 = vmatprep.subr.mxu0 0.0
    %439 = vmatpush2.msra.mxu0 0.0
    %440 = vmatprep.mubr.f32.mxu0 0.0
    %441 = vmatmul.mubr.f32.gmra.mxu0 %v298
    %v442 = vpop.f32.mrf.mxu0
    %v443 = vadd.f32 0.0, %v442
    %v444 = vpop.f32.mrf.mxu0
    %445 = vdwg.mxu0
    %vm446 = vcmask 15360
    %v448 = vsel %vm446, %v370, 0
    %vm450 = vcmask 1041408
    %v452 = vsel %vm450, %v367, 0
    %454 = vmatprep.subr.mxu0 0.0
    %455 = vmatpush1.msra.mxu0 0.0
    %456 = vmatprep.subr.mxu0 0.0
    %457 = vmatpush1.msra.mxu0 0.0
    %458 = vmatprep.subr.mxu0 0.0
    %459 = vmatpush1.msra.mxu0 0.0
    %460 = vmatprep.subr.mxu0 0.0
    %461 = vmatpush1.msra.mxu0 0.0
    %462 = vmatprep.subr.mxu0 0.0
    %463 = vmatpush1.msra.mxu0 0.0
    %464 = vmatprep.subr.mxu0 0.0
    %465 = vmatpush1.msra.mxu0 0.0
    %466 = vmatprep.subr.mxu0 0.0
    %467 = vmatpush1.msra.mxu0 0.0
    %468 = vmatprep.subr.mxu0 0.0
    %469 = vmatpush1.msra.mxu0 0.0
    %470 = vmatprep.subr.mxu0 0.0
    %471 = vmatpush1.msra.mxu0 0.0
    %472 = vmatprep.subr.mxu0 0.0
    %473 = vmatpush1.msra.mxu0 0.0
    %474 = vmatprep.subr.mxu0 0.0
    %475 = vmatpush1.msra.mxu0 0.0
    %476 = vmatprep.subr.mxu0 0.0
    %477 = vmatpush1.msra.mxu0 0.0
    %478 = vmatprep.subr.mxu0 0.0
    %479 = vmatpush1.msra.mxu0 0.0
    %480 = vmatprep.subr.mxu0 0.0
    %481 = vmatpush1.msra.mxu0 0.0
    %482 = vmatprep.subr.mxu0 0.0
    %483 = vmatpush1.msra.mxu0 0.0
    %484 = vmatprep.subr.mxu0 0.0
    %485 = vmatpush1.msra.mxu0 %v452
    %486 = vmatprep.subr.mxu0 0.0
    %487 = vmatpush2.msra.mxu0 0.0
    %488 = vmatprep.subr.mxu0 0.0
    %489 = vmatpush2.msra.mxu0 0.0
    %490 = vmatprep.subr.mxu0 0.0
    %491 = vmatpush2.msra.mxu0 0.0
    %492 = vmatprep.subr.mxu0 0.0
    %493 = vmatpush2.msra.mxu0 0.0
    %494 = vmatprep.subr.mxu0 0.0
    %495 = vmatpush2.msra.mxu0 0.0
    %496 = vmatprep.subr.mxu0 0.0
    %497 = vmatpush2.msra.mxu0 0.0
    %498 = vmatprep.subr.mxu0 0.0
    %499 = vmatpush2.msra.mxu0 0.0
    %500 = vmatprep.subr.mxu0 0.0
    %501 = vmatpush2.msra.mxu0 0.0
    %502 = vmatprep.subr.mxu0 0.0
    %503 = vmatpush2.msra.mxu0 0.0
    %504 = vmatprep.subr.mxu0 0.0
    %505 = vmatpush2.msra.mxu0 0.0
    %506 = vmatprep.subr.mxu0 0.0
    %507 = vmatpush2.msra.mxu0 0.0
    %508 = vmatprep.subr.mxu0 0.0
    %509 = vmatpush2.msra.mxu0 0.0
    %510 = vmatprep.subr.mxu0 0.0
    %511 = vmatpush2.msra.mxu0 0.0
    %512 = vmatprep.subr.mxu0 0.0
    %513 = vmatpush2.msra.mxu0 0.0
    %514 = vmatprep.subr.mxu0 0.0
    %515 = vmatpush2.msra.mxu0 0.0
    %516 = vmatprep.subr.mxu0 0.0
    %517 = vmatpush2.msra.mxu0 0.0
    %518 = vmatprep.mubr.f32.mxu0 0.0
    %519 = vmatmul.mubr.f32.gmra.mxu0 %v448
    %v520 = vpop.f32.mrf.mxu0
    %v521 = vadd.f32 %v443, %v520
    %v522 = vpop.f32.mrf.mxu0
    %523 = vdwg.mxu0
    %s524 = scalar_lea.vmem %s7, 64
    %v525 = vld [vmem:[%s524] sm:$0xff]
    %v526 = vld [vmem:[%s524 + $0x8] sm:$0xff]
    %v527 = vld [vmem:[%s524 + $0x10] sm:$0xff]
    %v528 = vld [vmem:[%s524 + $0x18] sm:$0xff]
    %529 = vmatprep.subr.mxu0 0.0
    %530 = vmatpush1.msra.mxu0 0.0
    %531 = vmatprep.subr.mxu0 0.0
    %532 = vmatpush1.msra.mxu0 0.0
    %533 = vmatprep.subr.mxu0 0.0
    %534 = vmatpush1.msra.mxu0 0.0
    %535 = vmatprep.subr.mxu0 0.0
    %536 = vmatpush1.msra.mxu0 0.0
    %537 = vmatprep.subr.mxu0 0.0
    %538 = vmatpush1.msra.mxu0 0.0
    %539 = vmatprep.subr.mxu0 0.0
    %540 = vmatpush1.msra.mxu0 0.0
    %541 = vmatprep.subr.mxu0 0.0
    %542 = vmatpush1.msra.mxu0 0.0
    %543 = vmatprep.subr.mxu0 0.0
    %544 = vmatpush1.msra.mxu0 0.0
    %545 = vmatprep.subr.mxu0 0.0
    %546 = vmatpush1.msra.mxu0 0.0
    %547 = vmatprep.subr.mxu0 0.0
    %548 = vmatpush1.msra.mxu0 0.0
    %549 = vmatprep.subr.mxu0 0.0
    %550 = vmatpush1.msra.mxu0 0.0
    %551 = vmatprep.subr.mxu0 0.0
    %552 = vmatpush1.msra.mxu0 0.0
    %553 = vmatprep.subr.mxu0 0.0
    %554 = vmatpush1.msra.mxu0 %v528
    %555 = vmatprep.subr.mxu0 0.0
    %556 = vmatpush1.msra.mxu0 %v527
    %557 = vmatprep.subr.mxu0 0.0
    %558 = vmatpush1.msra.mxu0 %v526
    %559 = vmatprep.subr.mxu0 0.0
    %560 = vmatpush1.msra.mxu0 %v525
    %561 = vmatprep.subr.mxu0 0.0
    %562 = vmatpush2.msra.mxu0 0.0
    %563 = vmatprep.subr.mxu0 0.0
    %564 = vmatpush2.msra.mxu0 0.0
    %565 = vmatprep.subr.mxu0 0.0
    %566 = vmatpush2.msra.mxu0 0.0
    %567 = vmatprep.subr.mxu0 0.0
    %568 = vmatpush2.msra.mxu0 0.0
    %569 = vmatprep.subr.mxu0 0.0
    %570 = vmatpush2.msra.mxu0 0.0
    %571 = vmatprep.subr.mxu0 0.0
    %572 = vmatpush2.msra.mxu0 0.0
    %573 = vmatprep.subr.mxu0 0.0
    %574 = vmatpush2.msra.mxu0 0.0
    %575 = vmatprep.subr.mxu0 0.0
    %576 = vmatpush2.msra.mxu0 0.0
    %577 = vmatprep.subr.mxu0 0.0
    %578 = vmatpush2.msra.mxu0 0.0
    %579 = vmatprep.subr.mxu0 0.0
    %580 = vmatpush2.msra.mxu0 0.0
    %581 = vmatprep.subr.mxu0 0.0
    %582 = vmatpush2.msra.mxu0 0.0
    %583 = vmatprep.subr.mxu0 0.0
    %584 = vmatpush2.msra.mxu0 0.0
    %585 = vmatprep.subr.mxu0 0.0
    %586 = vmatpush2.msra.mxu0 0.0
    %587 = vmatprep.subr.mxu0 0.0
    %588 = vmatpush2.msra.mxu0 0.0
    %589 = vmatprep.subr.mxu0 0.0
    %590 = vmatpush2.msra.mxu0 0.0
    %591 = vmatprep.subr.mxu0 0.0
    %592 = vmatpush2.msra.mxu0 0.0
    %593 = vmatprep.mubr.f32.mxu0 0.0
    %594 = vmatmul.mubr.f32.gmra.mxu0 %v298
    %v595 = vpop.f32.mrf.mxu0
    %v596 = vadd.f32 0.0, %v595
    %v597 = vpop.f32.mrf.mxu0
    %598 = vdwg.mxu0
    %s599 = scalar_lea.vmem %s4, 4
    %v600 = vld [vmem:[%s599] sm:$0x3]
    %v602 = vsel %vm446, %v600, 0
    %v605 = vsel %vm450, %v596, 0
    %607 = vmatprep.subr.mxu0 0.0
    %608 = vmatpush1.msra.mxu0 0.0
    %609 = vmatprep.subr.mxu0 0.0
    %610 = vmatpush1.msra.mxu0 0.0
    %611 = vmatprep.subr.mxu0 0.0
    %612 = vmatpush1.msra.mxu0 0.0
    %613 = vmatprep.subr.mxu0 0.0
    %614 = vmatpush1.msra.mxu0 0.0
    %615 = vmatprep.subr.mxu0 0.0
    %616 = vmatpush1.msra.mxu0 0.0
    %617 = vmatprep.subr.mxu0 0.0
    %618 = vmatpush1.msra.mxu0 0.0
    %619 = vmatprep.subr.mxu0 0.0
    %620 = vmatpush1.msra.mxu0 0.0
    %621 = vmatprep.subr.mxu0 0.0
    %622 = vmatpush1.msra.mxu0 0.0
    %623 = vmatprep.subr.mxu0 0.0
    %624 = vmatpush1.msra.mxu0 0.0
    %625 = vmatprep.subr.mxu0 0.0
    %626 = vmatpush1.msra.mxu0 0.0
    %627 = vmatprep.subr.mxu0 0.0
    %628 = vmatpush1.msra.mxu0 0.0
    %629 = vmatprep.subr.mxu0 0.0
    %630 = vmatpush1.msra.mxu0 0.0
    %631 = vmatprep.subr.mxu0 0.0
    %632 = vmatpush1.msra.mxu0 0.0
    %633 = vmatprep.subr.mxu0 0.0
    %634 = vmatpush1.msra.mxu0 0.0
    %635 = vmatprep.subr.mxu0 0.0
    %636 = vmatpush1.msra.mxu0 0.0
    %637 = vmatprep.subr.mxu0 0.0
    %638 = vmatpush1.msra.mxu0 %v605
    %639 = vmatprep.subr.mxu0 0.0
    %640 = vmatpush2.msra.mxu0 0.0
    %641 = vmatprep.subr.mxu0 0.0
    %642 = vmatpush2.msra.mxu0 0.0
    %643 = vmatprep.subr.mxu0 0.0
    %644 = vmatpush2.msra.mxu0 0.0
    %645 = vmatprep.subr.mxu0 0.0
    %646 = vmatpush2.msra.mxu0 0.0
    %647 = vmatprep.subr.mxu0 0.0
    %648 = vmatpush2.msra.mxu0 0.0
    %649 = vmatprep.subr.mxu0 0.0
    %650 = vmatpush2.msra.mxu0 0.0
    %651 = vmatprep.subr.mxu0 0.0
    %652 = vmatpush2.msra.mxu0 0.0
    %653 = vmatprep.subr.mxu0 0.0
    %654 = vmatpush2.msra.mxu0 0.0
    %655 = vmatprep.subr.mxu0 0.0
    %656 = vmatpush2.msra.mxu0 0.0
    %657 = vmatprep.subr.mxu0 0.0
    %658 = vmatpush2.msra.mxu0 0.0
    %659 = vmatprep.subr.mxu0 0.0
    %660 = vmatpush2.msra.mxu0 0.0
    %661 = vmatprep.subr.mxu0 0.0
    %662 = vmatpush2.msra.mxu0 0.0
    %663 = vmatprep.subr.mxu0 0.0
    %664 = vmatpush2.msra.mxu0 0.0
    %665 = vmatprep.subr.mxu0 0.0
    %666 = vmatpush2.msra.mxu0 0.0
    %667 = vmatprep.subr.mxu0 0.0
    %668 = vmatpush2.msra.mxu0 0.0
    %669 = vmatprep.subr.mxu0 0.0
    %670 = vmatpush2.msra.mxu0 0.0
    %671 = vmatprep.mubr.f32.mxu0 0.0
    %672 = vmatmul.mubr.f32.gmra.mxu0 %v602
    %v673 = vpop.f32.mrf.mxu0
    %v674 = vadd.f32 0.0, %v673
    %v675 = vpop.f32.mrf.mxu0
    %676 = vdwg.mxu0
    %v677 = vadd.f32 %v521, %v674
    %v678 = vld [vmem:[%s8] sm:$0x1]
    %v680 = vlaneseq
    %v681 = vshrl.u32 %v680, 7
    %v682 = vsub.s32 0, %v681
    %v683 = vrot.slane %v678, %v682
    %v685 = vadd.f32 %v677, %v683
    %v686 = vld [vmem:[%s9] sm:$0xff]
    %v687 = vld [vmem:[%s9 + $0x8] sm:$0xff]
    %v688 = vld [vmem:[%s9 + $0x10] sm:$0xff]
    %v689 = vld [vmem:[%s9 + $0x18] sm:$0xff]
    %v690 = vld [vmem:[%s10] sm:$0x1]
    %v692 = vlaneseq
    %v693 = vshrl.u32 %v692, 7
    %v694 = vsub.s32 0, %v693
    %v695 = vrot.slane %v690, %v694
    %v698 = vsel %vm219, %v685, 0
    %700 = vmatprep.subr.mxu0 0.0
    %701 = vmatpush1.msra.mxu0 0.0
    %702 = vmatprep.subr.mxu0 0.0
    %703 = vmatpush1.msra.mxu0 0.0
    %704 = vmatprep.subr.mxu0 0.0
    %705 = vmatpush1.msra.mxu0 0.0
    %706 = vmatprep.subr.mxu0 0.0
    %707 = vmatpush1.msra.mxu0 0.0
    %708 = vmatprep.subr.mxu0 0.0
    %709 = vmatpush1.msra.mxu0 0.0
    %710 = vmatprep.subr.mxu0 0.0
    %711 = vmatpush1.msra.mxu0 0.0
    %712 = vmatprep.subr.mxu0 0.0
    %713 = vmatpush1.msra.mxu0 0.0
    %714 = vmatprep.subr.mxu0 0.0
    %715 = vmatpush1.msra.mxu0 0.0
    %716 = vmatprep.subr.mxu0 0.0
    %717 = vmatpush1.msra.mxu0 0.0
    %718 = vmatprep.subr.mxu0 0.0
    %719 = vmatpush1.msra.mxu0 0.0
    %720 = vmatprep.subr.mxu0 0.0
    %721 = vmatpush1.msra.mxu0 0.0
    %722 = vmatprep.subr.mxu0 0.0
    %723 = vmatpush1.msra.mxu0 0.0
    %724 = vmatprep.subr.mxu0 0.0
    %725 = vmatpush1.msra.mxu0 %v689
    %726 = vmatprep.subr.mxu0 0.0
    %727 = vmatpush1.msra.mxu0 %v688
    %728 = vmatprep.subr.mxu0 0.0
    %729 = vmatpush1.msra.mxu0 %v687
    %730 = vmatprep.subr.mxu0 0.0
    %731 = vmatpush1.msra.mxu0 %v686
    %732 = vmatprep.subr.mxu0 0.0
    %733 = vmatpush2.msra.mxu0 0.0
    %734 = vmatprep.subr.mxu0 0.0
    %735 = vmatpush2.msra.mxu0 0.0
    %736 = vmatprep.subr.mxu0 0.0
    %737 = vmatpush2.msra.mxu0 0.0
    %738 = vmatprep.subr.mxu0 0.0
    %739 = vmatpush2.msra.mxu0 0.0
    %740 = vmatprep.subr.mxu0 0.0
    %741 = vmatpush2.msra.mxu0 0.0
    %742 = vmatprep.subr.mxu0 0.0
    %743 = vmatpush2.msra.mxu0 0.0
    %744 = vmatprep.subr.mxu0 0.0
    %745 = vmatpush2.msra.mxu0 0.0
    %746 = vmatprep.subr.mxu0 0.0
    %747 = vmatpush2.msra.mxu0 0.0
    %748 = vmatprep.subr.mxu0 0.0
    %749 = vmatpush2.msra.mxu0 0.0
    %750 = vmatprep.subr.mxu0 0.0
    %751 = vmatpush2.msra.mxu0 0.0
    %752 = vmatprep.subr.mxu0 0.0
    %753 = vmatpush2.msra.mxu0 0.0
    %754 = vmatprep.subr.mxu0 0.0
    %755 = vmatpush2.msra.mxu0 0.0
    %756 = vmatprep.subr.mxu0 0.0
    %757 = vmatpush2.msra.mxu0 0.0
    %758 = vmatprep.subr.mxu0 0.0
    %759 = vmatpush2.msra.mxu0 0.0
    %760 = vmatprep.subr.mxu0 0.0
    %761 = vmatpush2.msra.mxu0 0.0
    %762 = vmatprep.subr.mxu0 0.0
    %763 = vmatpush2.msra.mxu0 0.0
    %764 = vmatprep.mubr.f32.mxu0 0.0
    %765 = vmatmul.mubr.f32.gmra.mxu0 %v698
    %v766 = vpop.f32.mrf.mxu0
    %v767 = vadd.f32 %v695, %v766
    %v768 = vpop.f32.mrf.mxu0
    %769 = vdwg.mxu0
    %v770 = vadd.f32 %v205, %v767
    %v771 = vmax.f32 %v770, 0.0
    %s772 = scalar_lea.vmem %s5, 32
    %v773 = vld [vmem:[%s772] sm:$0xff]
    %v774 = vld [vmem:[%s772 + $0x8] sm:$0xff]
    %v775 = vld [vmem:[%s772 + $0x10] sm:$0xff]
    %v776 = vld [vmem:[%s772 + $0x18] sm:$0xff]
    %s777 = scalar_lea.vmem %s6, 1
    %v778 = vld [vmem:[%s777] sm:$0x1]
    %v780 = vlaneseq
    %v781 = vshrl.u32 %v780, 7
    %v782 = vsub.s32 0, %v781
    %v783 = vrot.slane %v778, %v782
    %v786 = vsel %vm219, %v771, 0
    %788 = vmatprep.subr.mxu0 0.0
    %789 = vmatpush1.msra.mxu0 0.0
    %790 = vmatprep.subr.mxu0 0.0
    %791 = vmatpush1.msra.mxu0 0.0
    %792 = vmatprep.subr.mxu0 0.0
    %793 = vmatpush1.msra.mxu0 0.0
    %794 = vmatprep.subr.mxu0 0.0
    %795 = vmatpush1.msra.mxu0 0.0
    %796 = vmatprep.subr.mxu0 0.0
    %797 = vmatpush1.msra.mxu0 0.0
    %798 = vmatprep.subr.mxu0 0.0
    %799 = vmatpush1.msra.mxu0 0.0
    %800 = vmatprep.subr.mxu0 0.0
    %801 = vmatpush1.msra.mxu0 0.0
    %802 = vmatprep.subr.mxu0 0.0
    %803 = vmatpush1.msra.mxu0 0.0
    %804 = vmatprep.subr.mxu0 0.0
    %805 = vmatpush1.msra.mxu0 0.0
    %806 = vmatprep.subr.mxu0 0.0
    %807 = vmatpush1.msra.mxu0 0.0
    %808 = vmatprep.subr.mxu0 0.0
    %809 = vmatpush1.msra.mxu0 0.0
    %810 = vmatprep.subr.mxu0 0.0
    %811 = vmatpush1.msra.mxu0 0.0
    %812 = vmatprep.subr.mxu0 0.0
    %813 = vmatpush1.msra.mxu0 %v776
    %814 = vmatprep.subr.mxu0 0.0
    %815 = vmatpush1.msra.mxu0 %v775
    %816 = vmatprep.subr.mxu0 0.0
    %817 = vmatpush1.msra.mxu0 %v774
    %818 = vmatprep.subr.mxu0 0.0
    %819 = vmatpush1.msra.mxu0 %v773
    %820 = vmatprep.subr.mxu0 0.0
    %821 = vmatpush2.msra.mxu0 0.0
    %822 = vmatprep.subr.mxu0 0.0
    %823 = vmatpush2.msra.mxu0 0.0
    %824 = vmatprep.subr.mxu0 0.0
    %825 = vmatpush2.msra.mxu0 0.0
    %826 = vmatprep.subr.mxu0 0.0
    %827 = vmatpush2.msra.mxu0 0.0
    %828 = vmatprep.subr.mxu0 0.0
    %829 = vmatpush2.msra.mxu0 0.0
    %830 = vmatprep.subr.mxu0 0.0
    %831 = vmatpush2.msra.mxu0 0.0
    %832 = vmatprep.subr.mxu0 0.0
    %833 = vmatpush2.msra.mxu0 0.0
    %834 = vmatprep.subr.mxu0 0.0
    %835 = vmatpush2.msra.mxu0 0.0
    %836 = vmatprep.subr.mxu0 0.0
    %837 = vmatpush2.msra.mxu0 0.0
    %838 = vmatprep.subr.mxu0 0.0
    %839 = vmatpush2.msra.mxu0 0.0
    %840 = vmatprep.subr.mxu0 0.0
    %841 = vmatpush2.msra.mxu0 0.0
    %842 = vmatprep.subr.mxu0 0.0
    %843 = vmatpush2.msra.mxu0 0.0
    %844 = vmatprep.subr.mxu0 0.0
    %845 = vmatpush2.msra.mxu0 0.0
    %846 = vmatprep.subr.mxu0 0.0
    %847 = vmatpush2.msra.mxu0 0.0
    %848 = vmatprep.subr.mxu0 0.0
    %849 = vmatpush2.msra.mxu0 0.0
    %850 = vmatprep.subr.mxu0 0.0
    %851 = vmatpush2.msra.mxu0 0.0
    %852 = vmatprep.mubr.f32.mxu0 0.0
    %853 = vmatmul.mubr.f32.gmra.mxu0 %v786
    %v854 = vpop.f32.mrf.mxu0
    %v855 = vadd.f32 %v783, %v854
    %v856 = vpop.f32.mrf.mxu0
    %857 = vdwg.mxu0
    %s858 = scalar_lea.vmem %s7, 96
    %v859 = vld [vmem:[%s858] sm:$0xff]
    %v860 = vld [vmem:[%s858 + $0x8] sm:$0xff]
    %v861 = vld [vmem:[%s858 + $0x10] sm:$0xff]
    %v862 = vld [vmem:[%s858 + $0x18] sm:$0xff]
    %v864 = vsel %vm219, %v855, 0
    %866 = vmatprep.subr.mxu0 0.0
    %867 = vmatpush1.msra.mxu0 0.0
    %868 = vmatprep.subr.mxu0 0.0
    %869 = vmatpush1.msra.mxu0 0.0
    %870 = vmatprep.subr.mxu0 0.0
    %871 = vmatpush1.msra.mxu0 0.0
    %872 = vmatprep.subr.mxu0 0.0
    %873 = vmatpush1.msra.mxu0 0.0
    %874 = vmatprep.subr.mxu0 0.0
    %875 = vmatpush1.msra.mxu0 0.0
    %876 = vmatprep.subr.mxu0 0.0
    %877 = vmatpush1.msra.mxu0 0.0
    %878 = vmatprep.subr.mxu0 0.0
    %879 = vmatpush1.msra.mxu0 0.0
    %880 = vmatprep.subr.mxu0 0.0
    %881 = vmatpush1.msra.mxu0 0.0
    %882 = vmatprep.subr.mxu0 0.0
    %883 = vmatpush1.msra.mxu0 0.0
    %884 = vmatprep.subr.mxu0 0.0
    %885 = vmatpush1.msra.mxu0 0.0
    %886 = vmatprep.subr.mxu0 0.0
    %887 = vmatpush1.msra.mxu0 0.0
    %888 = vmatprep.subr.mxu0 0.0
    %889 = vmatpush1.msra.mxu0 0.0
    %890 = vmatprep.subr.mxu0 0.0
    %891 = vmatpush1.msra.mxu0 %v862
    %892 = vmatprep.subr.mxu0 0.0
    %893 = vmatpush1.msra.mxu0 %v861
    %894 = vmatprep.subr.mxu0 0.0
    %895 = vmatpush1.msra.mxu0 %v860
    %896 = vmatprep.subr.mxu0 0.0
    %897 = vmatpush1.msra.mxu0 %v859
    %898 = vmatprep.subr.mxu0 0.0
    %899 = vmatpush2.msra.mxu0 0.0
    %900 = vmatprep.subr.mxu0 0.0
    %901 = vmatpush2.msra.mxu0 0.0
    %902 = vmatprep.subr.mxu0 0.0
    %903 = vmatpush2.msra.mxu0 0.0
    %904 = vmatprep.subr.mxu0 0.0
    %905 = vmatpush2.msra.mxu0 0.0
    %906 = vmatprep.subr.mxu0 0.0
    %907 = vmatpush2.msra.mxu0 0.0
    %908 = vmatprep.subr.mxu0 0.0
    %909 = vmatpush2.msra.mxu0 0.0
    %910 = vmatprep.subr.mxu0 0.0
    %911 = vmatpush2.msra.mxu0 0.0
    %912 = vmatprep.subr.mxu0 0.0
    %913 = vmatpush2.msra.mxu0 0.0
    %914 = vmatprep.subr.mxu0 0.0
    %915 = vmatpush2.msra.mxu0 0.0
    %916 = vmatprep.subr.mxu0 0.0
    %917 = vmatpush2.msra.mxu0 0.0
    %918 = vmatprep.subr.mxu0 0.0
    %919 = vmatpush2.msra.mxu0 0.0
    %920 = vmatprep.subr.mxu0 0.0
    %921 = vmatpush2.msra.mxu0 0.0
    %922 = vmatprep.subr.mxu0 0.0
    %923 = vmatpush2.msra.mxu0 0.0
    %924 = vmatprep.subr.mxu0 0.0
    %925 = vmatpush2.msra.mxu0 0.0
    %926 = vmatprep.subr.mxu0 0.0
    %927 = vmatpush2.msra.mxu0 0.0
    %928 = vmatprep.subr.mxu0 0.0
    %929 = vmatpush2.msra.mxu0 0.0
    %930 = vmatprep.mubr.f32.mxu0 0.0
    %931 = vmatmul.mubr.f32.gmra.mxu0 %v864
    %v932 = vpop.f32.mrf.mxu0
    %v933 = vadd.f32 0.0, %v932
    %v934 = vpop.f32.mrf.mxu0
    %935 = vdwg.mxu0
    %s936 = scalar_lea.vmem %s7, 128
    %v937 = vld [vmem:[%s936] sm:$0xff]
    %v938 = vld [vmem:[%s936 + $0x8] sm:$0xff]
    %v939 = vld [vmem:[%s936 + $0x10] sm:$0xff]
    %v940 = vld [vmem:[%s936 + $0x18] sm:$0xff]
    %941 = vmatprep.subr.mxu0 0.0
    %942 = vmatpush1.msra.mxu0 0.0
    %943 = vmatprep.subr.mxu0 0.0
    %944 = vmatpush1.msra.mxu0 0.0
    %945 = vmatprep.subr.mxu0 0.0
    %946 = vmatpush1.msra.mxu0 0.0
    %947 = vmatprep.subr.mxu0 0.0
    %948 = vmatpush1.msra.mxu0 0.0
    %949 = vmatprep.subr.mxu0 0.0
    %950 = vmatpush1.msra.mxu0 0.0
    %951 = vmatprep.subr.mxu0 0.0
    %952 = vmatpush1.msra.mxu0 0.0
    %953 = vmatprep.subr.mxu0 0.0
    %954 = vmatpush1.msra.mxu0 0.0
    %955 = vmatprep.subr.mxu0 0.0
    %956 = vmatpush1.msra.mxu0 0.0
    %957 = vmatprep.subr.mxu0 0.0
    %958 = vmatpush1.msra.mxu0 0.0
    %959 = vmatprep.subr.mxu0 0.0
    %960 = vmatpush1.msra.mxu0 0.0
    %961 = vmatprep.subr.mxu0 0.0
    %962 = vmatpush1.msra.mxu0 0.0
    %963 = vmatprep.subr.mxu0 0.0
    %964 = vmatpush1.msra.mxu0 0.0
    %965 = vmatprep.subr.mxu0 0.0
    %966 = vmatpush1.msra.mxu0 %v940
    %967 = vmatprep.subr.mxu0 0.0
    %968 = vmatpush1.msra.mxu0 %v939
    %969 = vmatprep.subr.mxu0 0.0
    %970 = vmatpush1.msra.mxu0 %v938
    %971 = vmatprep.subr.mxu0 0.0
    %972 = vmatpush1.msra.mxu0 %v937
    %973 = vmatprep.subr.mxu0 0.0
    %974 = vmatpush2.msra.mxu0 0.0
    %975 = vmatprep.subr.mxu0 0.0
    %976 = vmatpush2.msra.mxu0 0.0
    %977 = vmatprep.subr.mxu0 0.0
    %978 = vmatpush2.msra.mxu0 0.0
    %979 = vmatprep.subr.mxu0 0.0
    %980 = vmatpush2.msra.mxu0 0.0
    %981 = vmatprep.subr.mxu0 0.0
    %982 = vmatpush2.msra.mxu0 0.0
    %983 = vmatprep.subr.mxu0 0.0
    %984 = vmatpush2.msra.mxu0 0.0
    %985 = vmatprep.subr.mxu0 0.0
    %986 = vmatpush2.msra.mxu0 0.0
    %987 = vmatprep.subr.mxu0 0.0
    %988 = vmatpush2.msra.mxu0 0.0
    %989 = vmatprep.subr.mxu0 0.0
    %990 = vmatpush2.msra.mxu0 0.0
    %991 = vmatprep.subr.mxu0 0.0
    %992 = vmatpush2.msra.mxu0 0.0
    %993 = vmatprep.subr.mxu0 0.0
    %994 = vmatpush2.msra.mxu0 0.0
    %995 = vmatprep.subr.mxu0 0.0
    %996 = vmatpush2.msra.mxu0 0.0
    %997 = vmatprep.subr.mxu0 0.0
    %998 = vmatpush2.msra.mxu0 0.0
    %999 = vmatprep.subr.mxu0 0.0
    %1000 = vmatpush2.msra.mxu0 0.0
    %1001 = vmatprep.subr.mxu0 0.0
    %1002 = vmatpush2.msra.mxu0 0.0
    %1003 = vmatprep.subr.mxu0 0.0
    %1004 = vmatpush2.msra.mxu0 0.0
    %1005 = vmatprep.mubr.f32.mxu0 0.0
    %1006 = vmatmul.mubr.f32.gmra.mxu0 %v864
    %v1007 = vpop.f32.mrf.mxu0
    %v1008 = vadd.f32 0.0, %v1007
    %v1009 = vpop.f32.mrf.mxu0
    %1010 = vdwg.mxu0
    %v1012 = vsel %vm450, %v933, 0
    %1014 = vmatprep.subr.mxu0 0.0
    %1015 = vmatpush1.msra.mxu0 0.0
    %1016 = vmatprep.subr.mxu0 0.0
    %1017 = vmatpush1.msra.mxu0 0.0
    %1018 = vmatprep.subr.mxu0 0.0
    %1019 = vmatpush1.msra.mxu0 0.0
    %1020 = vmatprep.subr.mxu0 0.0
    %1021 = vmatpush1.msra.mxu0 0.0
    %1022 = vmatprep.subr.mxu0 0.0
    %1023 = vmatpush1.msra.mxu0 0.0
    %1024 = vmatprep.subr.mxu0 0.0
    %1025 = vmatpush1.msra.mxu0 0.0
    %1026 = vmatprep.subr.mxu0 0.0
    %1027 = vmatpush1.msra.mxu0 0.0
    %1028 = vmatprep.subr.mxu0 0.0
    %1029 = vmatpush1.msra.mxu0 0.0
    %1030 = vmatprep.subr.mxu0 0.0
    %1031 = vmatpush1.msra.mxu0 0.0
    %1032 = vmatprep.subr.mxu0 0.0
    %1033 = vmatpush1.msra.mxu0 0.0
    %1034 = vmatprep.subr.mxu0 0.0
    %1035 = vmatpush1.msra.mxu0 0.0
    %1036 = vmatprep.subr.mxu0 0.0
    %1037 = vmatpush1.msra.mxu0 0.0
    %1038 = vmatprep.subr.mxu0 0.0
    %1039 = vmatpush1.msra.mxu0 0.0
    %1040 = vmatprep.subr.mxu0 0.0
    %1041 = vmatpush1.msra.mxu0 0.0
    %1042 = vmatprep.subr.mxu0 0.0
    %1043 = vmatpush1.msra.mxu0 0.0
    %1044 = vmatprep.subr.mxu0 0.0
    %1045 = vmatpush1.msra.mxu0 %v1012
    %1046 = vmatprep.subr.mxu0 0.0
    %1047 = vmatpush2.msra.mxu0 0.0
    %1048 = vmatprep.subr.mxu0 0.0
    %1049 = vmatpush2.msra.mxu0 0.0
    %1050 = vmatprep.subr.mxu0 0.0
    %1051 = vmatpush2.msra.mxu0 0.0
    %1052 = vmatprep.subr.mxu0 0.0
    %1053 = vmatpush2.msra.mxu0 0.0
    %1054 = vmatprep.subr.mxu0 0.0
    %1055 = vmatpush2.msra.mxu0 0.0
    %1056 = vmatprep.subr.mxu0 0.0
    %1057 = vmatpush2.msra.mxu0 0.0
    %1058 = vmatprep.subr.mxu0 0.0
    %1059 = vmatpush2.msra.mxu0 0.0
    %1060 = vmatprep.subr.mxu0 0.0
    %1061 = vmatpush2.msra.mxu0 0.0
    %1062 = vmatprep.subr.mxu0 0.0
    %1063 = vmatpush2.msra.mxu0 0.0
    %1064 = vmatprep.subr.mxu0 0.0
    %1065 = vmatpush2.msra.mxu0 0.0
    %1066 = vmatprep.subr.mxu0 0.0
    %1067 = vmatpush2.msra.mxu0 0.0
    %1068 = vmatprep.subr.mxu0 0.0
    %1069 = vmatpush2.msra.mxu0 0.0
    %1070 = vmatprep.subr.mxu0 0.0
    %1071 = vmatpush2.msra.mxu0 0.0
    %1072 = vmatprep.subr.mxu0 0.0
    %1073 = vmatpush2.msra.mxu0 0.0
    %1074 = vmatprep.subr.mxu0 0.0
    %1075 = vmatpush2.msra.mxu0 0.0
    %1076 = vmatprep.subr.mxu0 0.0
    %1077 = vmatpush2.msra.mxu0 0.0
    %1078 = vmatprep.mubr.f32.mxu0 0.0
    %1079 = vmatmul.mubr.f32.gmra.mxu0 %v448
    %v1080 = vpop.f32.mrf.mxu0
    %v1081 = vadd.f32 %v1008, %v1080
    %v1082 = vpop.f32.mrf.mxu0
    %1083 = vdwg.mxu0
    %s1084 = scalar_lea.vmem %s7, 160
    %v1085 = vld [vmem:[%s1084] sm:$0xff]
    %v1086 = vld [vmem:[%s1084 + $0x8] sm:$0xff]
    %v1087 = vld [vmem:[%s1084 + $0x10] sm:$0xff]
    %v1088 = vld [vmem:[%s1084 + $0x18] sm:$0xff]
    %1089 = vmatprep.subr.mxu0 0.0
    %1090 = vmatpush1.msra.mxu0 0.0
    %1091 = vmatprep.subr.mxu0 0.0
    %1092 = vmatpush1.msra.mxu0 0.0
    %1093 = vmatprep.subr.mxu0 0.0
    %1094 = vmatpush1.msra.mxu0 0.0
    %1095 = vmatprep.subr.mxu0 0.0
    %1096 = vmatpush1.msra.mxu0 0.0
    %1097 = vmatprep.subr.mxu0 0.0
    %1098 = vmatpush1.msra.mxu0 0.0
    %1099 = vmatprep.subr.mxu0 0.0
    %1100 = vmatpush1.msra.mxu0 0.0
    %1101 = vmatprep.subr.mxu0 0.0
    %1102 = vmatpush1.msra.mxu0 0.0
    %1103 = vmatprep.subr.mxu0 0.0
    %1104 = vmatpush1.msra.mxu0 0.0
    %1105 = vmatprep.subr.mxu0 0.0
    %1106 = vmatpush1.msra.mxu0 0.0
    %1107 = vmatprep.subr.mxu0 0.0
    %1108 = vmatpush1.msra.mxu0 0.0
    %1109 = vmatprep.subr.mxu0 0.0
    %1110 = vmatpush1.msra.mxu0 0.0
    %1111 = vmatprep.subr.mxu0 0.0
    %1112 = vmatpush1.msra.mxu0 0.0
    %1113 = vmatprep.subr.mxu0 0.0
    %1114 = vmatpush1.msra.mxu0 %v1088
    %1115 = vmatprep.subr.mxu0 0.0
    %1116 = vmatpush1.msra.mxu0 %v1087
    %1117 = vmatprep.subr.mxu0 0.0
    %1118 = vmatpush1.msra.mxu0 %v1086
    %1119 = vmatprep.subr.mxu0 0.0
    %1120 = vmatpush1.msra.mxu0 %v1085
    %1121 = vmatprep.subr.mxu0 0.0
    %1122 = vmatpush2.msra.mxu0 0.0
    %1123 = vmatprep.subr.mxu0 0.0
    %1124 = vmatpush2.msra.mxu0 0.0
    %1125 = vmatprep.subr.mxu0 0.0
    %1126 = vmatpush2.msra.mxu0 0.0
    %1127 = vmatprep.subr.mxu0 0.0
    %1128 = vmatpush2.msra.mxu0 0.0
    %1129 = vmatprep.subr.mxu0 0.0
    %1130 = vmatpush2.msra.mxu0 0.0
    %1131 = vmatprep.subr.mxu0 0.0
    %1132 = vmatpush2.msra.mxu0 0.0
    %1133 = vmatprep.subr.mxu0 0.0
    %1134 = vmatpush2.msra.mxu0 0.0
    %1135 = vmatprep.subr.mxu0 0.0
    %1136 = vmatpush2.msra.mxu0 0.0
    %1137 = vmatprep.subr.mxu0 0.0
    %1138 = vmatpush2.msra.mxu0 0.0
    %1139 = vmatprep.subr.mxu0 0.0
    %1140 = vmatpush2.msra.mxu0 0.0
    %1141 = vmatprep.subr.mxu0 0.0
    %1142 = vmatpush2.msra.mxu0 0.0
    %1143 = vmatprep.subr.mxu0 0.0
    %1144 = vmatpush2.msra.mxu0 0.0
    %1145 = vmatprep.subr.mxu0 0.0
    %1146 = vmatpush2.msra.mxu0 0.0
    %1147 = vmatprep.subr.mxu0 0.0
    %1148 = vmatpush2.msra.mxu0 0.0
    %1149 = vmatprep.subr.mxu0 0.0
    %1150 = vmatpush2.msra.mxu0 0.0
    %1151 = vmatprep.subr.mxu0 0.0
    %1152 = vmatpush2.msra.mxu0 0.0
    %1153 = vmatprep.mubr.f32.mxu0 0.0
    %1154 = vmatmul.mubr.f32.gmra.mxu0 %v864
    %v1155 = vpop.f32.mrf.mxu0
    %v1156 = vadd.f32 0.0, %v1155
    %v1157 = vpop.f32.mrf.mxu0
    %1158 = vdwg.mxu0
    %v1160 = vsel %vm450, %v1156, 0
    %1162 = vmatprep.subr.mxu0 0.0
    %1163 = vmatpush1.msra.mxu0 0.0
    %1164 = vmatprep.subr.mxu0 0.0
    %1165 = vmatpush1.msra.mxu0 0.0
    %1166 = vmatprep.subr.mxu0 0.0
    %1167 = vmatpush1.msra.mxu0 0.0
    %1168 = vmatprep.subr.mxu0 0.0
    %1169 = vmatpush1.msra.mxu0 0.0
    %1170 = vmatprep.subr.mxu0 0.0
    %1171 = vmatpush1.msra.mxu0 0.0
    %1172 = vmatprep.subr.mxu0 0.0
    %1173 = vmatpush1.msra.mxu0 0.0
    %1174 = vmatprep.subr.mxu0 0.0
    %1175 = vmatpush1.msra.mxu0 0.0
    %1176 = vmatprep.subr.mxu0 0.0
    %1177 = vmatpush1.msra.mxu0 0.0
    %1178 = vmatprep.subr.mxu0 0.0
    %1179 = vmatpush1.msra.mxu0 0.0
    %1180 = vmatprep.subr.mxu0 0.0
    %1181 = vmatpush1.msra.mxu0 0.0
    %1182 = vmatprep.subr.mxu0 0.0
    %1183 = vmatpush1.msra.mxu0 0.0
    %1184 = vmatprep.subr.mxu0 0.0
    %1185 = vmatpush1.msra.mxu0 0.0
    %1186 = vmatprep.subr.mxu0 0.0
    %1187 = vmatpush1.msra.mxu0 0.0
    %1188 = vmatprep.subr.mxu0 0.0
    %1189 = vmatpush1.msra.mxu0 0.0
    %1190 = vmatprep.subr.mxu0 0.0
    %1191 = vmatpush1.msra.mxu0 0.0
    %1192 = vmatprep.subr.mxu0 0.0
    %1193 = vmatpush1.msra.mxu0 %v1160
    %1194 = vmatprep.subr.mxu0 0.0
    %1195 = vmatpush2.msra.mxu0 0.0
    %1196 = vmatprep.subr.mxu0 0.0
    %1197 = vmatpush2.msra.mxu0 0.0
    %1198 = vmatprep.subr.mxu0 0.0
    %1199 = vmatpush2.msra.mxu0 0.0
    %1200 = vmatprep.subr.mxu0 0.0
    %1201 = vmatpush2.msra.mxu0 0.0
    %1202 = vmatprep.subr.mxu0 0.0
    %1203 = vmatpush2.msra.mxu0 0.0
    %1204 = vmatprep.subr.mxu0 0.0
    %1205 = vmatpush2.msra.mxu0 0.0
    %1206 = vmatprep.subr.mxu0 0.0
    %1207 = vmatpush2.msra.mxu0 0.0
    %1208 = vmatprep.subr.mxu0 0.0
    %1209 = vmatpush2.msra.mxu0 0.0
    %1210 = vmatprep.subr.mxu0 0.0
    %1211 = vmatpush2.msra.mxu0 0.0
    %1212 = vmatprep.subr.mxu0 0.0
    %1213 = vmatpush2.msra.mxu0 0.0
    %1214 = vmatprep.subr.mxu0 0.0
    %1215 = vmatpush2.msra.mxu0 0.0
    %1216 = vmatprep.subr.mxu0 0.0
    %1217 = vmatpush2.msra.mxu0 0.0
    %1218 = vmatprep.subr.mxu0 0.0
    %1219 = vmatpush2.msra.mxu0 0.0
    %1220 = vmatprep.subr.mxu0 0.0
    %1221 = vmatpush2.msra.mxu0 0.0
    %1222 = vmatprep.subr.mxu0 0.0
    %1223 = vmatpush2.msra.mxu0 0.0
    %1224 = vmatprep.subr.mxu0 0.0
    %1225 = vmatpush2.msra.mxu0 0.0
    %1226 = vmatprep.mubr.f32.mxu0 0.0
    %1227 = vmatmul.mubr.f32.gmra.mxu0 %v602
    %v1228 = vpop.f32.mrf.mxu0
    %v1229 = vadd.f32 0.0, %v1228
    %v1230 = vpop.f32.mrf.mxu0
    %1231 = vdwg.mxu0
    %v1232 = vadd.f32 %v1081, %v1229
    %s1233 = scalar_lea.vmem %s8, 1
    %v1234 = vld [vmem:[%s1233] sm:$0x1]
    %v1236 = vlaneseq
    %v1237 = vshrl.u32 %v1236, 7
    %v1238 = vsub.s32 0, %v1237
    %v1239 = vrot.slane %v1234, %v1238
    %v1241 = vadd.f32 %v1232, %v1239
    %s1242 = scalar_lea.vmem %s9, 32
    %v1243 = vld [vmem:[%s1242] sm:$0xff]
    %v1244 = vld [vmem:[%s1242 + $0x8] sm:$0xff]
    %v1245 = vld [vmem:[%s1242 + $0x10] sm:$0xff]
    %v1246 = vld [vmem:[%s1242 + $0x18] sm:$0xff]
    %s1247 = scalar_lea.vmem %s10, 1
    %v1248 = vld [vmem:[%s1247] sm:$0x1]
    %v1250 = vlaneseq
    %v1251 = vshrl.u32 %v1250, 7
    %v1252 = vsub.s32 0, %v1251
    %v1253 = vrot.slane %v1248, %v1252
    %v1256 = vsel %vm219, %v1241, 0
    %1258 = vmatprep.subr.mxu0 0.0
    %1259 = vmatpush1.msra.mxu0 0.0
    %1260 = vmatprep.subr.mxu0 0.0
    %1261 = vmatpush1.msra.mxu0 0.0
    %1262 = vmatprep.subr.mxu0 0.0
    %1263 = vmatpush1.msra.mxu0 0.0
    %1264 = vmatprep.subr.mxu0 0.0
    %1265 = vmatpush1.msra.mxu0 0.0
    %1266 = vmatprep.subr.mxu0 0.0
    %1267 = vmatpush1.msra.mxu0 0.0
    %1268 = vmatprep.subr.mxu0 0.0
    %1269 = vmatpush1.msra.mxu0 0.0
    %1270 = vmatprep.subr.mxu0 0.0
    %1271 = vmatpush1.msra.mxu0 0.0
    %1272 = vmatprep.subr.mxu0 0.0
    %1273 = vmatpush1.msra.mxu0 0.0
    %1274 = vmatprep.subr.mxu0 0.0
    %1275 = vmatpush1.msra.mxu0 0.0
    %1276 = vmatprep.subr.mxu0 0.0
    %1277 = vmatpush1.msra.mxu0 0.0
    %1278 = vmatprep.subr.mxu0 0.0
    %1279 = vmatpush1.msra.mxu0 0.0
    %1280 = vmatprep.subr.mxu0 0.0
    %1281 = vmatpush1.msra.mxu0 0.0
    %1282 = vmatprep.subr.mxu0 0.0
    %1283 = vmatpush1.msra.mxu0 %v1246
    %1284 = vmatprep.subr.mxu0 0.0
    %1285 = vmatpush1.msra.mxu0 %v1245
    %1286 = vmatprep.subr.mxu0 0.0
    %1287 = vmatpush1.msra.mxu0 %v1244
    %1288 = vmatprep.subr.mxu0 0.0
    %1289 = vmatpush1.msra.mxu0 %v1243
    %1290 = vmatprep.subr.mxu0 0.0
    %1291 = vmatpush2.msra.mxu0 0.0
    %1292 = vmatprep.subr.mxu0 0.0
    %1293 = vmatpush2.msra.mxu0 0.0
    %1294 = vmatprep.subr.mxu0 0.0
    %1295 = vmatpush2.msra.mxu0 0.0
    %1296 = vmatprep.subr.mxu0 0.0
    %1297 = vmatpush2.msra.mxu0 0.0
    %1298 = vmatprep.subr.mxu0 0.0
    %1299 = vmatpush2.msra.mxu0 0.0
    %1300 = vmatprep.subr.mxu0 0.0
    %1301 = vmatpush2.msra.mxu0 0.0
    %1302 = vmatprep.subr.mxu0 0.0
    %1303 = vmatpush2.msra.mxu0 0.0
    %1304 = vmatprep.subr.mxu0 0.0
    %1305 = vmatpush2.msra.mxu0 0.0
    %1306 = vmatprep.subr.mxu0 0.0
    %1307 = vmatpush2.msra.mxu0 0.0
    %1308 = vmatprep.subr.mxu0 0.0
    %1309 = vmatpush2.msra.mxu0 0.0
    %1310 = vmatprep.subr.mxu0 0.0
    %1311 = vmatpush2.msra.mxu0 0.0
    %1312 = vmatprep.subr.mxu0 0.0
    %1313 = vmatpush2.msra.mxu0 0.0
    %1314 = vmatprep.subr.mxu0 0.0
    %1315 = vmatpush2.msra.mxu0 0.0
    %1316 = vmatprep.subr.mxu0 0.0
    %1317 = vmatpush2.msra.mxu0 0.0
    %1318 = vmatprep.subr.mxu0 0.0
    %1319 = vmatpush2.msra.mxu0 0.0
    %1320 = vmatprep.subr.mxu0 0.0
    %1321 = vmatpush2.msra.mxu0 0.0
    %1322 = vmatprep.mubr.f32.mxu0 0.0
    %1323 = vmatmul.mubr.f32.gmra.mxu0 %v1256
    %v1324 = vpop.f32.mrf.mxu0
    %v1325 = vadd.f32 %v1253, %v1324
    %v1326 = vpop.f32.mrf.mxu0
    %1327 = vdwg.mxu0
    %v1328 = vadd.f32 %v771, %v1325
    %v1329 = vmax.f32 %v1328, 0.0
    %vm1330 = vcmask 254976
    %1331 = vst.msk [vmem:[#allocation2] sm:$0x3] %vm1330, %v1329
    // Predicated region
    $region46: #{downsample_forward.9} parent=1 // pred_check
      _
    $region47: #{downsample_forward.9} parent=1 // pred_check_branch
      %1333 = sbr.rel (0) target = $region49
    $region48: #{downsample_forward.9} parent=1 // pred_region
      %s1335 = ssub.s32 32, 32
      %1336 = vsyncadd [#allocation3], %s1335
      %s1338 = sshll.u32 [#allocation2], 4
      %s1339 = int_to_ptr.vmem [resolvable:$true] %s1338
      %1341 = dma.vmem_to_hbm [thread:$0]  %s1339, 32, %s11, [#allocation3]
    $region49: #{downsample_forward.9} parent=1 // pred_fallthru
      _
    // Predicated region
    $region50: #{downsample_forward.9} parent=1 // pred_check
      _
    $region51: #{downsample_forward.9} parent=1 // pred_check_branch
      %1343 = sbr.rel (0) target = $region53
    $region52: #{downsample_forward.9} parent=1 // pred_region
      %1344 = dma.done [#allocation3], 32
    $region53: #{downsample_forward.9} parent=1 // pred_fallthru
      _
    %1345 = vsyncpa [#allocation3], 1

</llo_original>
